<compile_context>
chip_gen: v6e
topology: v6e:2x2x1
jax: 0.10.0
libtpu: 0.0.40
codegen_flags: <defaults>
</compile_context>

<pallas_src>
import functools
import math

import jax
import jax.numpy as jnp
from jax.experimental import pallas as pl
from jax.experimental.pallas import tpu as pltpu


# ----------------------------------------------------------------------------
# Fused ResBlock kernel (one batch element per grid step)
# ----------------------------------------------------------------------------
def _resblock_kernel(x_ref, w1_ref, b1_ref, w2_ref, b2_ref, o_ref, pad_ref,
                     *, H, W, C, neg_slope, compute_dtype):
    """x_ref:(1,H,W,C)  w*_ref:(9,C,C) compute_dtype  b*_ref:(1,C) f32
    o_ref:(1,H,W,C)  pad_ref:(H+2,W+2,C) compute_dtype scratch (padded input of
    BOTH convolutions)."""
    cdt = compute_dtype

    # --- halo-only zero (interior fully overwritten below) -------------------
    zero_row = jnp.zeros((W + 2, C), cdt)
    pad_ref[0] = zero_row
    pad_ref[H + 1] = zero_row
    zero_col = jnp.zeros((H, 1, C), cdt)
    pad_ref[1:H + 1, 0:1, :] = zero_col
    pad_ref[1:H + 1, W + 1:W + 2, :] = zero_col

    def conv3x3(w_ref, b_ref):
        # 9 per-tap MXU matmuls (M=H*W, K=C, N=C), f32 accumulator in registers.
        acc = None
        for kh in range(3):
            for kw in range(3):
                tap = pad_ref[kh:kh + H, kw:kw + W, :].reshape(H * W, C)
                part = jnp.dot(tap, w_ref[kh * 3 + kw],
                               preferred_element_type=jnp.float32)
                acc = part if acc is None else acc + part
        return acc + b_ref[...]                           # bias in f32

    # ---- conv1 (3x3, bias=True) + LeakyReLU(0.2) applied 'after' ------------
    pad_ref[1:H + 1, 1:W + 1, :] = x_ref[0].astype(cdt)
    y1 = conv3x3(w1_ref, b1_ref)
    y1 = jnp.where(y1 >= 0, y1, neg_slope * y1)           # f32 VPU

    # ---- conv2 (3x3, bias=True), no activation -------------------------------
    pad_ref[1:H + 1, 1:W + 1, :] = y1.reshape(H, W, C).astype(cdt)
    y2 = conv3x3(w2_ref, b2_ref)

    # ---- residual add (re-read the resident input tile; nothing held live) ---
    out = y2 + x_ref[0].astype(jnp.float32).reshape(H * W, C)
    o_ref[0] = out.reshape(H, W, C).astype(o_ref.dtype)


def resblock_forward(params, x, *, compute_dtype=jnp.bfloat16):
    """x: (N, H, W, C) NHWC -> (N, H, W, C).

    compute_dtype controls the MXU operand dtype (scratch, taps, weights);
    accumulation / activation / residual are always f32.
    """
    N, H, W, C = x.shape
    cdt = compute_dtype

    # Host-side reshape + cast: (3,3,Cin,Cout) -> (9,Cin,Cout) in compute_dtype.
    w1 = params['w1'].reshape(9, C, C).astype(cdt)
    w2 = params['w2'].reshape(9, C, C).astype(cdt)
    b1 = params['b1'].reshape(1, C).astype(jnp.float32)
    b2 = params['b2'].reshape(1, C).astype(jnp.float32)

    kern = functools.partial(_resblock_kernel, H=H, W=W, C=C,
                             neg_slope=0.2, compute_dtype=cdt)
    return pl.pallas_call(
        kern,
        out_shape=jax.ShapeDtypeStruct((N, H, W, C), x.dtype),
        grid=(N,),
        in_specs=[
            pl.BlockSpec((1, H, W, C), lambda n: (n, 0, 0, 0)),
            pl.BlockSpec((9, C, C), lambda n: (0, 0, 0)),
            pl.BlockSpec((1, C), lambda n: (0, 0)),
            pl.BlockSpec((9, C, C), lambda n: (0, 0, 0)),
            pl.BlockSpec((1, C), lambda n: (0, 0)),
        ],
        out_specs=pl.BlockSpec((1, H, W, C), lambda n: (n, 0, 0, 0)),
        scratch_shapes=[pltpu.VMEM((H + 2, W + 2, C), cdt)],
        compiler_params=pltpu.CompilerParams(
            dimension_semantics=("parallel",)),
    )(x, w1, b1, w2, b2)


# ----------------------------------------------------------------------------
# Parameter initialization (mirrors the PyTorch __init__)
# ----------------------------------------------------------------------------
def _kaiming_std(fan_in, a):
    gain = math.sqrt(2.0 / (1.0 + a * a))
    return gain / math.sqrt(fan_in)


def _wn_conv_init(key, cin, cout, a):
    """kaiming_normal_(a, fan_in, leaky_relu) + weight_norm(dim=0) + default bias.

    weight_norm at init: w = g * v / ||v|| with g = ||v||  =>  w == v."""
    kw_key, kb_key = jax.random.split(key)
    std = _kaiming_std(cin * 9, a)
    w = jax.random.normal(kw_key, (3, 3, cin, cout), jnp.float32) * std  # HWIO
    bound = 1.0 / math.sqrt(cin * 9)                    # Conv2d default bias init
    b = jax.random.uniform(kb_key, (cout,), jnp.float32, -bound, bound)
    return w, b


def resblock_init(key, in_c):
    k1, k2 = jax.random.split(key)
    w1, b1 = _wn_conv_init(k1, in_c, in_c, a=0.2)       # conv1: negative_slope=0.2
    w2, b2 = _wn_conv_init(k2, in_c, in_c, a=1.0)       # conv2: negative_slope=1
    return {'w1': w1, 'b1': b1, 'w2': w2, 'b2': b2}


# ----------------------------------------------------------------------------
# Pure-JAX reference (for in-script correctness check)
# ----------------------------------------------------------------------------
def resblock_ref(params, x):
    dn = ('NHWC', 'HWIO', 'NHWC')
    hi = jax.lax.Precision.HIGHEST
    y = jax.lax.conv_general_dilated(x, params['w1'], (1, 1), 'SAME',
                                     dimension_numbers=dn, precision=hi)
    y = y + params['b1']
    y = jnp.where(y >= 0, y, 0.2 * y)                   # LeakyReLU(0.2) after conv1
    y = jax.lax.conv_general_dilated(y, params['w2'], (1, 1), 'SAME',
                                     dimension_numbers=dn, precision=hi)
    y = y + params['b2']
    return y + x


# ----------------------------------------------------------------------------
if __name__ == "__main__":
    key = jax.random.PRNGKey(0)
    k_param, k_input = jax.random.split(key)

    # ResBlock(in_c=128) on NHWC input (PyTorch equivalent: NCHW (2, 128, 16, 16)).
    # C=128 keeps the channel (lane) dim exactly one vreg wide -> unmasked stores.
    N, H, W, C = 2, 16, 16, 128

    params = resblock_init(k_param, C)
    x = jax.random.normal(k_input, (N, H, W, C), jnp.float32)

    ref = resblock_ref(params, x)

    def rel_err(out):
        return float(jnp.max(jnp.abs(out - ref) / (1.0 + jnp.abs(ref))))

    # bf16 MXU operands (default path), f32 accumulation/activation/residual.
    out_bf16 = jax.block_until_ready(resblock_forward(params, x))
    assert out_bf16.shape == (N, H, W, C)
    assert out_bf16.dtype == jnp.float32
    assert bool(jnp.all(jnp.isfinite(out_bf16)))
    e_bf16 = rel_err(out_bf16)
    assert e_bf16 < 5e-2, f"bf16 path error vs reference: {e_bf16}"

    # Full-f32 path with a tight tolerance (guards against silent precision bugs).
    out_f32 = jax.block_until_ready(
        resblock_forward(params, x, compute_dtype=jnp.float32))
    assert bool(jnp.all(jnp.isfinite(out_f32)))
    e_f32 = rel_err(out_f32)
    assert e_f32 < 1e-3, f"f32 path error vs reference: {e_f32}"

    print("KERNEL_OK")
</pallas_src>

<mosaic_0001>
module attributes {stable_mosaic.version = 11 : i64} {
  func.func @_resblock_kernel(%arg0: i32, %arg1: memref<1x16x16x128xf32, #tpu.memory_space<vmem>>, %arg2: memref<9x128x128xbf16, #tpu.memory_space<vmem>>, %arg3: memref<1x128xf32, #tpu.memory_space<vmem>>, %arg4: memref<9x128x128xbf16, #tpu.memory_space<vmem>>, %arg5: memref<1x128xf32, #tpu.memory_space<vmem>>, %arg6: memref<1x16x16x128xf32, #tpu.memory_space<vmem>>, %arg7: memref<18x18x128xbf16, #tpu.memory_space<vmem>>) attributes {dimension_semantics = [#tpu.dimension_semantics<parallel>], iteration_bounds = array<i64: 2>, scalar_prefetch = 0 : i64, scratch_operands = 1 : i64, tpu.core_type = #tpu.core_type<tc>, window_params = [{transform_indices = @transform_0, window_bounds = array<i64: 1, 16, 16, 128>}, {pipeline_mode = #tpu.pipeline_mode<synchronous>, transform_indices = @transform_1, window_bounds = array<i64: 9, 128, 128>}, {pipeline_mode = #tpu.pipeline_mode<synchronous>, transform_indices = @transform_2, window_bounds = array<i64: 1, 128>}, {pipeline_mode = #tpu.pipeline_mode<synchronous>, transform_indices = @transform_3, window_bounds = array<i64: 9, 128, 128>}, {pipeline_mode = #tpu.pipeline_mode<synchronous>, transform_indices = @transform_4, window_bounds = array<i64: 1, 128>}, {transform_indices = @transform_5, window_bounds = array<i64: 1, 16, 16, 128>}]} {
    %cst = arith.constant 0.000000e+00 : bf16
    %0 = vector.broadcast %cst : bf16 to vector<18x128xbf16>
    %c0 = arith.constant 0 : index
    %c0_0 = arith.constant 0 : index
    %c0_1 = arith.constant 0 : index
    %1 = vector.load %arg7[%c0, %c0_0, %c0_1] : memref<18x18x128xbf16, #tpu.memory_space<vmem>>, vector<1x18x128xbf16>
    %2 = vector.shape_cast %1 : vector<1x18x128xbf16> to vector<18x128xbf16>
    %3 = vector.shape_cast %0 : vector<18x128xbf16> to vector<1x18x128xbf16>
    tpu.vector_store %arg7[%c0, %c0_0, %c0_1], %3 {strides = array<i32>} : memref<18x18x128xbf16, #tpu.memory_space<vmem>>, vector<1x18x128xbf16>,
    %c17 = arith.constant 17 : index
    %c0_2 = arith.constant 0 : index
    %c0_3 = arith.constant 0 : index
    %4 = vector.load %arg7[%c17, %c0_2, %c0_3] : memref<18x18x128xbf16, #tpu.memory_space<vmem>>, vector<1x18x128xbf16>
    %5 = vector.shape_cast %4 : vector<1x18x128xbf16> to vector<18x128xbf16>
    %6 = vector.shape_cast %0 : vector<18x128xbf16> to vector<1x18x128xbf16>
    tpu.vector_store %arg7[%c17, %c0_2, %c0_3], %6 {strides = array<i32>} : memref<18x18x128xbf16, #tpu.memory_space<vmem>>, vector<1x18x128xbf16>,
    %cst_4 = arith.constant 0.000000e+00 : bf16
    %7 = vector.broadcast %cst_4 : bf16 to vector<16x1x128xbf16>
    %c1 = arith.constant 1 : index
    %c0_5 = arith.constant 0 : index
    %c0_6 = arith.constant 0 : index
    %8 = vector.load %arg7[%c1, %c0_5, %c0_6] : memref<18x18x128xbf16, #tpu.memory_space<vmem>>, vector<16x1x128xbf16>
    tpu.vector_store %arg7[%c1, %c0_5, %c0_6], %7 {strides = array<i32>} : memref<18x18x128xbf16, #tpu.memory_space<vmem>>, vector<16x1x128xbf16>,
    %c1_7 = arith.constant 1 : index
    %c17_8 = arith.constant 17 : index
    %c0_9 = arith.constant 0 : index
    %9 = vector.load %arg7[%c1_7, %c17_8, %c0_9] : memref<18x18x128xbf16, #tpu.memory_space<vmem>>, vector<16x1x128xbf16>
    tpu.vector_store %arg7[%c1_7, %c17_8, %c0_9], %7 {strides = array<i32>} : memref<18x18x128xbf16, #tpu.memory_space<vmem>>, vector<16x1x128xbf16>,
    %c0_10 = arith.constant 0 : index
    %c0_11 = arith.constant 0 : index
    %c0_12 = arith.constant 0 : index
    %c0_13 = arith.constant 0 : index
    %10 = vector.load %arg1[%c0_10, %c0_11, %c0_12, %c0_13] : memref<1x16x16x128xf32, #tpu.memory_space<vmem>>, vector<1x16x16x128xf32>
    %11 = vector.shape_cast %10 : vector<1x16x16x128xf32> to vector<16x16x128xf32>
    %12 = arith.truncf %11 : vector<16x16x128xf32> to vector<16x16x128xbf16>
    %c1_14 = arith.constant 1 : index
    %c1_15 = arith.constant 1 : index
    %c0_16 = arith.constant 0 : index
    %13 = vector.load %arg7[%c1_14, %c1_15, %c0_16] : memref<18x18x128xbf16, #tpu.memory_space<vmem>>, vector<16x16x128xbf16>
    tpu.vector_store %arg7[%c1_14, %c1_15, %c0_16], %12 {strides = array<i32>} : memref<18x18x128xbf16, #tpu.memory_space<vmem>>, vector<16x16x128xbf16>,
    %c0_17 = arith.constant 0 : index
    %c0_18 = arith.constant 0 : index
    %c0_19 = arith.constant 0 : index
    %14 = vector.load %arg7[%c0_17, %c0_18, %c0_19] : memref<18x18x128xbf16, #tpu.memory_space<vmem>>, vector<16x16x128xbf16>
    %15 = vector.shape_cast %14 : vector<16x16x128xbf16> to vector<256x128xbf16>
    %c0_20 = arith.constant 0 : index
    %c0_21 = arith.constant 0 : index
    %c0_22 = arith.constant 0 : index
    %16 = vector.load %arg2[%c0_20, %c0_21, %c0_22] : memref<9x128x128xbf16, #tpu.memory_space<vmem>>, vector<1x128x128xbf16>
    %17 = vector.shape_cast %16 : vector<1x128x128xbf16> to vector<128x128xbf16>
    %cst_23 = arith.constant dense<0.000000e+00> : vector<256x128xf32>
    %18 = tpu.matmul %15, %17, %cst_23 {dimension_numbers = #tpu.dot_dimension_numbers<[1], [0], [0], [1], [0, 0, 1, 1], [], []>} : vector<256x128xbf16>, vector<128x128xbf16>, vector<256x128xf32> -> vector<256x128xf32>
    %c0_24 = arith.constant 0 : index
    %c1_25 = arith.constant 1 : index
    %c0_26 = arith.constant 0 : index
    %19 = vector.load %arg7[%c0_24, %c1_25, %c0_26] : memref<18x18x128xbf16, #tpu.memory_space<vmem>>, vector<16x16x128xbf16>
    %20 = vector.shape_cast %19 : vector<16x16x128xbf16> to vector<256x128xbf16>
    %c1_27 = arith.constant 1 : index
    %c0_28 = arith.constant 0 : index
    %c0_29 = arith.constant 0 : index
    %21 = vector.load %arg2[%c1_27, %c0_28, %c0_29] : memref<9x128x128xbf16, #tpu.memory_space<vmem>>, vector<1x128x128xbf16>
    %22 = vector.shape_cast %21 : vector<1x128x128xbf16> to vector<128x128xbf16>
    %cst_30 = arith.constant dense<0.000000e+00> : vector<256x128xf32>
    %23 = tpu.matmul %20, %22, %cst_30 {dimension_numbers = #tpu.dot_dimension_numbers<[1], [0], [0], [1], [0, 0, 1, 1], [], []>} : vector<256x128xbf16>, vector<128x128xbf16>, vector<256x128xf32> -> vector<256x128xf32>
    %24 = arith.addf %18, %23 : vector<256x128xf32>
    %c0_31 = arith.constant 0 : index
    %c2 = arith.constant 2 : index
    %c0_32 = arith.constant 0 : index
    %25 = vector.load %arg7[%c0_31, %c2, %c0_32] : memref<18x18x128xbf16, #tpu.memory_space<vmem>>, vector<16x16x128xbf16>
    %26 = vector.shape_cast %25 : vector<16x16x128xbf16> to vector<256x128xbf16>
    %c2_33 = arith.constant 2 : index
    %c0_34 = arith.constant 0 : index
    %c0_35 = arith.constant 0 : index
    %27 = vector.load %arg2[%c2_33, %c0_34, %c0_35] : memref<9x128x128xbf16, #tpu.memory_space<vmem>>, vector<1x128x128xbf16>
    %28 = vector.shape_cast %27 : vector<1x128x128xbf16> to vector<128x128xbf16>
    %cst_36 = arith.constant dense<0.000000e+00> : vector<256x128xf32>
    %29 = tpu.matmul %26, %28, %cst_36 {dimension_numbers = #tpu.dot_dimension_numbers<[1], [0], [0], [1], [0, 0, 1, 1], [], []>} : vector<256x128xbf16>, vector<128x128xbf16>, vector<256x128xf32> -> vector<256x128xf32>
    %30 = arith.addf %24, %29 : vector<256x128xf32>
    %c1_37 = arith.constant 1 : index
    %c0_38 = arith.constant 0 : index
    %c0_39 = arith.constant 0 : index
    %31 = vector.load %arg7[%c1_37, %c0_38, %c0_39] : memref<18x18x128xbf16, #tpu.memory_space<vmem>>, vector<16x16x128xbf16>
    %32 = vector.shape_cast %31 : vector<16x16x128xbf16> to vector<256x128xbf16>
    %c3 = arith.constant 3 : index
    %c0_40 = arith.constant 0 : index
    %c0_41 = arith.constant 0 : index
    %33 = vector.load %arg2[%c3, %c0_40, %c0_41] : memref<9x128x128xbf16, #tpu.memory_space<vmem>>, vector<1x128x128xbf16>
    %34 = vector.shape_cast %33 : vector<1x128x128xbf16> to vector<128x128xbf16>
    %cst_42 = arith.constant dense<0.000000e+00> : vector<256x128xf32>
    %35 = tpu.matmul %32, %34, %cst_42 {dimension_numbers = #tpu.dot_dimension_numbers<[1], [0], [0], [1], [0, 0, 1, 1], [], []>} : vector<256x128xbf16>, vector<128x128xbf16>, vector<256x128xf32> -> vector<256x128xf32>
    %36 = arith.addf %30, %35 : vector<256x128xf32>
    %c1_43 = arith.constant 1 : index
    %c1_44 = arith.constant 1 : index
    %c0_45 = arith.constant 0 : index
    %37 = vector.load %arg7[%c1_43, %c1_44, %c0_45] : memref<18x18x128xbf16, #tpu.memory_space<vmem>>, vector<16x16x128xbf16>
    %38 = vector.shape_cast %37 : vector<16x16x128xbf16> to vector<256x128xbf16>
    %c4 = arith.constant 4 : index
    %c0_46 = arith.constant 0 : index
    %c0_47 = arith.constant 0 : index
    %39 = vector.load %arg2[%c4, %c0_46, %c0_47] : memref<9x128x128xbf16, #tpu.memory_space<vmem>>, vector<1x128x128xbf16>
    %40 = vector.shape_cast %39 : vector<1x128x128xbf16> to vector<128x128xbf16>
    %cst_48 = arith.constant dense<0.000000e+00> : vector<256x128xf32>
    %41 = tpu.matmul %38, %40, %cst_48 {dimension_numbers = #tpu.dot_dimension_numbers<[1], [0], [0], [1], [0, 0, 1, 1], [], []>} : vector<256x128xbf16>, vector<128x128xbf16>, vector<256x128xf32> -> vector<256x128xf32>
    %42 = arith.addf %36, %41 : vector<256x128xf32>
    %c1_49 = arith.constant 1 : index
    %c2_50 = arith.constant 2 : index
    %c0_51 = arith.constant 0 : index
    %43 = vector.load %arg7[%c1_49, %c2_50, %c0_51] : memref<18x18x128xbf16, #tpu.memory_space<vmem>>, vector<16x16x128xbf16>
    %44 = vector.shape_cast %43 : vector<16x16x128xbf16> to vector<256x128xbf16>
    %c5 = arith.constant 5 : index
    %c0_52 = arith.constant 0 : index
    %c0_53 = arith.constant 0 : index
    %45 = vector.load %arg2[%c5, %c0_52, %c0_53] : memref<9x128x128xbf16, #tpu.memory_space<vmem>>, vector<1x128x128xbf16>
    %46 = vector.shape_cast %45 : vector<1x128x128xbf16> to vector<128x128xbf16>
    %cst_54 = arith.constant dense<0.000000e+00> : vector<256x128xf32>
    %47 = tpu.matmul %44, %46, %cst_54 {dimension_numbers = #tpu.dot_dimension_numbers<[1], [0], [0], [1], [0, 0, 1, 1], [], []>} : vector<256x128xbf16>, vector<128x128xbf16>, vector<256x128xf32> -> vector<256x128xf32>
    %48 = arith.addf %42, %47 : vector<256x128xf32>
    %c2_55 = arith.constant 2 : index
    %c0_56 = arith.constant 0 : index
    %c0_57 = arith.constant 0 : index
    %49 = vector.load %arg7[%c2_55, %c0_56, %c0_57] : memref<18x18x128xbf16, #tpu.memory_space<vmem>>, vector<16x16x128xbf16>
    %50 = vector.shape_cast %49 : vector<16x16x128xbf16> to vector<256x128xbf16>
    %c6 = arith.constant 6 : index
    %c0_58 = arith.constant 0 : index
    %c0_59 = arith.constant 0 : index
    %51 = vector.load %arg2[%c6, %c0_58, %c0_59] : memref<9x128x128xbf16, #tpu.memory_space<vmem>>, vector<1x128x128xbf16>
    %52 = vector.shape_cast %51 : vector<1x128x128xbf16> to vector<128x128xbf16>
    %cst_60 = arith.constant dense<0.000000e+00> : vector<256x128xf32>
    %53 = tpu.matmul %50, %52, %cst_60 {dimension_numbers = #tpu.dot_dimension_numbers<[1], [0], [0], [1], [0, 0, 1, 1], [], []>} : vector<256x128xbf16>, vector<128x128xbf16>, vector<256x128xf32> -> vector<256x128xf32>
    %54 = arith.addf %48, %53 : vector<256x128xf32>
    %c2_61 = arith.constant 2 : index
    %c1_62 = arith.constant 1 : index
    %c0_63 = arith.constant 0 : index
    %55 = vector.load %arg7[%c2_61, %c1_62, %c0_63] : memref<18x18x128xbf16, #tpu.memory_space<vmem>>, vector<16x16x128xbf16>
    %56 = vector.shape_cast %55 : vector<16x16x128xbf16> to vector<256x128xbf16>
    %c7 = arith.constant 7 : index
    %c0_64 = arith.constant 0 : index
    %c0_65 = arith.constant 0 : index
    %57 = vector.load %arg2[%c7, %c0_64, %c0_65] : memref<9x128x128xbf16, #tpu.memory_space<vmem>>, vector<1x128x128xbf16>
    %58 = vector.shape_cast %57 : vector<1x128x128xbf16> to vector<128x128xbf16>
    %cst_66 = arith.constant dense<0.000000e+00> : vector<256x128xf32>
    %59 = tpu.matmul %56, %58, %cst_66 {dimension_numbers = #tpu.dot_dimension_numbers<[1], [0], [0], [1], [0, 0, 1, 1], [], []>} : vector<256x128xbf16>, vector<128x128xbf16>, vector<256x128xf32> -> vector<256x128xf32>
    %60 = arith.addf %54, %59 : vector<256x128xf32>
    %c2_67 = arith.constant 2 : index
    %c2_68 = arith.constant 2 : index
    %c0_69 = arith.constant 0 : index
    %61 = vector.load %arg7[%c2_67, %c2_68, %c0_69] : memref<18x18x128xbf16, #tpu.memory_space<vmem>>, vector<16x16x128xbf16>
    %62 = vector.shape_cast %61 : vector<16x16x128xbf16> to vector<256x128xbf16>
    %c8 = arith.constant 8 : index
    %c0_70 = arith.constant 0 : index
    %c0_71 = arith.constant 0 : index
    %63 = vector.load %arg2[%c8, %c0_70, %c0_71] : memref<9x128x128xbf16, #tpu.memory_space<vmem>>, vector<1x128x128xbf16>
    %64 = vector.shape_cast %63 : vector<1x128x128xbf16> to vector<128x128xbf16>
    %cst_72 = arith.constant dense<0.000000e+00> : vector<256x128xf32>
    %65 = tpu.matmul %62, %64, %cst_72 {dimension_numbers = #tpu.dot_dimension_numbers<[1], [0], [0], [1], [0, 0, 1, 1], [], []>} : vector<256x128xbf16>, vector<128x128xbf16>, vector<256x128xf32> -> vector<256x128xf32>
    %66 = arith.addf %60, %65 : vector<256x128xf32>
    %c0_73 = arith.constant 0 : index
    %c0_74 = arith.constant 0 : index
    %67 = vector.load %arg3[%c0_73, %c0_74] : memref<1x128xf32, #tpu.memory_space<vmem>>, vector<1x128xf32>
    %68 = vector.broadcast %67 : vector<1x128xf32> to vector<256x128xf32>
    %69 = arith.addf %66, %68 : vector<256x128xf32>
    %cst_75 = arith.constant 0.000000e+00 : f32
    %70 = vector.broadcast %cst_75 : f32 to vector<256x128xf32>
    %71 = arith.cmpf oge, %69, %70 : vector<256x128xf32>
    %cst_76 = arith.constant 2.000000e-01 : f32
    %72 = vector.broadcast %cst_76 : f32 to vector<256x128xf32>
    %73 = arith.mulf %72, %69 : vector<256x128xf32>
    %74 = arith.select %71, %69, %73 : vector<256x128xi1>, vector<256x128xf32>
    %75 = vector.shape_cast %74 : vector<256x128xf32> to vector<16x16x128xf32>
    %76 = arith.truncf %75 : vector<16x16x128xf32> to vector<16x16x128xbf16>
    %c1_77 = arith.constant 1 : index
    %c1_78 = arith.constant 1 : index
    %c0_79 = arith.constant 0 : index
    %77 = vector.load %arg7[%c1_77, %c1_78, %c0_79] : memref<18x18x128xbf16, #tpu.memory_space<vmem>>, vector<16x16x128xbf16>
    tpu.vector_store %arg7[%c1_77, %c1_78, %c0_79], %76 {strides = array<i32>} : memref<18x18x128xbf16, #tpu.memory_space<vmem>>, vector<16x16x128xbf16>,
    %c0_80 = arith.constant 0 : index
    %c0_81 = arith.constant 0 : index
    %c0_82 = arith.constant 0 : index
    %78 = vector.load %arg7[%c0_80, %c0_81, %c0_82] : memref<18x18x128xbf16, #tpu.memory_space<vmem>>, vector<16x16x128xbf16>
    %79 = vector.shape_cast %78 : vector<16x16x128xbf16> to vector<256x128xbf16>
    %c0_83 = arith.constant 0 : index
    %c0_84 = arith.constant 0 : index
    %c0_85 = arith.constant 0 : index
    %80 = vector.load %arg4[%c0_83, %c0_84, %c0_85] : memref<9x128x128xbf16, #tpu.memory_space<vmem>>, vector<1x128x128xbf16>
    %81 = vector.shape_cast %80 : vector<1x128x128xbf16> to vector<128x128xbf16>
    %cst_86 = arith.constant dense<0.000000e+00> : vector<256x128xf32>
    %82 = tpu.matmul %79, %81, %cst_86 {dimension_numbers = #tpu.dot_dimension_numbers<[1], [0], [0], [1], [0, 0, 1, 1], [], []>} : vector<256x128xbf16>, vector<128x128xbf16>, vector<256x128xf32> -> vector<256x128xf32>
    %c0_87 = arith.constant 0 : index
    %c1_88 = arith.constant 1 : index
    %c0_89 = arith.constant 0 : index
    %83 = vector.load %arg7[%c0_87, %c1_88, %c0_89] : memref<18x18x128xbf16, #tpu.memory_space<vmem>>, vector<16x16x128xbf16>
    %84 = vector.shape_cast %83 : vector<16x16x128xbf16> to vector<256x128xbf16>
    %c1_90 = arith.constant 1 : index
    %c0_91 = arith.constant 0 : index
    %c0_92 = arith.constant 0 : index
    %85 = vector.load %arg4[%c1_90, %c0_91, %c0_92] : memref<9x128x128xbf16, #tpu.memory_space<vmem>>, vector<1x128x128xbf16>
    %86 = vector.shape_cast %85 : vector<1x128x128xbf16> to vector<128x128xbf16>
    %cst_93 = arith.constant dense<0.000000e+00> : vector<256x128xf32>
    %87 = tpu.matmul %84, %86, %cst_93 {dimension_numbers = #tpu.dot_dimension_numbers<[1], [0], [0], [1], [0, 0, 1, 1], [], []>} : vector<256x128xbf16>, vector<128x128xbf16>, vector<256x128xf32> -> vector<256x128xf32>
    %88 = arith.addf %82, %87 : vector<256x128xf32>
    %c0_94 = arith.constant 0 : index
    %c2_95 = arith.constant 2 : index
    %c0_96 = arith.constant 0 : index
    %89 = vector.load %arg7[%c0_94, %c2_95, %c0_96] : memref<18x18x128xbf16, #tpu.memory_space<vmem>>, vector<16x16x128xbf16>
    %90 = vector.shape_cast %89 : vector<16x16x128xbf16> to vector<256x128xbf16>
    %c2_97 = arith.constant 2 : index
    %c0_98 = arith.constant 0 : index
    %c0_99 = arith.constant 0 : index
    %91 = vector.load %arg4[%c2_97, %c0_98, %c0_99] : memref<9x128x128xbf16, #tpu.memory_space<vmem>>, vector<1x128x128xbf16>
    %92 = vector.shape_cast %91 : vector<1x128x128xbf16> to vector<128x128xbf16>
    %cst_100 = arith.constant dense<0.000000e+00> : vector<256x128xf32>
    %93 = tpu.matmul %90, %92, %cst_100 {dimension_numbers = #tpu.dot_dimension_numbers<[1], [0], [0], [1], [0, 0, 1, 1], [], []>} : vector<256x128xbf16>, vector<128x128xbf16>, vector<256x128xf32> -> vector<256x128xf32>
    %94 = arith.addf %88, %93 : vector<256x128xf32>
    %c1_101 = arith.constant 1 : index
    %c0_102 = arith.constant 0 : index
    %c0_103 = arith.constant 0 : index
    %95 = vector.load %arg7[%c1_101, %c0_102, %c0_103] : memref<18x18x128xbf16, #tpu.memory_space<vmem>>, vector<16x16x128xbf16>
    %96 = vector.shape_cast %95 : vector<16x16x128xbf16> to vector<256x128xbf16>
    %c3_104 = arith.constant 3 : index
    %c0_105 = arith.constant 0 : index
    %c0_106 = arith.constant 0 : index
    %97 = vector.load %arg4[%c3_104, %c0_105, %c0_106] : memref<9x128x128xbf16, #tpu.memory_space<vmem>>, vector<1x128x128xbf16>
    %98 = vector.shape_cast %97 : vector<1x128x128xbf16> to vector<128x128xbf16>
    %cst_107 = arith.constant dense<0.000000e+00> : vector<256x128xf32>
    %99 = tpu.matmul %96, %98, %cst_107 {dimension_numbers = #tpu.dot_dimension_numbers<[1], [0], [0], [1], [0, 0, 1, 1], [], []>} : vector<256x128xbf16>, vector<128x128xbf16>, vector<256x128xf32> -> vector<256x128xf32>
    %100 = arith.addf %94, %99 : vector<256x128xf32>
    %c1_108 = arith.constant 1 : index
    %c1_109 = arith.constant 1 : index
    %c0_110 = arith.constant 0 : index
    %101 = vector.load %arg7[%c1_108, %c1_109, %c0_110] : memref<18x18x128xbf16, #tpu.memory_space<vmem>>, vector<16x16x128xbf16>
    %102 = vector.shape_cast %101 : vector<16x16x128xbf16> to vector<256x128xbf16>
    %c4_111 = arith.constant 4 : index
    %c0_112 = arith.constant 0 : index
    %c0_113 = arith.constant 0 : index
    %103 = vector.load %arg4[%c4_111, %c0_112, %c0_113] : memref<9x128x128xbf16, #tpu.memory_space<vmem>>, vector<1x128x128xbf16>
    %104 = vector.shape_cast %103 : vector<1x128x128xbf16> to vector<128x128xbf16>
    %cst_114 = arith.constant dense<0.000000e+00> : vector<256x128xf32>
    %105 = tpu.matmul %102, %104, %cst_114 {dimension_numbers = #tpu.dot_dimension_numbers<[1], [0], [0], [1], [0, 0, 1, 1], [], []>} : vector<256x128xbf16>, vector<128x128xbf16>, vector<256x128xf32> -> vector<256x128xf32>
    %106 = arith.addf %100, %105 : vector<256x128xf32>
    %c1_115 = arith.constant 1 : index
    %c2_116 = arith.constant 2 : index
    %c0_117 = arith.constant 0 : index
    %107 = vector.load %arg7[%c1_115, %c2_116, %c0_117] : memref<18x18x128xbf16, #tpu.memory_space<vmem>>, vector<16x16x128xbf16>
    %108 = vector.shape_cast %107 : vector<16x16x128xbf16> to vector<256x128xbf16>
    %c5_118 = arith.constant 5 : index
    %c0_119 = arith.constant 0 : index
    %c0_120 = arith.constant 0 : index
    %109 = vector.load %arg4[%c5_118, %c0_119, %c0_120] : memref<9x128x128xbf16, #tpu.memory_space<vmem>>, vector<1x128x128xbf16>
    %110 = vector.shape_cast %109 : vector<1x128x128xbf16> to vector<128x128xbf16>
    %cst_121 = arith.constant dense<0.000000e+00> : vector<256x128xf32>
    %111 = tpu.matmul %108, %110, %cst_121 {dimension_numbers = #tpu.dot_dimension_numbers<[1], [0], [0], [1], [0, 0, 1, 1], [], []>} : vector<256x128xbf16>, vector<128x128xbf16>, vector<256x128xf32> -> vector<256x128xf32>
    %112 = arith.addf %106, %111 : vector<256x128xf32>
    %c2_122 = arith.constant 2 : index
    %c0_123 = arith.constant 0 : index
    %c0_124 = arith.constant 0 : index
    %113 = vector.load %arg7[%c2_122, %c0_123, %c0_124] : memref<18x18x128xbf16, #tpu.memory_space<vmem>>, vector<16x16x128xbf16>
    %114 = vector.shape_cast %113 : vector<16x16x128xbf16> to vector<256x128xbf16>
    %c6_125 = arith.constant 6 : index
    %c0_126 = arith.constant 0 : index
    %c0_127 = arith.constant 0 : index
    %115 = vector.load %arg4[%c6_125, %c0_126, %c0_127] : memref<9x128x128xbf16, #tpu.memory_space<vmem>>, vector<1x128x128xbf16>
    %116 = vector.shape_cast %115 : vector<1x128x128xbf16> to vector<128x128xbf16>
    %cst_128 = arith.constant dense<0.000000e+00> : vector<256x128xf32>
    %117 = tpu.matmul %114, %116, %cst_128 {dimension_numbers = #tpu.dot_dimension_numbers<[1], [0], [0], [1], [0, 0, 1, 1], [], []>} : vector<256x128xbf16>, vector<128x128xbf16>, vector<256x128xf32> -> vector<256x128xf32>
    %118 = arith.addf %112, %117 : vector<256x128xf32>
    %c2_129 = arith.constant 2 : index
    %c1_130 = arith.constant 1 : index
    %c0_131 = arith.constant 0 : index
    %119 = vector.load %arg7[%c2_129, %c1_130, %c0_131] : memref<18x18x128xbf16, #tpu.memory_space<vmem>>, vector<16x16x128xbf16>
    %120 = vector.shape_cast %119 : vector<16x16x128xbf16> to vector<256x128xbf16>
    %c7_132 = arith.constant 7 : index
    %c0_133 = arith.constant 0 : index
    %c0_134 = arith.constant 0 : index
    %121 = vector.load %arg4[%c7_132, %c0_133, %c0_134] : memref<9x128x128xbf16, #tpu.memory_space<vmem>>, vector<1x128x128xbf16>
    %122 = vector.shape_cast %121 : vector<1x128x128xbf16> to vector<128x128xbf16>
    %cst_135 = arith.constant dense<0.000000e+00> : vector<256x128xf32>
    %123 = tpu.matmul %120, %122, %cst_135 {dimension_numbers = #tpu.dot_dimension_numbers<[1], [0], [0], [1], [0, 0, 1, 1], [], []>} : vector<256x128xbf16>, vector<128x128xbf16>, vector<256x128xf32> -> vector<256x128xf32>
    %124 = arith.addf %118, %123 : vector<256x128xf32>
    %c2_136 = arith.constant 2 : index
    %c2_137 = arith.constant 2 : index
    %c0_138 = arith.constant 0 : index
    %125 = vector.load %arg7[%c2_136, %c2_137, %c0_138] : memref<18x18x128xbf16, #tpu.memory_space<vmem>>, vector<16x16x128xbf16>
    %126 = vector.shape_cast %125 : vector<16x16x128xbf16> to vector<256x128xbf16>
    %c8_139 = arith.constant 8 : index
    %c0_140 = arith.constant 0 : index
    %c0_141 = arith.constant 0 : index
    %127 = vector.load %arg4[%c8_139, %c0_140, %c0_141] : memref<9x128x128xbf16, #tpu.memory_space<vmem>>, vector<1x128x128xbf16>
    %128 = vector.shape_cast %127 : vector<1x128x128xbf16> to vector<128x128xbf16>
    %cst_142 = arith.constant dense<0.000000e+00> : vector<256x128xf32>
    %129 = tpu.matmul %126, %128, %cst_142 {dimension_numbers = #tpu.dot_dimension_numbers<[1], [0], [0], [1], [0, 0, 1, 1], [], []>} : vector<256x128xbf16>, vector<128x128xbf16>, vector<256x128xf32> -> vector<256x128xf32>
    %130 = arith.addf %124, %129 : vector<256x128xf32>
    %c0_143 = arith.constant 0 : index
    %c0_144 = arith.constant 0 : index
    %131 = vector.load %arg5[%c0_143, %c0_144] : memref<1x128xf32, #tpu.memory_space<vmem>>, vector<1x128xf32>
    %132 = vector.broadcast %131 : vector<1x128xf32> to vector<256x128xf32>
    %133 = arith.addf %130, %132 : vector<256x128xf32>
    %c0_145 = arith.constant 0 : index
    %c0_146 = arith.constant 0 : index
    %c0_147 = arith.constant 0 : index
    %c0_148 = arith.constant 0 : index
    %134 = vector.load %arg1[%c0_145, %c0_146, %c0_147, %c0_148] : memref<1x16x16x128xf32, #tpu.memory_space<vmem>>, vector<1x16x16x128xf32>
    %135 = vector.shape_cast %134 : vector<1x16x16x128xf32> to vector<16x16x128xf32>
    %136 = vector.shape_cast %135 : vector<16x16x128xf32> to vector<256x128xf32>
    %137 = arith.addf %133, %136 : vector<256x128xf32>
    %138 = vector.shape_cast %137 : vector<256x128xf32> to vector<16x16x128xf32>
    %c0_149 = arith.constant 0 : index
    %c0_150 = arith.constant 0 : index
    %c0_151 = arith.constant 0 : index
    %c0_152 = arith.constant 0 : index
    %139 = vector.load %arg6[%c0_149, %c0_150, %c0_151, %c0_152] : memref<1x16x16x128xf32, #tpu.memory_space<vmem>>, vector<1x16x16x128xf32>
    %140 = vector.shape_cast %139 : vector<1x16x16x128xf32> to vector<16x16x128xf32>
    %141 = vector.shape_cast %138 : vector<16x16x128xf32> to vector<1x16x16x128xf32>
    tpu.vector_store %arg6[%c0_149, %c0_150, %c0_151, %c0_152], %141 {strides = array<i32>} : memref<1x16x16x128xf32, #tpu.memory_space<vmem>>, vector<1x16x16x128xf32>,
    return
  }
  func.func @transform_0(%arg0: i32) -> (i32, i32, i32, i32) {
    %c0_i32 = arith.constant 0 : i32
    %c0_i32_0 = arith.constant 0 : i32
    %c0_i32_1 = arith.constant 0 : i32
    %c0_i32_2 = arith.constant 0 : i32
    return %arg0, %c0_i32, %c0_i32_0, %c0_i32_1 : i32, i32, i32, i32
  }
  func.func @transform_1(%arg0: i32) -> (i32, i32, i32) {
    %c0_i32 = arith.constant 0 : i32
    %c0_i32_0 = arith.constant 0 : i32
    %c0_i32_1 = arith.constant 0 : i32
    %c0_i32_2 = arith.constant 0 : i32
    return %c0_i32, %c0_i32_0, %c0_i32_1 : i32, i32, i32
  }
  func.func @transform_2(%arg0: i32) -> (i32, i32) {
    %c0_i32 = arith.constant 0 : i32
    %c0_i32_0 = arith.constant 0 : i32
    %c0_i32_1 = arith.constant 0 : i32
    return %c0_i32, %c0_i32_0 : i32, i32
  }
  func.func @transform_3(%arg0: i32) -> (i32, i32, i32) {
    %c0_i32 = arith.constant 0 : i32
    %c0_i32_0 = arith.constant 0 : i32
    %c0_i32_1 = arith.constant 0 : i32
    %c0_i32_2 = arith.constant 0 : i32
    return %c0_i32, %c0_i32_0, %c0_i32_1 : i32, i32, i32
  }
  func.func @transform_4(%arg0: i32) -> (i32, i32) {
    %c0_i32 = arith.constant 0 : i32
    %c0_i32_0 = arith.constant 0 : i32
    %c0_i32_1 = arith.constant 0 : i32
    return %c0_i32, %c0_i32_0 : i32, i32
  }
  func.func @transform_5(%arg0: i32) -> (i32, i32, i32, i32) {
    %c0_i32 = arith.constant 0 : i32
    %c0_i32_0 = arith.constant 0 : i32
    %c0_i32_1 = arith.constant 0 : i32
    %c0_i32_2 = arith.constant 0 : i32
    return %arg0, %c0_i32, %c0_i32_0, %c0_i32_1 : i32, i32, i32, i32
  }
}

</mosaic_0001>

<llo_original>
// kernel: tpu_custom_call.1
$region0: #{tpu_custom_call.1}
  #allocation0 [shape = 'u32[]', space=smem, size = 0x4, offset = 0x4, fixed_abs, tag = 'smem constant byte address 0x4 - core index']
  #allocation1 [shape = 'u32[144,128]{1,0:T(1,128)}', space=vmem, size = 0x12000, scoped, tag = 'internal scratch']
  #allocation2 [shape = 'bf16[18,18,128]{2,1,0:T(8,128)(2,1)}', space=vmem, size = 0x1b000, scoped, tag = 'scratch operand']
  %s0 = inlined_call_operand.hbm [shape: f32[2,16,16,128], index: 0, kind: input, shape index: {}]
  %s1 = inlined_call_operand.hbm [shape: bf16[9,128,128], index: 1, kind: input, shape index: {}]
  %s2 = inlined_call_operand.vmem [shape: f32[1,128], index: 2, kind: input, shape index: {}]
  %s3 = inlined_call_operand.hbm [shape: bf16[9,128,128], index: 3, kind: input, shape index: {}]
  %s4 = inlined_call_operand.vmem [shape: f32[1,128], index: 4, kind: input, shape index: {}]
  %s5 = inlined_call_operand.hbm [shape: f32[2,16,16,128], index: 5, kind: output, shape index: {}]
  %s6 = sld [smem:[#allocation0]]
  $region65: #{tpu_custom_call.1} parent=0
    _
  %s8 = ssub.s32 1, %s6
  %s9 = scalar_select 0, %s8, %s6
  $region1: #{tpu_custom_call.1} parent=0
    #allocation3 [shape = 'u8[262144]{0}', space=vmem, size = 0x40000, scoped, tag = 'input window, operand 0']
    #allocation4 [shape = 's32[2]{0}', space=sflag, size = 0x8, scoped, tag = 'scoped memory for tpu_custom_call.1']
    #allocation5 [shape = 's32[2]{0}', space=sflag, size = 0x8, scoped, tag = 'scoped memory for tpu_custom_call.1']
    #allocation6 [shape = 'u8[294912]{0}', space=vmem, size = 0x48000, scoped, tag = 'input window, operand 1, single buffered']
    #allocation7 [shape = 's32[1]{0}', space=sflag, size = 0x4, scoped, tag = 'scoped memory for tpu_custom_call.1']
    #allocation8 [shape = 'u8[294912]{0}', space=vmem, size = 0x48000, scoped, tag = 'input window, operand 3, single buffered']
    #allocation9 [shape = 'u8[262144]{0}', space=vmem, size = 0x40000, scoped, tag = 'output window, operand 0']
    %10 = vsyncpa [#allocation4], 0
    %s11 = scalar_lea.sflag [#allocation4], 1
    %12 = vsyncpa %s11, 0
    %13 = vsyncpa [#allocation7], 0
    %14 = vsyncpa [#allocation5], 0
    %s15 = scalar_lea.sflag [#allocation5], 1
    %16 = vsyncpa %s15, 0
    loop: start=0, step=1, limit=4
    $region2: #{tpu_custom_call.1} parent=1 // loop_pre_header
      _
    $region3: #{tpu_custom_call.1} parent=1 // loop_header
      %s18 = sphi 0, %s22
      %p19 = scmp.ge.s32.totalorder %s18, 4
      %s28 = sphi 0, %s30
      %s31 = sphi 0, %s28
      %s32 = sphi 0, %s31
      %s48 = sphi 0, %s32
      %s52 = sphi 0, %s52
      %s54 = sphi 0, %s52
      %s55 = sphi 0, %s54
      %s69 = sphi 0, %s55
      %s73 = sphi 0, %s73
      %s75 = sphi 0, %s73
      %s76 = sphi 0, %s75
      %s90 = sphi 0, %s76
      %s94 = sphi 0, %s94
      %s96 = sphi 0, %s94
      %s97 = sphi 0, %s96
      %s111 = sphi 0, %s97
      %s115 = sphi 0, %s115
      %s117 = sphi 0, %s115
      %s118 = sphi 0, %s117
      %s132 = sphi 0, %s118
      %s138 = sphi 0, %s140
      %s141 = sphi 0, %s138
      %s142 = sphi 0, %s141
      %s158 = sphi 0, %s142
    $region4: #{tpu_custom_call.1} parent=1 // loop_header_branch
      %21 = sbr.rel (%p19) target = $region8
    $region5: #{tpu_custom_call.1} parent=1 // loop_body
      %s23 = ssub.s32 %s18, 1
      %s24 = ssub.s32 %s18, 2
      %s25 = sadd.s32 %s18, 1
      %s26 = ssub.s32 %s18, %s25
      %p27 = scmp.eq.s32.totalorder %s26, 0
      %s29 = sadd.s32 %s28, 1
      %s30 = scalar_select %p27, %s28, %s29
      %p33 = pneg %p27
      %p34 = scmp.eq.s32.totalorder %s18, 1
      %p35 = por %p33, %p34
      %p36 = scmp.ne.s32.totalorder %s28, %s31
      %p37 = scmp.eq.s32.totalorder %s18, 0
      %p38 = por %p36, %p37
      %p39 = scmp.ne.s32.totalorder %s28, %s31
      %p40 = scmp.eq.s32.totalorder %s23, 1
      %p41 = por %p39, %p40
      %p42 = scmp.ne.s32.totalorder %s31, %s32
      %p43 = scmp.eq.s32.totalorder %s23, 0
      %p44 = por %p42, %p43
      %p45 = scmp.ne.s32.totalorder %s31, %s32
      %p46 = scmp.eq.s32.totalorder %s24, 1
      %p47 = por %p45, %p46
      %p49 = scmp.ne.s32.totalorder %s32, %s48
      %p50 = scmp.eq.s32.totalorder %s24, 0
      %p51 = por %p49, %p50
      %s53 = sadd.s32 %s52, 1
      %p56 = scmp.eq.s32.totalorder %s18, 1
      %p57 = scmp.ne.s32.totalorder %s52, %s54
      %p58 = scmp.eq.s32.totalorder %s18, 0
      %p59 = por %p57, %p58
      %p60 = scmp.ne.s32.totalorder %s52, %s54
      %p61 = scmp.eq.s32.totalorder %s23, 1
      %p62 = por %p60, %p61
      %p63 = scmp.ne.s32.totalorder %s54, %s55
      %p64 = scmp.eq.s32.totalorder %s23, 0
      %p65 = por %p63, %p64
      %p66 = scmp.ne.s32.totalorder %s54, %s55
      %p67 = scmp.eq.s32.totalorder %s24, 1
      %p68 = por %p66, %p67
      %p70 = scmp.ne.s32.totalorder %s55, %s69
      %p71 = scmp.eq.s32.totalorder %s24, 0
      %p72 = por %p70, %p71
      %s74 = sadd.s32 %s73, 1
      %p77 = scmp.eq.s32.totalorder %s18, 1
      %p78 = scmp.ne.s32.totalorder %s73, %s75
      %p79 = scmp.eq.s32.totalorder %s18, 0
      %p80 = por %p78, %p79
      %p81 = scmp.ne.s32.totalorder %s73, %s75
      %p82 = scmp.eq.s32.totalorder %s23, 1
      %p83 = por %p81, %p82
      %p84 = scmp.ne.s32.totalorder %s75, %s76
      %p85 = scmp.eq.s32.totalorder %s23, 0
      %p86 = por %p84, %p85
      %p87 = scmp.ne.s32.totalorder %s75, %s76
      %p88 = scmp.eq.s32.totalorder %s24, 1
      %p89 = por %p87, %p88
      %p91 = scmp.ne.s32.totalorder %s76, %s90
      %p92 = scmp.eq.s32.totalorder %s24, 0
      %p93 = por %p91, %p92
      %s95 = sadd.s32 %s94, 1
      %p98 = scmp.eq.s32.totalorder %s18, 1
      %p99 = scmp.ne.s32.totalorder %s94, %s96
      %p100 = scmp.eq.s32.totalorder %s18, 0
      %p101 = por %p99, %p100
      %p102 = scmp.ne.s32.totalorder %s94, %s96
      %p103 = scmp.eq.s32.totalorder %s23, 1
      %p104 = por %p102, %p103
      %p105 = scmp.ne.s32.totalorder %s96, %s97
      %p106 = scmp.eq.s32.totalorder %s23, 0
      %p107 = por %p105, %p106
      %p108 = scmp.ne.s32.totalorder %s96, %s97
      %p109 = scmp.eq.s32.totalorder %s24, 1
      %p110 = por %p108, %p109
      %p112 = scmp.ne.s32.totalorder %s97, %s111
      %p113 = scmp.eq.s32.totalorder %s24, 0
      %p114 = por %p112, %p113
      %s116 = sadd.s32 %s115, 1
      %p119 = scmp.eq.s32.totalorder %s18, 1
      %p120 = scmp.ne.s32.totalorder %s115, %s117
      %p121 = scmp.eq.s32.totalorder %s18, 0
      %p122 = por %p120, %p121
      %p123 = scmp.ne.s32.totalorder %s115, %s117
      %p124 = scmp.eq.s32.totalorder %s23, 1
      %p125 = por %p123, %p124
      %p126 = scmp.ne.s32.totalorder %s117, %s118
      %p127 = scmp.eq.s32.totalorder %s23, 0
      %p128 = por %p126, %p127
      %p129 = scmp.ne.s32.totalorder %s117, %s118
      %p130 = scmp.eq.s32.totalorder %s24, 1
      %p131 = por %p129, %p130
      %p133 = scmp.ne.s32.totalorder %s118, %s132
      %p134 = scmp.eq.s32.totalorder %s24, 0
      %p135 = por %p133, %p134
      %s136 = ssub.s32 %s18, %s25
      %p137 = scmp.eq.s32.totalorder %s136, 0
      %s139 = sadd.s32 %s138, 1
      %s140 = scalar_select %p137, %s138, %s139
      %p143 = pneg %p137
      %p144 = scmp.eq.s32.totalorder %s18, 1
      %p145 = por %p143, %p144
      %p146 = scmp.ne.s32.totalorder %s138, %s141
      %p147 = scmp.eq.s32.totalorder %s18, 0
      %p148 = por %p146, %p147
      %p149 = scmp.ne.s32.totalorder %s138, %s141
      %p150 = scmp.eq.s32.totalorder %s23, 1
      %p151 = por %p149, %p150
      %p152 = scmp.ne.s32.totalorder %s141, %s142
      %p153 = scmp.eq.s32.totalorder %s23, 0
      %p154 = por %p152, %p153
      %p155 = scmp.ne.s32.totalorder %s141, %s142
      %p156 = scmp.eq.s32.totalorder %s24, 1
      %p157 = por %p155, %p156
      %p159 = scmp.ne.s32.totalorder %s142, %s158
      %p160 = scmp.eq.s32.totalorder %s24, 0
      %p161 = por %p159, %p160
      %p162 = scmp.le.s32.totalorder 1, %s18
      %p163 = scmp.lt.s32.totalorder %s18, 3
      %p164 = pnand %p162, %p163
      %p165 = pneg %p164
      // Predicated region
      $region9: #{tpu_custom_call.1} parent=5 // pred_check
        _
      $region10: #{tpu_custom_call.1} parent=5 // pred_check_branch
        %167 = sbr.rel (%p164) target = $region12
      $region11: #{tpu_custom_call.1} parent=5 // pred_region
        %s168 = ssub.s32 %s18, 1
        // Predicated region
        $region13: #{tpu_custom_call.1} parent=11 // pred_check
          %p169 = pneg %p65
        $region14: #{tpu_custom_call.1} parent=11 // pred_check_branch
          %171 = sbr.rel (%p169) target = $region16
        $region15: #{tpu_custom_call.1} parent=11 // pred_region
          %s173 = ssub.s32 9216, 9216
          %174 = vsyncadd [#allocation7], %s173
          %s175 = sshll.u32 [#allocation6], 4
          %s176 = int_to_ptr.vmem [resolvable:$true] %s175
          %181 = dma.hbm_to_vmem [thread:$0]  %s1, 9216, %s176, [#allocation7], 64, 64, 4
        $region16: #{tpu_custom_call.1} parent=11 // pred_fallthru
          _
        // Predicated region
        $region17: #{tpu_custom_call.1} parent=11 // pred_check
          %p182 = pneg %p86
        $region18: #{tpu_custom_call.1} parent=11 // pred_check_branch
          %184 = sbr.rel (%p182) target = $region20
        $region19: #{tpu_custom_call.1} parent=11 // pred_region
          _
        $region20: #{tpu_custom_call.1} parent=11 // pred_fallthru
          _
        // Predicated region
        $region21: #{tpu_custom_call.1} parent=11 // pred_check
          %p185 = pneg %p107
        $region22: #{tpu_custom_call.1} parent=11 // pred_check_branch
          %187 = sbr.rel (%p185) target = $region24
        $region23: #{tpu_custom_call.1} parent=11 // pred_region
          %s189 = ssub.s32 9216, 9216
          %190 = vsyncadd [#allocation7], %s189
          %s191 = sshll.u32 [#allocation8], 4
          %s192 = int_to_ptr.vmem [resolvable:$true] %s191
          %197 = dma.hbm_to_vmem [thread:$0]  %s3, 9216, %s192, [#allocation7], 64, 64, 4
        $region24: #{tpu_custom_call.1} parent=11 // pred_fallthru
          _
        // Predicated region
        $region25: #{tpu_custom_call.1} parent=11 // pred_check
          %p198 = pneg %p128
        $region26: #{tpu_custom_call.1} parent=11 // pred_check_branch
          %200 = sbr.rel (%p198) target = $region28
        $region27: #{tpu_custom_call.1} parent=11 // pred_region
          _
        $region28: #{tpu_custom_call.1} parent=11 // pred_fallthru
          _
      $region12: #{tpu_custom_call.1} parent=5 // pred_fallthru
        _
      %p201 = scmp.lt.s32.totalorder %s18, 2
      // Predicated region
      $region29: #{tpu_custom_call.1} parent=5 // pred_check
        %p202 = pneg %p201
      $region30: #{tpu_custom_call.1} parent=5 // pred_check_branch
        %204 = sbr.rel (%p202) target = $region32
      $region31: #{tpu_custom_call.1} parent=5 // pred_region
        // Predicated region
        $region33: #{tpu_custom_call.1} parent=31 // pred_check
          %p205 = pneg %p38
        $region34: #{tpu_custom_call.1} parent=31 // pred_check_branch
          %207 = sbr.rel (%p205) target = $region36
        $region35: #{tpu_custom_call.1} parent=31 // pred_region
          %s208 = sand.u32 %s28, 1
          %s209 = scalar_lea.sflag [#allocation4], %s208
          %s210 = sand.u32 %s28, 1
          %s211 = smul.addr %s210, 256
          %s212 = scalar_lea.vmem [#allocation3], %s211
          %s214 = ssub.s32 4096, 4096
          %215 = vsyncadd %s209, %s214
          %s216 = smul.addr %s18, 32
          %s217 = smul.addr %s216, 128
          %s218 = scalar_lea.hbm %s0, %s217
          %s219 = sshll.u32 %s212, 4
          %s220 = int_to_ptr.vmem [resolvable:$true] %s219
          %225 = dma.hbm_to_vmem [thread:$0]  %s218, 4096, %s220, %s209, 128, 128, 8
        $region36: #{tpu_custom_call.1} parent=31 // pred_fallthru
          _
      $region32: #{tpu_custom_call.1} parent=5 // pred_fallthru
        _
      %p226 = scmp.le.s32.totalorder 1, %s18
      %p227 = scmp.lt.s32.totalorder %s18, 3
      %p228 = pnand %p226, %p227
      %p229 = pneg %p228
      // Predicated region
      $region37: #{tpu_custom_call.1} parent=5 // pred_check
        _
      $region38: #{tpu_custom_call.1} parent=5 // pred_check_branch
        %231 = sbr.rel (%p228) target = $region40
      $region39: #{tpu_custom_call.1} parent=5 // pred_region
        %s232 = ssub.s32 %s18, 1
        %s233 = sand.u32 %s31, 1
        %s234 = scalar_lea.sflag [#allocation4], %s233
        %s235 = sand.u32 %s31, 1
        %s236 = smul.addr %s235, 256
        %s237 = scalar_lea.vmem [#allocation3], %s236
        // Predicated region
        $region41: #{tpu_custom_call.1} parent=39 // pred_check
          %p238 = pneg %p44
        $region42: #{tpu_custom_call.1} parent=39 // pred_check_branch
          %240 = sbr.rel (%p238) target = $region44
        $region43: #{tpu_custom_call.1} parent=39 // pred_region
          %241 = dma.done %s234, 4096
        $region44: #{tpu_custom_call.1} parent=39 // pred_fallthru
          _
        // Predicated region
        $region45: #{tpu_custom_call.1} parent=39 // pred_check
          %p242 = pneg %p65
        $region46: #{tpu_custom_call.1} parent=39 // pred_check_branch
          %244 = sbr.rel (%p242) target = $region48
        $region47: #{tpu_custom_call.1} parent=39 // pred_region
          %245 = dma.done [#allocation7], 9216
        $region48: #{tpu_custom_call.1} parent=39 // pred_fallthru
          _
        // Predicated region
        $region49: #{tpu_custom_call.1} parent=39 // pred_check
          %p246 = pneg %p107
        $region50: #{tpu_custom_call.1} parent=39 // pred_check_branch
          %248 = sbr.rel (%p246) target = $region52
        $region51: #{tpu_custom_call.1} parent=39 // pred_region
          %249 = dma.done [#allocation7], 9216
        $region52: #{tpu_custom_call.1} parent=39 // pred_fallthru
          _
        %s250 = sand.u32 %s31, 1
        %s251 = scalar_lea.sflag [#allocation4], %s250
        %s252 = sand.u32 %s31, 1
        %s253 = smul.addr %s252, 256
        %s254 = scalar_lea.vmem [#allocation3], %s253
        %p255 = pneg %p44
        %p256 = pneg %p41
        %p257 = pneg %p65
        %p258 = pneg %p62
        %p259 = pneg %p86
        %p260 = pneg %p83
        %p261 = pneg %p107
        %p262 = pneg %p104
        %p263 = pneg %p128
        %p264 = pneg %p125
        %p265 = pneg %p154
        %p266 = pneg %p151
        %s267 = sand.u32 %s141, 1
        %s268 = scalar_lea.sflag [#allocation5], %s267
        %s269 = sand.u32 %s141, 1
        %s270 = smul.addr %s269, 256
        %s271 = scalar_lea.vmem [#allocation9], %s270
        %273 = vst [vmem:[#allocation2] sm:$0xf] 0
        %274 = vst [vmem:[#allocation2 + $0x4] sm:$0xf] 0
        %275 = vst [vmem:[#allocation2 + $0x8] sm:$0x1] 0
        %s276 = scalar_lea.vmem [#allocation2], 204
        %277 = vst [vmem:[%s276] sm:$0xf] 0
        %278 = vst [vmem:[%s276 + $0x4] sm:$0xf] 0
        %279 = vst [vmem:[%s276 + $0x8] sm:$0x1] 0
        %s280 = scalar_lea.vmem [#allocation2], 12
        %vm281 = vcmask 1040384
        %vm282 = vsmask.f32 256
        %vm283 = vmand %vm281, %vm282
        %v284 = vld [vmem:[%s280] sm:$0x1]
        %v285 = vsel %vm283, 0, %v284
        %286 = vst [vmem:[%s280] sm:$0x1] %v285
        %v287 = vld [vmem:[%s280 + $0xc] sm:$0x1]
        %v288 = vsel %vm283, 0, %v287
        %289 = vst [vmem:[%s280 + $0xc] sm:$0x1] %v288
        %v290 = vld [vmem:[%s280 + $0x18] sm:$0x1]
        %v291 = vsel %vm283, 0, %v290
        %292 = vst [vmem:[%s280 + $0x18] sm:$0x1] %v291
        %v293 = vld [vmem:[%s280 + $0x24] sm:$0x1]
        %v294 = vsel %vm283, 0, %v293
        %295 = vst [vmem:[%s280 + $0x24] sm:$0x1] %v294
        %v296 = vld [vmem:[%s280 + $0x30] sm:$0x1]
        %v297 = vsel %vm283, 0, %v296
        %298 = vst [vmem:[%s280 + $0x30] sm:$0x1] %v297
        %v299 = vld [vmem:[%s280 + $0x3c] sm:$0x1]
        %v300 = vsel %vm283, 0, %v299
        %301 = vst [vmem:[%s280 + $0x3c] sm:$0x1] %v300
        %v302 = vld [vmem:[%s280 + $0x48] sm:$0x1]
        %v303 = vsel %vm283, 0, %v302
        %304 = vst [vmem:[%s280 + $0x48] sm:$0x1] %v303
        %v305 = vld [vmem:[%s280 + $0x54] sm:$0x1]
        %v306 = vsel %vm283, 0, %v305
        %307 = vst [vmem:[%s280 + $0x54] sm:$0x1] %v306
        %v308 = vld [vmem:[%s280 + $0x60] sm:$0x1]
        %v309 = vsel %vm283, 0, %v308
        %310 = vst [vmem:[%s280 + $0x60] sm:$0x1] %v309
        %v311 = vld [vmem:[%s280 + $0x6c] sm:$0x1]
        %v312 = vsel %vm283, 0, %v311
        %313 = vst [vmem:[%s280 + $0x6c] sm:$0x1] %v312
        %v314 = vld [vmem:[%s280 + $0x78] sm:$0x1]
        %v315 = vsel %vm283, 0, %v314
        %316 = vst [vmem:[%s280 + $0x78] sm:$0x1] %v315
        %v317 = vld [vmem:[%s280 + $0x84] sm:$0x1]
        %v318 = vsel %vm283, 0, %v317
        %319 = vst [vmem:[%s280 + $0x84] sm:$0x1] %v318
        %v320 = vld [vmem:[%s280 + $0x90] sm:$0x1]
        %v321 = vsel %vm283, 0, %v320
        %322 = vst [vmem:[%s280 + $0x90] sm:$0x1] %v321
        %v323 = vld [vmem:[%s280 + $0x9c] sm:$0x1]
        %v324 = vsel %vm283, 0, %v323
        %325 = vst [vmem:[%s280 + $0x9c] sm:$0x1] %v324
        %v326 = vld [vmem:[%s280 + $0xa8] sm:$0x1]
        %v327 = vsel %vm283, 0, %v326
        %328 = vst [vmem:[%s280 + $0xa8] sm:$0x1] %v327
        %v329 = vld [vmem:[%s280 + $0xb4] sm:$0x1]
        %v330 = vsel %vm283, 0, %v329
        %331 = vst [vmem:[%s280 + $0xb4] sm:$0x1] %v330
        %vm332 = vsmask.f32 7938
        %vm333 = vmand %vm281, %vm332
        %v334 = vld [vmem:[%s280 + $0x8] sm:$0x1]
        %v335 = vsel %vm333, 0, %v334
        %336 = vst [vmem:[%s280 + $0x8] sm:$0x1] %v335
        %v337 = vld [vmem:[%s280 + $0x14] sm:$0x1]
        %v338 = vsel %vm333, 0, %v337
        %339 = vst [vmem:[%s280 + $0x14] sm:$0x1] %v338
        %v340 = vld [vmem:[%s280 + $0x20] sm:$0x1]
        %v341 = vsel %vm333, 0, %v340
        %342 = vst [vmem:[%s280 + $0x20] sm:$0x1] %v341
        %v343 = vld [vmem:[%s280 + $0x2c] sm:$0x1]
        %v344 = vsel %vm333, 0, %v343
        %345 = vst [vmem:[%s280 + $0x2c] sm:$0x1] %v344
        %v346 = vld [vmem:[%s280 + $0x38] sm:$0x1]
        %v347 = vsel %vm333, 0, %v346
        %348 = vst [vmem:[%s280 + $0x38] sm:$0x1] %v347
        %v349 = vld [vmem:[%s280 + $0x44] sm:$0x1]
        %v350 = vsel %vm333, 0, %v349
        %351 = vst [vmem:[%s280 + $0x44] sm:$0x1] %v350
        %v352 = vld [vmem:[%s280 + $0x50] sm:$0x1]
        %v353 = vsel %vm333, 0, %v352
        %354 = vst [vmem:[%s280 + $0x50] sm:$0x1] %v353
        %v355 = vld [vmem:[%s280 + $0x5c] sm:$0x1]
        %v356 = vsel %vm333, 0, %v355
        %357 = vst [vmem:[%s280 + $0x5c] sm:$0x1] %v356
        %v358 = vld [vmem:[%s280 + $0x68] sm:$0x1]
        %v359 = vsel %vm333, 0, %v358
        %360 = vst [vmem:[%s280 + $0x68] sm:$0x1] %v359
        %v361 = vld [vmem:[%s280 + $0x74] sm:$0x1]
        %v362 = vsel %vm333, 0, %v361
        %363 = vst [vmem:[%s280 + $0x74] sm:$0x1] %v362
        %v364 = vld [vmem:[%s280 + $0x80] sm:$0x1]
        %v365 = vsel %vm333, 0, %v364
        %366 = vst [vmem:[%s280 + $0x80] sm:$0x1] %v365
        %v367 = vld [vmem:[%s280 + $0x8c] sm:$0x1]
        %v368 = vsel %vm333, 0, %v367
        %369 = vst [vmem:[%s280 + $0x8c] sm:$0x1] %v368
        %v370 = vld [vmem:[%s280 + $0x98] sm:$0x1]
        %v371 = vsel %vm333, 0, %v370
        %372 = vst [vmem:[%s280 + $0x98] sm:$0x1] %v371
        %v373 = vld [vmem:[%s280 + $0xa4] sm:$0x1]
        %v374 = vsel %vm333, 0, %v373
        %375 = vst [vmem:[%s280 + $0xa4] sm:$0x1] %v374
        %v376 = vld [vmem:[%s280 + $0xb0] sm:$0x1]
        %v377 = vsel %vm333, 0, %v376
        %378 = vst [vmem:[%s280 + $0xb0] sm:$0x1] %v377
        %v379 = vld [vmem:[%s280 + $0xbc] sm:$0x1]
        %v380 = vsel %vm333, 0, %v379
        %381 = vst [vmem:[%s280 + $0xbc] sm:$0x1] %v380
        %v382 = vld [vmem:[%s237] sm:$0xff]
        %v383 = vld [vmem:[%s237 + $0x8] sm:$0xff]
        %v384 = vld [vmem:[%s237 + $0x10] sm:$0xff]
        %v385 = vld [vmem:[%s237 + $0x18] sm:$0xff]
        %v386 = vld [vmem:[%s237 + $0x20] sm:$0xff]
        %v387 = vld [vmem:[%s237 + $0x28] sm:$0xff]
        %v388 = vld [vmem:[%s237 + $0x30] sm:$0xff]
        %v389 = vld [vmem:[%s237 + $0x38] sm:$0xff]
        %v390 = vld [vmem:[%s237 + $0x40] sm:$0xff]
        %v391 = vld [vmem:[%s237 + $0x48] sm:$0xff]
        %v392 = vld [vmem:[%s237 + $0x50] sm:$0xff]
        %v393 = vld [vmem:[%s237 + $0x58] sm:$0xff]
        %v394 = vld [vmem:[%s237 + $0x60] sm:$0xff]
        %v395 = vld [vmem:[%s237 + $0x68] sm:$0xff]
        %v396 = vld [vmem:[%s237 + $0x70] sm:$0xff]
        %v397 = vld [vmem:[%s237 + $0x78] sm:$0xff]
        %v398 = vld [vmem:[%s237 + $0x80] sm:$0xff]
        %v399 = vld [vmem:[%s237 + $0x88] sm:$0xff]
        %v400 = vld [vmem:[%s237 + $0x90] sm:$0xff]
        %v401 = vld [vmem:[%s237 + $0x98] sm:$0xff]
        %v402 = vld [vmem:[%s237 + $0xa0] sm:$0xff]
        %v403 = vld [vmem:[%s237 + $0xa8] sm:$0xff]
        %v404 = vld [vmem:[%s237 + $0xb0] sm:$0xff]
        %v405 = vld [vmem:[%s237 + $0xb8] sm:$0xff]
        %v406 = vld [vmem:[%s237 + $0xc0] sm:$0xff]
        %v407 = vld [vmem:[%s237 + $0xc8] sm:$0xff]
        %v408 = vld [vmem:[%s237 + $0xd0] sm:$0xff]
        %v409 = vld [vmem:[%s237 + $0xd8] sm:$0xff]
        %v410 = vld [vmem:[%s237 + $0xe0] sm:$0xff]
        %v411 = vld [vmem:[%s237 + $0xe8] sm:$0xff]
        %v412 = vld [vmem:[%s237 + $0xf0] sm:$0xff]
        %v413 = vld [vmem:[%s237 + $0xf8] sm:$0xff]
        %v414 = vpack.c.bf16 %v383, %v382
        %v415 = vpack.c.bf16 %v385, %v384
        %v416 = vpack.c.bf16 %v387, %v386
        %v417 = vpack.c.bf16 %v389, %v388
        %v418 = vpack.c.bf16 %v391, %v390
        %v419 = vpack.c.bf16 %v393, %v392
        %v420 = vpack.c.bf16 %v395, %v394
        %v421 = vpack.c.bf16 %v397, %v396
        %v422 = vpack.c.bf16 %v399, %v398
        %v423 = vpack.c.bf16 %v401, %v400
        %v424 = vpack.c.bf16 %v403, %v402
        %v425 = vpack.c.bf16 %v405, %v404
        %v426 = vpack.c.bf16 %v407, %v406
        %v427 = vpack.c.bf16 %v409, %v408
        %v428 = vpack.c.bf16 %v411, %v410
        %v429 = vpack.c.bf16 %v413, %v412
        %v446 = vunpack.c.l.b16 %v414
        %v447 = vunpack.c.h.b16 %v414
        %v448 = vunpack.c.l.b16 %v415
        %v449 = vunpack.c.h.b16 %v415
        %v450 = vunpack.c.l.b16 %v416
        %v451 = vunpack.c.h.b16 %v416
        %v452 = vunpack.c.l.b16 %v417
        %v453 = vunpack.c.h.b16 %v417
        %v454 = vunpack.c.l.b16 %v418
        %v455 = vunpack.c.h.b16 %v418
        %v456 = vunpack.c.l.b16 %v419
        %v457 = vunpack.c.h.b16 %v419
        %v458 = vunpack.c.l.b16 %v420
        %v459 = vunpack.c.h.b16 %v420
        %v460 = vunpack.c.l.b16 %v421
        %v461 = vunpack.c.h.b16 %v421
        %v462 = vunpack.c.l.b16 %v422
        %v463 = vunpack.c.h.b16 %v422
        %v464 = vunpack.c.l.b16 %v423
        %v465 = vunpack.c.h.b16 %v423
        %v466 = vunpack.c.l.b16 %v424
        %v467 = vunpack.c.h.b16 %v424
        %v468 = vunpack.c.l.b16 %v425
        %v469 = vunpack.c.h.b16 %v425
        %v470 = vunpack.c.l.b16 %v426
        %v471 = vunpack.c.h.b16 %v426
        %v472 = vunpack.c.l.b16 %v427
        %v473 = vunpack.c.h.b16 %v427
        %v474 = vunpack.c.l.b16 %v428
        %v475 = vunpack.c.h.b16 %v428
        %v476 = vunpack.c.l.b16 %v429
        %v477 = vunpack.c.h.b16 %v429
        %v478 = vpack.c.b16 %v446, %v446
        %v479 = vpack.c.b16 %v447, %v447
        %v480 = vpack.c.b16 %v448, %v448
        %v481 = vpack.c.b16 %v449, %v449
        %v482 = vpack.c.b16 %v450, %v450
        %v483 = vpack.c.b16 %v451, %v451
        %v484 = vpack.c.b16 %v452, %v452
        %v485 = vpack.c.b16 %v453, %v453
        %v486 = vpack.c.b16 %v454, %v454
        %v487 = vpack.c.b16 %v455, %v455
        %v488 = vpack.c.b16 %v456, %v456
        %v489 = vpack.c.b16 %v457, %v457
        %v490 = vpack.c.b16 %v458, %v458
        %v491 = vpack.c.b16 %v459, %v459
        %v492 = vpack.c.b16 %v460, %v460
        %v493 = vpack.c.b16 %v461, %v461
        %v494 = vpack.c.b16 %v462, %v462
        %v495 = vpack.c.b16 %v463, %v463
        %v496 = vpack.c.b16 %v464, %v464
        %v497 = vpack.c.b16 %v465, %v465
        %v498 = vpack.c.b16 %v466, %v466
        %v499 = vpack.c.b16 %v467, %v467
        %v500 = vpack.c.b16 %v468, %v468
        %v501 = vpack.c.b16 %v469, %v469
        %v502 = vpack.c.b16 %v470, %v470
        %v503 = vpack.c.b16 %v471, %v471
        %v504 = vpack.c.b16 %v472, %v472
        %v505 = vpack.c.b16 %v473, %v473
        %v506 = vpack.c.b16 %v474, %v474
        %v507 = vpack.c.b16 %v475, %v475
        %v508 = vpack.c.b16 %v476, %v476
        %v509 = vpack.c.b16 %v477, %v477
        %vm510 = vsmask.f32 4368
        %vm511 = vmor %vm282, %vm510
        %v513 = vshrl.u32 %v478, 16
        %v515 = vrot.slane %v513, 7
        %v516 = vshll.u32 %v478, 16
        %v518 = vor.u32 %v515, %v516
        %v519 = vrot.slane %v515, 4
        %v521 = vshrl.u32 %v479, 16
        %v523 = vrot.slane %v521, 7
        %v524 = vshll.u32 %v479, 16
        %v526 = vor.u32 %v523, %v524
        %v527 = vsel %vm511, %v519, %v526
        %v528 = vrot.slane %v523, 4
        %v530 = vshrl.u32 %v480, 16
        %v532 = vrot.slane %v530, 7
        %v533 = vshll.u32 %v480, 16
        %v535 = vor.u32 %v532, %v533
        %v536 = vrot.slane %v532, 4
        %v538 = vshrl.u32 %v481, 16
        %v540 = vrot.slane %v538, 7
        %v541 = vshll.u32 %v481, 16
        %v543 = vor.u32 %v540, %v541
        %v544 = vsel %vm511, %v536, %v543
        %v545 = vrot.slane %v540, 4
        %v547 = vshrl.u32 %v482, 16
        %v549 = vrot.slane %v547, 7
        %v550 = vshll.u32 %v482, 16
        %v552 = vor.u32 %v549, %v550
        %v553 = vrot.slane %v549, 4
        %v555 = vshrl.u32 %v483, 16
        %v557 = vrot.slane %v555, 7
        %v558 = vshll.u32 %v483, 16
        %v560 = vor.u32 %v557, %v558
        %v561 = vsel %vm511, %v553, %v560
        %v562 = vrot.slane %v557, 4
        %v564 = vshrl.u32 %v484, 16
        %v566 = vrot.slane %v564, 7
        %v567 = vshll.u32 %v484, 16
        %v569 = vor.u32 %v566, %v567
        %v570 = vrot.slane %v566, 4
        %v572 = vshrl.u32 %v485, 16
        %v574 = vrot.slane %v572, 7
        %v575 = vshll.u32 %v485, 16
        %v577 = vor.u32 %v574, %v575
        %v578 = vsel %vm511, %v570, %v577
        %v579 = vrot.slane %v574, 4
        %v581 = vshrl.u32 %v486, 16
        %v583 = vrot.slane %v581, 7
        %v584 = vshll.u32 %v486, 16
        %v586 = vor.u32 %v583, %v584
        %v587 = vrot.slane %v583, 4
        %v589 = vshrl.u32 %v487, 16
        %v591 = vrot.slane %v589, 7
        %v592 = vshll.u32 %v487, 16
        %v594 = vor.u32 %v591, %v592
        %v595 = vsel %vm511, %v587, %v594
        %v596 = vrot.slane %v591, 4
        %v598 = vshrl.u32 %v488, 16
        %v600 = vrot.slane %v598, 7
        %v601 = vshll.u32 %v488, 16
        %v603 = vor.u32 %v600, %v601
        %v604 = vrot.slane %v600, 4
        %v606 = vshrl.u32 %v489, 16
        %v608 = vrot.slane %v606, 7
        %v609 = vshll.u32 %v489, 16
        %v611 = vor.u32 %v608, %v609
        %v612 = vsel %vm511, %v604, %v611
        %v613 = vrot.slane %v608, 4
        %v615 = vshrl.u32 %v490, 16
        %v617 = vrot.slane %v615, 7
        %v618 = vshll.u32 %v490, 16
        %v620 = vor.u32 %v617, %v618
        %v621 = vrot.slane %v617, 4
        %v623 = vshrl.u32 %v491, 16
        %v625 = vrot.slane %v623, 7
        %v626 = vshll.u32 %v491, 16
        %v628 = vor.u32 %v625, %v626
        %v629 = vsel %vm511, %v621, %v628
        %v630 = vrot.slane %v625, 4
        %v632 = vshrl.u32 %v492, 16
        %v634 = vrot.slane %v632, 7
        %v635 = vshll.u32 %v492, 16
        %v637 = vor.u32 %v634, %v635
        %v638 = vrot.slane %v634, 4
        %v640 = vshrl.u32 %v493, 16
        %v642 = vrot.slane %v640, 7
        %v643 = vshll.u32 %v493, 16
        %v645 = vor.u32 %v642, %v643
        %v646 = vsel %vm511, %v638, %v645
        %v647 = vrot.slane %v642, 4
        %v649 = vshrl.u32 %v494, 16
        %v651 = vrot.slane %v649, 7
        %v652 = vshll.u32 %v494, 16
        %v654 = vor.u32 %v651, %v652
        %v655 = vrot.slane %v651, 4
        %v657 = vshrl.u32 %v495, 16
        %v659 = vrot.slane %v657, 7
        %v660 = vshll.u32 %v495, 16
        %v662 = vor.u32 %v659, %v660
        %v663 = vsel %vm511, %v655, %v662
        %v664 = vrot.slane %v659, 4
        %v666 = vshrl.u32 %v496, 16
        %v668 = vrot.slane %v666, 7
        %v669 = vshll.u32 %v496, 16
        %v671 = vor.u32 %v668, %v669
        %v672 = vrot.slane %v668, 4
        %v674 = vshrl.u32 %v497, 16
        %v676 = vrot.slane %v674, 7
        %v677 = vshll.u32 %v497, 16
        %v679 = vor.u32 %v676, %v677
        %v680 = vsel %vm511, %v672, %v679
        %v681 = vrot.slane %v676, 4
        %v683 = vshrl.u32 %v498, 16
        %v685 = vrot.slane %v683, 7
        %v686 = vshll.u32 %v498, 16
        %v688 = vor.u32 %v685, %v686
        %v689 = vrot.slane %v685, 4
        %v691 = vshrl.u32 %v499, 16
        %v693 = vrot.slane %v691, 7
        %v694 = vshll.u32 %v499, 16
        %v696 = vor.u32 %v693, %v694
        %v697 = vsel %vm511, %v689, %v696
        %v698 = vrot.slane %v693, 4
        %v700 = vshrl.u32 %v500, 16
        %v702 = vrot.slane %v700, 7
        %v703 = vshll.u32 %v500, 16
        %v705 = vor.u32 %v702, %v703
        %v706 = vrot.slane %v702, 4
        %v708 = vshrl.u32 %v501, 16
        %v710 = vrot.slane %v708, 7
        %v711 = vshll.u32 %v501, 16
        %v713 = vor.u32 %v710, %v711
        %v714 = vsel %vm511, %v706, %v713
        %v715 = vrot.slane %v710, 4
        %v717 = vshrl.u32 %v502, 16
        %v719 = vrot.slane %v717, 7
        %v720 = vshll.u32 %v502, 16
        %v722 = vor.u32 %v719, %v720
        %v723 = vrot.slane %v719, 4
        %v725 = vshrl.u32 %v503, 16
        %v727 = vrot.slane %v725, 7
        %v728 = vshll.u32 %v503, 16
        %v730 = vor.u32 %v727, %v728
        %v731 = vsel %vm511, %v723, %v730
        %v732 = vrot.slane %v727, 4
        %v734 = vshrl.u32 %v504, 16
        %v736 = vrot.slane %v734, 7
        %v737 = vshll.u32 %v504, 16
        %v739 = vor.u32 %v736, %v737
        %v740 = vrot.slane %v736, 4
        %v742 = vshrl.u32 %v505, 16
        %v744 = vrot.slane %v742, 7
        %v745 = vshll.u32 %v505, 16
        %v747 = vor.u32 %v744, %v745
        %v748 = vsel %vm511, %v740, %v747
        %v749 = vrot.slane %v744, 4
        %v751 = vshrl.u32 %v506, 16
        %v753 = vrot.slane %v751, 7
        %v754 = vshll.u32 %v506, 16
        %v756 = vor.u32 %v753, %v754
        %v757 = vrot.slane %v753, 4
        %v759 = vshrl.u32 %v507, 16
        %v761 = vrot.slane %v759, 7
        %v762 = vshll.u32 %v507, 16
        %v764 = vor.u32 %v761, %v762
        %v765 = vsel %vm511, %v757, %v764
        %v766 = vrot.slane %v761, 4
        %v768 = vshrl.u32 %v508, 16
        %v770 = vrot.slane %v768, 7
        %v771 = vshll.u32 %v508, 16
        %v773 = vor.u32 %v770, %v771
        %v774 = vrot.slane %v770, 4
        %v776 = vshrl.u32 %v509, 16
        %v778 = vrot.slane %v776, 7
        %v779 = vshll.u32 %v509, 16
        %v781 = vor.u32 %v778, %v779
        %v782 = vsel %vm511, %v774, %v781
        %v783 = vrot.slane %v778, 4
        %vm832 = vcmask 1043456
        %vm833 = vmand %vm832, %vm332
        %v834 = vld [vmem:[%s280] sm:$0xf]
        %v835 = vsel %vm833, %v518, %v834
        %836 = vst [vmem:[%s280] sm:$0xf] %v835
        %837 = vst [vmem:[%s280 + $0x4] sm:$0xf] %v527
        %v838 = vld [vmem:[%s280 + $0x8] sm:$0x1]
        %v839 = vsel %vm283, %v528, %v838
        %840 = vst [vmem:[%s280 + $0x8] sm:$0x1] %v839
        %v841 = vld [vmem:[%s280 + $0xc] sm:$0xf]
        %v842 = vsel %vm833, %v535, %v841
        %843 = vst [vmem:[%s280 + $0xc] sm:$0xf] %v842
        %844 = vst [vmem:[%s280 + $0x10] sm:$0xf] %v544
        %v845 = vld [vmem:[%s280 + $0x14] sm:$0x1]
        %v846 = vsel %vm283, %v545, %v845
        %847 = vst [vmem:[%s280 + $0x14] sm:$0x1] %v846
        %v848 = vld [vmem:[%s280 + $0x18] sm:$0xf]
        %v849 = vsel %vm833, %v552, %v848
        %850 = vst [vmem:[%s280 + $0x18] sm:$0xf] %v849
        %851 = vst [vmem:[%s280 + $0x1c] sm:$0xf] %v561
        %v852 = vld [vmem:[%s280 + $0x20] sm:$0x1]
        %v853 = vsel %vm283, %v562, %v852
        %854 = vst [vmem:[%s280 + $0x20] sm:$0x1] %v853
        %v855 = vld [vmem:[%s280 + $0x24] sm:$0xf]
        %v856 = vsel %vm833, %v569, %v855
        %857 = vst [vmem:[%s280 + $0x24] sm:$0xf] %v856
        %858 = vst [vmem:[%s280 + $0x28] sm:$0xf] %v578
        %v859 = vld [vmem:[%s280 + $0x2c] sm:$0x1]
        %v860 = vsel %vm283, %v579, %v859
        %861 = vst [vmem:[%s280 + $0x2c] sm:$0x1] %v860
        %v862 = vld [vmem:[%s280 + $0x30] sm:$0xf]
        %v863 = vsel %vm833, %v586, %v862
        %864 = vst [vmem:[%s280 + $0x30] sm:$0xf] %v863
        %865 = vst [vmem:[%s280 + $0x34] sm:$0xf] %v595
        %v866 = vld [vmem:[%s280 + $0x38] sm:$0x1]
        %v867 = vsel %vm283, %v596, %v866
        %868 = vst [vmem:[%s280 + $0x38] sm:$0x1] %v867
        %v869 = vld [vmem:[%s280 + $0x3c] sm:$0xf]
        %v870 = vsel %vm833, %v603, %v869
        %871 = vst [vmem:[%s280 + $0x3c] sm:$0xf] %v870
        %872 = vst [vmem:[%s280 + $0x40] sm:$0xf] %v612
        %v873 = vld [vmem:[%s280 + $0x44] sm:$0x1]
        %v874 = vsel %vm283, %v613, %v873
        %875 = vst [vmem:[%s280 + $0x44] sm:$0x1] %v874
        %v876 = vld [vmem:[%s280 + $0x48] sm:$0xf]
        %v877 = vsel %vm833, %v620, %v876
        %878 = vst [vmem:[%s280 + $0x48] sm:$0xf] %v877
        %879 = vst [vmem:[%s280 + $0x4c] sm:$0xf] %v629
        %v880 = vld [vmem:[%s280 + $0x50] sm:$0x1]
        %v881 = vsel %vm283, %v630, %v880
        %882 = vst [vmem:[%s280 + $0x50] sm:$0x1] %v881
        %v883 = vld [vmem:[%s280 + $0x54] sm:$0xf]
        %v884 = vsel %vm833, %v637, %v883
        %885 = vst [vmem:[%s280 + $0x54] sm:$0xf] %v884
        %886 = vst [vmem:[%s280 + $0x58] sm:$0xf] %v646
        %v887 = vld [vmem:[%s280 + $0x5c] sm:$0x1]
        %v888 = vsel %vm283, %v647, %v887
        %889 = vst [vmem:[%s280 + $0x5c] sm:$0x1] %v888
        %v890 = vld [vmem:[%s280 + $0x60] sm:$0xf]
        %v891 = vsel %vm833, %v654, %v890
        %892 = vst [vmem:[%s280 + $0x60] sm:$0xf] %v891
        %893 = vst [vmem:[%s280 + $0x64] sm:$0xf] %v663
        %v894 = vld [vmem:[%s280 + $0x68] sm:$0x1]
        %v895 = vsel %vm283, %v664, %v894
        %896 = vst [vmem:[%s280 + $0x68] sm:$0x1] %v895
        %v897 = vld [vmem:[%s280 + $0x6c] sm:$0xf]
        %v898 = vsel %vm833, %v671, %v897
        %899 = vst [vmem:[%s280 + $0x6c] sm:$0xf] %v898
        %900 = vst [vmem:[%s280 + $0x70] sm:$0xf] %v680
        %v901 = vld [vmem:[%s280 + $0x74] sm:$0x1]
        %v902 = vsel %vm283, %v681, %v901
        %903 = vst [vmem:[%s280 + $0x74] sm:$0x1] %v902
        %v904 = vld [vmem:[%s280 + $0x78] sm:$0xf]
        %v905 = vsel %vm833, %v688, %v904
        %906 = vst [vmem:[%s280 + $0x78] sm:$0xf] %v905
        %907 = vst [vmem:[%s280 + $0x7c] sm:$0xf] %v697
        %v908 = vld [vmem:[%s280 + $0x80] sm:$0x1]
        %v909 = vsel %vm283, %v698, %v908
        %910 = vst [vmem:[%s280 + $0x80] sm:$0x1] %v909
        %v911 = vld [vmem:[%s280 + $0x84] sm:$0xf]
        %v912 = vsel %vm833, %v705, %v911
        %913 = vst [vmem:[%s280 + $0x84] sm:$0xf] %v912
        %914 = vst [vmem:[%s280 + $0x88] sm:$0xf] %v714
        %v915 = vld [vmem:[%s280 + $0x8c] sm:$0x1]
        %v916 = vsel %vm283, %v715, %v915
        %917 = vst [vmem:[%s280 + $0x8c] sm:$0x1] %v916
        %v918 = vld [vmem:[%s280 + $0x90] sm:$0xf]
        %v919 = vsel %vm833, %v722, %v918
        %920 = vst [vmem:[%s280 + $0x90] sm:$0xf] %v919
        %921 = vst [vmem:[%s280 + $0x94] sm:$0xf] %v731
        %v922 = vld [vmem:[%s280 + $0x98] sm:$0x1]
        %v923 = vsel %vm283, %v732, %v922
        %924 = vst [vmem:[%s280 + $0x98] sm:$0x1] %v923
        %v925 = vld [vmem:[%s280 + $0x9c] sm:$0xf]
        %v926 = vsel %vm833, %v739, %v925
        %927 = vst [vmem:[%s280 + $0x9c] sm:$0xf] %v926
        %928 = vst [vmem:[%s280 + $0xa0] sm:$0xf] %v748
        %v929 = vld [vmem:[%s280 + $0xa4] sm:$0x1]
        %v930 = vsel %vm283, %v749, %v929
        %931 = vst [vmem:[%s280 + $0xa4] sm:$0x1] %v930
        %v932 = vld [vmem:[%s280 + $0xa8] sm:$0xf]
        %v933 = vsel %vm833, %v756, %v932
        %934 = vst [vmem:[%s280 + $0xa8] sm:$0xf] %v933
        %935 = vst [vmem:[%s280 + $0xac] sm:$0xf] %v765
        %v936 = vld [vmem:[%s280 + $0xb0] sm:$0x1]
        %v937 = vsel %vm283, %v766, %v936
        %938 = vst [vmem:[%s280 + $0xb0] sm:$0x1] %v937
        %v939 = vld [vmem:[%s280 + $0xb4] sm:$0xf]
        %v940 = vsel %vm833, %v773, %v939
        %941 = vst [vmem:[%s280 + $0xb4] sm:$0xf] %v940
        %942 = vst [vmem:[%s280 + $0xb8] sm:$0xf] %v782
        %v943 = vld [vmem:[%s280 + $0xbc] sm:$0x1]
        %v944 = vsel %vm283, %v783, %v943
        %945 = vst [vmem:[%s280 + $0xbc] sm:$0x1] %v944
        %v946 = vld [vmem:[#allocation2] sm:$0xf]
        %v947 = vld [vmem:[#allocation2 + $0x4] sm:$0xf]
        %v948 = vld [vmem:[#allocation2 + $0xc] sm:$0xf]
        %v949 = vld [vmem:[#allocation2 + $0x10] sm:$0xf]
        %v950 = vld [vmem:[#allocation2 + $0x18] sm:$0xf]
        %v951 = vld [vmem:[#allocation2 + $0x1c] sm:$0xf]
        %v952 = vld [vmem:[#allocation2 + $0x24] sm:$0xf]
        %v953 = vld [vmem:[#allocation2 + $0x28] sm:$0xf]
        %v954 = vld [vmem:[#allocation2 + $0x30] sm:$0xf]
        %v955 = vld [vmem:[#allocation2 + $0x34] sm:$0xf]
        %v956 = vld [vmem:[#allocation2 + $0x3c] sm:$0xf]
        %v957 = vld [vmem:[#allocation2 + $0x40] sm:$0xf]
        %v958 = vld [vmem:[#allocation2 + $0x48] sm:$0xf]
        %v959 = vld [vmem:[#allocation2 + $0x4c] sm:$0xf]
        %v960 = vld [vmem:[#allocation2 + $0x54] sm:$0xf]
        %v961 = vld [vmem:[#allocation2 + $0x58] sm:$0xf]
        %v962 = vld [vmem:[#allocation2 + $0x60] sm:$0xf]
        %v963 = vld [vmem:[#allocation2 + $0x64] sm:$0xf]
        %v964 = vld [vmem:[#allocation2 + $0x6c] sm:$0xf]
        %v965 = vld [vmem:[#allocation2 + $0x70] sm:$0xf]
        %v966 = vld [vmem:[#allocation2 + $0x78] sm:$0xf]
        %v967 = vld [vmem:[#allocation2 + $0x7c] sm:$0xf]
        %v968 = vld [vmem:[#allocation2 + $0x84] sm:$0xf]
        %v969 = vld [vmem:[#allocation2 + $0x88] sm:$0xf]
        %v970 = vld [vmem:[#allocation2 + $0x90] sm:$0xf]
        %v971 = vld [vmem:[#allocation2 + $0x94] sm:$0xf]
        %v972 = vld [vmem:[#allocation2 + $0x9c] sm:$0xf]
        %v973 = vld [vmem:[#allocation2 + $0xa0] sm:$0xf]
        %v974 = vld [vmem:[#allocation2 + $0xa8] sm:$0xf]
        %v975 = vld [vmem:[#allocation2 + $0xac] sm:$0xf]
        %v976 = vld [vmem:[#allocation2 + $0xb4] sm:$0xf]
        %v977 = vld [vmem:[#allocation2 + $0xb8] sm:$0xf]
        %v978 = vld [vmem:[#allocation6] sm:$0xf]
        %v979 = vld [vmem:[#allocation6 + $0x4] sm:$0xf]
        %v980 = vld [vmem:[#allocation6 + $0x8] sm:$0xf]
        %v981 = vld [vmem:[#allocation6 + $0xc] sm:$0xf]
        %v982 = vld [vmem:[#allocation6 + $0x10] sm:$0xf]
        %v983 = vld [vmem:[#allocation6 + $0x14] sm:$0xf]
        %v984 = vld [vmem:[#allocation6 + $0x18] sm:$0xf]
        %v985 = vld [vmem:[#allocation6 + $0x1c] sm:$0xf]
        %v986 = vld [vmem:[#allocation6 + $0x20] sm:$0xf]
        %v987 = vld [vmem:[#allocation6 + $0x24] sm:$0xf]
        %v988 = vld [vmem:[#allocation6 + $0x28] sm:$0xf]
        %v989 = vld [vmem:[#allocation6 + $0x2c] sm:$0xf]
        %v990 = vld [vmem:[#allocation6 + $0x30] sm:$0xf]
        %v991 = vld [vmem:[#allocation6 + $0x34] sm:$0xf]
        %v992 = vld [vmem:[#allocation6 + $0x38] sm:$0xf]
        %v993 = vld [vmem:[#allocation6 + $0x3c] sm:$0xf]
        %v994 = vld [vmem:[#allocation2 + $0x8] sm:$0x1]
        %v995 = vld [vmem:[#allocation2 + $0x14] sm:$0x1]
        %v996 = vld [vmem:[#allocation2 + $0x20] sm:$0x1]
        %v997 = vld [vmem:[#allocation2 + $0x2c] sm:$0x1]
        %v998 = vld [vmem:[#allocation2 + $0x38] sm:$0x1]
        %v999 = vld [vmem:[#allocation2 + $0x44] sm:$0x1]
        %v1000 = vld [vmem:[#allocation2 + $0x50] sm:$0x1]
        %v1001 = vld [vmem:[#allocation2 + $0x5c] sm:$0x1]
        %v1002 = vld [vmem:[#allocation2 + $0x68] sm:$0x1]
        %v1003 = vld [vmem:[#allocation2 + $0x74] sm:$0x1]
        %v1004 = vld [vmem:[#allocation2 + $0x80] sm:$0x1]
        %v1005 = vld [vmem:[#allocation2 + $0x8c] sm:$0x1]
        %v1006 = vld [vmem:[#allocation2 + $0x98] sm:$0x1]
        %v1007 = vld [vmem:[#allocation2 + $0xa4] sm:$0x1]
        %v1008 = vld [vmem:[#allocation2 + $0xb0] sm:$0x1]
        %v1009 = vld [vmem:[#allocation2 + $0xbc] sm:$0x1]
        %vm1010 = vsmask.f32 3328
        %vm1011 = vsmask.f32 7440
        %vm1012 = vmor %vm1010, %vm1011
        %v1014 = vshrl.u32 %v946, 16
        %v1016 = vrot.slane %v1014, 4
        %v1017 = vshll.u32 %v946, 16
        %v1019 = vrot.slane %v1017, 5
        %v1020 = vor.u32 %v1016, %v1019
        %v1021 = vrot.slane %v1020, 4
        %v1023 = vshll.u32 %v947, 16
        %v1025 = vrot.slane %v1023, 5
        %v1026 = vsel %vm1012, %v1021, %v1025
        %v1027 = vshrl.u32 %v947, 16
        %v1029 = vrot.slane %v1027, 4
        %v1030 = vor.u32 %v1029, %v1025
        %v1031 = vrot.slane %v1030, 4
        %v1033 = vshll.u32 %v994, 16
        %v1035 = vrot.slane %v1033, 5
        %v1036 = vsel %vm1012, %v1031, %v1035
        %v1038 = vshrl.u32 %v948, 16
        %v1040 = vrot.slane %v1038, 4
        %v1041 = vshll.u32 %v948, 16
        %v1043 = vrot.slane %v1041, 5
        %v1044 = vor.u32 %v1040, %v1043
        %v1045 = vrot.slane %v1044, 4
        %v1047 = vshll.u32 %v949, 16
        %v1049 = vrot.slane %v1047, 5
        %v1050 = vsel %vm1012, %v1045, %v1049
        %v1051 = vshrl.u32 %v949, 16
        %v1053 = vrot.slane %v1051, 4
        %v1054 = vor.u32 %v1053, %v1049
        %v1055 = vrot.slane %v1054, 4
        %v1057 = vshll.u32 %v995, 16
        %v1059 = vrot.slane %v1057, 5
        %v1060 = vsel %vm1012, %v1055, %v1059
        %v1062 = vshrl.u32 %v950, 16
        %v1064 = vrot.slane %v1062, 4
        %v1065 = vshll.u32 %v950, 16
        %v1067 = vrot.slane %v1065, 5
        %v1068 = vor.u32 %v1064, %v1067
        %v1069 = vrot.slane %v1068, 4
        %v1071 = vshll.u32 %v951, 16
        %v1073 = vrot.slane %v1071, 5
        %v1074 = vsel %vm1012, %v1069, %v1073
        %v1075 = vshrl.u32 %v951, 16
        %v1077 = vrot.slane %v1075, 4
        %v1078 = vor.u32 %v1077, %v1073
        %v1079 = vrot.slane %v1078, 4
        %v1081 = vshll.u32 %v996, 16
        %v1083 = vrot.slane %v1081, 5
        %v1084 = vsel %vm1012, %v1079, %v1083
        %v1086 = vshrl.u32 %v952, 16
        %v1088 = vrot.slane %v1086, 4
        %v1089 = vshll.u32 %v952, 16
        %v1091 = vrot.slane %v1089, 5
        %v1092 = vor.u32 %v1088, %v1091
        %v1093 = vrot.slane %v1092, 4
        %v1095 = vshll.u32 %v953, 16
        %v1097 = vrot.slane %v1095, 5
        %v1098 = vsel %vm1012, %v1093, %v1097
        %v1099 = vshrl.u32 %v953, 16
        %v1101 = vrot.slane %v1099, 4
        %v1102 = vor.u32 %v1101, %v1097
        %v1103 = vrot.slane %v1102, 4
        %v1105 = vshll.u32 %v997, 16
        %v1107 = vrot.slane %v1105, 5
        %v1108 = vsel %vm1012, %v1103, %v1107
        %v1110 = vshrl.u32 %v954, 16
        %v1112 = vrot.slane %v1110, 4
        %v1113 = vshll.u32 %v954, 16
        %v1115 = vrot.slane %v1113, 5
        %v1116 = vor.u32 %v1112, %v1115
        %v1117 = vrot.slane %v1116, 4
        %v1119 = vshll.u32 %v955, 16
        %v1121 = vrot.slane %v1119, 5
        %v1122 = vsel %vm1012, %v1117, %v1121
        %v1123 = vshrl.u32 %v955, 16
        %v1125 = vrot.slane %v1123, 4
        %v1126 = vor.u32 %v1125, %v1121
        %v1127 = vrot.slane %v1126, 4
        %v1129 = vshll.u32 %v998, 16
        %v1131 = vrot.slane %v1129, 5
        %v1132 = vsel %vm1012, %v1127, %v1131
        %v1134 = vshrl.u32 %v956, 16
        %v1136 = vrot.slane %v1134, 4
        %v1137 = vshll.u32 %v956, 16
        %v1139 = vrot.slane %v1137, 5
        %v1140 = vor.u32 %v1136, %v1139
        %v1141 = vrot.slane %v1140, 4
        %v1143 = vshll.u32 %v957, 16
        %v1145 = vrot.slane %v1143, 5
        %v1146 = vsel %vm1012, %v1141, %v1145
        %v1147 = vshrl.u32 %v957, 16
        %v1149 = vrot.slane %v1147, 4
        %v1150 = vor.u32 %v1149, %v1145
        %v1151 = vrot.slane %v1150, 4
        %v1153 = vshll.u32 %v999, 16
        %v1155 = vrot.slane %v1153, 5
        %v1156 = vsel %vm1012, %v1151, %v1155
        %v1158 = vshrl.u32 %v958, 16
        %v1160 = vrot.slane %v1158, 4
        %v1161 = vshll.u32 %v958, 16
        %v1163 = vrot.slane %v1161, 5
        %v1164 = vor.u32 %v1160, %v1163
        %v1165 = vrot.slane %v1164, 4
        %v1167 = vshll.u32 %v959, 16
        %v1169 = vrot.slane %v1167, 5
        %v1170 = vsel %vm1012, %v1165, %v1169
        %v1171 = vshrl.u32 %v959, 16
        %v1173 = vrot.slane %v1171, 4
        %v1174 = vor.u32 %v1173, %v1169
        %v1175 = vrot.slane %v1174, 4
        %v1177 = vshll.u32 %v1000, 16
        %v1179 = vrot.slane %v1177, 5
        %v1180 = vsel %vm1012, %v1175, %v1179
        %v1182 = vshrl.u32 %v960, 16
        %v1184 = vrot.slane %v1182, 4
        %v1185 = vshll.u32 %v960, 16
        %v1187 = vrot.slane %v1185, 5
        %v1188 = vor.u32 %v1184, %v1187
        %v1189 = vrot.slane %v1188, 4
        %v1191 = vshll.u32 %v961, 16
        %v1193 = vrot.slane %v1191, 5
        %v1194 = vsel %vm1012, %v1189, %v1193
        %v1195 = vshrl.u32 %v961, 16
        %v1197 = vrot.slane %v1195, 4
        %v1198 = vor.u32 %v1197, %v1193
        %v1199 = vrot.slane %v1198, 4
        %v1201 = vshll.u32 %v1001, 16
        %v1203 = vrot.slane %v1201, 5
        %v1204 = vsel %vm1012, %v1199, %v1203
        %v1206 = vshrl.u32 %v962, 16
        %v1208 = vrot.slane %v1206, 4
        %v1209 = vshll.u32 %v962, 16
        %v1211 = vrot.slane %v1209, 5
        %v1212 = vor.u32 %v1208, %v1211
        %v1213 = vrot.slane %v1212, 4
        %v1215 = vshll.u32 %v963, 16
        %v1217 = vrot.slane %v1215, 5
        %v1218 = vsel %vm1012, %v1213, %v1217
        %v1219 = vshrl.u32 %v963, 16
        %v1221 = vrot.slane %v1219, 4
        %v1222 = vor.u32 %v1221, %v1217
        %v1223 = vrot.slane %v1222, 4
        %v1225 = vshll.u32 %v1002, 16
        %v1227 = vrot.slane %v1225, 5
        %v1228 = vsel %vm1012, %v1223, %v1227
        %v1230 = vshrl.u32 %v964, 16
        %v1232 = vrot.slane %v1230, 4
        %v1233 = vshll.u32 %v964, 16
        %v1235 = vrot.slane %v1233, 5
        %v1236 = vor.u32 %v1232, %v1235
        %v1237 = vrot.slane %v1236, 4
        %v1239 = vshll.u32 %v965, 16
        %v1241 = vrot.slane %v1239, 5
        %v1242 = vsel %vm1012, %v1237, %v1241
        %v1243 = vshrl.u32 %v965, 16
        %v1245 = vrot.slane %v1243, 4
        %v1246 = vor.u32 %v1245, %v1241
        %v1247 = vrot.slane %v1246, 4
        %v1249 = vshll.u32 %v1003, 16
        %v1251 = vrot.slane %v1249, 5
        %v1252 = vsel %vm1012, %v1247, %v1251
        %v1254 = vshrl.u32 %v966, 16
        %v1256 = vrot.slane %v1254, 4
        %v1257 = vshll.u32 %v966, 16
        %v1259 = vrot.slane %v1257, 5
        %v1260 = vor.u32 %v1256, %v1259
        %v1261 = vrot.slane %v1260, 4
        %v1263 = vshll.u32 %v967, 16
        %v1265 = vrot.slane %v1263, 5
        %v1266 = vsel %vm1012, %v1261, %v1265
        %v1267 = vshrl.u32 %v967, 16
        %v1269 = vrot.slane %v1267, 4
        %v1270 = vor.u32 %v1269, %v1265
        %v1271 = vrot.slane %v1270, 4
        %v1273 = vshll.u32 %v1004, 16
        %v1275 = vrot.slane %v1273, 5
        %v1276 = vsel %vm1012, %v1271, %v1275
        %v1278 = vshrl.u32 %v968, 16
        %v1280 = vrot.slane %v1278, 4
        %v1281 = vshll.u32 %v968, 16
        %v1283 = vrot.slane %v1281, 5
        %v1284 = vor.u32 %v1280, %v1283
        %v1285 = vrot.slane %v1284, 4
        %v1287 = vshll.u32 %v969, 16
        %v1289 = vrot.slane %v1287, 5
        %v1290 = vsel %vm1012, %v1285, %v1289
        %v1291 = vshrl.u32 %v969, 16
        %v1293 = vrot.slane %v1291, 4
        %v1294 = vor.u32 %v1293, %v1289
        %v1295 = vrot.slane %v1294, 4
        %v1297 = vshll.u32 %v1005, 16
        %v1299 = vrot.slane %v1297, 5
        %v1300 = vsel %vm1012, %v1295, %v1299
        %v1302 = vshrl.u32 %v970, 16
        %v1304 = vrot.slane %v1302, 4
        %v1305 = vshll.u32 %v970, 16
        %v1307 = vrot.slane %v1305, 5
        %v1308 = vor.u32 %v1304, %v1307
        %v1309 = vrot.slane %v1308, 4
        %v1311 = vshll.u32 %v971, 16
        %v1313 = vrot.slane %v1311, 5
        %v1314 = vsel %vm1012, %v1309, %v1313
        %v1315 = vshrl.u32 %v971, 16
        %v1317 = vrot.slane %v1315, 4
        %v1318 = vor.u32 %v1317, %v1313
        %v1319 = vrot.slane %v1318, 4
        %v1321 = vshll.u32 %v1006, 16
        %v1323 = vrot.slane %v1321, 5
        %v1324 = vsel %vm1012, %v1319, %v1323
        %v1326 = vshrl.u32 %v972, 16
        %v1328 = vrot.slane %v1326, 4
        %v1329 = vshll.u32 %v972, 16
        %v1331 = vrot.slane %v1329, 5
        %v1332 = vor.u32 %v1328, %v1331
        %v1333 = vrot.slane %v1332, 4
        %v1335 = vshll.u32 %v973, 16
        %v1337 = vrot.slane %v1335, 5
        %v1338 = vsel %vm1012, %v1333, %v1337
        %v1339 = vshrl.u32 %v973, 16
        %v1341 = vrot.slane %v1339, 4
        %v1342 = vor.u32 %v1341, %v1337
        %v1343 = vrot.slane %v1342, 4
        %v1345 = vshll.u32 %v1007, 16
        %v1347 = vrot.slane %v1345, 5
        %v1348 = vsel %vm1012, %v1343, %v1347
        %v1350 = vshrl.u32 %v974, 16
        %v1352 = vrot.slane %v1350, 4
        %v1353 = vshll.u32 %v974, 16
        %v1355 = vrot.slane %v1353, 5
        %v1356 = vor.u32 %v1352, %v1355
        %v1357 = vrot.slane %v1356, 4
        %v1359 = vshll.u32 %v975, 16
        %v1361 = vrot.slane %v1359, 5
        %v1362 = vsel %vm1012, %v1357, %v1361
        %v1363 = vshrl.u32 %v975, 16
        %v1365 = vrot.slane %v1363, 4
        %v1366 = vor.u32 %v1365, %v1361
        %v1367 = vrot.slane %v1366, 4
        %v1369 = vshll.u32 %v1008, 16
        %v1371 = vrot.slane %v1369, 5
        %v1372 = vsel %vm1012, %v1367, %v1371
        %v1374 = vshrl.u32 %v976, 16
        %v1376 = vrot.slane %v1374, 4
        %v1377 = vshll.u32 %v976, 16
        %v1379 = vrot.slane %v1377, 5
        %v1380 = vor.u32 %v1376, %v1379
        %v1381 = vrot.slane %v1380, 4
        %v1383 = vshll.u32 %v977, 16
        %v1385 = vrot.slane %v1383, 5
        %v1386 = vsel %vm1012, %v1381, %v1385
        %v1387 = vshrl.u32 %v977, 16
        %v1389 = vrot.slane %v1387, 4
        %v1390 = vor.u32 %v1389, %v1385
        %v1391 = vrot.slane %v1390, 4
        %v1393 = vshll.u32 %v1009, 16
        %v1395 = vrot.slane %v1393, 5
        %v1396 = vsel %vm1012, %v1391, %v1395
        %s1397 = scalar_lea.vmem [#allocation6], 64
        %v1398 = vld [vmem:[%s1397] sm:$0xf]
        %v1399 = vld [vmem:[%s1397 + $0x4] sm:$0xf]
        %v1400 = vld [vmem:[%s1397 + $0x8] sm:$0xf]
        %v1401 = vld [vmem:[%s1397 + $0xc] sm:$0xf]
        %v1402 = vld [vmem:[%s1397 + $0x10] sm:$0xf]
        %v1403 = vld [vmem:[%s1397 + $0x14] sm:$0xf]
        %v1404 = vld [vmem:[%s1397 + $0x18] sm:$0xf]
        %v1405 = vld [vmem:[%s1397 + $0x1c] sm:$0xf]
        %v1406 = vld [vmem:[%s1397 + $0x20] sm:$0xf]
        %v1407 = vld [vmem:[%s1397 + $0x24] sm:$0xf]
        %v1408 = vld [vmem:[%s1397 + $0x28] sm:$0xf]
        %v1409 = vld [vmem:[%s1397 + $0x2c] sm:$0xf]
        %v1410 = vld [vmem:[%s1397 + $0x30] sm:$0xf]
        %v1411 = vld [vmem:[%s1397 + $0x34] sm:$0xf]
        %v1412 = vld [vmem:[%s1397 + $0x38] sm:$0xf]
        %v1413 = vld [vmem:[%s1397 + $0x3c] sm:$0xf]
        %v1414 = vunpack.c.l.b16 %v1026
        %v1415 = vunpack.c.l.b16 %v1036
        %v1416 = vunpack.c.l.b16 %v1050
        %v1417 = vunpack.c.l.b16 %v1060
        %v1418 = vunpack.c.l.b16 %v1074
        %v1419 = vunpack.c.l.b16 %v1084
        %v1420 = vunpack.c.l.b16 %v1098
        %v1421 = vunpack.c.l.b16 %v1108
        %v1422 = vunpack.c.l.b16 %v1122
        %v1423 = vunpack.c.l.b16 %v1132
        %v1424 = vunpack.c.l.b16 %v1146
        %v1425 = vunpack.c.l.b16 %v1156
        %v1426 = vunpack.c.l.b16 %v1170
        %v1427 = vunpack.c.l.b16 %v1180
        %v1428 = vunpack.c.l.b16 %v1194
        %v1429 = vunpack.c.l.b16 %v1204
        %v1430 = vunpack.c.l.b16 %v1218
        %v1431 = vunpack.c.l.b16 %v1228
        %v1432 = vunpack.c.l.b16 %v1242
        %v1433 = vunpack.c.l.b16 %v1252
        %v1434 = vunpack.c.l.b16 %v1266
        %v1435 = vunpack.c.l.b16 %v1276
        %v1436 = vunpack.c.l.b16 %v1290
        %v1437 = vunpack.c.l.b16 %v1300
        %v1438 = vunpack.c.l.b16 %v1314
        %v1439 = vunpack.c.l.b16 %v1324
        %v1440 = vunpack.c.l.b16 %v1338
        %v1441 = vunpack.c.l.b16 %v1348
        %v1442 = vunpack.c.l.b16 %v1362
        %v1443 = vunpack.c.l.b16 %v1372
        %v1444 = vunpack.c.l.b16 %v1386
        %v1445 = vunpack.c.l.b16 %v1396
        %v1446 = vpack.c.b16 %v1415, %v1414
        %v1447 = vpack.c.b16 %v1417, %v1416
        %v1448 = vpack.c.b16 %v1419, %v1418
        %v1449 = vpack.c.b16 %v1421, %v1420
        %v1450 = vpack.c.b16 %v1423, %v1422
        %v1451 = vpack.c.b16 %v1425, %v1424
        %v1452 = vpack.c.b16 %v1427, %v1426
        %v1453 = vpack.c.b16 %v1429, %v1428
        %v1454 = vpack.c.b16 %v1431, %v1430
        %v1455 = vpack.c.b16 %v1433, %v1432
        %v1456 = vpack.c.b16 %v1435, %v1434
        %v1457 = vpack.c.b16 %v1437, %v1436
        %v1458 = vpack.c.b16 %v1439, %v1438
        %v1459 = vpack.c.b16 %v1441, %v1440
        %v1460 = vpack.c.b16 %v1443, %v1442
        %v1461 = vpack.c.b16 %v1445, %v1444
        %v1494 = vunpack.c.l.b16 %v1398
        %v1495 = vunpack.c.l.b16 %v1399
        %v1496 = vunpack.c.l.b16 %v1400
        %v1497 = vunpack.c.l.b16 %v1401
        %v1498 = vunpack.c.l.b16 %v1402
        %v1499 = vunpack.c.l.b16 %v1403
        %v1500 = vunpack.c.l.b16 %v1404
        %v1501 = vunpack.c.l.b16 %v1405
        %v1502 = vunpack.c.l.b16 %v1406
        %v1503 = vunpack.c.l.b16 %v1407
        %v1504 = vunpack.c.l.b16 %v1408
        %v1505 = vunpack.c.l.b16 %v1409
        %v1506 = vunpack.c.l.b16 %v1410
        %v1507 = vunpack.c.l.b16 %v1411
        %v1508 = vunpack.c.l.b16 %v1412
        %v1509 = vunpack.c.l.b16 %v1413
        %v1510 = vpack.c.b16 %v1495, %v1494
        %v1511 = vpack.c.b16 %v1497, %v1496
        %v1512 = vpack.c.b16 %v1499, %v1498
        %v1513 = vpack.c.b16 %v1501, %v1500
        %v1514 = vpack.c.b16 %v1503, %v1502
        %v1515 = vpack.c.b16 %v1505, %v1504
        %v1516 = vpack.c.b16 %v1507, %v1506
        %v1517 = vpack.c.b16 %v1509, %v1508
        %1526 = vmatprep.subr.bf16.mxu0 0
        %1527 = vmatpush1.bf16.msra.mxu0 %v1517
        %1528 = vmatprep.subr.bf16.mxu0 0
        %1529 = vmatpush1.bf16.msra.mxu0 %v1516
        %1530 = vmatprep.subr.bf16.mxu0 0
        %1531 = vmatpush1.bf16.msra.mxu0 %v1515
        %1532 = vmatprep.subr.bf16.mxu0 0
        %1533 = vmatpush1.bf16.msra.mxu0 %v1514
        %1534 = vmatprep.subr.bf16.mxu0 0
        %1535 = vmatpush1.bf16.msra.mxu0 %v1513
        %1536 = vmatprep.subr.bf16.mxu0 0
        %1537 = vmatpush1.bf16.msra.mxu0 %v1512
        %1538 = vmatprep.subr.bf16.mxu0 0
        %1539 = vmatpush1.bf16.msra.mxu0 %v1511
        %1540 = vmatprep.subr.bf16.mxu0 0
        %1541 = vmatpush1.bf16.msra.mxu0 %v1510
        %1542 = vmatprep.subr.bf16.mxu0 0
        %1543 = vmatpush2.bf16.msra.mxu0 0
        %1544 = vmatprep.subr.bf16.mxu0 0
        %1545 = vmatpush2.bf16.msra.mxu0 0
        %1546 = vmatprep.subr.bf16.mxu0 0
        %1547 = vmatpush2.bf16.msra.mxu0 0
        %1548 = vmatprep.subr.bf16.mxu0 0
        %1549 = vmatpush2.bf16.msra.mxu0 0
        %1550 = vmatprep.subr.bf16.mxu0 0
        %1551 = vmatpush2.bf16.msra.mxu0 0
        %1552 = vmatprep.subr.bf16.mxu0 0
        %1553 = vmatpush2.bf16.msra.mxu0 0
        %1554 = vmatprep.subr.bf16.mxu0 0
        %1555 = vmatpush2.bf16.msra.mxu0 0
        %1556 = vmatprep.subr.bf16.mxu0 0
        %1557 = vmatpush2.bf16.msra.mxu0 0
        %1558 = vmatprep.mubr.bf16.mxu0 0
        %1559 = vmatmul.mubr.bf16.gmra.mxu0 %v1446
        %v1560 = vpop.f32.mrf.mxu0
        %v1561 = vadd.f32 0.0, %v1560
        %v1562 = vpop.f32.mrf.mxu0
        %v1563 = vpop.f32.mrf.mxu0
        %v1564 = vadd.f32 0.0, %v1563
        %v1565 = vpop.f32.mrf.mxu0
        %1566 = vmatprep.mubr.bf16.mxu0 0
        %1567 = vmatmul.mubr.bf16.gmra.mxu0 %v1447
        %v1568 = vpop.f32.mrf.mxu0
        %v1569 = vadd.f32 0.0, %v1568
        %v1570 = vpop.f32.mrf.mxu0
        %v1571 = vpop.f32.mrf.mxu0
        %v1572 = vadd.f32 0.0, %v1571
        %v1573 = vpop.f32.mrf.mxu0
        %1574 = vmatprep.mubr.bf16.mxu0 0
        %1575 = vmatmul.mubr.bf16.gmra.mxu0 %v1448
        %v1576 = vpop.f32.mrf.mxu0
        %v1577 = vadd.f32 0.0, %v1576
        %v1578 = vpop.f32.mrf.mxu0
        %v1579 = vpop.f32.mrf.mxu0
        %v1580 = vadd.f32 0.0, %v1579
        %v1581 = vpop.f32.mrf.mxu0
        %1582 = vmatprep.mubr.bf16.mxu0 0
        %1583 = vmatmul.mubr.bf16.gmra.mxu0 %v1449
        %v1584 = vpop.f32.mrf.mxu0
        %v1585 = vadd.f32 0.0, %v1584
        %v1586 = vpop.f32.mrf.mxu0
        %v1587 = vpop.f32.mrf.mxu0
        %v1588 = vadd.f32 0.0, %v1587
        %v1589 = vpop.f32.mrf.mxu0
        %1590 = vmatprep.mubr.bf16.mxu0 0
        %1591 = vmatmul.mubr.bf16.gmra.mxu0 %v1450
        %v1592 = vpop.f32.mrf.mxu0
        %v1593 = vadd.f32 0.0, %v1592
        %v1594 = vpop.f32.mrf.mxu0
        %v1595 = vpop.f32.mrf.mxu0
        %v1596 = vadd.f32 0.0, %v1595
        %v1597 = vpop.f32.mrf.mxu0
        %1598 = vmatprep.mubr.bf16.mxu0 0
        %1599 = vmatmul.mubr.bf16.gmra.mxu0 %v1451
        %v1600 = vpop.f32.mrf.mxu0
        %v1601 = vadd.f32 0.0, %v1600
        %v1602 = vpop.f32.mrf.mxu0
        %v1603 = vpop.f32.mrf.mxu0
        %v1604 = vadd.f32 0.0, %v1603
        %v1605 = vpop.f32.mrf.mxu0
        %1606 = vmatprep.mubr.bf16.mxu0 0
        %1607 = vmatmul.mubr.bf16.gmra.mxu0 %v1452
        %v1608 = vpop.f32.mrf.mxu0
        %v1609 = vadd.f32 0.0, %v1608
        %v1610 = vpop.f32.mrf.mxu0
        %v1611 = vpop.f32.mrf.mxu0
        %v1612 = vadd.f32 0.0, %v1611
        %v1613 = vpop.f32.mrf.mxu0
        %1614 = vmatprep.mubr.bf16.mxu0 0
        %1615 = vmatmul.mubr.bf16.gmra.mxu0 %v1453
        %v1616 = vpop.f32.mrf.mxu0
        %v1617 = vadd.f32 0.0, %v1616
        %v1618 = vpop.f32.mrf.mxu0
        %v1619 = vpop.f32.mrf.mxu0
        %v1620 = vadd.f32 0.0, %v1619
        %v1621 = vpop.f32.mrf.mxu0
        %1622 = vmatprep.mubr.bf16.mxu0 0
        %1623 = vmatmul.mubr.bf16.gmra.mxu0 %v1454
        %v1624 = vpop.f32.mrf.mxu0
        %v1625 = vadd.f32 0.0, %v1624
        %v1626 = vpop.f32.mrf.mxu0
        %v1627 = vpop.f32.mrf.mxu0
        %v1628 = vadd.f32 0.0, %v1627
        %v1629 = vpop.f32.mrf.mxu0
        %1630 = vmatprep.mubr.bf16.mxu0 0
        %1631 = vmatmul.mubr.bf16.gmra.mxu0 %v1455
        %v1632 = vpop.f32.mrf.mxu0
        %v1633 = vadd.f32 0.0, %v1632
        %v1634 = vpop.f32.mrf.mxu0
        %v1635 = vpop.f32.mrf.mxu0
        %v1636 = vadd.f32 0.0, %v1635
        %v1637 = vpop.f32.mrf.mxu0
        %1638 = vmatprep.mubr.bf16.mxu0 0
        %1639 = vmatmul.mubr.bf16.gmra.mxu0 %v1456
        %v1640 = vpop.f32.mrf.mxu0
        %v1641 = vadd.f32 0.0, %v1640
        %v1642 = vpop.f32.mrf.mxu0
        %v1643 = vpop.f32.mrf.mxu0
        %v1644 = vadd.f32 0.0, %v1643
        %v1645 = vpop.f32.mrf.mxu0
        %1646 = vmatprep.mubr.bf16.mxu0 0
        %1647 = vmatmul.mubr.bf16.gmra.mxu0 %v1457
        %v1648 = vpop.f32.mrf.mxu0
        %v1649 = vadd.f32 0.0, %v1648
        %v1650 = vpop.f32.mrf.mxu0
        %v1651 = vpop.f32.mrf.mxu0
        %v1652 = vadd.f32 0.0, %v1651
        %v1653 = vpop.f32.mrf.mxu0
        %1654 = vmatprep.mubr.bf16.mxu0 0
        %1655 = vmatmul.mubr.bf16.gmra.mxu0 %v1458
        %v1656 = vpop.f32.mrf.mxu0
        %v1657 = vadd.f32 0.0, %v1656
        %v1658 = vpop.f32.mrf.mxu0
        %v1659 = vpop.f32.mrf.mxu0
        %v1660 = vadd.f32 0.0, %v1659
        %v1661 = vpop.f32.mrf.mxu0
        %1662 = vmatprep.mubr.bf16.mxu0 0
        %1663 = vmatmul.mubr.bf16.gmra.mxu0 %v1459
        %v1664 = vpop.f32.mrf.mxu0
        %v1665 = vadd.f32 0.0, %v1664
        %v1666 = vpop.f32.mrf.mxu0
        %v1667 = vpop.f32.mrf.mxu0
        %v1668 = vadd.f32 0.0, %v1667
        %v1669 = vpop.f32.mrf.mxu0
        %1670 = vmatprep.mubr.bf16.mxu0 0
        %1671 = vmatmul.mubr.bf16.gmra.mxu0 %v1460
        %v1672 = vpop.f32.mrf.mxu0
        %v1673 = vadd.f32 0.0, %v1672
        %v1674 = vpop.f32.mrf.mxu0
        %v1675 = vpop.f32.mrf.mxu0
        %v1676 = vadd.f32 0.0, %v1675
        %v1677 = vpop.f32.mrf.mxu0
        %1678 = vmatprep.mubr.bf16.mxu0 0
        %1679 = vmatmul.mubr.bf16.gmra.mxu0 %v1461
        %v1680 = vpop.f32.mrf.mxu0
        %v1681 = vadd.f32 0.0, %v1680
        %v1682 = vpop.f32.mrf.mxu0
        %v1683 = vpop.f32.mrf.mxu0
        %v1684 = vadd.f32 0.0, %v1683
        %v1685 = vpop.f32.mrf.mxu0
        %1686 = vdwg.mxu0
        %v1719 = vunpack.c.l.b16 %v946
        %v1720 = vunpack.c.l.b16 %v947
        %v1721 = vunpack.c.l.b16 %v948
        %v1722 = vunpack.c.l.b16 %v949
        %v1723 = vunpack.c.l.b16 %v950
        %v1724 = vunpack.c.l.b16 %v951
        %v1725 = vunpack.c.l.b16 %v952
        %v1726 = vunpack.c.l.b16 %v953
        %v1727 = vunpack.c.l.b16 %v954
        %v1728 = vunpack.c.l.b16 %v955
        %v1729 = vunpack.c.l.b16 %v956
        %v1730 = vunpack.c.l.b16 %v957
        %v1731 = vunpack.c.l.b16 %v958
        %v1732 = vunpack.c.l.b16 %v959
        %v1733 = vunpack.c.l.b16 %v960
        %v1734 = vunpack.c.l.b16 %v961
        %v1735 = vunpack.c.l.b16 %v962
        %v1736 = vunpack.c.l.b16 %v963
        %v1737 = vunpack.c.l.b16 %v964
        %v1738 = vunpack.c.l.b16 %v965
        %v1739 = vunpack.c.l.b16 %v966
        %v1740 = vunpack.c.l.b16 %v967
        %v1741 = vunpack.c.l.b16 %v968
        %v1742 = vunpack.c.l.b16 %v969
        %v1743 = vunpack.c.l.b16 %v970
        %v1744 = vunpack.c.l.b16 %v971
        %v1745 = vunpack.c.l.b16 %v972
        %v1746 = vunpack.c.l.b16 %v973
        %v1747 = vunpack.c.l.b16 %v974
        %v1748 = vunpack.c.l.b16 %v975
        %v1749 = vunpack.c.l.b16 %v976
        %v1750 = vunpack.c.l.b16 %v977
        %v1751 = vpack.c.b16 %v1720, %v1719
        %v1752 = vpack.c.b16 %v1722, %v1721
        %v1753 = vpack.c.b16 %v1724, %v1723
        %v1754 = vpack.c.b16 %v1726, %v1725
        %v1755 = vpack.c.b16 %v1728, %v1727
        %v1756 = vpack.c.b16 %v1730, %v1729
        %v1757 = vpack.c.b16 %v1732, %v1731
        %v1758 = vpack.c.b16 %v1734, %v1733
        %v1759 = vpack.c.b16 %v1736, %v1735
        %v1760 = vpack.c.b16 %v1738, %v1737
        %v1761 = vpack.c.b16 %v1740, %v1739
        %v1762 = vpack.c.b16 %v1742, %v1741
        %v1763 = vpack.c.b16 %v1744, %v1743
        %v1764 = vpack.c.b16 %v1746, %v1745
        %v1765 = vpack.c.b16 %v1748, %v1747
        %v1766 = vpack.c.b16 %v1750, %v1749
        %v1799 = vunpack.c.l.b16 %v978
        %v1800 = vunpack.c.l.b16 %v979
        %v1801 = vunpack.c.l.b16 %v980
        %v1802 = vunpack.c.l.b16 %v981
        %v1803 = vunpack.c.l.b16 %v982
        %v1804 = vunpack.c.l.b16 %v983
        %v1805 = vunpack.c.l.b16 %v984
        %v1806 = vunpack.c.l.b16 %v985
        %v1807 = vunpack.c.l.b16 %v986
        %v1808 = vunpack.c.l.b16 %v987
        %v1809 = vunpack.c.l.b16 %v988
        %v1810 = vunpack.c.l.b16 %v989
        %v1811 = vunpack.c.l.b16 %v990
        %v1812 = vunpack.c.l.b16 %v991
        %v1813 = vunpack.c.l.b16 %v992
        %v1814 = vunpack.c.l.b16 %v993
        %v1815 = vpack.c.b16 %v1800, %v1799
        %v1816 = vpack.c.b16 %v1802, %v1801
        %v1817 = vpack.c.b16 %v1804, %v1803
        %v1818 = vpack.c.b16 %v1806, %v1805
        %v1819 = vpack.c.b16 %v1808, %v1807
        %v1820 = vpack.c.b16 %v1810, %v1809
        %v1821 = vpack.c.b16 %v1812, %v1811
        %v1822 = vpack.c.b16 %v1814, %v1813
        %1831 = vmatprep.subr.bf16.mxu0 0
        %1832 = vmatpush1.bf16.msra.mxu0 %v1822
        %1833 = vmatprep.subr.bf16.mxu0 0
        %1834 = vmatpush1.bf16.msra.mxu0 %v1821
        %1835 = vmatprep.subr.bf16.mxu0 0
        %1836 = vmatpush1.bf16.msra.mxu0 %v1820
        %1837 = vmatprep.subr.bf16.mxu0 0
        %1838 = vmatpush1.bf16.msra.mxu0 %v1819
        %1839 = vmatprep.subr.bf16.mxu0 0
        %1840 = vmatpush1.bf16.msra.mxu0 %v1818
        %1841 = vmatprep.subr.bf16.mxu0 0
        %1842 = vmatpush1.bf16.msra.mxu0 %v1817
        %1843 = vmatprep.subr.bf16.mxu0 0
        %1844 = vmatpush1.bf16.msra.mxu0 %v1816
        %1845 = vmatprep.subr.bf16.mxu0 0
        %1846 = vmatpush1.bf16.msra.mxu0 %v1815
        %1847 = vmatprep.subr.bf16.mxu0 0
        %1848 = vmatpush2.bf16.msra.mxu0 0
        %1849 = vmatprep.subr.bf16.mxu0 0
        %1850 = vmatpush2.bf16.msra.mxu0 0
        %1851 = vmatprep.subr.bf16.mxu0 0
        %1852 = vmatpush2.bf16.msra.mxu0 0
        %1853 = vmatprep.subr.bf16.mxu0 0
        %1854 = vmatpush2.bf16.msra.mxu0 0
        %1855 = vmatprep.subr.bf16.mxu0 0
        %1856 = vmatpush2.bf16.msra.mxu0 0
        %1857 = vmatprep.subr.bf16.mxu0 0
        %1858 = vmatpush2.bf16.msra.mxu0 0
        %1859 = vmatprep.subr.bf16.mxu0 0
        %1860 = vmatpush2.bf16.msra.mxu0 0
        %1861 = vmatprep.subr.bf16.mxu0 0
        %1862 = vmatpush2.bf16.msra.mxu0 0
        %1863 = vmatprep.mubr.bf16.mxu0 0
        %1864 = vmatmul.mubr.bf16.gmra.mxu0 %v1751
        %v1865 = vpop.f32.mrf.mxu0
        %v1866 = vadd.f32 %v1561, %v1865
        %v1867 = vpop.f32.mrf.mxu0
        %v1868 = vpop.f32.mrf.mxu0
        %v1869 = vadd.f32 %v1564, %v1868
        %v1870 = vpop.f32.mrf.mxu0
        %1871 = vmatprep.mubr.bf16.mxu0 0
        %1872 = vmatmul.mubr.bf16.gmra.mxu0 %v1752
        %v1873 = vpop.f32.mrf.mxu0
        %v1874 = vadd.f32 %v1569, %v1873
        %v1875 = vpop.f32.mrf.mxu0
        %v1876 = vpop.f32.mrf.mxu0
        %v1877 = vadd.f32 %v1572, %v1876
        %v1878 = vpop.f32.mrf.mxu0
        %1879 = vmatprep.mubr.bf16.mxu0 0
        %1880 = vmatmul.mubr.bf16.gmra.mxu0 %v1753
        %v1881 = vpop.f32.mrf.mxu0
        %v1882 = vadd.f32 %v1577, %v1881
        %v1883 = vpop.f32.mrf.mxu0
        %v1884 = vpop.f32.mrf.mxu0
        %v1885 = vadd.f32 %v1580, %v1884
        %v1886 = vpop.f32.mrf.mxu0
        %1887 = vmatprep.mubr.bf16.mxu0 0
        %1888 = vmatmul.mubr.bf16.gmra.mxu0 %v1754
        %v1889 = vpop.f32.mrf.mxu0
        %v1890 = vadd.f32 %v1585, %v1889
        %v1891 = vpop.f32.mrf.mxu0
        %v1892 = vpop.f32.mrf.mxu0
        %v1893 = vadd.f32 %v1588, %v1892
        %v1894 = vpop.f32.mrf.mxu0
        %1895 = vmatprep.mubr.bf16.mxu0 0
        %1896 = vmatmul.mubr.bf16.gmra.mxu0 %v1755
        %v1897 = vpop.f32.mrf.mxu0
        %v1898 = vadd.f32 %v1593, %v1897
        %v1899 = vpop.f32.mrf.mxu0
        %v1900 = vpop.f32.mrf.mxu0
        %v1901 = vadd.f32 %v1596, %v1900
        %v1902 = vpop.f32.mrf.mxu0
        %1903 = vmatprep.mubr.bf16.mxu0 0
        %1904 = vmatmul.mubr.bf16.gmra.mxu0 %v1756
        %v1905 = vpop.f32.mrf.mxu0
        %v1906 = vadd.f32 %v1601, %v1905
        %v1907 = vpop.f32.mrf.mxu0
        %v1908 = vpop.f32.mrf.mxu0
        %v1909 = vadd.f32 %v1604, %v1908
        %v1910 = vpop.f32.mrf.mxu0
        %1911 = vmatprep.mubr.bf16.mxu0 0
        %1912 = vmatmul.mubr.bf16.gmra.mxu0 %v1757
        %v1913 = vpop.f32.mrf.mxu0
        %v1914 = vadd.f32 %v1609, %v1913
        %v1915 = vpop.f32.mrf.mxu0
        %v1916 = vpop.f32.mrf.mxu0
        %v1917 = vadd.f32 %v1612, %v1916
        %v1918 = vpop.f32.mrf.mxu0
        %1919 = vmatprep.mubr.bf16.mxu0 0
        %1920 = vmatmul.mubr.bf16.gmra.mxu0 %v1758
        %v1921 = vpop.f32.mrf.mxu0
        %v1922 = vadd.f32 %v1617, %v1921
        %v1923 = vpop.f32.mrf.mxu0
        %v1924 = vpop.f32.mrf.mxu0
        %v1925 = vadd.f32 %v1620, %v1924
        %v1926 = vpop.f32.mrf.mxu0
        %1927 = vmatprep.mubr.bf16.mxu0 0
        %1928 = vmatmul.mubr.bf16.gmra.mxu0 %v1759
        %v1929 = vpop.f32.mrf.mxu0
        %v1930 = vadd.f32 %v1625, %v1929
        %v1931 = vpop.f32.mrf.mxu0
        %v1932 = vpop.f32.mrf.mxu0
        %v1933 = vadd.f32 %v1628, %v1932
        %v1934 = vpop.f32.mrf.mxu0
        %1935 = vmatprep.mubr.bf16.mxu0 0
        %1936 = vmatmul.mubr.bf16.gmra.mxu0 %v1760
        %v1937 = vpop.f32.mrf.mxu0
        %v1938 = vadd.f32 %v1633, %v1937
        %v1939 = vpop.f32.mrf.mxu0
        %v1940 = vpop.f32.mrf.mxu0
        %v1941 = vadd.f32 %v1636, %v1940
        %v1942 = vpop.f32.mrf.mxu0
        %1943 = vmatprep.mubr.bf16.mxu0 0
        %1944 = vmatmul.mubr.bf16.gmra.mxu0 %v1761
        %v1945 = vpop.f32.mrf.mxu0
        %v1946 = vadd.f32 %v1641, %v1945
        %v1947 = vpop.f32.mrf.mxu0
        %v1948 = vpop.f32.mrf.mxu0
        %v1949 = vadd.f32 %v1644, %v1948
        %v1950 = vpop.f32.mrf.mxu0
        %1951 = vmatprep.mubr.bf16.mxu0 0
        %1952 = vmatmul.mubr.bf16.gmra.mxu0 %v1762
        %v1953 = vpop.f32.mrf.mxu0
        %v1954 = vadd.f32 %v1649, %v1953
        %v1955 = vpop.f32.mrf.mxu0
        %v1956 = vpop.f32.mrf.mxu0
        %v1957 = vadd.f32 %v1652, %v1956
        %v1958 = vpop.f32.mrf.mxu0
        %1959 = vmatprep.mubr.bf16.mxu0 0
        %1960 = vmatmul.mubr.bf16.gmra.mxu0 %v1763
        %v1961 = vpop.f32.mrf.mxu0
        %v1962 = vadd.f32 %v1657, %v1961
        %v1963 = vpop.f32.mrf.mxu0
        %v1964 = vpop.f32.mrf.mxu0
        %v1965 = vadd.f32 %v1660, %v1964
        %v1966 = vpop.f32.mrf.mxu0
        %1967 = vmatprep.mubr.bf16.mxu0 0
        %1968 = vmatmul.mubr.bf16.gmra.mxu0 %v1764
        %v1969 = vpop.f32.mrf.mxu0
        %v1970 = vadd.f32 %v1665, %v1969
        %v1971 = vpop.f32.mrf.mxu0
        %v1972 = vpop.f32.mrf.mxu0
        %v1973 = vadd.f32 %v1668, %v1972
        %v1974 = vpop.f32.mrf.mxu0
        %1975 = vmatprep.mubr.bf16.mxu0 0
        %1976 = vmatmul.mubr.bf16.gmra.mxu0 %v1765
        %v1977 = vpop.f32.mrf.mxu0
        %v1978 = vadd.f32 %v1673, %v1977
        %v1979 = vpop.f32.mrf.mxu0
        %v1980 = vpop.f32.mrf.mxu0
        %v1981 = vadd.f32 %v1676, %v1980
        %v1982 = vpop.f32.mrf.mxu0
        %1983 = vmatprep.mubr.bf16.mxu0 0
        %1984 = vmatmul.mubr.bf16.gmra.mxu0 %v1766
        %v1985 = vpop.f32.mrf.mxu0
        %v1986 = vadd.f32 %v1681, %v1985
        %v1987 = vpop.f32.mrf.mxu0
        %v1988 = vpop.f32.mrf.mxu0
        %v1989 = vadd.f32 %v1684, %v1988
        %v1990 = vpop.f32.mrf.mxu0
        %1991 = vdwg.mxu0
        %v1992 = vld [vmem:[#allocation2] sm:$0xe]
        %v1993 = vld [vmem:[#allocation2 + $0xc] sm:$0xe]
        %v1994 = vld [vmem:[#allocation2 + $0x18] sm:$0xe]
        %v1995 = vld [vmem:[#allocation2 + $0x24] sm:$0xe]
        %v1996 = vld [vmem:[#allocation2 + $0x30] sm:$0xe]
        %v1997 = vld [vmem:[#allocation2 + $0x3c] sm:$0xe]
        %v1998 = vld [vmem:[#allocation2 + $0x48] sm:$0xe]
        %v1999 = vld [vmem:[#allocation2 + $0x54] sm:$0xe]
        %v2000 = vld [vmem:[#allocation2 + $0x60] sm:$0xe]
        %v2001 = vld [vmem:[#allocation2 + $0x6c] sm:$0xe]
        %v2002 = vld [vmem:[#allocation2 + $0x78] sm:$0xe]
        %v2003 = vld [vmem:[#allocation2 + $0x84] sm:$0xe]
        %v2004 = vld [vmem:[#allocation2 + $0x90] sm:$0xe]
        %v2005 = vld [vmem:[#allocation2 + $0x9c] sm:$0xe]
        %v2006 = vld [vmem:[#allocation2 + $0xa8] sm:$0xe]
        %v2007 = vld [vmem:[#allocation2 + $0xb4] sm:$0xe]
        %vm2040 = vcmask 1042432
        %vm2041 = vcmask 1046532
        %vm2042 = vmor %vm2040, %vm2041
        %v2043 = vrot.slane %v1992, 5
        %v2044 = vrot.slane %v2043, 4
        %v2045 = vrot.slane %v947, 5
        %v2046 = vsel %vm2042, %v2044, %v2045
        %v2047 = vrot.slane %v2045, 4
        %v2048 = vrot.slane %v994, 5
        %v2049 = vsel %vm2042, %v2047, %v2048
        %v2050 = vrot.slane %v1993, 5
        %v2051 = vrot.slane %v2050, 4
        %v2052 = vrot.slane %v949, 5
        %v2053 = vsel %vm2042, %v2051, %v2052
        %v2054 = vrot.slane %v2052, 4
        %v2055 = vrot.slane %v995, 5
        %v2056 = vsel %vm2042, %v2054, %v2055
        %v2057 = vrot.slane %v1994, 5
        %v2058 = vrot.slane %v2057, 4
        %v2059 = vrot.slane %v951, 5
        %v2060 = vsel %vm2042, %v2058, %v2059
        %v2061 = vrot.slane %v2059, 4
        %v2062 = vrot.slane %v996, 5
        %v2063 = vsel %vm2042, %v2061, %v2062
        %v2064 = vrot.slane %v1995, 5
        %v2065 = vrot.slane %v2064, 4
        %v2066 = vrot.slane %v953, 5
        %v2067 = vsel %vm2042, %v2065, %v2066
        %v2068 = vrot.slane %v2066, 4
        %v2069 = vrot.slane %v997, 5
        %v2070 = vsel %vm2042, %v2068, %v2069
        %v2071 = vrot.slane %v1996, 5
        %v2072 = vrot.slane %v2071, 4
        %v2073 = vrot.slane %v955, 5
        %v2074 = vsel %vm2042, %v2072, %v2073
        %v2075 = vrot.slane %v2073, 4
        %v2076 = vrot.slane %v998, 5
        %v2077 = vsel %vm2042, %v2075, %v2076
        %v2078 = vrot.slane %v1997, 5
        %v2079 = vrot.slane %v2078, 4
        %v2080 = vrot.slane %v957, 5
        %v2081 = vsel %vm2042, %v2079, %v2080
        %v2082 = vrot.slane %v2080, 4
        %v2083 = vrot.slane %v999, 5
        %v2084 = vsel %vm2042, %v2082, %v2083
        %v2085 = vrot.slane %v1998, 5
        %v2086 = vrot.slane %v2085, 4
        %v2087 = vrot.slane %v959, 5
        %v2088 = vsel %vm2042, %v2086, %v2087
        %v2089 = vrot.slane %v2087, 4
        %v2090 = vrot.slane %v1000, 5
        %v2091 = vsel %vm2042, %v2089, %v2090
        %v2092 = vrot.slane %v1999, 5
        %v2093 = vrot.slane %v2092, 4
        %v2094 = vrot.slane %v961, 5
        %v2095 = vsel %vm2042, %v2093, %v2094
        %v2096 = vrot.slane %v2094, 4
        %v2097 = vrot.slane %v1001, 5
        %v2098 = vsel %vm2042, %v2096, %v2097
        %v2099 = vrot.slane %v2000, 5
        %v2100 = vrot.slane %v2099, 4
        %v2101 = vrot.slane %v963, 5
        %v2102 = vsel %vm2042, %v2100, %v2101
        %v2103 = vrot.slane %v2101, 4
        %v2104 = vrot.slane %v1002, 5
        %v2105 = vsel %vm2042, %v2103, %v2104
        %v2106 = vrot.slane %v2001, 5
        %v2107 = vrot.slane %v2106, 4
        %v2108 = vrot.slane %v965, 5
        %v2109 = vsel %vm2042, %v2107, %v2108
        %v2110 = vrot.slane %v2108, 4
        %v2111 = vrot.slane %v1003, 5
        %v2112 = vsel %vm2042, %v2110, %v2111
        %v2113 = vrot.slane %v2002, 5
        %v2114 = vrot.slane %v2113, 4
        %v2115 = vrot.slane %v967, 5
        %v2116 = vsel %vm2042, %v2114, %v2115
        %v2117 = vrot.slane %v2115, 4
        %v2118 = vrot.slane %v1004, 5
        %v2119 = vsel %vm2042, %v2117, %v2118
        %v2120 = vrot.slane %v2003, 5
        %v2121 = vrot.slane %v2120, 4
        %v2122 = vrot.slane %v969, 5
        %v2123 = vsel %vm2042, %v2121, %v2122
        %v2124 = vrot.slane %v2122, 4
        %v2125 = vrot.slane %v1005, 5
        %v2126 = vsel %vm2042, %v2124, %v2125
        %v2127 = vrot.slane %v2004, 5
        %v2128 = vrot.slane %v2127, 4
        %v2129 = vrot.slane %v971, 5
        %v2130 = vsel %vm2042, %v2128, %v2129
        %v2131 = vrot.slane %v2129, 4
        %v2132 = vrot.slane %v1006, 5
        %v2133 = vsel %vm2042, %v2131, %v2132
        %v2134 = vrot.slane %v2005, 5
        %v2135 = vrot.slane %v2134, 4
        %v2136 = vrot.slane %v973, 5
        %v2137 = vsel %vm2042, %v2135, %v2136
        %v2138 = vrot.slane %v2136, 4
        %v2139 = vrot.slane %v1007, 5
        %v2140 = vsel %vm2042, %v2138, %v2139
        %v2141 = vrot.slane %v2006, 5
        %v2142 = vrot.slane %v2141, 4
        %v2143 = vrot.slane %v975, 5
        %v2144 = vsel %vm2042, %v2142, %v2143
        %v2145 = vrot.slane %v2143, 4
        %v2146 = vrot.slane %v1008, 5
        %v2147 = vsel %vm2042, %v2145, %v2146
        %v2148 = vrot.slane %v2007, 5
        %v2149 = vrot.slane %v2148, 4
        %v2150 = vrot.slane %v977, 5
        %v2151 = vsel %vm2042, %v2149, %v2150
        %v2152 = vrot.slane %v2150, 4
        %v2153 = vrot.slane %v1009, 5
        %v2154 = vsel %vm2042, %v2152, %v2153
        %s2155 = scalar_lea.vmem [#allocation6], 128
        %v2156 = vld [vmem:[%s2155] sm:$0xf]
        %v2157 = vld [vmem:[%s2155 + $0x4] sm:$0xf]
        %v2158 = vld [vmem:[%s2155 + $0x8] sm:$0xf]
        %v2159 = vld [vmem:[%s2155 + $0xc] sm:$0xf]
        %v2160 = vld [vmem:[%s2155 + $0x10] sm:$0xf]
        %v2161 = vld [vmem:[%s2155 + $0x14] sm:$0xf]
        %v2162 = vld [vmem:[%s2155 + $0x18] sm:$0xf]
        %v2163 = vld [vmem:[%s2155 + $0x1c] sm:$0xf]
        %v2164 = vld [vmem:[%s2155 + $0x20] sm:$0xf]
        %v2165 = vld [vmem:[%s2155 + $0x24] sm:$0xf]
        %v2166 = vld [vmem:[%s2155 + $0x28] sm:$0xf]
        %v2167 = vld [vmem:[%s2155 + $0x2c] sm:$0xf]
        %v2168 = vld [vmem:[%s2155 + $0x30] sm:$0xf]
        %v2169 = vld [vmem:[%s2155 + $0x34] sm:$0xf]
        %v2170 = vld [vmem:[%s2155 + $0x38] sm:$0xf]
        %v2171 = vld [vmem:[%s2155 + $0x3c] sm:$0xf]
        %v2172 = vunpack.c.l.b16 %v2046
        %v2173 = vunpack.c.l.b16 %v2049
        %v2174 = vunpack.c.l.b16 %v2053
        %v2175 = vunpack.c.l.b16 %v2056
        %v2176 = vunpack.c.l.b16 %v2060
        %v2177 = vunpack.c.l.b16 %v2063
        %v2178 = vunpack.c.l.b16 %v2067
        %v2179 = vunpack.c.l.b16 %v2070
        %v2180 = vunpack.c.l.b16 %v2074
        %v2181 = vunpack.c.l.b16 %v2077
        %v2182 = vunpack.c.l.b16 %v2081
        %v2183 = vunpack.c.l.b16 %v2084
        %v2184 = vunpack.c.l.b16 %v2088
        %v2185 = vunpack.c.l.b16 %v2091
        %v2186 = vunpack.c.l.b16 %v2095
        %v2187 = vunpack.c.l.b16 %v2098
        %v2188 = vunpack.c.l.b16 %v2102
        %v2189 = vunpack.c.l.b16 %v2105
        %v2190 = vunpack.c.l.b16 %v2109
        %v2191 = vunpack.c.l.b16 %v2112
        %v2192 = vunpack.c.l.b16 %v2116
        %v2193 = vunpack.c.l.b16 %v2119
        %v2194 = vunpack.c.l.b16 %v2123
        %v2195 = vunpack.c.l.b16 %v2126
        %v2196 = vunpack.c.l.b16 %v2130
        %v2197 = vunpack.c.l.b16 %v2133
        %v2198 = vunpack.c.l.b16 %v2137
        %v2199 = vunpack.c.l.b16 %v2140
        %v2200 = vunpack.c.l.b16 %v2144
        %v2201 = vunpack.c.l.b16 %v2147
        %v2202 = vunpack.c.l.b16 %v2151
        %v2203 = vunpack.c.l.b16 %v2154
        %v2204 = vpack.c.b16 %v2173, %v2172
        %v2205 = vpack.c.b16 %v2175, %v2174
        %v2206 = vpack.c.b16 %v2177, %v2176
        %v2207 = vpack.c.b16 %v2179, %v2178
        %v2208 = vpack.c.b16 %v2181, %v2180
        %v2209 = vpack.c.b16 %v2183, %v2182
        %v2210 = vpack.c.b16 %v2185, %v2184
        %v2211 = vpack.c.b16 %v2187, %v2186
        %v2212 = vpack.c.b16 %v2189, %v2188
        %v2213 = vpack.c.b16 %v2191, %v2190
        %v2214 = vpack.c.b16 %v2193, %v2192
        %v2215 = vpack.c.b16 %v2195, %v2194
        %v2216 = vpack.c.b16 %v2197, %v2196
        %v2217 = vpack.c.b16 %v2199, %v2198
        %v2218 = vpack.c.b16 %v2201, %v2200
        %v2219 = vpack.c.b16 %v2203, %v2202
        %v2252 = vunpack.c.l.b16 %v2156
        %v2253 = vunpack.c.l.b16 %v2157
        %v2254 = vunpack.c.l.b16 %v2158
        %v2255 = vunpack.c.l.b16 %v2159
        %v2256 = vunpack.c.l.b16 %v2160
        %v2257 = vunpack.c.l.b16 %v2161
        %v2258 = vunpack.c.l.b16 %v2162
        %v2259 = vunpack.c.l.b16 %v2163
        %v2260 = vunpack.c.l.b16 %v2164
        %v2261 = vunpack.c.l.b16 %v2165
        %v2262 = vunpack.c.l.b16 %v2166
        %v2263 = vunpack.c.l.b16 %v2167
        %v2264 = vunpack.c.l.b16 %v2168
        %v2265 = vunpack.c.l.b16 %v2169
        %v2266 = vunpack.c.l.b16 %v2170
        %v2267 = vunpack.c.l.b16 %v2171
        %v2268 = vpack.c.b16 %v2253, %v2252
        %v2269 = vpack.c.b16 %v2255, %v2254
        %v2270 = vpack.c.b16 %v2257, %v2256
        %v2271 = vpack.c.b16 %v2259, %v2258
        %v2272 = vpack.c.b16 %v2261, %v2260
        %v2273 = vpack.c.b16 %v2263, %v2262
        %v2274 = vpack.c.b16 %v2265, %v2264
        %v2275 = vpack.c.b16 %v2267, %v2266
        %2284 = vmatprep.subr.bf16.mxu0 0
        %2285 = vmatpush1.bf16.msra.mxu0 %v2275
        %2286 = vmatprep.subr.bf16.mxu0 0
        %2287 = vmatpush1.bf16.msra.mxu0 %v2274
        %2288 = vmatprep.subr.bf16.mxu0 0
        %2289 = vmatpush1.bf16.msra.mxu0 %v2273
        %2290 = vmatprep.subr.bf16.mxu0 0
        %2291 = vmatpush1.bf16.msra.mxu0 %v2272
        %2292 = vmatprep.subr.bf16.mxu0 0
        %2293 = vmatpush1.bf16.msra.mxu0 %v2271
        %2294 = vmatprep.subr.bf16.mxu0 0
        %2295 = vmatpush1.bf16.msra.mxu0 %v2270
        %2296 = vmatprep.subr.bf16.mxu0 0
        %2297 = vmatpush1.bf16.msra.mxu0 %v2269
        %2298 = vmatprep.subr.bf16.mxu0 0
        %2299 = vmatpush1.bf16.msra.mxu0 %v2268
        %2300 = vmatprep.subr.bf16.mxu0 0
        %2301 = vmatpush2.bf16.msra.mxu0 0
        %2302 = vmatprep.subr.bf16.mxu0 0
        %2303 = vmatpush2.bf16.msra.mxu0 0
        %2304 = vmatprep.subr.bf16.mxu0 0
        %2305 = vmatpush2.bf16.msra.mxu0 0
        %2306 = vmatprep.subr.bf16.mxu0 0
        %2307 = vmatpush2.bf16.msra.mxu0 0
        %2308 = vmatprep.subr.bf16.mxu0 0
        %2309 = vmatpush2.bf16.msra.mxu0 0
        %2310 = vmatprep.subr.bf16.mxu0 0
        %2311 = vmatpush2.bf16.msra.mxu0 0
        %2312 = vmatprep.subr.bf16.mxu0 0
        %2313 = vmatpush2.bf16.msra.mxu0 0
        %2314 = vmatprep.subr.bf16.mxu0 0
        %2315 = vmatpush2.bf16.msra.mxu0 0
        %2316 = vmatprep.mubr.bf16.mxu0 0
        %2317 = vmatmul.mubr.bf16.gmra.mxu0 %v2204
        %v2318 = vpop.f32.mrf.mxu0
        %v2319 = vadd.f32 0.0, %v2318
        %v2320 = vpop.f32.mrf.mxu0
        %v2321 = vpop.f32.mrf.mxu0
        %v2322 = vadd.f32 0.0, %v2321
        %v2323 = vpop.f32.mrf.mxu0
        %2324 = vmatprep.mubr.bf16.mxu0 0
        %2325 = vmatmul.mubr.bf16.gmra.mxu0 %v2205
        %v2326 = vpop.f32.mrf.mxu0
        %v2327 = vadd.f32 0.0, %v2326
        %v2328 = vpop.f32.mrf.mxu0
        %v2329 = vpop.f32.mrf.mxu0
        %v2330 = vadd.f32 0.0, %v2329
        %v2331 = vpop.f32.mrf.mxu0
        %2332 = vmatprep.mubr.bf16.mxu0 0
        %2333 = vmatmul.mubr.bf16.gmra.mxu0 %v2206
        %v2334 = vpop.f32.mrf.mxu0
        %v2335 = vadd.f32 0.0, %v2334
        %v2336 = vpop.f32.mrf.mxu0
        %v2337 = vpop.f32.mrf.mxu0
        %v2338 = vadd.f32 0.0, %v2337
        %v2339 = vpop.f32.mrf.mxu0
        %2340 = vmatprep.mubr.bf16.mxu0 0
        %2341 = vmatmul.mubr.bf16.gmra.mxu0 %v2207
        %v2342 = vpop.f32.mrf.mxu0
        %v2343 = vadd.f32 0.0, %v2342
        %v2344 = vpop.f32.mrf.mxu0
        %v2345 = vpop.f32.mrf.mxu0
        %v2346 = vadd.f32 0.0, %v2345
        %v2347 = vpop.f32.mrf.mxu0
        %2348 = vmatprep.mubr.bf16.mxu0 0
        %2349 = vmatmul.mubr.bf16.gmra.mxu0 %v2208
        %v2350 = vpop.f32.mrf.mxu0
        %v2351 = vadd.f32 0.0, %v2350
        %v2352 = vpop.f32.mrf.mxu0
        %v2353 = vpop.f32.mrf.mxu0
        %v2354 = vadd.f32 0.0, %v2353
        %v2355 = vpop.f32.mrf.mxu0
        %2356 = vmatprep.mubr.bf16.mxu0 0
        %2357 = vmatmul.mubr.bf16.gmra.mxu0 %v2209
        %v2358 = vpop.f32.mrf.mxu0
        %v2359 = vadd.f32 0.0, %v2358
        %v2360 = vpop.f32.mrf.mxu0
        %v2361 = vpop.f32.mrf.mxu0
        %v2362 = vadd.f32 0.0, %v2361
        %v2363 = vpop.f32.mrf.mxu0
        %2364 = vmatprep.mubr.bf16.mxu0 0
        %2365 = vmatmul.mubr.bf16.gmra.mxu0 %v2210
        %v2366 = vpop.f32.mrf.mxu0
        %v2367 = vadd.f32 0.0, %v2366
        %v2368 = vpop.f32.mrf.mxu0
        %v2369 = vpop.f32.mrf.mxu0
        %v2370 = vadd.f32 0.0, %v2369
        %v2371 = vpop.f32.mrf.mxu0
        %2372 = vmatprep.mubr.bf16.mxu0 0
        %2373 = vmatmul.mubr.bf16.gmra.mxu0 %v2211
        %v2374 = vpop.f32.mrf.mxu0
        %v2375 = vadd.f32 0.0, %v2374
        %v2376 = vpop.f32.mrf.mxu0
        %v2377 = vpop.f32.mrf.mxu0
        %v2378 = vadd.f32 0.0, %v2377
        %v2379 = vpop.f32.mrf.mxu0
        %2380 = vmatprep.mubr.bf16.mxu0 0
        %2381 = vmatmul.mubr.bf16.gmra.mxu0 %v2212
        %v2382 = vpop.f32.mrf.mxu0
        %v2383 = vadd.f32 0.0, %v2382
        %v2384 = vpop.f32.mrf.mxu0
        %v2385 = vpop.f32.mrf.mxu0
        %v2386 = vadd.f32 0.0, %v2385
        %v2387 = vpop.f32.mrf.mxu0
        %2388 = vmatprep.mubr.bf16.mxu0 0
        %2389 = vmatmul.mubr.bf16.gmra.mxu0 %v2213
        %v2390 = vpop.f32.mrf.mxu0
        %v2391 = vadd.f32 0.0, %v2390
        %v2392 = vpop.f32.mrf.mxu0
        %v2393 = vpop.f32.mrf.mxu0
        %v2394 = vadd.f32 0.0, %v2393
        %v2395 = vpop.f32.mrf.mxu0
        %2396 = vmatprep.mubr.bf16.mxu0 0
        %2397 = vmatmul.mubr.bf16.gmra.mxu0 %v2214
        %v2398 = vpop.f32.mrf.mxu0
        %v2399 = vadd.f32 0.0, %v2398
        %v2400 = vpop.f32.mrf.mxu0
        %v2401 = vpop.f32.mrf.mxu0
        %v2402 = vadd.f32 0.0, %v2401
        %v2403 = vpop.f32.mrf.mxu0
        %2404 = vmatprep.mubr.bf16.mxu0 0
        %2405 = vmatmul.mubr.bf16.gmra.mxu0 %v2215
        %v2406 = vpop.f32.mrf.mxu0
        %v2407 = vadd.f32 0.0, %v2406
        %v2408 = vpop.f32.mrf.mxu0
        %v2409 = vpop.f32.mrf.mxu0
        %v2410 = vadd.f32 0.0, %v2409
        %v2411 = vpop.f32.mrf.mxu0
        %2412 = vmatprep.mubr.bf16.mxu0 0
        %2413 = vmatmul.mubr.bf16.gmra.mxu0 %v2216
        %v2414 = vpop.f32.mrf.mxu0
        %v2415 = vadd.f32 0.0, %v2414
        %v2416 = vpop.f32.mrf.mxu0
        %v2417 = vpop.f32.mrf.mxu0
        %v2418 = vadd.f32 0.0, %v2417
        %v2419 = vpop.f32.mrf.mxu0
        %2420 = vmatprep.mubr.bf16.mxu0 0
        %2421 = vmatmul.mubr.bf16.gmra.mxu0 %v2217
        %v2422 = vpop.f32.mrf.mxu0
        %v2423 = vadd.f32 0.0, %v2422
        %v2424 = vpop.f32.mrf.mxu0
        %v2425 = vpop.f32.mrf.mxu0
        %v2426 = vadd.f32 0.0, %v2425
        %v2427 = vpop.f32.mrf.mxu0
        %2428 = vmatprep.mubr.bf16.mxu0 0
        %2429 = vmatmul.mubr.bf16.gmra.mxu0 %v2218
        %v2430 = vpop.f32.mrf.mxu0
        %v2431 = vadd.f32 0.0, %v2430
        %v2432 = vpop.f32.mrf.mxu0
        %v2433 = vpop.f32.mrf.mxu0
        %v2434 = vadd.f32 0.0, %v2433
        %v2435 = vpop.f32.mrf.mxu0
        %2436 = vmatprep.mubr.bf16.mxu0 0
        %2437 = vmatmul.mubr.bf16.gmra.mxu0 %v2219
        %v2438 = vpop.f32.mrf.mxu0
        %v2439 = vadd.f32 0.0, %v2438
        %v2440 = vpop.f32.mrf.mxu0
        %v2441 = vpop.f32.mrf.mxu0
        %v2442 = vadd.f32 0.0, %v2441
        %v2443 = vpop.f32.mrf.mxu0
        %2444 = vdwg.mxu0
        %v2445 = vadd.f32 %v1866, %v2319
        %v2446 = vadd.f32 %v1869, %v2322
        %v2447 = vadd.f32 %v1874, %v2327
        %v2448 = vadd.f32 %v1877, %v2330
        %v2449 = vadd.f32 %v1882, %v2335
        %v2450 = vadd.f32 %v1885, %v2338
        %v2451 = vadd.f32 %v1890, %v2343
        %v2452 = vadd.f32 %v1893, %v2346
        %v2453 = vadd.f32 %v1898, %v2351
        %v2454 = vadd.f32 %v1901, %v2354
        %v2455 = vadd.f32 %v1906, %v2359
        %v2456 = vadd.f32 %v1909, %v2362
        %v2457 = vadd.f32 %v1914, %v2367
        %v2458 = vadd.f32 %v1917, %v2370
        %v2459 = vadd.f32 %v1922, %v2375
        %v2460 = vadd.f32 %v1925, %v2378
        %v2461 = vadd.f32 %v1930, %v2383
        %v2462 = vadd.f32 %v1933, %v2386
        %v2463 = vadd.f32 %v1938, %v2391
        %v2464 = vadd.f32 %v1941, %v2394
        %v2465 = vadd.f32 %v1946, %v2399
        %v2466 = vadd.f32 %v1949, %v2402
        %v2467 = vadd.f32 %v1954, %v2407
        %v2468 = vadd.f32 %v1957, %v2410
        %v2469 = vadd.f32 %v1962, %v2415
        %v2470 = vadd.f32 %v1965, %v2418
        %v2471 = vadd.f32 %v1970, %v2423
        %v2472 = vadd.f32 %v1973, %v2426
        %v2473 = vadd.f32 %v1978, %v2431
        %v2474 = vadd.f32 %v1981, %v2434
        %v2475 = vadd.f32 %v1986, %v2439
        %v2476 = vadd.f32 %v1989, %v2442
        %v2477 = vld [vmem:[%s280] sm:$0xf]
        %v2478 = vld [vmem:[%s280 + $0x4] sm:$0xf]
        %v2479 = vld [vmem:[%s280 + $0xc] sm:$0xf]
        %v2480 = vld [vmem:[%s280 + $0x10] sm:$0xf]
        %v2481 = vld [vmem:[%s280 + $0x18] sm:$0xf]
        %v2482 = vld [vmem:[%s280 + $0x1c] sm:$0xf]
        %v2483 = vld [vmem:[%s280 + $0x24] sm:$0xf]
        %v2484 = vld [vmem:[%s280 + $0x28] sm:$0xf]
        %v2485 = vld [vmem:[%s280 + $0x30] sm:$0xf]
        %v2486 = vld [vmem:[%s280 + $0x34] sm:$0xf]
        %v2487 = vld [vmem:[%s280 + $0x3c] sm:$0xf]
        %v2488 = vld [vmem:[%s280 + $0x40] sm:$0xf]
        %v2489 = vld [vmem:[%s280 + $0x48] sm:$0xf]
        %v2490 = vld [vmem:[%s280 + $0x4c] sm:$0xf]
        %v2491 = vld [vmem:[%s280 + $0x54] sm:$0xf]
        %v2492 = vld [vmem:[%s280 + $0x58] sm:$0xf]
        %v2493 = vld [vmem:[%s280 + $0x60] sm:$0xf]
        %v2494 = vld [vmem:[%s280 + $0x64] sm:$0xf]
        %v2495 = vld [vmem:[%s280 + $0x6c] sm:$0xf]
        %v2496 = vld [vmem:[%s280 + $0x70] sm:$0xf]
        %v2497 = vld [vmem:[%s280 + $0x78] sm:$0xf]
        %v2498 = vld [vmem:[%s280 + $0x7c] sm:$0xf]
        %v2499 = vld [vmem:[%s280 + $0x84] sm:$0xf]
        %v2500 = vld [vmem:[%s280 + $0x88] sm:$0xf]
        %v2501 = vld [vmem:[%s280 + $0x90] sm:$0xf]
        %v2502 = vld [vmem:[%s280 + $0x94] sm:$0xf]
        %v2503 = vld [vmem:[%s280 + $0x9c] sm:$0xf]
        %v2504 = vld [vmem:[%s280 + $0xa0] sm:$0xf]
        %v2505 = vld [vmem:[%s280 + $0xa8] sm:$0xf]
        %v2506 = vld [vmem:[%s280 + $0xac] sm:$0xf]
        %v2507 = vld [vmem:[%s280 + $0xb4] sm:$0xf]
        %v2508 = vld [vmem:[%s280 + $0xb8] sm:$0xf]
        %s2509 = scalar_lea.vmem [#allocation6], 192
        %v2510 = vld [vmem:[%s2509] sm:$0xf]
        %v2511 = vld [vmem:[%s2509 + $0x4] sm:$0xf]
        %v2512 = vld [vmem:[%s2509 + $0x8] sm:$0xf]
        %v2513 = vld [vmem:[%s2509 + $0xc] sm:$0xf]
        %v2514 = vld [vmem:[%s2509 + $0x10] sm:$0xf]
        %v2515 = vld [vmem:[%s2509 + $0x14] sm:$0xf]
        %v2516 = vld [vmem:[%s2509 + $0x18] sm:$0xf]
        %v2517 = vld [vmem:[%s2509 + $0x1c] sm:$0xf]
        %v2518 = vld [vmem:[%s2509 + $0x20] sm:$0xf]
        %v2519 = vld [vmem:[%s2509 + $0x24] sm:$0xf]
        %v2520 = vld [vmem:[%s2509 + $0x28] sm:$0xf]
        %v2521 = vld [vmem:[%s2509 + $0x2c] sm:$0xf]
        %v2522 = vld [vmem:[%s2509 + $0x30] sm:$0xf]
        %v2523 = vld [vmem:[%s2509 + $0x34] sm:$0xf]
        %v2524 = vld [vmem:[%s2509 + $0x38] sm:$0xf]
        %v2525 = vld [vmem:[%s2509 + $0x3c] sm:$0xf]
        %v2558 = vunpack.c.l.b16 %v2477
        %v2559 = vunpack.c.l.b16 %v2478
        %v2560 = vunpack.c.l.b16 %v2479
        %v2561 = vunpack.c.l.b16 %v2480
        %v2562 = vunpack.c.l.b16 %v2481
        %v2563 = vunpack.c.l.b16 %v2482
        %v2564 = vunpack.c.l.b16 %v2483
        %v2565 = vunpack.c.l.b16 %v2484
        %v2566 = vunpack.c.l.b16 %v2485
        %v2567 = vunpack.c.l.b16 %v2486
        %v2568 = vunpack.c.l.b16 %v2487
        %v2569 = vunpack.c.l.b16 %v2488
        %v2570 = vunpack.c.l.b16 %v2489
        %v2571 = vunpack.c.l.b16 %v2490
        %v2572 = vunpack.c.l.b16 %v2491
        %v2573 = vunpack.c.l.b16 %v2492
        %v2574 = vunpack.c.l.b16 %v2493
        %v2575 = vunpack.c.l.b16 %v2494
        %v2576 = vunpack.c.l.b16 %v2495
        %v2577 = vunpack.c.l.b16 %v2496
        %v2578 = vunpack.c.l.b16 %v2497
        %v2579 = vunpack.c.l.b16 %v2498
        %v2580 = vunpack.c.l.b16 %v2499
        %v2581 = vunpack.c.l.b16 %v2500
        %v2582 = vunpack.c.l.b16 %v2501
        %v2583 = vunpack.c.l.b16 %v2502
        %v2584 = vunpack.c.l.b16 %v2503
        %v2585 = vunpack.c.l.b16 %v2504
        %v2586 = vunpack.c.l.b16 %v2505
        %v2587 = vunpack.c.l.b16 %v2506
        %v2588 = vunpack.c.l.b16 %v2507
        %v2589 = vunpack.c.l.b16 %v2508
        %v2590 = vpack.c.b16 %v2559, %v2558
        %v2591 = vpack.c.b16 %v2561, %v2560
        %v2592 = vpack.c.b16 %v2563, %v2562
        %v2593 = vpack.c.b16 %v2565, %v2564
        %v2594 = vpack.c.b16 %v2567, %v2566
        %v2595 = vpack.c.b16 %v2569, %v2568
        %v2596 = vpack.c.b16 %v2571, %v2570
        %v2597 = vpack.c.b16 %v2573, %v2572
        %v2598 = vpack.c.b16 %v2575, %v2574
        %v2599 = vpack.c.b16 %v2577, %v2576
        %v2600 = vpack.c.b16 %v2579, %v2578
        %v2601 = vpack.c.b16 %v2581, %v2580
        %v2602 = vpack.c.b16 %v2583, %v2582
        %v2603 = vpack.c.b16 %v2585, %v2584
        %v2604 = vpack.c.b16 %v2587, %v2586
        %v2605 = vpack.c.b16 %v2589, %v2588
        %v2638 = vunpack.c.l.b16 %v2510
        %v2639 = vunpack.c.l.b16 %v2511
        %v2640 = vunpack.c.l.b16 %v2512
        %v2641 = vunpack.c.l.b16 %v2513
        %v2642 = vunpack.c.l.b16 %v2514
        %v2643 = vunpack.c.l.b16 %v2515
        %v2644 = vunpack.c.l.b16 %v2516
        %v2645 = vunpack.c.l.b16 %v2517
        %v2646 = vunpack.c.l.b16 %v2518
        %v2647 = vunpack.c.l.b16 %v2519
        %v2648 = vunpack.c.l.b16 %v2520
        %v2649 = vunpack.c.l.b16 %v2521
        %v2650 = vunpack.c.l.b16 %v2522
        %v2651 = vunpack.c.l.b16 %v2523
        %v2652 = vunpack.c.l.b16 %v2524
        %v2653 = vunpack.c.l.b16 %v2525
        %v2654 = vpack.c.b16 %v2639, %v2638
        %v2655 = vpack.c.b16 %v2641, %v2640
        %v2656 = vpack.c.b16 %v2643, %v2642
        %v2657 = vpack.c.b16 %v2645, %v2644
        %v2658 = vpack.c.b16 %v2647, %v2646
        %v2659 = vpack.c.b16 %v2649, %v2648
        %v2660 = vpack.c.b16 %v2651, %v2650
        %v2661 = vpack.c.b16 %v2653, %v2652
        %2670 = vmatprep.subr.bf16.mxu0 0
        %2671 = vmatpush1.bf16.msra.mxu0 %v2661
        %2672 = vmatprep.subr.bf16.mxu0 0
        %2673 = vmatpush1.bf16.msra.mxu0 %v2660
        %2674 = vmatprep.subr.bf16.mxu0 0
        %2675 = vmatpush1.bf16.msra.mxu0 %v2659
        %2676 = vmatprep.subr.bf16.mxu0 0
        %2677 = vmatpush1.bf16.msra.mxu0 %v2658
        %2678 = vmatprep.subr.bf16.mxu0 0
        %2679 = vmatpush1.bf16.msra.mxu0 %v2657
        %2680 = vmatprep.subr.bf16.mxu0 0
        %2681 = vmatpush1.bf16.msra.mxu0 %v2656
        %2682 = vmatprep.subr.bf16.mxu0 0
        %2683 = vmatpush1.bf16.msra.mxu0 %v2655
        %2684 = vmatprep.subr.bf16.mxu0 0
        %2685 = vmatpush1.bf16.msra.mxu0 %v2654
        %2686 = vmatprep.subr.bf16.mxu0 0
        %2687 = vmatpush2.bf16.msra.mxu0 0
        %2688 = vmatprep.subr.bf16.mxu0 0
        %2689 = vmatpush2.bf16.msra.mxu0 0
        %2690 = vmatprep.subr.bf16.mxu0 0
        %2691 = vmatpush2.bf16.msra.mxu0 0
        %2692 = vmatprep.subr.bf16.mxu0 0
        %2693 = vmatpush2.bf16.msra.mxu0 0
        %2694 = vmatprep.subr.bf16.mxu0 0
        %2695 = vmatpush2.bf16.msra.mxu0 0
        %2696 = vmatprep.subr.bf16.mxu0 0
        %2697 = vmatpush2.bf16.msra.mxu0 0
        %2698 = vmatprep.subr.bf16.mxu0 0
        %2699 = vmatpush2.bf16.msra.mxu0 0
        %2700 = vmatprep.subr.bf16.mxu0 0
        %2701 = vmatpush2.bf16.msra.mxu0 0
        %2702 = vmatprep.mubr.bf16.mxu0 0
        %2703 = vmatmul.mubr.bf16.gmra.mxu0 %v2590
        %v2704 = vpop.f32.mrf.mxu0
        %v2705 = vadd.f32 0.0, %v2704
        %v2706 = vpop.f32.mrf.mxu0
        %v2707 = vpop.f32.mrf.mxu0
        %v2708 = vadd.f32 0.0, %v2707
        %v2709 = vpop.f32.mrf.mxu0
        %2710 = vmatprep.mubr.bf16.mxu0 0
        %2711 = vmatmul.mubr.bf16.gmra.mxu0 %v2591
        %v2712 = vpop.f32.mrf.mxu0
        %v2713 = vadd.f32 0.0, %v2712
        %v2714 = vpop.f32.mrf.mxu0
        %v2715 = vpop.f32.mrf.mxu0
        %v2716 = vadd.f32 0.0, %v2715
        %v2717 = vpop.f32.mrf.mxu0
        %2718 = vmatprep.mubr.bf16.mxu0 0
        %2719 = vmatmul.mubr.bf16.gmra.mxu0 %v2592
        %v2720 = vpop.f32.mrf.mxu0
        %v2721 = vadd.f32 0.0, %v2720
        %v2722 = vpop.f32.mrf.mxu0
        %v2723 = vpop.f32.mrf.mxu0
        %v2724 = vadd.f32 0.0, %v2723
        %v2725 = vpop.f32.mrf.mxu0
        %2726 = vmatprep.mubr.bf16.mxu0 0
        %2727 = vmatmul.mubr.bf16.gmra.mxu0 %v2593
        %v2728 = vpop.f32.mrf.mxu0
        %v2729 = vadd.f32 0.0, %v2728
        %v2730 = vpop.f32.mrf.mxu0
        %v2731 = vpop.f32.mrf.mxu0
        %v2732 = vadd.f32 0.0, %v2731
        %v2733 = vpop.f32.mrf.mxu0
        %2734 = vmatprep.mubr.bf16.mxu0 0
        %2735 = vmatmul.mubr.bf16.gmra.mxu0 %v2594
        %v2736 = vpop.f32.mrf.mxu0
        %v2737 = vadd.f32 0.0, %v2736
        %v2738 = vpop.f32.mrf.mxu0
        %v2739 = vpop.f32.mrf.mxu0
        %v2740 = vadd.f32 0.0, %v2739
        %v2741 = vpop.f32.mrf.mxu0
        %2742 = vmatprep.mubr.bf16.mxu0 0
        %2743 = vmatmul.mubr.bf16.gmra.mxu0 %v2595
        %v2744 = vpop.f32.mrf.mxu0
        %v2745 = vadd.f32 0.0, %v2744
        %v2746 = vpop.f32.mrf.mxu0
        %v2747 = vpop.f32.mrf.mxu0
        %v2748 = vadd.f32 0.0, %v2747
        %v2749 = vpop.f32.mrf.mxu0
        %2750 = vmatprep.mubr.bf16.mxu0 0
        %2751 = vmatmul.mubr.bf16.gmra.mxu0 %v2596
        %v2752 = vpop.f32.mrf.mxu0
        %v2753 = vadd.f32 0.0, %v2752
        %v2754 = vpop.f32.mrf.mxu0
        %v2755 = vpop.f32.mrf.mxu0
        %v2756 = vadd.f32 0.0, %v2755
        %v2757 = vpop.f32.mrf.mxu0
        %2758 = vmatprep.mubr.bf16.mxu0 0
        %2759 = vmatmul.mubr.bf16.gmra.mxu0 %v2597
        %v2760 = vpop.f32.mrf.mxu0
        %v2761 = vadd.f32 0.0, %v2760
        %v2762 = vpop.f32.mrf.mxu0
        %v2763 = vpop.f32.mrf.mxu0
        %v2764 = vadd.f32 0.0, %v2763
        %v2765 = vpop.f32.mrf.mxu0
        %2766 = vmatprep.mubr.bf16.mxu0 0
        %2767 = vmatmul.mubr.bf16.gmra.mxu0 %v2598
        %v2768 = vpop.f32.mrf.mxu0
        %v2769 = vadd.f32 0.0, %v2768
        %v2770 = vpop.f32.mrf.mxu0
        %v2771 = vpop.f32.mrf.mxu0
        %v2772 = vadd.f32 0.0, %v2771
        %v2773 = vpop.f32.mrf.mxu0
        %2774 = vmatprep.mubr.bf16.mxu0 0
        %2775 = vmatmul.mubr.bf16.gmra.mxu0 %v2599
        %v2776 = vpop.f32.mrf.mxu0
        %v2777 = vadd.f32 0.0, %v2776
        %v2778 = vpop.f32.mrf.mxu0
        %v2779 = vpop.f32.mrf.mxu0
        %v2780 = vadd.f32 0.0, %v2779
        %v2781 = vpop.f32.mrf.mxu0
        %2782 = vmatprep.mubr.bf16.mxu0 0
        %2783 = vmatmul.mubr.bf16.gmra.mxu0 %v2600
        %v2784 = vpop.f32.mrf.mxu0
        %v2785 = vadd.f32 0.0, %v2784
        %v2786 = vpop.f32.mrf.mxu0
        %v2787 = vpop.f32.mrf.mxu0
        %v2788 = vadd.f32 0.0, %v2787
        %v2789 = vpop.f32.mrf.mxu0
        %2790 = vmatprep.mubr.bf16.mxu0 0
        %2791 = vmatmul.mubr.bf16.gmra.mxu0 %v2601
        %v2792 = vpop.f32.mrf.mxu0
        %v2793 = vadd.f32 0.0, %v2792
        %v2794 = vpop.f32.mrf.mxu0
        %v2795 = vpop.f32.mrf.mxu0
        %v2796 = vadd.f32 0.0, %v2795
        %v2797 = vpop.f32.mrf.mxu0
        %2798 = vmatprep.mubr.bf16.mxu0 0
        %2799 = vmatmul.mubr.bf16.gmra.mxu0 %v2602
        %v2800 = vpop.f32.mrf.mxu0
        %v2801 = vadd.f32 0.0, %v2800
        %v2802 = vpop.f32.mrf.mxu0
        %v2803 = vpop.f32.mrf.mxu0
        %v2804 = vadd.f32 0.0, %v2803
        %v2805 = vpop.f32.mrf.mxu0
        %2806 = vmatprep.mubr.bf16.mxu0 0
        %2807 = vmatmul.mubr.bf16.gmra.mxu0 %v2603
        %v2808 = vpop.f32.mrf.mxu0
        %v2809 = vadd.f32 0.0, %v2808
        %v2810 = vpop.f32.mrf.mxu0
        %v2811 = vpop.f32.mrf.mxu0
        %v2812 = vadd.f32 0.0, %v2811
        %v2813 = vpop.f32.mrf.mxu0
        %2814 = vmatprep.mubr.bf16.mxu0 0
        %2815 = vmatmul.mubr.bf16.gmra.mxu0 %v2604
        %v2816 = vpop.f32.mrf.mxu0
        %v2817 = vadd.f32 0.0, %v2816
        %v2818 = vpop.f32.mrf.mxu0
        %v2819 = vpop.f32.mrf.mxu0
        %v2820 = vadd.f32 0.0, %v2819
        %v2821 = vpop.f32.mrf.mxu0
        %2822 = vmatprep.mubr.bf16.mxu0 0
        %2823 = vmatmul.mubr.bf16.gmra.mxu0 %v2605
        %v2824 = vpop.f32.mrf.mxu0
        %v2825 = vadd.f32 0.0, %v2824
        %v2826 = vpop.f32.mrf.mxu0
        %v2827 = vpop.f32.mrf.mxu0
        %v2828 = vadd.f32 0.0, %v2827
        %v2829 = vpop.f32.mrf.mxu0
        %2830 = vdwg.mxu0
        %v2831 = vadd.f32 %v2445, %v2705
        %v2832 = vadd.f32 %v2446, %v2708
        %v2833 = vadd.f32 %v2447, %v2713
        %v2834 = vadd.f32 %v2448, %v2716
        %v2835 = vadd.f32 %v2449, %v2721
        %v2836 = vadd.f32 %v2450, %v2724
        %v2837 = vadd.f32 %v2451, %v2729
        %v2838 = vadd.f32 %v2452, %v2732
        %v2839 = vadd.f32 %v2453, %v2737
        %v2840 = vadd.f32 %v2454, %v2740
        %v2841 = vadd.f32 %v2455, %v2745
        %v2842 = vadd.f32 %v2456, %v2748
        %v2843 = vadd.f32 %v2457, %v2753
        %v2844 = vadd.f32 %v2458, %v2756
        %v2845 = vadd.f32 %v2459, %v2761
        %v2846 = vadd.f32 %v2460, %v2764
        %v2847 = vadd.f32 %v2461, %v2769
        %v2848 = vadd.f32 %v2462, %v2772
        %v2849 = vadd.f32 %v2463, %v2777
        %v2850 = vadd.f32 %v2464, %v2780
        %v2851 = vadd.f32 %v2465, %v2785
        %v2852 = vadd.f32 %v2466, %v2788
        %v2853 = vadd.f32 %v2467, %v2793
        %v2854 = vadd.f32 %v2468, %v2796
        %v2855 = vadd.f32 %v2469, %v2801
        %v2856 = vadd.f32 %v2470, %v2804
        %v2857 = vadd.f32 %v2471, %v2809
        %v2858 = vadd.f32 %v2472, %v2812
        %v2859 = vadd.f32 %v2473, %v2817
        %v2860 = vadd.f32 %v2474, %v2820
        %v2861 = vadd.f32 %v2475, %v2825
        %v2862 = vadd.f32 %v2476, %v2828
        %v2863 = vld [vmem:[%s280] sm:$0xf]
        %v2864 = vld [vmem:[%s280 + $0x4] sm:$0xf]
        %v2865 = vld [vmem:[%s280 + $0x8] sm:$0x1]
        %v2866 = vld [vmem:[%s280 + $0xc] sm:$0xf]
        %v2867 = vld [vmem:[%s280 + $0x10] sm:$0xf]
        %v2868 = vld [vmem:[%s280 + $0x14] sm:$0x1]
        %v2869 = vld [vmem:[%s280 + $0x18] sm:$0xf]
        %v2870 = vld [vmem:[%s280 + $0x1c] sm:$0xf]
        %v2871 = vld [vmem:[%s280 + $0x20] sm:$0x1]
        %v2872 = vld [vmem:[%s280 + $0x24] sm:$0xf]
        %v2873 = vld [vmem:[%s280 + $0x28] sm:$0xf]
        %v2874 = vld [vmem:[%s280 + $0x2c] sm:$0x1]
        %v2875 = vld [vmem:[%s280 + $0x30] sm:$0xf]
        %v2876 = vld [vmem:[%s280 + $0x34] sm:$0xf]
        %v2877 = vld [vmem:[%s280 + $0x38] sm:$0x1]
        %v2878 = vld [vmem:[%s280 + $0x3c] sm:$0xf]
        %v2879 = vld [vmem:[%s280 + $0x40] sm:$0xf]
        %v2880 = vld [vmem:[%s280 + $0x44] sm:$0x1]
        %v2881 = vld [vmem:[%s280 + $0x48] sm:$0xf]
        %v2882 = vld [vmem:[%s280 + $0x4c] sm:$0xf]
        %v2883 = vld [vmem:[%s280 + $0x50] sm:$0x1]
        %v2884 = vld [vmem:[%s280 + $0x54] sm:$0xf]
        %v2885 = vld [vmem:[%s280 + $0x58] sm:$0xf]
        %v2886 = vld [vmem:[%s280 + $0x5c] sm:$0x1]
        %v2887 = vld [vmem:[%s280 + $0x60] sm:$0xf]
        %v2888 = vld [vmem:[%s280 + $0x64] sm:$0xf]
        %v2889 = vld [vmem:[%s280 + $0x68] sm:$0x1]
        %v2890 = vld [vmem:[%s280 + $0x6c] sm:$0xf]
        %v2891 = vld [vmem:[%s280 + $0x70] sm:$0xf]
        %v2892 = vld [vmem:[%s280 + $0x74] sm:$0x1]
        %v2893 = vld [vmem:[%s280 + $0x78] sm:$0xf]
        %v2894 = vld [vmem:[%s280 + $0x7c] sm:$0xf]
        %v2895 = vld [vmem:[%s280 + $0x80] sm:$0x1]
        %v2896 = vld [vmem:[%s280 + $0x84] sm:$0xf]
        %v2897 = vld [vmem:[%s280 + $0x88] sm:$0xf]
        %v2898 = vld [vmem:[%s280 + $0x8c] sm:$0x1]
        %v2899 = vld [vmem:[%s280 + $0x90] sm:$0xf]
        %v2900 = vld [vmem:[%s280 + $0x94] sm:$0xf]
        %v2901 = vld [vmem:[%s280 + $0x98] sm:$0x1]
        %v2902 = vld [vmem:[%s280 + $0x9c] sm:$0xf]
        %v2903 = vld [vmem:[%s280 + $0xa0] sm:$0xf]
        %v2904 = vld [vmem:[%s280 + $0xa4] sm:$0x1]
        %v2905 = vld [vmem:[%s280 + $0xa8] sm:$0xf]
        %v2906 = vld [vmem:[%s280 + $0xac] sm:$0xf]
        %v2907 = vld [vmem:[%s280 + $0xb0] sm:$0x1]
        %v2908 = vld [vmem:[%s280 + $0xb4] sm:$0xf]
        %v2909 = vld [vmem:[%s280 + $0xb8] sm:$0xf]
        %v2910 = vld [vmem:[%s280 + $0xbc] sm:$0x1]
        %v2912 = vshrl.u32 %v2863, 16
        %v2914 = vrot.slane %v2912, 4
        %v2915 = vshll.u32 %v2863, 16
        %v2917 = vrot.slane %v2915, 5
        %v2918 = vor.u32 %v2914, %v2917
        %v2919 = vrot.slane %v2918, 4
        %v2921 = vshll.u32 %v2864, 16
        %v2923 = vrot.slane %v2921, 5
        %v2924 = vsel %vm1012, %v2919, %v2923
        %v2925 = vshrl.u32 %v2864, 16
        %v2927 = vrot.slane %v2925, 4
        %v2928 = vor.u32 %v2927, %v2923
        %v2929 = vrot.slane %v2928, 4
        %v2931 = vshll.u32 %v2865, 16
        %v2933 = vrot.slane %v2931, 5
        %v2934 = vsel %vm1012, %v2929, %v2933
        %v2936 = vshrl.u32 %v2866, 16
        %v2938 = vrot.slane %v2936, 4
        %v2939 = vshll.u32 %v2866, 16
        %v2941 = vrot.slane %v2939, 5
        %v2942 = vor.u32 %v2938, %v2941
        %v2943 = vrot.slane %v2942, 4
        %v2945 = vshll.u32 %v2867, 16
        %v2947 = vrot.slane %v2945, 5
        %v2948 = vsel %vm1012, %v2943, %v2947
        %v2949 = vshrl.u32 %v2867, 16
        %v2951 = vrot.slane %v2949, 4
        %v2952 = vor.u32 %v2951, %v2947
        %v2953 = vrot.slane %v2952, 4
        %v2955 = vshll.u32 %v2868, 16
        %v2957 = vrot.slane %v2955, 5
        %v2958 = vsel %vm1012, %v2953, %v2957
        %v2960 = vshrl.u32 %v2869, 16
        %v2962 = vrot.slane %v2960, 4
        %v2963 = vshll.u32 %v2869, 16
        %v2965 = vrot.slane %v2963, 5
        %v2966 = vor.u32 %v2962, %v2965
        %v2967 = vrot.slane %v2966, 4
        %v2969 = vshll.u32 %v2870, 16
        %v2971 = vrot.slane %v2969, 5
        %v2972 = vsel %vm1012, %v2967, %v2971
        %v2973 = vshrl.u32 %v2870, 16
        %v2975 = vrot.slane %v2973, 4
        %v2976 = vor.u32 %v2975, %v2971
        %v2977 = vrot.slane %v2976, 4
        %v2979 = vshll.u32 %v2871, 16
        %v2981 = vrot.slane %v2979, 5
        %v2982 = vsel %vm1012, %v2977, %v2981
        %v2984 = vshrl.u32 %v2872, 16
        %v2986 = vrot.slane %v2984, 4
        %v2987 = vshll.u32 %v2872, 16
        %v2989 = vrot.slane %v2987, 5
        %v2990 = vor.u32 %v2986, %v2989
        %v2991 = vrot.slane %v2990, 4
        %v2993 = vshll.u32 %v2873, 16
        %v2995 = vrot.slane %v2993, 5
        %v2996 = vsel %vm1012, %v2991, %v2995
        %v2997 = vshrl.u32 %v2873, 16
        %v2999 = vrot.slane %v2997, 4
        %v3000 = vor.u32 %v2999, %v2995
        %v3001 = vrot.slane %v3000, 4
        %v3003 = vshll.u32 %v2874, 16
        %v3005 = vrot.slane %v3003, 5
        %v3006 = vsel %vm1012, %v3001, %v3005
        %v3008 = vshrl.u32 %v2875, 16
        %v3010 = vrot.slane %v3008, 4
        %v3011 = vshll.u32 %v2875, 16
        %v3013 = vrot.slane %v3011, 5
        %v3014 = vor.u32 %v3010, %v3013
        %v3015 = vrot.slane %v3014, 4
        %v3017 = vshll.u32 %v2876, 16
        %v3019 = vrot.slane %v3017, 5
        %v3020 = vsel %vm1012, %v3015, %v3019
        %v3021 = vshrl.u32 %v2876, 16
        %v3023 = vrot.slane %v3021, 4
        %v3024 = vor.u32 %v3023, %v3019
        %v3025 = vrot.slane %v3024, 4
        %v3027 = vshll.u32 %v2877, 16
        %v3029 = vrot.slane %v3027, 5
        %v3030 = vsel %vm1012, %v3025, %v3029
        %v3032 = vshrl.u32 %v2878, 16
        %v3034 = vrot.slane %v3032, 4
        %v3035 = vshll.u32 %v2878, 16
        %v3037 = vrot.slane %v3035, 5
        %v3038 = vor.u32 %v3034, %v3037
        %v3039 = vrot.slane %v3038, 4
        %v3041 = vshll.u32 %v2879, 16
        %v3043 = vrot.slane %v3041, 5
        %v3044 = vsel %vm1012, %v3039, %v3043
        %v3045 = vshrl.u32 %v2879, 16
        %v3047 = vrot.slane %v3045, 4
        %v3048 = vor.u32 %v3047, %v3043
        %v3049 = vrot.slane %v3048, 4
        %v3051 = vshll.u32 %v2880, 16
        %v3053 = vrot.slane %v3051, 5
        %v3054 = vsel %vm1012, %v3049, %v3053
        %v3056 = vshrl.u32 %v2881, 16
        %v3058 = vrot.slane %v3056, 4
        %v3059 = vshll.u32 %v2881, 16
        %v3061 = vrot.slane %v3059, 5
        %v3062 = vor.u32 %v3058, %v3061
        %v3063 = vrot.slane %v3062, 4
        %v3065 = vshll.u32 %v2882, 16
        %v3067 = vrot.slane %v3065, 5
        %v3068 = vsel %vm1012, %v3063, %v3067
        %v3069 = vshrl.u32 %v2882, 16
        %v3071 = vrot.slane %v3069, 4
        %v3072 = vor.u32 %v3071, %v3067
        %v3073 = vrot.slane %v3072, 4
        %v3075 = vshll.u32 %v2883, 16
        %v3077 = vrot.slane %v3075, 5
        %v3078 = vsel %vm1012, %v3073, %v3077
        %v3080 = vshrl.u32 %v2884, 16
        %v3082 = vrot.slane %v3080, 4
        %v3083 = vshll.u32 %v2884, 16
        %v3085 = vrot.slane %v3083, 5
        %v3086 = vor.u32 %v3082, %v3085
        %v3087 = vrot.slane %v3086, 4
        %v3089 = vshll.u32 %v2885, 16
        %v3091 = vrot.slane %v3089, 5
        %v3092 = vsel %vm1012, %v3087, %v3091
        %v3093 = vshrl.u32 %v2885, 16
        %v3095 = vrot.slane %v3093, 4
        %v3096 = vor.u32 %v3095, %v3091
        %v3097 = vrot.slane %v3096, 4
        %v3099 = vshll.u32 %v2886, 16
        %v3101 = vrot.slane %v3099, 5
        %v3102 = vsel %vm1012, %v3097, %v3101
        %v3104 = vshrl.u32 %v2887, 16
        %v3106 = vrot.slane %v3104, 4
        %v3107 = vshll.u32 %v2887, 16
        %v3109 = vrot.slane %v3107, 5
        %v3110 = vor.u32 %v3106, %v3109
        %v3111 = vrot.slane %v3110, 4
        %v3113 = vshll.u32 %v2888, 16
        %v3115 = vrot.slane %v3113, 5
        %v3116 = vsel %vm1012, %v3111, %v3115
        %v3117 = vshrl.u32 %v2888, 16
        %v3119 = vrot.slane %v3117, 4
        %v3120 = vor.u32 %v3119, %v3115
        %v3121 = vrot.slane %v3120, 4
        %v3123 = vshll.u32 %v2889, 16
        %v3125 = vrot.slane %v3123, 5
        %v3126 = vsel %vm1012, %v3121, %v3125
        %v3128 = vshrl.u32 %v2890, 16
        %v3130 = vrot.slane %v3128, 4
        %v3131 = vshll.u32 %v2890, 16
        %v3133 = vrot.slane %v3131, 5
        %v3134 = vor.u32 %v3130, %v3133
        %v3135 = vrot.slane %v3134, 4
        %v3137 = vshll.u32 %v2891, 16
        %v3139 = vrot.slane %v3137, 5
        %v3140 = vsel %vm1012, %v3135, %v3139
        %v3141 = vshrl.u32 %v2891, 16
        %v3143 = vrot.slane %v3141, 4
        %v3144 = vor.u32 %v3143, %v3139
        %v3145 = vrot.slane %v3144, 4
        %v3147 = vshll.u32 %v2892, 16
        %v3149 = vrot.slane %v3147, 5
        %v3150 = vsel %vm1012, %v3145, %v3149
        %v3152 = vshrl.u32 %v2893, 16
        %v3154 = vrot.slane %v3152, 4
        %v3155 = vshll.u32 %v2893, 16
        %v3157 = vrot.slane %v3155, 5
        %v3158 = vor.u32 %v3154, %v3157
        %v3159 = vrot.slane %v3158, 4
        %v3161 = vshll.u32 %v2894, 16
        %v3163 = vrot.slane %v3161, 5
        %v3164 = vsel %vm1012, %v3159, %v3163
        %v3165 = vshrl.u32 %v2894, 16
        %v3167 = vrot.slane %v3165, 4
        %v3168 = vor.u32 %v3167, %v3163
        %v3169 = vrot.slane %v3168, 4
        %v3171 = vshll.u32 %v2895, 16
        %v3173 = vrot.slane %v3171, 5
        %v3174 = vsel %vm1012, %v3169, %v3173
        %v3176 = vshrl.u32 %v2896, 16
        %v3178 = vrot.slane %v3176, 4
        %v3179 = vshll.u32 %v2896, 16
        %v3181 = vrot.slane %v3179, 5
        %v3182 = vor.u32 %v3178, %v3181
        %v3183 = vrot.slane %v3182, 4
        %v3185 = vshll.u32 %v2897, 16
        %v3187 = vrot.slane %v3185, 5
        %v3188 = vsel %vm1012, %v3183, %v3187
        %v3189 = vshrl.u32 %v2897, 16
        %v3191 = vrot.slane %v3189, 4
        %v3192 = vor.u32 %v3191, %v3187
        %v3193 = vrot.slane %v3192, 4
        %v3195 = vshll.u32 %v2898, 16
        %v3197 = vrot.slane %v3195, 5
        %v3198 = vsel %vm1012, %v3193, %v3197
        %v3200 = vshrl.u32 %v2899, 16
        %v3202 = vrot.slane %v3200, 4
        %v3203 = vshll.u32 %v2899, 16
        %v3205 = vrot.slane %v3203, 5
        %v3206 = vor.u32 %v3202, %v3205
        %v3207 = vrot.slane %v3206, 4
        %v3209 = vshll.u32 %v2900, 16
        %v3211 = vrot.slane %v3209, 5
        %v3212 = vsel %vm1012, %v3207, %v3211
        %v3213 = vshrl.u32 %v2900, 16
        %v3215 = vrot.slane %v3213, 4
        %v3216 = vor.u32 %v3215, %v3211
        %v3217 = vrot.slane %v3216, 4
        %v3219 = vshll.u32 %v2901, 16
        %v3221 = vrot.slane %v3219, 5
        %v3222 = vsel %vm1012, %v3217, %v3221
        %v3224 = vshrl.u32 %v2902, 16
        %v3226 = vrot.slane %v3224, 4
        %v3227 = vshll.u32 %v2902, 16
        %v3229 = vrot.slane %v3227, 5
        %v3230 = vor.u32 %v3226, %v3229
        %v3231 = vrot.slane %v3230, 4
        %v3233 = vshll.u32 %v2903, 16
        %v3235 = vrot.slane %v3233, 5
        %v3236 = vsel %vm1012, %v3231, %v3235
        %v3237 = vshrl.u32 %v2903, 16
        %v3239 = vrot.slane %v3237, 4
        %v3240 = vor.u32 %v3239, %v3235
        %v3241 = vrot.slane %v3240, 4
        %v3243 = vshll.u32 %v2904, 16
        %v3245 = vrot.slane %v3243, 5
        %v3246 = vsel %vm1012, %v3241, %v3245
        %v3248 = vshrl.u32 %v2905, 16
        %v3250 = vrot.slane %v3248, 4
        %v3251 = vshll.u32 %v2905, 16
        %v3253 = vrot.slane %v3251, 5
        %v3254 = vor.u32 %v3250, %v3253
        %v3255 = vrot.slane %v3254, 4
        %v3257 = vshll.u32 %v2906, 16
        %v3259 = vrot.slane %v3257, 5
        %v3260 = vsel %vm1012, %v3255, %v3259
        %v3261 = vshrl.u32 %v2906, 16
        %v3263 = vrot.slane %v3261, 4
        %v3264 = vor.u32 %v3263, %v3259
        %v3265 = vrot.slane %v3264, 4
        %v3267 = vshll.u32 %v2907, 16
        %v3269 = vrot.slane %v3267, 5
        %v3270 = vsel %vm1012, %v3265, %v3269
        %v3272 = vshrl.u32 %v2908, 16
        %v3274 = vrot.slane %v3272, 4
        %v3275 = vshll.u32 %v2908, 16
        %v3277 = vrot.slane %v3275, 5
        %v3278 = vor.u32 %v3274, %v3277
        %v3279 = vrot.slane %v3278, 4
        %v3281 = vshll.u32 %v2909, 16
        %v3283 = vrot.slane %v3281, 5
        %v3284 = vsel %vm1012, %v3279, %v3283
        %v3285 = vshrl.u32 %v2909, 16
        %v3287 = vrot.slane %v3285, 4
        %v3288 = vor.u32 %v3287, %v3283
        %v3289 = vrot.slane %v3288, 4
        %v3291 = vshll.u32 %v2910, 16
        %v3293 = vrot.slane %v3291, 5
        %v3294 = vsel %vm1012, %v3289, %v3293
        %s3295 = scalar_lea.vmem [#allocation6], 256
        %v3296 = vld [vmem:[%s3295] sm:$0xf]
        %v3297 = vld [vmem:[%s3295 + $0x4] sm:$0xf]
        %v3298 = vld [vmem:[%s3295 + $0x8] sm:$0xf]
        %v3299 = vld [vmem:[%s3295 + $0xc] sm:$0xf]
        %v3300 = vld [vmem:[%s3295 + $0x10] sm:$0xf]
        %v3301 = vld [vmem:[%s3295 + $0x14] sm:$0xf]
        %v3302 = vld [vmem:[%s3295 + $0x18] sm:$0xf]
        %v3303 = vld [vmem:[%s3295 + $0x1c] sm:$0xf]
        %v3304 = vld [vmem:[%s3295 + $0x20] sm:$0xf]
        %v3305 = vld [vmem:[%s3295 + $0x24] sm:$0xf]
        %v3306 = vld [vmem:[%s3295 + $0x28] sm:$0xf]
        %v3307 = vld [vmem:[%s3295 + $0x2c] sm:$0xf]
        %v3308 = vld [vmem:[%s3295 + $0x30] sm:$0xf]
        %v3309 = vld [vmem:[%s3295 + $0x34] sm:$0xf]
        %v3310 = vld [vmem:[%s3295 + $0x38] sm:$0xf]
        %v3311 = vld [vmem:[%s3295 + $0x3c] sm:$0xf]
        %v3312 = vunpack.c.l.b16 %v2924
        %v3313 = vunpack.c.l.b16 %v2934
        %v3314 = vunpack.c.l.b16 %v2948
        %v3315 = vunpack.c.l.b16 %v2958
        %v3316 = vunpack.c.l.b16 %v2972
        %v3317 = vunpack.c.l.b16 %v2982
        %v3318 = vunpack.c.l.b16 %v2996
        %v3319 = vunpack.c.l.b16 %v3006
        %v3320 = vunpack.c.l.b16 %v3020
        %v3321 = vunpack.c.l.b16 %v3030
        %v3322 = vunpack.c.l.b16 %v3044
        %v3323 = vunpack.c.l.b16 %v3054
        %v3324 = vunpack.c.l.b16 %v3068
        %v3325 = vunpack.c.l.b16 %v3078
        %v3326 = vunpack.c.l.b16 %v3092
        %v3327 = vunpack.c.l.b16 %v3102
        %v3328 = vunpack.c.l.b16 %v3116
        %v3329 = vunpack.c.l.b16 %v3126
        %v3330 = vunpack.c.l.b16 %v3140
        %v3331 = vunpack.c.l.b16 %v3150
        %v3332 = vunpack.c.l.b16 %v3164
        %v3333 = vunpack.c.l.b16 %v3174
        %v3334 = vunpack.c.l.b16 %v3188
        %v3335 = vunpack.c.l.b16 %v3198
        %v3336 = vunpack.c.l.b16 %v3212
        %v3337 = vunpack.c.l.b16 %v3222
        %v3338 = vunpack.c.l.b16 %v3236
        %v3339 = vunpack.c.l.b16 %v3246
        %v3340 = vunpack.c.l.b16 %v3260
        %v3341 = vunpack.c.l.b16 %v3270
        %v3342 = vunpack.c.l.b16 %v3284
        %v3343 = vunpack.c.l.b16 %v3294
        %v3344 = vpack.c.b16 %v3313, %v3312
        %v3345 = vpack.c.b16 %v3315, %v3314
        %v3346 = vpack.c.b16 %v3317, %v3316
        %v3347 = vpack.c.b16 %v3319, %v3318
        %v3348 = vpack.c.b16 %v3321, %v3320
        %v3349 = vpack.c.b16 %v3323, %v3322
        %v3350 = vpack.c.b16 %v3325, %v3324
        %v3351 = vpack.c.b16 %v3327, %v3326
        %v3352 = vpack.c.b16 %v3329, %v3328
        %v3353 = vpack.c.b16 %v3331, %v3330
        %v3354 = vpack.c.b16 %v3333, %v3332
        %v3355 = vpack.c.b16 %v3335, %v3334
        %v3356 = vpack.c.b16 %v3337, %v3336
        %v3357 = vpack.c.b16 %v3339, %v3338
        %v3358 = vpack.c.b16 %v3341, %v3340
        %v3359 = vpack.c.b16 %v3343, %v3342
        %v3392 = vunpack.c.l.b16 %v3296
        %v3393 = vunpack.c.l.b16 %v3297
        %v3394 = vunpack.c.l.b16 %v3298
        %v3395 = vunpack.c.l.b16 %v3299
        %v3396 = vunpack.c.l.b16 %v3300
        %v3397 = vunpack.c.l.b16 %v3301
        %v3398 = vunpack.c.l.b16 %v3302
        %v3399 = vunpack.c.l.b16 %v3303
        %v3400 = vunpack.c.l.b16 %v3304
        %v3401 = vunpack.c.l.b16 %v3305
        %v3402 = vunpack.c.l.b16 %v3306
        %v3403 = vunpack.c.l.b16 %v3307
        %v3404 = vunpack.c.l.b16 %v3308
        %v3405 = vunpack.c.l.b16 %v3309
        %v3406 = vunpack.c.l.b16 %v3310
        %v3407 = vunpack.c.l.b16 %v3311
        %v3408 = vpack.c.b16 %v3393, %v3392
        %v3409 = vpack.c.b16 %v3395, %v3394
        %v3410 = vpack.c.b16 %v3397, %v3396
        %v3411 = vpack.c.b16 %v3399, %v3398
        %v3412 = vpack.c.b16 %v3401, %v3400
        %v3413 = vpack.c.b16 %v3403, %v3402
        %v3414 = vpack.c.b16 %v3405, %v3404
        %v3415 = vpack.c.b16 %v3407, %v3406
        %3424 = vmatprep.subr.bf16.mxu0 0
        %3425 = vmatpush1.bf16.msra.mxu0 %v3415
        %3426 = vmatprep.subr.bf16.mxu0 0
        %3427 = vmatpush1.bf16.msra.mxu0 %v3414
        %3428 = vmatprep.subr.bf16.mxu0 0
        %3429 = vmatpush1.bf16.msra.mxu0 %v3413
        %3430 = vmatprep.subr.bf16.mxu0 0
        %3431 = vmatpush1.bf16.msra.mxu0 %v3412
        %3432 = vmatprep.subr.bf16.mxu0 0
        %3433 = vmatpush1.bf16.msra.mxu0 %v3411
        %3434 = vmatprep.subr.bf16.mxu0 0
        %3435 = vmatpush1.bf16.msra.mxu0 %v3410
        %3436 = vmatprep.subr.bf16.mxu0 0
        %3437 = vmatpush1.bf16.msra.mxu0 %v3409
        %3438 = vmatprep.subr.bf16.mxu0 0
        %3439 = vmatpush1.bf16.msra.mxu0 %v3408
        %3440 = vmatprep.subr.bf16.mxu0 0
        %3441 = vmatpush2.bf16.msra.mxu0 0
        %3442 = vmatprep.subr.bf16.mxu0 0
        %3443 = vmatpush2.bf16.msra.mxu0 0
        %3444 = vmatprep.subr.bf16.mxu0 0
        %3445 = vmatpush2.bf16.msra.mxu0 0
        %3446 = vmatprep.subr.bf16.mxu0 0
        %3447 = vmatpush2.bf16.msra.mxu0 0
        %3448 = vmatprep.subr.bf16.mxu0 0
        %3449 = vmatpush2.bf16.msra.mxu0 0
        %3450 = vmatprep.subr.bf16.mxu0 0
        %3451 = vmatpush2.bf16.msra.mxu0 0
        %3452 = vmatprep.subr.bf16.mxu0 0
        %3453 = vmatpush2.bf16.msra.mxu0 0
        %3454 = vmatprep.subr.bf16.mxu0 0
        %3455 = vmatpush2.bf16.msra.mxu0 0
        %3456 = vmatprep.mubr.bf16.mxu0 0
        %3457 = vmatmul.mubr.bf16.gmra.mxu0 %v3344
        %v3458 = vpop.f32.mrf.mxu0
        %v3459 = vadd.f32 0.0, %v3458
        %v3460 = vpop.f32.mrf.mxu0
        %v3461 = vpop.f32.mrf.mxu0
        %v3462 = vadd.f32 0.0, %v3461
        %v3463 = vpop.f32.mrf.mxu0
        %3464 = vmatprep.mubr.bf16.mxu0 0
        %3465 = vmatmul.mubr.bf16.gmra.mxu0 %v3345
        %v3466 = vpop.f32.mrf.mxu0
        %v3467 = vadd.f32 0.0, %v3466
        %v3468 = vpop.f32.mrf.mxu0
        %v3469 = vpop.f32.mrf.mxu0
        %v3470 = vadd.f32 0.0, %v3469
        %v3471 = vpop.f32.mrf.mxu0
        %3472 = vmatprep.mubr.bf16.mxu0 0
        %3473 = vmatmul.mubr.bf16.gmra.mxu0 %v3346
        %v3474 = vpop.f32.mrf.mxu0
        %v3475 = vadd.f32 0.0, %v3474
        %v3476 = vpop.f32.mrf.mxu0
        %v3477 = vpop.f32.mrf.mxu0
        %v3478 = vadd.f32 0.0, %v3477
        %v3479 = vpop.f32.mrf.mxu0
        %3480 = vmatprep.mubr.bf16.mxu0 0
        %3481 = vmatmul.mubr.bf16.gmra.mxu0 %v3347
        %v3482 = vpop.f32.mrf.mxu0
        %v3483 = vadd.f32 0.0, %v3482
        %v3484 = vpop.f32.mrf.mxu0
        %v3485 = vpop.f32.mrf.mxu0
        %v3486 = vadd.f32 0.0, %v3485
        %v3487 = vpop.f32.mrf.mxu0
        %3488 = vmatprep.mubr.bf16.mxu0 0
        %3489 = vmatmul.mubr.bf16.gmra.mxu0 %v3348
        %v3490 = vpop.f32.mrf.mxu0
        %v3491 = vadd.f32 0.0, %v3490
        %v3492 = vpop.f32.mrf.mxu0
        %v3493 = vpop.f32.mrf.mxu0
        %v3494 = vadd.f32 0.0, %v3493
        %v3495 = vpop.f32.mrf.mxu0
        %3496 = vmatprep.mubr.bf16.mxu0 0
        %3497 = vmatmul.mubr.bf16.gmra.mxu0 %v3349
        %v3498 = vpop.f32.mrf.mxu0
        %v3499 = vadd.f32 0.0, %v3498
        %v3500 = vpop.f32.mrf.mxu0
        %v3501 = vpop.f32.mrf.mxu0
        %v3502 = vadd.f32 0.0, %v3501
        %v3503 = vpop.f32.mrf.mxu0
        %3504 = vmatprep.mubr.bf16.mxu0 0
        %3505 = vmatmul.mubr.bf16.gmra.mxu0 %v3350
        %v3506 = vpop.f32.mrf.mxu0
        %v3507 = vadd.f32 0.0, %v3506
        %v3508 = vpop.f32.mrf.mxu0
        %v3509 = vpop.f32.mrf.mxu0
        %v3510 = vadd.f32 0.0, %v3509
        %v3511 = vpop.f32.mrf.mxu0
        %3512 = vmatprep.mubr.bf16.mxu0 0
        %3513 = vmatmul.mubr.bf16.gmra.mxu0 %v3351
        %v3514 = vpop.f32.mrf.mxu0
        %v3515 = vadd.f32 0.0, %v3514
        %v3516 = vpop.f32.mrf.mxu0
        %v3517 = vpop.f32.mrf.mxu0
        %v3518 = vadd.f32 0.0, %v3517
        %v3519 = vpop.f32.mrf.mxu0
        %3520 = vmatprep.mubr.bf16.mxu0 0
        %3521 = vmatmul.mubr.bf16.gmra.mxu0 %v3352
        %v3522 = vpop.f32.mrf.mxu0
        %v3523 = vadd.f32 0.0, %v3522
        %v3524 = vpop.f32.mrf.mxu0
        %v3525 = vpop.f32.mrf.mxu0
        %v3526 = vadd.f32 0.0, %v3525
        %v3527 = vpop.f32.mrf.mxu0
        %3528 = vmatprep.mubr.bf16.mxu0 0
        %3529 = vmatmul.mubr.bf16.gmra.mxu0 %v3353
        %v3530 = vpop.f32.mrf.mxu0
        %v3531 = vadd.f32 0.0, %v3530
        %v3532 = vpop.f32.mrf.mxu0
        %v3533 = vpop.f32.mrf.mxu0
        %v3534 = vadd.f32 0.0, %v3533
        %v3535 = vpop.f32.mrf.mxu0
        %3536 = vmatprep.mubr.bf16.mxu0 0
        %3537 = vmatmul.mubr.bf16.gmra.mxu0 %v3354
        %v3538 = vpop.f32.mrf.mxu0
        %v3539 = vadd.f32 0.0, %v3538
        %v3540 = vpop.f32.mrf.mxu0
        %v3541 = vpop.f32.mrf.mxu0
        %v3542 = vadd.f32 0.0, %v3541
        %v3543 = vpop.f32.mrf.mxu0
        %3544 = vmatprep.mubr.bf16.mxu0 0
        %3545 = vmatmul.mubr.bf16.gmra.mxu0 %v3355
        %v3546 = vpop.f32.mrf.mxu0
        %v3547 = vadd.f32 0.0, %v3546
        %v3548 = vpop.f32.mrf.mxu0
        %v3549 = vpop.f32.mrf.mxu0
        %v3550 = vadd.f32 0.0, %v3549
        %v3551 = vpop.f32.mrf.mxu0
        %3552 = vmatprep.mubr.bf16.mxu0 0
        %3553 = vmatmul.mubr.bf16.gmra.mxu0 %v3356
        %v3554 = vpop.f32.mrf.mxu0
        %v3555 = vadd.f32 0.0, %v3554
        %v3556 = vpop.f32.mrf.mxu0
        %v3557 = vpop.f32.mrf.mxu0
        %v3558 = vadd.f32 0.0, %v3557
        %v3559 = vpop.f32.mrf.mxu0
        %3560 = vmatprep.mubr.bf16.mxu0 0
        %3561 = vmatmul.mubr.bf16.gmra.mxu0 %v3357
        %v3562 = vpop.f32.mrf.mxu0
        %v3563 = vadd.f32 0.0, %v3562
        %v3564 = vpop.f32.mrf.mxu0
        %v3565 = vpop.f32.mrf.mxu0
        %v3566 = vadd.f32 0.0, %v3565
        %v3567 = vpop.f32.mrf.mxu0
        %3568 = vmatprep.mubr.bf16.mxu0 0
        %3569 = vmatmul.mubr.bf16.gmra.mxu0 %v3358
        %v3570 = vpop.f32.mrf.mxu0
        %v3571 = vadd.f32 0.0, %v3570
        %v3572 = vpop.f32.mrf.mxu0
        %v3573 = vpop.f32.mrf.mxu0
        %v3574 = vadd.f32 0.0, %v3573
        %v3575 = vpop.f32.mrf.mxu0
        %3576 = vmatprep.mubr.bf16.mxu0 0
        %3577 = vmatmul.mubr.bf16.gmra.mxu0 %v3359
        %v3578 = vpop.f32.mrf.mxu0
        %v3579 = vadd.f32 0.0, %v3578
        %v3580 = vpop.f32.mrf.mxu0
        %v3581 = vpop.f32.mrf.mxu0
        %v3582 = vadd.f32 0.0, %v3581
        %v3583 = vpop.f32.mrf.mxu0
        %3584 = vdwg.mxu0
        %v3585 = vadd.f32 %v2831, %v3459
        %v3586 = vadd.f32 %v2832, %v3462
        %v3587 = vadd.f32 %v2833, %v3467
        %v3588 = vadd.f32 %v2834, %v3470
        %v3589 = vadd.f32 %v2835, %v3475
        %v3590 = vadd.f32 %v2836, %v3478
        %v3591 = vadd.f32 %v2837, %v3483
        %v3592 = vadd.f32 %v2838, %v3486
        %v3593 = vadd.f32 %v2839, %v3491
        %v3594 = vadd.f32 %v2840, %v3494
        %v3595 = vadd.f32 %v2841, %v3499
        %v3596 = vadd.f32 %v2842, %v3502
        %v3597 = vadd.f32 %v2843, %v3507
        %v3598 = vadd.f32 %v2844, %v3510
        %v3599 = vadd.f32 %v2845, %v3515
        %v3600 = vadd.f32 %v2846, %v3518
        %v3601 = vadd.f32 %v2847, %v3523
        %v3602 = vadd.f32 %v2848, %v3526
        %v3603 = vadd.f32 %v2849, %v3531
        %v3604 = vadd.f32 %v2850, %v3534
        %v3605 = vadd.f32 %v2851, %v3539
        %v3606 = vadd.f32 %v2852, %v3542
        %v3607 = vadd.f32 %v2853, %v3547
        %v3608 = vadd.f32 %v2854, %v3550
        %v3609 = vadd.f32 %v2855, %v3555
        %v3610 = vadd.f32 %v2856, %v3558
        %v3611 = vadd.f32 %v2857, %v3563
        %v3612 = vadd.f32 %v2858, %v3566
        %v3613 = vadd.f32 %v2859, %v3571
        %v3614 = vadd.f32 %v2860, %v3574
        %v3615 = vadd.f32 %v2861, %v3579
        %v3616 = vadd.f32 %v2862, %v3582
        %v3617 = vld [vmem:[%s280] sm:$0xe]
        %v3618 = vld [vmem:[%s280 + $0xc] sm:$0xe]
        %v3619 = vld [vmem:[%s280 + $0x18] sm:$0xe]
        %v3620 = vld [vmem:[%s280 + $0x24] sm:$0xe]
        %v3621 = vld [vmem:[%s280 + $0x30] sm:$0xe]
        %v3622 = vld [vmem:[%s280 + $0x3c] sm:$0xe]
        %v3623 = vld [vmem:[%s280 + $0x48] sm:$0xe]
        %v3624 = vld [vmem:[%s280 + $0x54] sm:$0xe]
        %v3625 = vld [vmem:[%s280 + $0x60] sm:$0xe]
        %v3626 = vld [vmem:[%s280 + $0x6c] sm:$0xe]
        %v3627 = vld [vmem:[%s280 + $0x78] sm:$0xe]
        %v3628 = vld [vmem:[%s280 + $0x84] sm:$0xe]
        %v3629 = vld [vmem:[%s280 + $0x90] sm:$0xe]
        %v3630 = vld [vmem:[%s280 + $0x9c] sm:$0xe]
        %v3631 = vld [vmem:[%s280 + $0xa8] sm:$0xe]
        %v3632 = vld [vmem:[%s280 + $0xb4] sm:$0xe]
        %v3681 = vrot.slane %v3617, 5
        %v3682 = vrot.slane %v3681, 4
        %v3683 = vrot.slane %v2864, 5
        %v3684 = vsel %vm2042, %v3682, %v3683
        %v3685 = vrot.slane %v3683, 4
        %v3686 = vrot.slane %v2865, 5
        %v3687 = vsel %vm2042, %v3685, %v3686
        %v3688 = vrot.slane %v3618, 5
        %v3689 = vrot.slane %v3688, 4
        %v3690 = vrot.slane %v2867, 5
        %v3691 = vsel %vm2042, %v3689, %v3690
        %v3692 = vrot.slane %v3690, 4
        %v3693 = vrot.slane %v2868, 5
        %v3694 = vsel %vm2042, %v3692, %v3693
        %v3695 = vrot.slane %v3619, 5
        %v3696 = vrot.slane %v3695, 4
        %v3697 = vrot.slane %v2870, 5
        %v3698 = vsel %vm2042, %v3696, %v3697
        %v3699 = vrot.slane %v3697, 4
        %v3700 = vrot.slane %v2871, 5
        %v3701 = vsel %vm2042, %v3699, %v3700
        %v3702 = vrot.slane %v3620, 5
        %v3703 = vrot.slane %v3702, 4
        %v3704 = vrot.slane %v2873, 5
        %v3705 = vsel %vm2042, %v3703, %v3704
        %v3706 = vrot.slane %v3704, 4
        %v3707 = vrot.slane %v2874, 5
        %v3708 = vsel %vm2042, %v3706, %v3707
        %v3709 = vrot.slane %v3621, 5
        %v3710 = vrot.slane %v3709, 4
        %v3711 = vrot.slane %v2876, 5
        %v3712 = vsel %vm2042, %v3710, %v3711
        %v3713 = vrot.slane %v3711, 4
        %v3714 = vrot.slane %v2877, 5
        %v3715 = vsel %vm2042, %v3713, %v3714
        %v3716 = vrot.slane %v3622, 5
        %v3717 = vrot.slane %v3716, 4
        %v3718 = vrot.slane %v2879, 5
        %v3719 = vsel %vm2042, %v3717, %v3718
        %v3720 = vrot.slane %v3718, 4
        %v3721 = vrot.slane %v2880, 5
        %v3722 = vsel %vm2042, %v3720, %v3721
        %v3723 = vrot.slane %v3623, 5
        %v3724 = vrot.slane %v3723, 4
        %v3725 = vrot.slane %v2882, 5
        %v3726 = vsel %vm2042, %v3724, %v3725
        %v3727 = vrot.slane %v3725, 4
        %v3728 = vrot.slane %v2883, 5
        %v3729 = vsel %vm2042, %v3727, %v3728
        %v3730 = vrot.slane %v3624, 5
        %v3731 = vrot.slane %v3730, 4
        %v3732 = vrot.slane %v2885, 5
        %v3733 = vsel %vm2042, %v3731, %v3732
        %v3734 = vrot.slane %v3732, 4
        %v3735 = vrot.slane %v2886, 5
        %v3736 = vsel %vm2042, %v3734, %v3735
        %v3737 = vrot.slane %v3625, 5
        %v3738 = vrot.slane %v3737, 4
        %v3739 = vrot.slane %v2888, 5
        %v3740 = vsel %vm2042, %v3738, %v3739
        %v3741 = vrot.slane %v3739, 4
        %v3742 = vrot.slane %v2889, 5
        %v3743 = vsel %vm2042, %v3741, %v3742
        %v3744 = vrot.slane %v3626, 5
        %v3745 = vrot.slane %v3744, 4
        %v3746 = vrot.slane %v2891, 5
        %v3747 = vsel %vm2042, %v3745, %v3746
        %v3748 = vrot.slane %v3746, 4
        %v3749 = vrot.slane %v2892, 5
        %v3750 = vsel %vm2042, %v3748, %v3749
        %v3751 = vrot.slane %v3627, 5
        %v3752 = vrot.slane %v3751, 4
        %v3753 = vrot.slane %v2894, 5
        %v3754 = vsel %vm2042, %v3752, %v3753
        %v3755 = vrot.slane %v3753, 4
        %v3756 = vrot.slane %v2895, 5
        %v3757 = vsel %vm2042, %v3755, %v3756
        %v3758 = vrot.slane %v3628, 5
        %v3759 = vrot.slane %v3758, 4
        %v3760 = vrot.slane %v2897, 5
        %v3761 = vsel %vm2042, %v3759, %v3760
        %v3762 = vrot.slane %v3760, 4
        %v3763 = vrot.slane %v2898, 5
        %v3764 = vsel %vm2042, %v3762, %v3763
        %v3765 = vrot.slane %v3629, 5
        %v3766 = vrot.slane %v3765, 4
        %v3767 = vrot.slane %v2900, 5
        %v3768 = vsel %vm2042, %v3766, %v3767
        %v3769 = vrot.slane %v3767, 4
        %v3770 = vrot.slane %v2901, 5
        %v3771 = vsel %vm2042, %v3769, %v3770
        %v3772 = vrot.slane %v3630, 5
        %v3773 = vrot.slane %v3772, 4
        %v3774 = vrot.slane %v2903, 5
        %v3775 = vsel %vm2042, %v3773, %v3774
        %v3776 = vrot.slane %v3774, 4
        %v3777 = vrot.slane %v2904, 5
        %v3778 = vsel %vm2042, %v3776, %v3777
        %v3779 = vrot.slane %v3631, 5
        %v3780 = vrot.slane %v3779, 4
        %v3781 = vrot.slane %v2906, 5
        %v3782 = vsel %vm2042, %v3780, %v3781
        %v3783 = vrot.slane %v3781, 4
        %v3784 = vrot.slane %v2907, 5
        %v3785 = vsel %vm2042, %v3783, %v3784
        %v3786 = vrot.slane %v3632, 5
        %v3787 = vrot.slane %v3786, 4
        %v3788 = vrot.slane %v2909, 5
        %v3789 = vsel %vm2042, %v3787, %v3788
        %v3790 = vrot.slane %v3788, 4
        %v3791 = vrot.slane %v2910, 5
        %v3792 = vsel %vm2042, %v3790, %v3791
        %s3793 = scalar_lea.vmem [#allocation6], 320
        %v3794 = vld [vmem:[%s3793] sm:$0xf]
        %v3795 = vld [vmem:[%s3793 + $0x4] sm:$0xf]
        %v3796 = vld [vmem:[%s3793 + $0x8] sm:$0xf]
        %v3797 = vld [vmem:[%s3793 + $0xc] sm:$0xf]
        %v3798 = vld [vmem:[%s3793 + $0x10] sm:$0xf]
        %v3799 = vld [vmem:[%s3793 + $0x14] sm:$0xf]
        %v3800 = vld [vmem:[%s3793 + $0x18] sm:$0xf]
        %v3801 = vld [vmem:[%s3793 + $0x1c] sm:$0xf]
        %v3802 = vld [vmem:[%s3793 + $0x20] sm:$0xf]
        %v3803 = vld [vmem:[%s3793 + $0x24] sm:$0xf]
        %v3804 = vld [vmem:[%s3793 + $0x28] sm:$0xf]
        %v3805 = vld [vmem:[%s3793 + $0x2c] sm:$0xf]
        %v3806 = vld [vmem:[%s3793 + $0x30] sm:$0xf]
        %v3807 = vld [vmem:[%s3793 + $0x34] sm:$0xf]
        %v3808 = vld [vmem:[%s3793 + $0x38] sm:$0xf]
        %v3809 = vld [vmem:[%s3793 + $0x3c] sm:$0xf]
        %v3810 = vunpack.c.l.b16 %v3684
        %v3811 = vunpack.c.l.b16 %v3687
        %v3812 = vunpack.c.l.b16 %v3691
        %v3813 = vunpack.c.l.b16 %v3694
        %v3814 = vunpack.c.l.b16 %v3698
        %v3815 = vunpack.c.l.b16 %v3701
        %v3816 = vunpack.c.l.b16 %v3705
        %v3817 = vunpack.c.l.b16 %v3708
        %v3818 = vunpack.c.l.b16 %v3712
        %v3819 = vunpack.c.l.b16 %v3715
        %v3820 = vunpack.c.l.b16 %v3719
        %v3821 = vunpack.c.l.b16 %v3722
        %v3822 = vunpack.c.l.b16 %v3726
        %v3823 = vunpack.c.l.b16 %v3729
        %v3824 = vunpack.c.l.b16 %v3733
        %v3825 = vunpack.c.l.b16 %v3736
        %v3826 = vunpack.c.l.b16 %v3740
        %v3827 = vunpack.c.l.b16 %v3743
        %v3828 = vunpack.c.l.b16 %v3747
        %v3829 = vunpack.c.l.b16 %v3750
        %v3830 = vunpack.c.l.b16 %v3754
        %v3831 = vunpack.c.l.b16 %v3757
        %v3832 = vunpack.c.l.b16 %v3761
        %v3833 = vunpack.c.l.b16 %v3764
        %v3834 = vunpack.c.l.b16 %v3768
        %v3835 = vunpack.c.l.b16 %v3771
        %v3836 = vunpack.c.l.b16 %v3775
        %v3837 = vunpack.c.l.b16 %v3778
        %v3838 = vunpack.c.l.b16 %v3782
        %v3839 = vunpack.c.l.b16 %v3785
        %v3840 = vunpack.c.l.b16 %v3789
        %v3841 = vunpack.c.l.b16 %v3792
        %v3842 = vpack.c.b16 %v3811, %v3810
        %v3843 = vpack.c.b16 %v3813, %v3812
        %v3844 = vpack.c.b16 %v3815, %v3814
        %v3845 = vpack.c.b16 %v3817, %v3816
        %v3846 = vpack.c.b16 %v3819, %v3818
        %v3847 = vpack.c.b16 %v3821, %v3820
        %v3848 = vpack.c.b16 %v3823, %v3822
        %v3849 = vpack.c.b16 %v3825, %v3824
        %v3850 = vpack.c.b16 %v3827, %v3826
        %v3851 = vpack.c.b16 %v3829, %v3828
        %v3852 = vpack.c.b16 %v3831, %v3830
        %v3853 = vpack.c.b16 %v3833, %v3832
        %v3854 = vpack.c.b16 %v3835, %v3834
        %v3855 = vpack.c.b16 %v3837, %v3836
        %v3856 = vpack.c.b16 %v3839, %v3838
        %v3857 = vpack.c.b16 %v3841, %v3840
        %v3890 = vunpack.c.l.b16 %v3794
        %v3891 = vunpack.c.l.b16 %v3795
        %v3892 = vunpack.c.l.b16 %v3796
        %v3893 = vunpack.c.l.b16 %v3797
        %v3894 = vunpack.c.l.b16 %v3798
        %v3895 = vunpack.c.l.b16 %v3799
        %v3896 = vunpack.c.l.b16 %v3800
        %v3897 = vunpack.c.l.b16 %v3801
        %v3898 = vunpack.c.l.b16 %v3802
        %v3899 = vunpack.c.l.b16 %v3803
        %v3900 = vunpack.c.l.b16 %v3804
        %v3901 = vunpack.c.l.b16 %v3805
        %v3902 = vunpack.c.l.b16 %v3806
        %v3903 = vunpack.c.l.b16 %v3807
        %v3904 = vunpack.c.l.b16 %v3808
        %v3905 = vunpack.c.l.b16 %v3809
        %v3906 = vpack.c.b16 %v3891, %v3890
        %v3907 = vpack.c.b16 %v3893, %v3892
        %v3908 = vpack.c.b16 %v3895, %v3894
        %v3909 = vpack.c.b16 %v3897, %v3896
        %v3910 = vpack.c.b16 %v3899, %v3898
        %v3911 = vpack.c.b16 %v3901, %v3900
        %v3912 = vpack.c.b16 %v3903, %v3902
        %v3913 = vpack.c.b16 %v3905, %v3904
        %3922 = vmatprep.subr.bf16.mxu0 0
        %3923 = vmatpush1.bf16.msra.mxu0 %v3913
        %3924 = vmatprep.subr.bf16.mxu0 0
        %3925 = vmatpush1.bf16.msra.mxu0 %v3912
        %3926 = vmatprep.subr.bf16.mxu0 0
        %3927 = vmatpush1.bf16.msra.mxu0 %v3911
        %3928 = vmatprep.subr.bf16.mxu0 0
        %3929 = vmatpush1.bf16.msra.mxu0 %v3910
        %3930 = vmatprep.subr.bf16.mxu0 0
        %3931 = vmatpush1.bf16.msra.mxu0 %v3909
        %3932 = vmatprep.subr.bf16.mxu0 0
        %3933 = vmatpush1.bf16.msra.mxu0 %v3908
        %3934 = vmatprep.subr.bf16.mxu0 0
        %3935 = vmatpush1.bf16.msra.mxu0 %v3907
        %3936 = vmatprep.subr.bf16.mxu0 0
        %3937 = vmatpush1.bf16.msra.mxu0 %v3906
        %3938 = vmatprep.subr.bf16.mxu0 0
        %3939 = vmatpush2.bf16.msra.mxu0 0
        %3940 = vmatprep.subr.bf16.mxu0 0
        %3941 = vmatpush2.bf16.msra.mxu0 0
        %3942 = vmatprep.subr.bf16.mxu0 0
        %3943 = vmatpush2.bf16.msra.mxu0 0
        %3944 = vmatprep.subr.bf16.mxu0 0
        %3945 = vmatpush2.bf16.msra.mxu0 0
        %3946 = vmatprep.subr.bf16.mxu0 0
        %3947 = vmatpush2.bf16.msra.mxu0 0
        %3948 = vmatprep.subr.bf16.mxu0 0
        %3949 = vmatpush2.bf16.msra.mxu0 0
        %3950 = vmatprep.subr.bf16.mxu0 0
        %3951 = vmatpush2.bf16.msra.mxu0 0
        %3952 = vmatprep.subr.bf16.mxu0 0
        %3953 = vmatpush2.bf16.msra.mxu0 0
        %3954 = vmatprep.mubr.bf16.mxu0 0
        %3955 = vmatmul.mubr.bf16.gmra.mxu0 %v3842
        %v3956 = vpop.f32.mrf.mxu0
        %v3957 = vadd.f32 0.0, %v3956
        %v3958 = vpop.f32.mrf.mxu0
        %v3959 = vpop.f32.mrf.mxu0
        %v3960 = vadd.f32 0.0, %v3959
        %v3961 = vpop.f32.mrf.mxu0
        %3962 = vmatprep.mubr.bf16.mxu0 0
        %3963 = vmatmul.mubr.bf16.gmra.mxu0 %v3843
        %v3964 = vpop.f32.mrf.mxu0
        %v3965 = vadd.f32 0.0, %v3964
        %v3966 = vpop.f32.mrf.mxu0
        %v3967 = vpop.f32.mrf.mxu0
        %v3968 = vadd.f32 0.0, %v3967
        %v3969 = vpop.f32.mrf.mxu0
        %3970 = vmatprep.mubr.bf16.mxu0 0
        %3971 = vmatmul.mubr.bf16.gmra.mxu0 %v3844
        %v3972 = vpop.f32.mrf.mxu0
        %v3973 = vadd.f32 0.0, %v3972
        %v3974 = vpop.f32.mrf.mxu0
        %v3975 = vpop.f32.mrf.mxu0
        %v3976 = vadd.f32 0.0, %v3975
        %v3977 = vpop.f32.mrf.mxu0
        %3978 = vmatprep.mubr.bf16.mxu0 0
        %3979 = vmatmul.mubr.bf16.gmra.mxu0 %v3845
        %v3980 = vpop.f32.mrf.mxu0
        %v3981 = vadd.f32 0.0, %v3980
        %v3982 = vpop.f32.mrf.mxu0
        %v3983 = vpop.f32.mrf.mxu0
        %v3984 = vadd.f32 0.0, %v3983
        %v3985 = vpop.f32.mrf.mxu0
        %3986 = vmatprep.mubr.bf16.mxu0 0
        %3987 = vmatmul.mubr.bf16.gmra.mxu0 %v3846
        %v3988 = vpop.f32.mrf.mxu0
        %v3989 = vadd.f32 0.0, %v3988
        %v3990 = vpop.f32.mrf.mxu0
        %v3991 = vpop.f32.mrf.mxu0
        %v3992 = vadd.f32 0.0, %v3991
        %v3993 = vpop.f32.mrf.mxu0
        %3994 = vmatprep.mubr.bf16.mxu0 0
        %3995 = vmatmul.mubr.bf16.gmra.mxu0 %v3847
        %v3996 = vpop.f32.mrf.mxu0
        %v3997 = vadd.f32 0.0, %v3996
        %v3998 = vpop.f32.mrf.mxu0
        %v3999 = vpop.f32.mrf.mxu0
        %v4000 = vadd.f32 0.0, %v3999
        %v4001 = vpop.f32.mrf.mxu0
        %4002 = vmatprep.mubr.bf16.mxu0 0
        %4003 = vmatmul.mubr.bf16.gmra.mxu0 %v3848
        %v4004 = vpop.f32.mrf.mxu0
        %v4005 = vadd.f32 0.0, %v4004
        %v4006 = vpop.f32.mrf.mxu0
        %v4007 = vpop.f32.mrf.mxu0
        %v4008 = vadd.f32 0.0, %v4007
        %v4009 = vpop.f32.mrf.mxu0
        %4010 = vmatprep.mubr.bf16.mxu0 0
        %4011 = vmatmul.mubr.bf16.gmra.mxu0 %v3849
        %v4012 = vpop.f32.mrf.mxu0
        %v4013 = vadd.f32 0.0, %v4012
        %v4014 = vpop.f32.mrf.mxu0
        %v4015 = vpop.f32.mrf.mxu0
        %v4016 = vadd.f32 0.0, %v4015
        %v4017 = vpop.f32.mrf.mxu0
        %4018 = vmatprep.mubr.bf16.mxu0 0
        %4019 = vmatmul.mubr.bf16.gmra.mxu0 %v3850
        %v4020 = vpop.f32.mrf.mxu0
        %v4021 = vadd.f32 0.0, %v4020
        %v4022 = vpop.f32.mrf.mxu0
        %v4023 = vpop.f32.mrf.mxu0
        %v4024 = vadd.f32 0.0, %v4023
        %v4025 = vpop.f32.mrf.mxu0
        %4026 = vmatprep.mubr.bf16.mxu0 0
        %4027 = vmatmul.mubr.bf16.gmra.mxu0 %v3851
        %v4028 = vpop.f32.mrf.mxu0
        %v4029 = vadd.f32 0.0, %v4028
        %v4030 = vpop.f32.mrf.mxu0
        %v4031 = vpop.f32.mrf.mxu0
        %v4032 = vadd.f32 0.0, %v4031
        %v4033 = vpop.f32.mrf.mxu0
        %4034 = vmatprep.mubr.bf16.mxu0 0
        %4035 = vmatmul.mubr.bf16.gmra.mxu0 %v3852
        %v4036 = vpop.f32.mrf.mxu0
        %v4037 = vadd.f32 0.0, %v4036
        %v4038 = vpop.f32.mrf.mxu0
        %v4039 = vpop.f32.mrf.mxu0
        %v4040 = vadd.f32 0.0, %v4039
        %v4041 = vpop.f32.mrf.mxu0
        %4042 = vmatprep.mubr.bf16.mxu0 0
        %4043 = vmatmul.mubr.bf16.gmra.mxu0 %v3853
        %v4044 = vpop.f32.mrf.mxu0
        %v4045 = vadd.f32 0.0, %v4044
        %v4046 = vpop.f32.mrf.mxu0
        %v4047 = vpop.f32.mrf.mxu0
        %v4048 = vadd.f32 0.0, %v4047
        %v4049 = vpop.f32.mrf.mxu0
        %4050 = vmatprep.mubr.bf16.mxu0 0
        %4051 = vmatmul.mubr.bf16.gmra.mxu0 %v3854
        %v4052 = vpop.f32.mrf.mxu0
        %v4053 = vadd.f32 0.0, %v4052
        %v4054 = vpop.f32.mrf.mxu0
        %v4055 = vpop.f32.mrf.mxu0
        %v4056 = vadd.f32 0.0, %v4055
        %v4057 = vpop.f32.mrf.mxu0
        %4058 = vmatprep.mubr.bf16.mxu0 0
        %4059 = vmatmul.mubr.bf16.gmra.mxu0 %v3855
        %v4060 = vpop.f32.mrf.mxu0
        %v4061 = vadd.f32 0.0, %v4060
        %v4062 = vpop.f32.mrf.mxu0
        %v4063 = vpop.f32.mrf.mxu0
        %v4064 = vadd.f32 0.0, %v4063
        %v4065 = vpop.f32.mrf.mxu0
        %4066 = vmatprep.mubr.bf16.mxu0 0
        %4067 = vmatmul.mubr.bf16.gmra.mxu0 %v3856
        %v4068 = vpop.f32.mrf.mxu0
        %v4069 = vadd.f32 0.0, %v4068
        %v4070 = vpop.f32.mrf.mxu0
        %v4071 = vpop.f32.mrf.mxu0
        %v4072 = vadd.f32 0.0, %v4071
        %v4073 = vpop.f32.mrf.mxu0
        %4074 = vmatprep.mubr.bf16.mxu0 0
        %4075 = vmatmul.mubr.bf16.gmra.mxu0 %v3857
        %v4076 = vpop.f32.mrf.mxu0
        %v4077 = vadd.f32 0.0, %v4076
        %v4078 = vpop.f32.mrf.mxu0
        %v4079 = vpop.f32.mrf.mxu0
        %v4080 = vadd.f32 0.0, %v4079
        %v4081 = vpop.f32.mrf.mxu0
        %4082 = vdwg.mxu0
        %v4083 = vadd.f32 %v3585, %v3957
        %v4084 = vadd.f32 %v3586, %v3960
        %v4085 = vadd.f32 %v3587, %v3965
        %v4086 = vadd.f32 %v3588, %v3968
        %v4087 = vadd.f32 %v3589, %v3973
        %v4088 = vadd.f32 %v3590, %v3976
        %v4089 = vadd.f32 %v3591, %v3981
        %v4090 = vadd.f32 %v3592, %v3984
        %v4091 = vadd.f32 %v3593, %v3989
        %v4092 = vadd.f32 %v3594, %v3992
        %v4093 = vadd.f32 %v3595, %v3997
        %v4094 = vadd.f32 %v3596, %v4000
        %v4095 = vadd.f32 %v3597, %v4005
        %v4096 = vadd.f32 %v3598, %v4008
        %v4097 = vadd.f32 %v3599, %v4013
        %v4098 = vadd.f32 %v3600, %v4016
        %v4099 = vadd.f32 %v3601, %v4021
        %v4100 = vadd.f32 %v3602, %v4024
        %v4101 = vadd.f32 %v3603, %v4029
        %v4102 = vadd.f32 %v3604, %v4032
        %v4103 = vadd.f32 %v3605, %v4037
        %v4104 = vadd.f32 %v3606, %v4040
        %v4105 = vadd.f32 %v3607, %v4045
        %v4106 = vadd.f32 %v3608, %v4048
        %v4107 = vadd.f32 %v3609, %v4053
        %v4108 = vadd.f32 %v3610, %v4056
        %v4109 = vadd.f32 %v3611, %v4061
        %v4110 = vadd.f32 %v3612, %v4064
        %v4111 = vadd.f32 %v3613, %v4069
        %v4112 = vadd.f32 %v3614, %v4072
        %v4113 = vadd.f32 %v3615, %v4077
        %v4114 = vadd.f32 %v3616, %v4080
        %s4115 = scalar_lea.vmem [#allocation2], 24
        %v4116 = vld [vmem:[%s4115] sm:$0xf]
        %v4117 = vld [vmem:[%s4115 + $0x4] sm:$0xf]
        %v4118 = vld [vmem:[%s4115 + $0xc] sm:$0xf]
        %v4119 = vld [vmem:[%s4115 + $0x10] sm:$0xf]
        %v4120 = vld [vmem:[%s4115 + $0x18] sm:$0xf]
        %v4121 = vld [vmem:[%s4115 + $0x1c] sm:$0xf]
        %v4122 = vld [vmem:[%s4115 + $0x24] sm:$0xf]
        %v4123 = vld [vmem:[%s4115 + $0x28] sm:$0xf]
        %v4124 = vld [vmem:[%s4115 + $0x30] sm:$0xf]
        %v4125 = vld [vmem:[%s4115 + $0x34] sm:$0xf]
        %v4126 = vld [vmem:[%s4115 + $0x3c] sm:$0xf]
        %v4127 = vld [vmem:[%s4115 + $0x40] sm:$0xf]
        %v4128 = vld [vmem:[%s4115 + $0x48] sm:$0xf]
        %v4129 = vld [vmem:[%s4115 + $0x4c] sm:$0xf]
        %v4130 = vld [vmem:[%s4115 + $0x54] sm:$0xf]
        %v4131 = vld [vmem:[%s4115 + $0x58] sm:$0xf]
        %v4132 = vld [vmem:[%s4115 + $0x60] sm:$0xf]
        %v4133 = vld [vmem:[%s4115 + $0x64] sm:$0xf]
        %v4134 = vld [vmem:[%s4115 + $0x6c] sm:$0xf]
        %v4135 = vld [vmem:[%s4115 + $0x70] sm:$0xf]
        %v4136 = vld [vmem:[%s4115 + $0x78] sm:$0xf]
        %v4137 = vld [vmem:[%s4115 + $0x7c] sm:$0xf]
        %v4138 = vld [vmem:[%s4115 + $0x84] sm:$0xf]
        %v4139 = vld [vmem:[%s4115 + $0x88] sm:$0xf]
        %v4140 = vld [vmem:[%s4115 + $0x90] sm:$0xf]
        %v4141 = vld [vmem:[%s4115 + $0x94] sm:$0xf]
        %v4142 = vld [vmem:[%s4115 + $0x9c] sm:$0xf]
        %v4143 = vld [vmem:[%s4115 + $0xa0] sm:$0xf]
        %v4144 = vld [vmem:[%s4115 + $0xa8] sm:$0xf]
        %v4145 = vld [vmem:[%s4115 + $0xac] sm:$0xf]
        %v4146 = vld [vmem:[%s4115 + $0xb4] sm:$0xf]
        %v4147 = vld [vmem:[%s4115 + $0xb8] sm:$0xf]
        %s4148 = scalar_lea.vmem [#allocation6], 384
        %v4149 = vld [vmem:[%s4148] sm:$0xf]
        %v4150 = vld [vmem:[%s4148 + $0x4] sm:$0xf]
        %v4151 = vld [vmem:[%s4148 + $0x8] sm:$0xf]
        %v4152 = vld [vmem:[%s4148 + $0xc] sm:$0xf]
        %v4153 = vld [vmem:[%s4148 + $0x10] sm:$0xf]
        %v4154 = vld [vmem:[%s4148 + $0x14] sm:$0xf]
        %v4155 = vld [vmem:[%s4148 + $0x18] sm:$0xf]
        %v4156 = vld [vmem:[%s4148 + $0x1c] sm:$0xf]
        %v4157 = vld [vmem:[%s4148 + $0x20] sm:$0xf]
        %v4158 = vld [vmem:[%s4148 + $0x24] sm:$0xf]
        %v4159 = vld [vmem:[%s4148 + $0x28] sm:$0xf]
        %v4160 = vld [vmem:[%s4148 + $0x2c] sm:$0xf]
        %v4161 = vld [vmem:[%s4148 + $0x30] sm:$0xf]
        %v4162 = vld [vmem:[%s4148 + $0x34] sm:$0xf]
        %v4163 = vld [vmem:[%s4148 + $0x38] sm:$0xf]
        %v4164 = vld [vmem:[%s4148 + $0x3c] sm:$0xf]
        %v4197 = vunpack.c.l.b16 %v4116
        %v4198 = vunpack.c.l.b16 %v4117
        %v4199 = vunpack.c.l.b16 %v4118
        %v4200 = vunpack.c.l.b16 %v4119
        %v4201 = vunpack.c.l.b16 %v4120
        %v4202 = vunpack.c.l.b16 %v4121
        %v4203 = vunpack.c.l.b16 %v4122
        %v4204 = vunpack.c.l.b16 %v4123
        %v4205 = vunpack.c.l.b16 %v4124
        %v4206 = vunpack.c.l.b16 %v4125
        %v4207 = vunpack.c.l.b16 %v4126
        %v4208 = vunpack.c.l.b16 %v4127
        %v4209 = vunpack.c.l.b16 %v4128
        %v4210 = vunpack.c.l.b16 %v4129
        %v4211 = vunpack.c.l.b16 %v4130
        %v4212 = vunpack.c.l.b16 %v4131
        %v4213 = vunpack.c.l.b16 %v4132
        %v4214 = vunpack.c.l.b16 %v4133
        %v4215 = vunpack.c.l.b16 %v4134
        %v4216 = vunpack.c.l.b16 %v4135
        %v4217 = vunpack.c.l.b16 %v4136
        %v4218 = vunpack.c.l.b16 %v4137
        %v4219 = vunpack.c.l.b16 %v4138
        %v4220 = vunpack.c.l.b16 %v4139
        %v4221 = vunpack.c.l.b16 %v4140
        %v4222 = vunpack.c.l.b16 %v4141
        %v4223 = vunpack.c.l.b16 %v4142
        %v4224 = vunpack.c.l.b16 %v4143
        %v4225 = vunpack.c.l.b16 %v4144
        %v4226 = vunpack.c.l.b16 %v4145
        %v4227 = vunpack.c.l.b16 %v4146
        %v4228 = vunpack.c.l.b16 %v4147
        %v4229 = vpack.c.b16 %v4198, %v4197
        %v4230 = vpack.c.b16 %v4200, %v4199
        %v4231 = vpack.c.b16 %v4202, %v4201
        %v4232 = vpack.c.b16 %v4204, %v4203
        %v4233 = vpack.c.b16 %v4206, %v4205
        %v4234 = vpack.c.b16 %v4208, %v4207
        %v4235 = vpack.c.b16 %v4210, %v4209
        %v4236 = vpack.c.b16 %v4212, %v4211
        %v4237 = vpack.c.b16 %v4214, %v4213
        %v4238 = vpack.c.b16 %v4216, %v4215
        %v4239 = vpack.c.b16 %v4218, %v4217
        %v4240 = vpack.c.b16 %v4220, %v4219
        %v4241 = vpack.c.b16 %v4222, %v4221
        %v4242 = vpack.c.b16 %v4224, %v4223
        %v4243 = vpack.c.b16 %v4226, %v4225
        %v4244 = vpack.c.b16 %v4228, %v4227
        %v4277 = vunpack.c.l.b16 %v4149
        %v4278 = vunpack.c.l.b16 %v4150
        %v4279 = vunpack.c.l.b16 %v4151
        %v4280 = vunpack.c.l.b16 %v4152
        %v4281 = vunpack.c.l.b16 %v4153
        %v4282 = vunpack.c.l.b16 %v4154
        %v4283 = vunpack.c.l.b16 %v4155
        %v4284 = vunpack.c.l.b16 %v4156
        %v4285 = vunpack.c.l.b16 %v4157
        %v4286 = vunpack.c.l.b16 %v4158
        %v4287 = vunpack.c.l.b16 %v4159
        %v4288 = vunpack.c.l.b16 %v4160
        %v4289 = vunpack.c.l.b16 %v4161
        %v4290 = vunpack.c.l.b16 %v4162
        %v4291 = vunpack.c.l.b16 %v4163
        %v4292 = vunpack.c.l.b16 %v4164
        %v4293 = vpack.c.b16 %v4278, %v4277
        %v4294 = vpack.c.b16 %v4280, %v4279
        %v4295 = vpack.c.b16 %v4282, %v4281
        %v4296 = vpack.c.b16 %v4284, %v4283
        %v4297 = vpack.c.b16 %v4286, %v4285
        %v4298 = vpack.c.b16 %v4288, %v4287
        %v4299 = vpack.c.b16 %v4290, %v4289
        %v4300 = vpack.c.b16 %v4292, %v4291
        %4309 = vmatprep.subr.bf16.mxu0 0
        %4310 = vmatpush1.bf16.msra.mxu0 %v4300
        %4311 = vmatprep.subr.bf16.mxu0 0
        %4312 = vmatpush1.bf16.msra.mxu0 %v4299
        %4313 = vmatprep.subr.bf16.mxu0 0
        %4314 = vmatpush1.bf16.msra.mxu0 %v4298
        %4315 = vmatprep.subr.bf16.mxu0 0
        %4316 = vmatpush1.bf16.msra.mxu0 %v4297
        %4317 = vmatprep.subr.bf16.mxu0 0
        %4318 = vmatpush1.bf16.msra.mxu0 %v4296
        %4319 = vmatprep.subr.bf16.mxu0 0
        %4320 = vmatpush1.bf16.msra.mxu0 %v4295
        %4321 = vmatprep.subr.bf16.mxu0 0
        %4322 = vmatpush1.bf16.msra.mxu0 %v4294
        %4323 = vmatprep.subr.bf16.mxu0 0
        %4324 = vmatpush1.bf16.msra.mxu0 %v4293
        %4325 = vmatprep.subr.bf16.mxu0 0
        %4326 = vmatpush2.bf16.msra.mxu0 0
        %4327 = vmatprep.subr.bf16.mxu0 0
        %4328 = vmatpush2.bf16.msra.mxu0 0
        %4329 = vmatprep.subr.bf16.mxu0 0
        %4330 = vmatpush2.bf16.msra.mxu0 0
        %4331 = vmatprep.subr.bf16.mxu0 0
        %4332 = vmatpush2.bf16.msra.mxu0 0
        %4333 = vmatprep.subr.bf16.mxu0 0
        %4334 = vmatpush2.bf16.msra.mxu0 0
        %4335 = vmatprep.subr.bf16.mxu0 0
        %4336 = vmatpush2.bf16.msra.mxu0 0
        %4337 = vmatprep.subr.bf16.mxu0 0
        %4338 = vmatpush2.bf16.msra.mxu0 0
        %4339 = vmatprep.subr.bf16.mxu0 0
        %4340 = vmatpush2.bf16.msra.mxu0 0
        %4341 = vmatprep.mubr.bf16.mxu0 0
        %4342 = vmatmul.mubr.bf16.gmra.mxu0 %v4229
        %v4343 = vpop.f32.mrf.mxu0
        %v4344 = vadd.f32 0.0, %v4343
        %v4345 = vpop.f32.mrf.mxu0
        %v4346 = vpop.f32.mrf.mxu0
        %v4347 = vadd.f32 0.0, %v4346
        %v4348 = vpop.f32.mrf.mxu0
        %4349 = vmatprep.mubr.bf16.mxu0 0
        %4350 = vmatmul.mubr.bf16.gmra.mxu0 %v4230
        %v4351 = vpop.f32.mrf.mxu0
        %v4352 = vadd.f32 0.0, %v4351
        %v4353 = vpop.f32.mrf.mxu0
        %v4354 = vpop.f32.mrf.mxu0
        %v4355 = vadd.f32 0.0, %v4354
        %v4356 = vpop.f32.mrf.mxu0
        %4357 = vmatprep.mubr.bf16.mxu0 0
        %4358 = vmatmul.mubr.bf16.gmra.mxu0 %v4231
        %v4359 = vpop.f32.mrf.mxu0
        %v4360 = vadd.f32 0.0, %v4359
        %v4361 = vpop.f32.mrf.mxu0
        %v4362 = vpop.f32.mrf.mxu0
        %v4363 = vadd.f32 0.0, %v4362
        %v4364 = vpop.f32.mrf.mxu0
        %4365 = vmatprep.mubr.bf16.mxu0 0
        %4366 = vmatmul.mubr.bf16.gmra.mxu0 %v4232
        %v4367 = vpop.f32.mrf.mxu0
        %v4368 = vadd.f32 0.0, %v4367
        %v4369 = vpop.f32.mrf.mxu0
        %v4370 = vpop.f32.mrf.mxu0
        %v4371 = vadd.f32 0.0, %v4370
        %v4372 = vpop.f32.mrf.mxu0
        %4373 = vmatprep.mubr.bf16.mxu0 0
        %4374 = vmatmul.mubr.bf16.gmra.mxu0 %v4233
        %v4375 = vpop.f32.mrf.mxu0
        %v4376 = vadd.f32 0.0, %v4375
        %v4377 = vpop.f32.mrf.mxu0
        %v4378 = vpop.f32.mrf.mxu0
        %v4379 = vadd.f32 0.0, %v4378
        %v4380 = vpop.f32.mrf.mxu0
        %4381 = vmatprep.mubr.bf16.mxu0 0
        %4382 = vmatmul.mubr.bf16.gmra.mxu0 %v4234
        %v4383 = vpop.f32.mrf.mxu0
        %v4384 = vadd.f32 0.0, %v4383
        %v4385 = vpop.f32.mrf.mxu0
        %v4386 = vpop.f32.mrf.mxu0
        %v4387 = vadd.f32 0.0, %v4386
        %v4388 = vpop.f32.mrf.mxu0
        %4389 = vmatprep.mubr.bf16.mxu0 0
        %4390 = vmatmul.mubr.bf16.gmra.mxu0 %v4235
        %v4391 = vpop.f32.mrf.mxu0
        %v4392 = vadd.f32 0.0, %v4391
        %v4393 = vpop.f32.mrf.mxu0
        %v4394 = vpop.f32.mrf.mxu0
        %v4395 = vadd.f32 0.0, %v4394
        %v4396 = vpop.f32.mrf.mxu0
        %4397 = vmatprep.mubr.bf16.mxu0 0
        %4398 = vmatmul.mubr.bf16.gmra.mxu0 %v4236
        %v4399 = vpop.f32.mrf.mxu0
        %v4400 = vadd.f32 0.0, %v4399
        %v4401 = vpop.f32.mrf.mxu0
        %v4402 = vpop.f32.mrf.mxu0
        %v4403 = vadd.f32 0.0, %v4402
        %v4404 = vpop.f32.mrf.mxu0
        %4405 = vmatprep.mubr.bf16.mxu0 0
        %4406 = vmatmul.mubr.bf16.gmra.mxu0 %v4237
        %v4407 = vpop.f32.mrf.mxu0
        %v4408 = vadd.f32 0.0, %v4407
        %v4409 = vpop.f32.mrf.mxu0
        %v4410 = vpop.f32.mrf.mxu0
        %v4411 = vadd.f32 0.0, %v4410
        %v4412 = vpop.f32.mrf.mxu0
        %4413 = vmatprep.mubr.bf16.mxu0 0
        %4414 = vmatmul.mubr.bf16.gmra.mxu0 %v4238
        %v4415 = vpop.f32.mrf.mxu0
        %v4416 = vadd.f32 0.0, %v4415
        %v4417 = vpop.f32.mrf.mxu0
        %v4418 = vpop.f32.mrf.mxu0
        %v4419 = vadd.f32 0.0, %v4418
        %v4420 = vpop.f32.mrf.mxu0
        %4421 = vmatprep.mubr.bf16.mxu0 0
        %4422 = vmatmul.mubr.bf16.gmra.mxu0 %v4239
        %v4423 = vpop.f32.mrf.mxu0
        %v4424 = vadd.f32 0.0, %v4423
        %v4425 = vpop.f32.mrf.mxu0
        %v4426 = vpop.f32.mrf.mxu0
        %v4427 = vadd.f32 0.0, %v4426
        %v4428 = vpop.f32.mrf.mxu0
        %4429 = vmatprep.mubr.bf16.mxu0 0
        %4430 = vmatmul.mubr.bf16.gmra.mxu0 %v4240
        %v4431 = vpop.f32.mrf.mxu0
        %v4432 = vadd.f32 0.0, %v4431
        %v4433 = vpop.f32.mrf.mxu0
        %v4434 = vpop.f32.mrf.mxu0
        %v4435 = vadd.f32 0.0, %v4434
        %v4436 = vpop.f32.mrf.mxu0
        %4437 = vmatprep.mubr.bf16.mxu0 0
        %4438 = vmatmul.mubr.bf16.gmra.mxu0 %v4241
        %v4439 = vpop.f32.mrf.mxu0
        %v4440 = vadd.f32 0.0, %v4439
        %v4441 = vpop.f32.mrf.mxu0
        %v4442 = vpop.f32.mrf.mxu0
        %v4443 = vadd.f32 0.0, %v4442
        %v4444 = vpop.f32.mrf.mxu0
        %4445 = vmatprep.mubr.bf16.mxu0 0
        %4446 = vmatmul.mubr.bf16.gmra.mxu0 %v4242
        %v4447 = vpop.f32.mrf.mxu0
        %v4448 = vadd.f32 0.0, %v4447
        %v4449 = vpop.f32.mrf.mxu0
        %v4450 = vpop.f32.mrf.mxu0
        %v4451 = vadd.f32 0.0, %v4450
        %v4452 = vpop.f32.mrf.mxu0
        %4453 = vmatprep.mubr.bf16.mxu0 0
        %4454 = vmatmul.mubr.bf16.gmra.mxu0 %v4243
        %v4455 = vpop.f32.mrf.mxu0
        %v4456 = vadd.f32 0.0, %v4455
        %v4457 = vpop.f32.mrf.mxu0
        %v4458 = vpop.f32.mrf.mxu0
        %v4459 = vadd.f32 0.0, %v4458
        %v4460 = vpop.f32.mrf.mxu0
        %4461 = vmatprep.mubr.bf16.mxu0 0
        %4462 = vmatmul.mubr.bf16.gmra.mxu0 %v4244
        %v4463 = vpop.f32.mrf.mxu0
        %v4464 = vadd.f32 0.0, %v4463
        %v4465 = vpop.f32.mrf.mxu0
        %v4466 = vpop.f32.mrf.mxu0
        %v4467 = vadd.f32 0.0, %v4466
        %v4468 = vpop.f32.mrf.mxu0
        %4469 = vdwg.mxu0
        %v4470 = vadd.f32 %v4083, %v4344
        %v4471 = vadd.f32 %v4084, %v4347
        %v4472 = vadd.f32 %v4085, %v4352
        %v4473 = vadd.f32 %v4086, %v4355
        %v4474 = vadd.f32 %v4087, %v4360
        %v4475 = vadd.f32 %v4088, %v4363
        %v4476 = vadd.f32 %v4089, %v4368
        %v4477 = vadd.f32 %v4090, %v4371
        %v4478 = vadd.f32 %v4091, %v4376
        %v4479 = vadd.f32 %v4092, %v4379
        %v4480 = vadd.f32 %v4093, %v4384
        %v4481 = vadd.f32 %v4094, %v4387
        %v4482 = vadd.f32 %v4095, %v4392
        %v4483 = vadd.f32 %v4096, %v4395
        %v4484 = vadd.f32 %v4097, %v4400
        %v4485 = vadd.f32 %v4098, %v4403
        %v4486 = vadd.f32 %v4099, %v4408
        %v4487 = vadd.f32 %v4100, %v4411
        %v4488 = vadd.f32 %v4101, %v4416
        %v4489 = vadd.f32 %v4102, %v4419
        %v4490 = vadd.f32 %v4103, %v4424
        %v4491 = vadd.f32 %v4104, %v4427
        %v4492 = vadd.f32 %v4105, %v4432
        %v4493 = vadd.f32 %v4106, %v4435
        %v4494 = vadd.f32 %v4107, %v4440
        %v4495 = vadd.f32 %v4108, %v4443
        %v4496 = vadd.f32 %v4109, %v4448
        %v4497 = vadd.f32 %v4110, %v4451
        %v4498 = vadd.f32 %v4111, %v4456
        %v4499 = vadd.f32 %v4112, %v4459
        %v4500 = vadd.f32 %v4113, %v4464
        %v4501 = vadd.f32 %v4114, %v4467
        %v4502 = vld [vmem:[%s4115] sm:$0xf]
        %v4503 = vld [vmem:[%s4115 + $0x4] sm:$0xf]
        %v4504 = vld [vmem:[%s4115 + $0x8] sm:$0x1]
        %v4505 = vld [vmem:[%s4115 + $0xc] sm:$0xf]
        %v4506 = vld [vmem:[%s4115 + $0x10] sm:$0xf]
        %v4507 = vld [vmem:[%s4115 + $0x14] sm:$0x1]
        %v4508 = vld [vmem:[%s4115 + $0x18] sm:$0xf]
        %v4509 = vld [vmem:[%s4115 + $0x1c] sm:$0xf]
        %v4510 = vld [vmem:[%s4115 + $0x20] sm:$0x1]
        %v4511 = vld [vmem:[%s4115 + $0x24] sm:$0xf]
        %v4512 = vld [vmem:[%s4115 + $0x28] sm:$0xf]
        %v4513 = vld [vmem:[%s4115 + $0x2c] sm:$0x1]
        %v4514 = vld [vmem:[%s4115 + $0x30] sm:$0xf]
        %v4515 = vld [vmem:[%s4115 + $0x34] sm:$0xf]
        %v4516 = vld [vmem:[%s4115 + $0x38] sm:$0x1]
        %v4517 = vld [vmem:[%s4115 + $0x3c] sm:$0xf]
        %v4518 = vld [vmem:[%s4115 + $0x40] sm:$0xf]
        %v4519 = vld [vmem:[%s4115 + $0x44] sm:$0x1]
        %v4520 = vld [vmem:[%s4115 + $0x48] sm:$0xf]
        %v4521 = vld [vmem:[%s4115 + $0x4c] sm:$0xf]
        %v4522 = vld [vmem:[%s4115 + $0x50] sm:$0x1]
        %v4523 = vld [vmem:[%s4115 + $0x54] sm:$0xf]
        %v4524 = vld [vmem:[%s4115 + $0x58] sm:$0xf]
        %v4525 = vld [vmem:[%s4115 + $0x5c] sm:$0x1]
        %v4526 = vld [vmem:[%s4115 + $0x60] sm:$0xf]
        %v4527 = vld [vmem:[%s4115 + $0x64] sm:$0xf]
        %v4528 = vld [vmem:[%s4115 + $0x68] sm:$0x1]
        %v4529 = vld [vmem:[%s4115 + $0x6c] sm:$0xf]
        %v4530 = vld [vmem:[%s4115 + $0x70] sm:$0xf]
        %v4531 = vld [vmem:[%s4115 + $0x74] sm:$0x1]
        %v4532 = vld [vmem:[%s4115 + $0x78] sm:$0xf]
        %v4533 = vld [vmem:[%s4115 + $0x7c] sm:$0xf]
        %v4534 = vld [vmem:[%s4115 + $0x80] sm:$0x1]
        %v4535 = vld [vmem:[%s4115 + $0x84] sm:$0xf]
        %v4536 = vld [vmem:[%s4115 + $0x88] sm:$0xf]
        %v4537 = vld [vmem:[%s4115 + $0x8c] sm:$0x1]
        %v4538 = vld [vmem:[%s4115 + $0x90] sm:$0xf]
        %v4539 = vld [vmem:[%s4115 + $0x94] sm:$0xf]
        %v4540 = vld [vmem:[%s4115 + $0x98] sm:$0x1]
        %v4541 = vld [vmem:[%s4115 + $0x9c] sm:$0xf]
        %v4542 = vld [vmem:[%s4115 + $0xa0] sm:$0xf]
        %v4543 = vld [vmem:[%s4115 + $0xa4] sm:$0x1]
        %v4544 = vld [vmem:[%s4115 + $0xa8] sm:$0xf]
        %v4545 = vld [vmem:[%s4115 + $0xac] sm:$0xf]
        %v4546 = vld [vmem:[%s4115 + $0xb0] sm:$0x1]
        %v4547 = vld [vmem:[%s4115 + $0xb4] sm:$0xf]
        %v4548 = vld [vmem:[%s4115 + $0xb8] sm:$0xf]
        %v4549 = vld [vmem:[%s4115 + $0xbc] sm:$0x1]
        %v4551 = vshrl.u32 %v4502, 16
        %v4553 = vrot.slane %v4551, 4
        %v4554 = vshll.u32 %v4502, 16
        %v4556 = vrot.slane %v4554, 5
        %v4557 = vor.u32 %v4553, %v4556
        %v4558 = vrot.slane %v4557, 4
        %v4560 = vshll.u32 %v4503, 16
        %v4562 = vrot.slane %v4560, 5
        %v4563 = vsel %vm1012, %v4558, %v4562
        %v4564 = vshrl.u32 %v4503, 16
        %v4566 = vrot.slane %v4564, 4
        %v4567 = vor.u32 %v4566, %v4562
        %v4568 = vrot.slane %v4567, 4
        %v4570 = vshll.u32 %v4504, 16
        %v4572 = vrot.slane %v4570, 5
        %v4573 = vsel %vm1012, %v4568, %v4572
        %v4575 = vshrl.u32 %v4505, 16
        %v4577 = vrot.slane %v4575, 4
        %v4578 = vshll.u32 %v4505, 16
        %v4580 = vrot.slane %v4578, 5
        %v4581 = vor.u32 %v4577, %v4580
        %v4582 = vrot.slane %v4581, 4
        %v4584 = vshll.u32 %v4506, 16
        %v4586 = vrot.slane %v4584, 5
        %v4587 = vsel %vm1012, %v4582, %v4586
        %v4588 = vshrl.u32 %v4506, 16
        %v4590 = vrot.slane %v4588, 4
        %v4591 = vor.u32 %v4590, %v4586
        %v4592 = vrot.slane %v4591, 4
        %v4594 = vshll.u32 %v4507, 16
        %v4596 = vrot.slane %v4594, 5
        %v4597 = vsel %vm1012, %v4592, %v4596
        %v4599 = vshrl.u32 %v4508, 16
        %v4601 = vrot.slane %v4599, 4
        %v4602 = vshll.u32 %v4508, 16
        %v4604 = vrot.slane %v4602, 5
        %v4605 = vor.u32 %v4601, %v4604
        %v4606 = vrot.slane %v4605, 4
        %v4608 = vshll.u32 %v4509, 16
        %v4610 = vrot.slane %v4608, 5
        %v4611 = vsel %vm1012, %v4606, %v4610
        %v4612 = vshrl.u32 %v4509, 16
        %v4614 = vrot.slane %v4612, 4
        %v4615 = vor.u32 %v4614, %v4610
        %v4616 = vrot.slane %v4615, 4
        %v4618 = vshll.u32 %v4510, 16
        %v4620 = vrot.slane %v4618, 5
        %v4621 = vsel %vm1012, %v4616, %v4620
        %v4623 = vshrl.u32 %v4511, 16
        %v4625 = vrot.slane %v4623, 4
        %v4626 = vshll.u32 %v4511, 16
        %v4628 = vrot.slane %v4626, 5
        %v4629 = vor.u32 %v4625, %v4628
        %v4630 = vrot.slane %v4629, 4
        %v4632 = vshll.u32 %v4512, 16
        %v4634 = vrot.slane %v4632, 5
        %v4635 = vsel %vm1012, %v4630, %v4634
        %v4636 = vshrl.u32 %v4512, 16
        %v4638 = vrot.slane %v4636, 4
        %v4639 = vor.u32 %v4638, %v4634
        %v4640 = vrot.slane %v4639, 4
        %v4642 = vshll.u32 %v4513, 16
        %v4644 = vrot.slane %v4642, 5
        %v4645 = vsel %vm1012, %v4640, %v4644
        %v4647 = vshrl.u32 %v4514, 16
        %v4649 = vrot.slane %v4647, 4
        %v4650 = vshll.u32 %v4514, 16
        %v4652 = vrot.slane %v4650, 5
        %v4653 = vor.u32 %v4649, %v4652
        %v4654 = vrot.slane %v4653, 4
        %v4656 = vshll.u32 %v4515, 16
        %v4658 = vrot.slane %v4656, 5
        %v4659 = vsel %vm1012, %v4654, %v4658
        %v4660 = vshrl.u32 %v4515, 16
        %v4662 = vrot.slane %v4660, 4
        %v4663 = vor.u32 %v4662, %v4658
        %v4664 = vrot.slane %v4663, 4
        %v4666 = vshll.u32 %v4516, 16
        %v4668 = vrot.slane %v4666, 5
        %v4669 = vsel %vm1012, %v4664, %v4668
        %v4671 = vshrl.u32 %v4517, 16
        %v4673 = vrot.slane %v4671, 4
        %v4674 = vshll.u32 %v4517, 16
        %v4676 = vrot.slane %v4674, 5
        %v4677 = vor.u32 %v4673, %v4676
        %v4678 = vrot.slane %v4677, 4
        %v4680 = vshll.u32 %v4518, 16
        %v4682 = vrot.slane %v4680, 5
        %v4683 = vsel %vm1012, %v4678, %v4682
        %v4684 = vshrl.u32 %v4518, 16
        %v4686 = vrot.slane %v4684, 4
        %v4687 = vor.u32 %v4686, %v4682
        %v4688 = vrot.slane %v4687, 4
        %v4690 = vshll.u32 %v4519, 16
        %v4692 = vrot.slane %v4690, 5
        %v4693 = vsel %vm1012, %v4688, %v4692
        %v4695 = vshrl.u32 %v4520, 16
        %v4697 = vrot.slane %v4695, 4
        %v4698 = vshll.u32 %v4520, 16
        %v4700 = vrot.slane %v4698, 5
        %v4701 = vor.u32 %v4697, %v4700
        %v4702 = vrot.slane %v4701, 4
        %v4704 = vshll.u32 %v4521, 16
        %v4706 = vrot.slane %v4704, 5
        %v4707 = vsel %vm1012, %v4702, %v4706
        %v4708 = vshrl.u32 %v4521, 16
        %v4710 = vrot.slane %v4708, 4
        %v4711 = vor.u32 %v4710, %v4706
        %v4712 = vrot.slane %v4711, 4
        %v4714 = vshll.u32 %v4522, 16
        %v4716 = vrot.slane %v4714, 5
        %v4717 = vsel %vm1012, %v4712, %v4716
        %v4719 = vshrl.u32 %v4523, 16
        %v4721 = vrot.slane %v4719, 4
        %v4722 = vshll.u32 %v4523, 16
        %v4724 = vrot.slane %v4722, 5
        %v4725 = vor.u32 %v4721, %v4724
        %v4726 = vrot.slane %v4725, 4
        %v4728 = vshll.u32 %v4524, 16
        %v4730 = vrot.slane %v4728, 5
        %v4731 = vsel %vm1012, %v4726, %v4730
        %v4732 = vshrl.u32 %v4524, 16
        %v4734 = vrot.slane %v4732, 4
        %v4735 = vor.u32 %v4734, %v4730
        %v4736 = vrot.slane %v4735, 4
        %v4738 = vshll.u32 %v4525, 16
        %v4740 = vrot.slane %v4738, 5
        %v4741 = vsel %vm1012, %v4736, %v4740
        %v4743 = vshrl.u32 %v4526, 16
        %v4745 = vrot.slane %v4743, 4
        %v4746 = vshll.u32 %v4526, 16
        %v4748 = vrot.slane %v4746, 5
        %v4749 = vor.u32 %v4745, %v4748
        %v4750 = vrot.slane %v4749, 4
        %v4752 = vshll.u32 %v4527, 16
        %v4754 = vrot.slane %v4752, 5
        %v4755 = vsel %vm1012, %v4750, %v4754
        %v4756 = vshrl.u32 %v4527, 16
        %v4758 = vrot.slane %v4756, 4
        %v4759 = vor.u32 %v4758, %v4754
        %v4760 = vrot.slane %v4759, 4
        %v4762 = vshll.u32 %v4528, 16
        %v4764 = vrot.slane %v4762, 5
        %v4765 = vsel %vm1012, %v4760, %v4764
        %v4767 = vshrl.u32 %v4529, 16
        %v4769 = vrot.slane %v4767, 4
        %v4770 = vshll.u32 %v4529, 16
        %v4772 = vrot.slane %v4770, 5
        %v4773 = vor.u32 %v4769, %v4772
        %v4774 = vrot.slane %v4773, 4
        %v4776 = vshll.u32 %v4530, 16
        %v4778 = vrot.slane %v4776, 5
        %v4779 = vsel %vm1012, %v4774, %v4778
        %v4780 = vshrl.u32 %v4530, 16
        %v4782 = vrot.slane %v4780, 4
        %v4783 = vor.u32 %v4782, %v4778
        %v4784 = vrot.slane %v4783, 4
        %v4786 = vshll.u32 %v4531, 16
        %v4788 = vrot.slane %v4786, 5
        %v4789 = vsel %vm1012, %v4784, %v4788
        %v4791 = vshrl.u32 %v4532, 16
        %v4793 = vrot.slane %v4791, 4
        %v4794 = vshll.u32 %v4532, 16
        %v4796 = vrot.slane %v4794, 5
        %v4797 = vor.u32 %v4793, %v4796
        %v4798 = vrot.slane %v4797, 4
        %v4800 = vshll.u32 %v4533, 16
        %v4802 = vrot.slane %v4800, 5
        %v4803 = vsel %vm1012, %v4798, %v4802
        %v4804 = vshrl.u32 %v4533, 16
        %v4806 = vrot.slane %v4804, 4
        %v4807 = vor.u32 %v4806, %v4802
        %v4808 = vrot.slane %v4807, 4
        %v4810 = vshll.u32 %v4534, 16
        %v4812 = vrot.slane %v4810, 5
        %v4813 = vsel %vm1012, %v4808, %v4812
        %v4815 = vshrl.u32 %v4535, 16
        %v4817 = vrot.slane %v4815, 4
        %v4818 = vshll.u32 %v4535, 16
        %v4820 = vrot.slane %v4818, 5
        %v4821 = vor.u32 %v4817, %v4820
        %v4822 = vrot.slane %v4821, 4
        %v4824 = vshll.u32 %v4536, 16
        %v4826 = vrot.slane %v4824, 5
        %v4827 = vsel %vm1012, %v4822, %v4826
        %v4828 = vshrl.u32 %v4536, 16
        %v4830 = vrot.slane %v4828, 4
        %v4831 = vor.u32 %v4830, %v4826
        %v4832 = vrot.slane %v4831, 4
        %v4834 = vshll.u32 %v4537, 16
        %v4836 = vrot.slane %v4834, 5
        %v4837 = vsel %vm1012, %v4832, %v4836
        %v4839 = vshrl.u32 %v4538, 16
        %v4841 = vrot.slane %v4839, 4
        %v4842 = vshll.u32 %v4538, 16
        %v4844 = vrot.slane %v4842, 5
        %v4845 = vor.u32 %v4841, %v4844
        %v4846 = vrot.slane %v4845, 4
        %v4848 = vshll.u32 %v4539, 16
        %v4850 = vrot.slane %v4848, 5
        %v4851 = vsel %vm1012, %v4846, %v4850
        %v4852 = vshrl.u32 %v4539, 16
        %v4854 = vrot.slane %v4852, 4
        %v4855 = vor.u32 %v4854, %v4850
        %v4856 = vrot.slane %v4855, 4
        %v4858 = vshll.u32 %v4540, 16
        %v4860 = vrot.slane %v4858, 5
        %v4861 = vsel %vm1012, %v4856, %v4860
        %v4863 = vshrl.u32 %v4541, 16
        %v4865 = vrot.slane %v4863, 4
        %v4866 = vshll.u32 %v4541, 16
        %v4868 = vrot.slane %v4866, 5
        %v4869 = vor.u32 %v4865, %v4868
        %v4870 = vrot.slane %v4869, 4
        %v4872 = vshll.u32 %v4542, 16
        %v4874 = vrot.slane %v4872, 5
        %v4875 = vsel %vm1012, %v4870, %v4874
        %v4876 = vshrl.u32 %v4542, 16
        %v4878 = vrot.slane %v4876, 4
        %v4879 = vor.u32 %v4878, %v4874
        %v4880 = vrot.slane %v4879, 4
        %v4882 = vshll.u32 %v4543, 16
        %v4884 = vrot.slane %v4882, 5
        %v4885 = vsel %vm1012, %v4880, %v4884
        %v4887 = vshrl.u32 %v4544, 16
        %v4889 = vrot.slane %v4887, 4
        %v4890 = vshll.u32 %v4544, 16
        %v4892 = vrot.slane %v4890, 5
        %v4893 = vor.u32 %v4889, %v4892
        %v4894 = vrot.slane %v4893, 4
        %v4896 = vshll.u32 %v4545, 16
        %v4898 = vrot.slane %v4896, 5
        %v4899 = vsel %vm1012, %v4894, %v4898
        %v4900 = vshrl.u32 %v4545, 16
        %v4902 = vrot.slane %v4900, 4
        %v4903 = vor.u32 %v4902, %v4898
        %v4904 = vrot.slane %v4903, 4
        %v4906 = vshll.u32 %v4546, 16
        %v4908 = vrot.slane %v4906, 5
        %v4909 = vsel %vm1012, %v4904, %v4908
        %v4911 = vshrl.u32 %v4547, 16
        %v4913 = vrot.slane %v4911, 4
        %v4914 = vshll.u32 %v4547, 16
        %v4916 = vrot.slane %v4914, 5
        %v4917 = vor.u32 %v4913, %v4916
        %v4918 = vrot.slane %v4917, 4
        %v4920 = vshll.u32 %v4548, 16
        %v4922 = vrot.slane %v4920, 5
        %v4923 = vsel %vm1012, %v4918, %v4922
        %v4924 = vshrl.u32 %v4548, 16
        %v4926 = vrot.slane %v4924, 4
        %v4927 = vor.u32 %v4926, %v4922
        %v4928 = vrot.slane %v4927, 4
        %v4930 = vshll.u32 %v4549, 16
        %v4932 = vrot.slane %v4930, 5
        %v4933 = vsel %vm1012, %v4928, %v4932
        %s4934 = scalar_lea.vmem [#allocation6], 448
        %v4935 = vld [vmem:[%s4934] sm:$0xf]
        %v4936 = vld [vmem:[%s4934 + $0x4] sm:$0xf]
        %v4937 = vld [vmem:[%s4934 + $0x8] sm:$0xf]
        %v4938 = vld [vmem:[%s4934 + $0xc] sm:$0xf]
        %v4939 = vld [vmem:[%s4934 + $0x10] sm:$0xf]
        %v4940 = vld [vmem:[%s4934 + $0x14] sm:$0xf]
        %v4941 = vld [vmem:[%s4934 + $0x18] sm:$0xf]
        %v4942 = vld [vmem:[%s4934 + $0x1c] sm:$0xf]
        %v4943 = vld [vmem:[%s4934 + $0x20] sm:$0xf]
        %v4944 = vld [vmem:[%s4934 + $0x24] sm:$0xf]
        %v4945 = vld [vmem:[%s4934 + $0x28] sm:$0xf]
        %v4946 = vld [vmem:[%s4934 + $0x2c] sm:$0xf]
        %v4947 = vld [vmem:[%s4934 + $0x30] sm:$0xf]
        %v4948 = vld [vmem:[%s4934 + $0x34] sm:$0xf]
        %v4949 = vld [vmem:[%s4934 + $0x38] sm:$0xf]
        %v4950 = vld [vmem:[%s4934 + $0x3c] sm:$0xf]
        %v4951 = vunpack.c.l.b16 %v4563
        %v4952 = vunpack.c.l.b16 %v4573
        %v4953 = vunpack.c.l.b16 %v4587
        %v4954 = vunpack.c.l.b16 %v4597
        %v4955 = vunpack.c.l.b16 %v4611
        %v4956 = vunpack.c.l.b16 %v4621
        %v4957 = vunpack.c.l.b16 %v4635
        %v4958 = vunpack.c.l.b16 %v4645
        %v4959 = vunpack.c.l.b16 %v4659
        %v4960 = vunpack.c.l.b16 %v4669
        %v4961 = vunpack.c.l.b16 %v4683
        %v4962 = vunpack.c.l.b16 %v4693
        %v4963 = vunpack.c.l.b16 %v4707
        %v4964 = vunpack.c.l.b16 %v4717
        %v4965 = vunpack.c.l.b16 %v4731
        %v4966 = vunpack.c.l.b16 %v4741
        %v4967 = vunpack.c.l.b16 %v4755
        %v4968 = vunpack.c.l.b16 %v4765
        %v4969 = vunpack.c.l.b16 %v4779
        %v4970 = vunpack.c.l.b16 %v4789
        %v4971 = vunpack.c.l.b16 %v4803
        %v4972 = vunpack.c.l.b16 %v4813
        %v4973 = vunpack.c.l.b16 %v4827
        %v4974 = vunpack.c.l.b16 %v4837
        %v4975 = vunpack.c.l.b16 %v4851
        %v4976 = vunpack.c.l.b16 %v4861
        %v4977 = vunpack.c.l.b16 %v4875
        %v4978 = vunpack.c.l.b16 %v4885
        %v4979 = vunpack.c.l.b16 %v4899
        %v4980 = vunpack.c.l.b16 %v4909
        %v4981 = vunpack.c.l.b16 %v4923
        %v4982 = vunpack.c.l.b16 %v4933
        %v4983 = vpack.c.b16 %v4952, %v4951
        %v4984 = vpack.c.b16 %v4954, %v4953
        %v4985 = vpack.c.b16 %v4956, %v4955
        %v4986 = vpack.c.b16 %v4958, %v4957
        %v4987 = vpack.c.b16 %v4960, %v4959
        %v4988 = vpack.c.b16 %v4962, %v4961
        %v4989 = vpack.c.b16 %v4964, %v4963
        %v4990 = vpack.c.b16 %v4966, %v4965
        %v4991 = vpack.c.b16 %v4968, %v4967
        %v4992 = vpack.c.b16 %v4970, %v4969
        %v4993 = vpack.c.b16 %v4972, %v4971
        %v4994 = vpack.c.b16 %v4974, %v4973
        %v4995 = vpack.c.b16 %v4976, %v4975
        %v4996 = vpack.c.b16 %v4978, %v4977
        %v4997 = vpack.c.b16 %v4980, %v4979
        %v4998 = vpack.c.b16 %v4982, %v4981
        %v5031 = vunpack.c.l.b16 %v4935
        %v5032 = vunpack.c.l.b16 %v4936
        %v5033 = vunpack.c.l.b16 %v4937
        %v5034 = vunpack.c.l.b16 %v4938
        %v5035 = vunpack.c.l.b16 %v4939
        %v5036 = vunpack.c.l.b16 %v4940
        %v5037 = vunpack.c.l.b16 %v4941
        %v5038 = vunpack.c.l.b16 %v4942
        %v5039 = vunpack.c.l.b16 %v4943
        %v5040 = vunpack.c.l.b16 %v4944
        %v5041 = vunpack.c.l.b16 %v4945
        %v5042 = vunpack.c.l.b16 %v4946
        %v5043 = vunpack.c.l.b16 %v4947
        %v5044 = vunpack.c.l.b16 %v4948
        %v5045 = vunpack.c.l.b16 %v4949
        %v5046 = vunpack.c.l.b16 %v4950
        %v5047 = vpack.c.b16 %v5032, %v5031
        %v5048 = vpack.c.b16 %v5034, %v5033
        %v5049 = vpack.c.b16 %v5036, %v5035
        %v5050 = vpack.c.b16 %v5038, %v5037
        %v5051 = vpack.c.b16 %v5040, %v5039
        %v5052 = vpack.c.b16 %v5042, %v5041
        %v5053 = vpack.c.b16 %v5044, %v5043
        %v5054 = vpack.c.b16 %v5046, %v5045
        %5063 = vmatprep.subr.bf16.mxu0 0
        %5064 = vmatpush1.bf16.msra.mxu0 %v5054
        %5065 = vmatprep.subr.bf16.mxu0 0
        %5066 = vmatpush1.bf16.msra.mxu0 %v5053
        %5067 = vmatprep.subr.bf16.mxu0 0
        %5068 = vmatpush1.bf16.msra.mxu0 %v5052
        %5069 = vmatprep.subr.bf16.mxu0 0
        %5070 = vmatpush1.bf16.msra.mxu0 %v5051
        %5071 = vmatprep.subr.bf16.mxu0 0
        %5072 = vmatpush1.bf16.msra.mxu0 %v5050
        %5073 = vmatprep.subr.bf16.mxu0 0
        %5074 = vmatpush1.bf16.msra.mxu0 %v5049
        %5075 = vmatprep.subr.bf16.mxu0 0
        %5076 = vmatpush1.bf16.msra.mxu0 %v5048
        %5077 = vmatprep.subr.bf16.mxu0 0
        %5078 = vmatpush1.bf16.msra.mxu0 %v5047
        %5079 = vmatprep.subr.bf16.mxu0 0
        %5080 = vmatpush2.bf16.msra.mxu0 0
        %5081 = vmatprep.subr.bf16.mxu0 0
        %5082 = vmatpush2.bf16.msra.mxu0 0
        %5083 = vmatprep.subr.bf16.mxu0 0
        %5084 = vmatpush2.bf16.msra.mxu0 0
        %5085 = vmatprep.subr.bf16.mxu0 0
        %5086 = vmatpush2.bf16.msra.mxu0 0
        %5087 = vmatprep.subr.bf16.mxu0 0
        %5088 = vmatpush2.bf16.msra.mxu0 0
        %5089 = vmatprep.subr.bf16.mxu0 0
        %5090 = vmatpush2.bf16.msra.mxu0 0
        %5091 = vmatprep.subr.bf16.mxu0 0
        %5092 = vmatpush2.bf16.msra.mxu0 0
        %5093 = vmatprep.subr.bf16.mxu0 0
        %5094 = vmatpush2.bf16.msra.mxu0 0
        %5095 = vmatprep.mubr.bf16.mxu0 0
        %5096 = vmatmul.mubr.bf16.gmra.mxu0 %v4983
        %v5097 = vpop.f32.mrf.mxu0
        %v5098 = vadd.f32 0.0, %v5097
        %v5099 = vpop.f32.mrf.mxu0
        %v5100 = vpop.f32.mrf.mxu0
        %v5101 = vadd.f32 0.0, %v5100
        %v5102 = vpop.f32.mrf.mxu0
        %5103 = vmatprep.mubr.bf16.mxu0 0
        %5104 = vmatmul.mubr.bf16.gmra.mxu0 %v4984
        %v5105 = vpop.f32.mrf.mxu0
        %v5106 = vadd.f32 0.0, %v5105
        %v5107 = vpop.f32.mrf.mxu0
        %v5108 = vpop.f32.mrf.mxu0
        %v5109 = vadd.f32 0.0, %v5108
        %v5110 = vpop.f32.mrf.mxu0
        %5111 = vmatprep.mubr.bf16.mxu0 0
        %5112 = vmatmul.mubr.bf16.gmra.mxu0 %v4985
        %v5113 = vpop.f32.mrf.mxu0
        %v5114 = vadd.f32 0.0, %v5113
        %v5115 = vpop.f32.mrf.mxu0
        %v5116 = vpop.f32.mrf.mxu0
        %v5117 = vadd.f32 0.0, %v5116
        %v5118 = vpop.f32.mrf.mxu0
        %5119 = vmatprep.mubr.bf16.mxu0 0
        %5120 = vmatmul.mubr.bf16.gmra.mxu0 %v4986
        %v5121 = vpop.f32.mrf.mxu0
        %v5122 = vadd.f32 0.0, %v5121
        %v5123 = vpop.f32.mrf.mxu0
        %v5124 = vpop.f32.mrf.mxu0
        %v5125 = vadd.f32 0.0, %v5124
        %v5126 = vpop.f32.mrf.mxu0
        %5127 = vmatprep.mubr.bf16.mxu0 0
        %5128 = vmatmul.mubr.bf16.gmra.mxu0 %v4987
        %v5129 = vpop.f32.mrf.mxu0
        %v5130 = vadd.f32 0.0, %v5129
        %v5131 = vpop.f32.mrf.mxu0
        %v5132 = vpop.f32.mrf.mxu0
        %v5133 = vadd.f32 0.0, %v5132
        %v5134 = vpop.f32.mrf.mxu0
        %5135 = vmatprep.mubr.bf16.mxu0 0
        %5136 = vmatmul.mubr.bf16.gmra.mxu0 %v4988
        %v5137 = vpop.f32.mrf.mxu0
        %v5138 = vadd.f32 0.0, %v5137
        %v5139 = vpop.f32.mrf.mxu0
        %v5140 = vpop.f32.mrf.mxu0
        %v5141 = vadd.f32 0.0, %v5140
        %v5142 = vpop.f32.mrf.mxu0
        %5143 = vmatprep.mubr.bf16.mxu0 0
        %5144 = vmatmul.mubr.bf16.gmra.mxu0 %v4989
        %v5145 = vpop.f32.mrf.mxu0
        %v5146 = vadd.f32 0.0, %v5145
        %v5147 = vpop.f32.mrf.mxu0
        %v5148 = vpop.f32.mrf.mxu0
        %v5149 = vadd.f32 0.0, %v5148
        %v5150 = vpop.f32.mrf.mxu0
        %5151 = vmatprep.mubr.bf16.mxu0 0
        %5152 = vmatmul.mubr.bf16.gmra.mxu0 %v4990
        %v5153 = vpop.f32.mrf.mxu0
        %v5154 = vadd.f32 0.0, %v5153
        %v5155 = vpop.f32.mrf.mxu0
        %v5156 = vpop.f32.mrf.mxu0
        %v5157 = vadd.f32 0.0, %v5156
        %v5158 = vpop.f32.mrf.mxu0
        %5159 = vmatprep.mubr.bf16.mxu0 0
        %5160 = vmatmul.mubr.bf16.gmra.mxu0 %v4991
        %v5161 = vpop.f32.mrf.mxu0
        %v5162 = vadd.f32 0.0, %v5161
        %v5163 = vpop.f32.mrf.mxu0
        %v5164 = vpop.f32.mrf.mxu0
        %v5165 = vadd.f32 0.0, %v5164
        %v5166 = vpop.f32.mrf.mxu0
        %5167 = vmatprep.mubr.bf16.mxu0 0
        %5168 = vmatmul.mubr.bf16.gmra.mxu0 %v4992
        %v5169 = vpop.f32.mrf.mxu0
        %v5170 = vadd.f32 0.0, %v5169
        %v5171 = vpop.f32.mrf.mxu0
        %v5172 = vpop.f32.mrf.mxu0
        %v5173 = vadd.f32 0.0, %v5172
        %v5174 = vpop.f32.mrf.mxu0
        %5175 = vmatprep.mubr.bf16.mxu0 0
        %5176 = vmatmul.mubr.bf16.gmra.mxu0 %v4993
        %v5177 = vpop.f32.mrf.mxu0
        %v5178 = vadd.f32 0.0, %v5177
        %v5179 = vpop.f32.mrf.mxu0
        %v5180 = vpop.f32.mrf.mxu0
        %v5181 = vadd.f32 0.0, %v5180
        %v5182 = vpop.f32.mrf.mxu0
        %5183 = vmatprep.mubr.bf16.mxu0 0
        %5184 = vmatmul.mubr.bf16.gmra.mxu0 %v4994
        %v5185 = vpop.f32.mrf.mxu0
        %v5186 = vadd.f32 0.0, %v5185
        %v5187 = vpop.f32.mrf.mxu0
        %v5188 = vpop.f32.mrf.mxu0
        %v5189 = vadd.f32 0.0, %v5188
        %v5190 = vpop.f32.mrf.mxu0
        %5191 = vmatprep.mubr.bf16.mxu0 0
        %5192 = vmatmul.mubr.bf16.gmra.mxu0 %v4995
        %v5193 = vpop.f32.mrf.mxu0
        %v5194 = vadd.f32 0.0, %v5193
        %v5195 = vpop.f32.mrf.mxu0
        %v5196 = vpop.f32.mrf.mxu0
        %v5197 = vadd.f32 0.0, %v5196
        %v5198 = vpop.f32.mrf.mxu0
        %5199 = vmatprep.mubr.bf16.mxu0 0
        %5200 = vmatmul.mubr.bf16.gmra.mxu0 %v4996
        %v5201 = vpop.f32.mrf.mxu0
        %v5202 = vadd.f32 0.0, %v5201
        %v5203 = vpop.f32.mrf.mxu0
        %v5204 = vpop.f32.mrf.mxu0
        %v5205 = vadd.f32 0.0, %v5204
        %v5206 = vpop.f32.mrf.mxu0
        %5207 = vmatprep.mubr.bf16.mxu0 0
        %5208 = vmatmul.mubr.bf16.gmra.mxu0 %v4997
        %v5209 = vpop.f32.mrf.mxu0
        %v5210 = vadd.f32 0.0, %v5209
        %v5211 = vpop.f32.mrf.mxu0
        %v5212 = vpop.f32.mrf.mxu0
        %v5213 = vadd.f32 0.0, %v5212
        %v5214 = vpop.f32.mrf.mxu0
        %5215 = vmatprep.mubr.bf16.mxu0 0
        %5216 = vmatmul.mubr.bf16.gmra.mxu0 %v4998
        %v5217 = vpop.f32.mrf.mxu0
        %v5218 = vadd.f32 0.0, %v5217
        %v5219 = vpop.f32.mrf.mxu0
        %v5220 = vpop.f32.mrf.mxu0
        %v5221 = vadd.f32 0.0, %v5220
        %v5222 = vpop.f32.mrf.mxu0
        %5223 = vdwg.mxu0
        %v5224 = vadd.f32 %v4470, %v5098
        %v5225 = vadd.f32 %v4471, %v5101
        %v5226 = vadd.f32 %v4472, %v5106
        %v5227 = vadd.f32 %v4473, %v5109
        %v5228 = vadd.f32 %v4474, %v5114
        %v5229 = vadd.f32 %v4475, %v5117
        %v5230 = vadd.f32 %v4476, %v5122
        %v5231 = vadd.f32 %v4477, %v5125
        %v5232 = vadd.f32 %v4478, %v5130
        %v5233 = vadd.f32 %v4479, %v5133
        %v5234 = vadd.f32 %v4480, %v5138
        %v5235 = vadd.f32 %v4481, %v5141
        %v5236 = vadd.f32 %v4482, %v5146
        %v5237 = vadd.f32 %v4483, %v5149
        %v5238 = vadd.f32 %v4484, %v5154
        %v5239 = vadd.f32 %v4485, %v5157
        %v5240 = vadd.f32 %v4486, %v5162
        %v5241 = vadd.f32 %v4487, %v5165
        %v5242 = vadd.f32 %v4488, %v5170
        %v5243 = vadd.f32 %v4489, %v5173
        %v5244 = vadd.f32 %v4490, %v5178
        %v5245 = vadd.f32 %v4491, %v5181
        %v5246 = vadd.f32 %v4492, %v5186
        %v5247 = vadd.f32 %v4493, %v5189
        %v5248 = vadd.f32 %v4494, %v5194
        %v5249 = vadd.f32 %v4495, %v5197
        %v5250 = vadd.f32 %v4496, %v5202
        %v5251 = vadd.f32 %v4497, %v5205
        %v5252 = vadd.f32 %v4498, %v5210
        %v5253 = vadd.f32 %v4499, %v5213
        %v5254 = vadd.f32 %v4500, %v5218
        %v5255 = vadd.f32 %v4501, %v5221
        %v5256 = vld [vmem:[%s4115] sm:$0xe]
        %v5257 = vld [vmem:[%s4115 + $0xc] sm:$0xe]
        %v5258 = vld [vmem:[%s4115 + $0x18] sm:$0xe]
        %v5259 = vld [vmem:[%s4115 + $0x24] sm:$0xe]
        %v5260 = vld [vmem:[%s4115 + $0x30] sm:$0xe]
        %v5261 = vld [vmem:[%s4115 + $0x3c] sm:$0xe]
        %v5262 = vld [vmem:[%s4115 + $0x48] sm:$0xe]
        %v5263 = vld [vmem:[%s4115 + $0x54] sm:$0xe]
        %v5264 = vld [vmem:[%s4115 + $0x60] sm:$0xe]
        %v5265 = vld [vmem:[%s4115 + $0x6c] sm:$0xe]
        %v5266 = vld [vmem:[%s4115 + $0x78] sm:$0xe]
        %v5267 = vld [vmem:[%s4115 + $0x84] sm:$0xe]
        %v5268 = vld [vmem:[%s4115 + $0x90] sm:$0xe]
        %v5269 = vld [vmem:[%s4115 + $0x9c] sm:$0xe]
        %v5270 = vld [vmem:[%s4115 + $0xa8] sm:$0xe]
        %v5271 = vld [vmem:[%s4115 + $0xb4] sm:$0xe]
        %v5320 = vrot.slane %v5256, 5
        %v5321 = vrot.slane %v5320, 4
        %v5322 = vrot.slane %v4503, 5
        %v5323 = vsel %vm2042, %v5321, %v5322
        %v5324 = vrot.slane %v5322, 4
        %v5325 = vrot.slane %v4504, 5
        %v5326 = vsel %vm2042, %v5324, %v5325
        %v5327 = vrot.slane %v5257, 5
        %v5328 = vrot.slane %v5327, 4
        %v5329 = vrot.slane %v4506, 5
        %v5330 = vsel %vm2042, %v5328, %v5329
        %v5331 = vrot.slane %v5329, 4
        %v5332 = vrot.slane %v4507, 5
        %v5333 = vsel %vm2042, %v5331, %v5332
        %v5334 = vrot.slane %v5258, 5
        %v5335 = vrot.slane %v5334, 4
        %v5336 = vrot.slane %v4509, 5
        %v5337 = vsel %vm2042, %v5335, %v5336
        %v5338 = vrot.slane %v5336, 4
        %v5339 = vrot.slane %v4510, 5
        %v5340 = vsel %vm2042, %v5338, %v5339
        %v5341 = vrot.slane %v5259, 5
        %v5342 = vrot.slane %v5341, 4
        %v5343 = vrot.slane %v4512, 5
        %v5344 = vsel %vm2042, %v5342, %v5343
        %v5345 = vrot.slane %v5343, 4
        %v5346 = vrot.slane %v4513, 5
        %v5347 = vsel %vm2042, %v5345, %v5346
        %v5348 = vrot.slane %v5260, 5
        %v5349 = vrot.slane %v5348, 4
        %v5350 = vrot.slane %v4515, 5
        %v5351 = vsel %vm2042, %v5349, %v5350
        %v5352 = vrot.slane %v5350, 4
        %v5353 = vrot.slane %v4516, 5
        %v5354 = vsel %vm2042, %v5352, %v5353
        %v5355 = vrot.slane %v5261, 5
        %v5356 = vrot.slane %v5355, 4
        %v5357 = vrot.slane %v4518, 5
        %v5358 = vsel %vm2042, %v5356, %v5357
        %v5359 = vrot.slane %v5357, 4
        %v5360 = vrot.slane %v4519, 5
        %v5361 = vsel %vm2042, %v5359, %v5360
        %v5362 = vrot.slane %v5262, 5
        %v5363 = vrot.slane %v5362, 4
        %v5364 = vrot.slane %v4521, 5
        %v5365 = vsel %vm2042, %v5363, %v5364
        %v5366 = vrot.slane %v5364, 4
        %v5367 = vrot.slane %v4522, 5
        %v5368 = vsel %vm2042, %v5366, %v5367
        %v5369 = vrot.slane %v5263, 5
        %v5370 = vrot.slane %v5369, 4
        %v5371 = vrot.slane %v4524, 5
        %v5372 = vsel %vm2042, %v5370, %v5371
        %v5373 = vrot.slane %v5371, 4
        %v5374 = vrot.slane %v4525, 5
        %v5375 = vsel %vm2042, %v5373, %v5374
        %v5376 = vrot.slane %v5264, 5
        %v5377 = vrot.slane %v5376, 4
        %v5378 = vrot.slane %v4527, 5
        %v5379 = vsel %vm2042, %v5377, %v5378
        %v5380 = vrot.slane %v5378, 4
        %v5381 = vrot.slane %v4528, 5
        %v5382 = vsel %vm2042, %v5380, %v5381
        %v5383 = vrot.slane %v5265, 5
        %v5384 = vrot.slane %v5383, 4
        %v5385 = vrot.slane %v4530, 5
        %v5386 = vsel %vm2042, %v5384, %v5385
        %v5387 = vrot.slane %v5385, 4
        %v5388 = vrot.slane %v4531, 5
        %v5389 = vsel %vm2042, %v5387, %v5388
        %v5390 = vrot.slane %v5266, 5
        %v5391 = vrot.slane %v5390, 4
        %v5392 = vrot.slane %v4533, 5
        %v5393 = vsel %vm2042, %v5391, %v5392
        %v5394 = vrot.slane %v5392, 4
        %v5395 = vrot.slane %v4534, 5
        %v5396 = vsel %vm2042, %v5394, %v5395
        %v5397 = vrot.slane %v5267, 5
        %v5398 = vrot.slane %v5397, 4
        %v5399 = vrot.slane %v4536, 5
        %v5400 = vsel %vm2042, %v5398, %v5399
        %v5401 = vrot.slane %v5399, 4
        %v5402 = vrot.slane %v4537, 5
        %v5403 = vsel %vm2042, %v5401, %v5402
        %v5404 = vrot.slane %v5268, 5
        %v5405 = vrot.slane %v5404, 4
        %v5406 = vrot.slane %v4539, 5
        %v5407 = vsel %vm2042, %v5405, %v5406
        %v5408 = vrot.slane %v5406, 4
        %v5409 = vrot.slane %v4540, 5
        %v5410 = vsel %vm2042, %v5408, %v5409
        %v5411 = vrot.slane %v5269, 5
        %v5412 = vrot.slane %v5411, 4
        %v5413 = vrot.slane %v4542, 5
        %v5414 = vsel %vm2042, %v5412, %v5413
        %v5415 = vrot.slane %v5413, 4
        %v5416 = vrot.slane %v4543, 5
        %v5417 = vsel %vm2042, %v5415, %v5416
        %v5418 = vrot.slane %v5270, 5
        %v5419 = vrot.slane %v5418, 4
        %v5420 = vrot.slane %v4545, 5
        %v5421 = vsel %vm2042, %v5419, %v5420
        %v5422 = vrot.slane %v5420, 4
        %v5423 = vrot.slane %v4546, 5
        %v5424 = vsel %vm2042, %v5422, %v5423
        %v5425 = vrot.slane %v5271, 5
        %v5426 = vrot.slane %v5425, 4
        %v5427 = vrot.slane %v4548, 5
        %v5428 = vsel %vm2042, %v5426, %v5427
        %v5429 = vrot.slane %v5427, 4
        %v5430 = vrot.slane %v4549, 5
        %v5431 = vsel %vm2042, %v5429, %v5430
        %s5432 = scalar_lea.vmem [#allocation6], 512
        %v5433 = vld [vmem:[%s5432] sm:$0xf]
        %v5434 = vld [vmem:[%s5432 + $0x4] sm:$0xf]
        %v5435 = vld [vmem:[%s5432 + $0x8] sm:$0xf]
        %v5436 = vld [vmem:[%s5432 + $0xc] sm:$0xf]
        %v5437 = vld [vmem:[%s5432 + $0x10] sm:$0xf]
        %v5438 = vld [vmem:[%s5432 + $0x14] sm:$0xf]
        %v5439 = vld [vmem:[%s5432 + $0x18] sm:$0xf]
        %v5440 = vld [vmem:[%s5432 + $0x1c] sm:$0xf]
        %v5441 = vld [vmem:[%s5432 + $0x20] sm:$0xf]
        %v5442 = vld [vmem:[%s5432 + $0x24] sm:$0xf]
        %v5443 = vld [vmem:[%s5432 + $0x28] sm:$0xf]
        %v5444 = vld [vmem:[%s5432 + $0x2c] sm:$0xf]
        %v5445 = vld [vmem:[%s5432 + $0x30] sm:$0xf]
        %v5446 = vld [vmem:[%s5432 + $0x34] sm:$0xf]
        %v5447 = vld [vmem:[%s5432 + $0x38] sm:$0xf]
        %v5448 = vld [vmem:[%s5432 + $0x3c] sm:$0xf]
        %v5449 = vunpack.c.l.b16 %v5323
        %v5450 = vunpack.c.l.b16 %v5326
        %v5451 = vunpack.c.l.b16 %v5330
        %v5452 = vunpack.c.l.b16 %v5333
        %v5453 = vunpack.c.l.b16 %v5337
        %v5454 = vunpack.c.l.b16 %v5340
        %v5455 = vunpack.c.l.b16 %v5344
        %v5456 = vunpack.c.l.b16 %v5347
        %v5457 = vunpack.c.l.b16 %v5351
        %v5458 = vunpack.c.l.b16 %v5354
        %v5459 = vunpack.c.l.b16 %v5358
        %v5460 = vunpack.c.l.b16 %v5361
        %v5461 = vunpack.c.l.b16 %v5365
        %v5462 = vunpack.c.l.b16 %v5368
        %v5463 = vunpack.c.l.b16 %v5372
        %v5464 = vunpack.c.l.b16 %v5375
        %v5465 = vunpack.c.l.b16 %v5379
        %v5466 = vunpack.c.l.b16 %v5382
        %v5467 = vunpack.c.l.b16 %v5386
        %v5468 = vunpack.c.l.b16 %v5389
        %v5469 = vunpack.c.l.b16 %v5393
        %v5470 = vunpack.c.l.b16 %v5396
        %v5471 = vunpack.c.l.b16 %v5400
        %v5472 = vunpack.c.l.b16 %v5403
        %v5473 = vunpack.c.l.b16 %v5407
        %v5474 = vunpack.c.l.b16 %v5410
        %v5475 = vunpack.c.l.b16 %v5414
        %v5476 = vunpack.c.l.b16 %v5417
        %v5477 = vunpack.c.l.b16 %v5421
        %v5478 = vunpack.c.l.b16 %v5424
        %v5479 = vunpack.c.l.b16 %v5428
        %v5480 = vunpack.c.l.b16 %v5431
        %v5481 = vpack.c.b16 %v5450, %v5449
        %v5482 = vpack.c.b16 %v5452, %v5451
        %v5483 = vpack.c.b16 %v5454, %v5453
        %v5484 = vpack.c.b16 %v5456, %v5455
        %v5485 = vpack.c.b16 %v5458, %v5457
        %v5486 = vpack.c.b16 %v5460, %v5459
        %v5487 = vpack.c.b16 %v5462, %v5461
        %v5488 = vpack.c.b16 %v5464, %v5463
        %v5489 = vpack.c.b16 %v5466, %v5465
        %v5490 = vpack.c.b16 %v5468, %v5467
        %v5491 = vpack.c.b16 %v5470, %v5469
        %v5492 = vpack.c.b16 %v5472, %v5471
        %v5493 = vpack.c.b16 %v5474, %v5473
        %v5494 = vpack.c.b16 %v5476, %v5475
        %v5495 = vpack.c.b16 %v5478, %v5477
        %v5496 = vpack.c.b16 %v5480, %v5479
        %v5529 = vunpack.c.l.b16 %v5433
        %v5530 = vunpack.c.l.b16 %v5434
        %v5531 = vunpack.c.l.b16 %v5435
        %v5532 = vunpack.c.l.b16 %v5436
        %v5533 = vunpack.c.l.b16 %v5437
        %v5534 = vunpack.c.l.b16 %v5438
        %v5535 = vunpack.c.l.b16 %v5439
        %v5536 = vunpack.c.l.b16 %v5440
        %v5537 = vunpack.c.l.b16 %v5441
        %v5538 = vunpack.c.l.b16 %v5442
        %v5539 = vunpack.c.l.b16 %v5443
        %v5540 = vunpack.c.l.b16 %v5444
        %v5541 = vunpack.c.l.b16 %v5445
        %v5542 = vunpack.c.l.b16 %v5446
        %v5543 = vunpack.c.l.b16 %v5447
        %v5544 = vunpack.c.l.b16 %v5448
        %v5545 = vpack.c.b16 %v5530, %v5529
        %v5546 = vpack.c.b16 %v5532, %v5531
        %v5547 = vpack.c.b16 %v5534, %v5533
        %v5548 = vpack.c.b16 %v5536, %v5535
        %v5549 = vpack.c.b16 %v5538, %v5537
        %v5550 = vpack.c.b16 %v5540, %v5539
        %v5551 = vpack.c.b16 %v5542, %v5541
        %v5552 = vpack.c.b16 %v5544, %v5543
        %5561 = vmatprep.subr.bf16.mxu0 0
        %5562 = vmatpush1.bf16.msra.mxu0 %v5552
        %5563 = vmatprep.subr.bf16.mxu0 0
        %5564 = vmatpush1.bf16.msra.mxu0 %v5551
        %5565 = vmatprep.subr.bf16.mxu0 0
        %5566 = vmatpush1.bf16.msra.mxu0 %v5550
        %5567 = vmatprep.subr.bf16.mxu0 0
        %5568 = vmatpush1.bf16.msra.mxu0 %v5549
        %5569 = vmatprep.subr.bf16.mxu0 0
        %5570 = vmatpush1.bf16.msra.mxu0 %v5548
        %5571 = vmatprep.subr.bf16.mxu0 0
        %5572 = vmatpush1.bf16.msra.mxu0 %v5547
        %5573 = vmatprep.subr.bf16.mxu0 0
        %5574 = vmatpush1.bf16.msra.mxu0 %v5546
        %5575 = vmatprep.subr.bf16.mxu0 0
        %5576 = vmatpush1.bf16.msra.mxu0 %v5545
        %5577 = vmatprep.subr.bf16.mxu0 0
        %5578 = vmatpush2.bf16.msra.mxu0 0
        %5579 = vmatprep.subr.bf16.mxu0 0
        %5580 = vmatpush2.bf16.msra.mxu0 0
        %5581 = vmatprep.subr.bf16.mxu0 0
        %5582 = vmatpush2.bf16.msra.mxu0 0
        %5583 = vmatprep.subr.bf16.mxu0 0
        %5584 = vmatpush2.bf16.msra.mxu0 0
        %5585 = vmatprep.subr.bf16.mxu0 0
        %5586 = vmatpush2.bf16.msra.mxu0 0
        %5587 = vmatprep.subr.bf16.mxu0 0
        %5588 = vmatpush2.bf16.msra.mxu0 0
        %5589 = vmatprep.subr.bf16.mxu0 0
        %5590 = vmatpush2.bf16.msra.mxu0 0
        %5591 = vmatprep.subr.bf16.mxu0 0
        %5592 = vmatpush2.bf16.msra.mxu0 0
        %5593 = vmatprep.mubr.bf16.mxu0 0
        %5594 = vmatmul.mubr.bf16.gmra.mxu0 %v5481
        %v5595 = vpop.f32.mrf.mxu0
        %v5596 = vadd.f32 0.0, %v5595
        %v5597 = vpop.f32.mrf.mxu0
        %v5598 = vpop.f32.mrf.mxu0
        %v5599 = vadd.f32 0.0, %v5598
        %v5600 = vpop.f32.mrf.mxu0
        %5601 = vmatprep.mubr.bf16.mxu0 0
        %5602 = vmatmul.mubr.bf16.gmra.mxu0 %v5482
        %v5603 = vpop.f32.mrf.mxu0
        %v5604 = vadd.f32 0.0, %v5603
        %v5605 = vpop.f32.mrf.mxu0
        %v5606 = vpop.f32.mrf.mxu0
        %v5607 = vadd.f32 0.0, %v5606
        %v5608 = vpop.f32.mrf.mxu0
        %5609 = vmatprep.mubr.bf16.mxu0 0
        %5610 = vmatmul.mubr.bf16.gmra.mxu0 %v5483
        %v5611 = vpop.f32.mrf.mxu0
        %v5612 = vadd.f32 0.0, %v5611
        %v5613 = vpop.f32.mrf.mxu0
        %v5614 = vpop.f32.mrf.mxu0
        %v5615 = vadd.f32 0.0, %v5614
        %v5616 = vpop.f32.mrf.mxu0
        %5617 = vmatprep.mubr.bf16.mxu0 0
        %5618 = vmatmul.mubr.bf16.gmra.mxu0 %v5484
        %v5619 = vpop.f32.mrf.mxu0
        %v5620 = vadd.f32 0.0, %v5619
        %v5621 = vpop.f32.mrf.mxu0
        %v5622 = vpop.f32.mrf.mxu0
        %v5623 = vadd.f32 0.0, %v5622
        %v5624 = vpop.f32.mrf.mxu0
        %5625 = vmatprep.mubr.bf16.mxu0 0
        %5626 = vmatmul.mubr.bf16.gmra.mxu0 %v5485
        %v5627 = vpop.f32.mrf.mxu0
        %v5628 = vadd.f32 0.0, %v5627
        %v5629 = vpop.f32.mrf.mxu0
        %v5630 = vpop.f32.mrf.mxu0
        %v5631 = vadd.f32 0.0, %v5630
        %v5632 = vpop.f32.mrf.mxu0
        %5633 = vmatprep.mubr.bf16.mxu0 0
        %5634 = vmatmul.mubr.bf16.gmra.mxu0 %v5486
        %v5635 = vpop.f32.mrf.mxu0
        %v5636 = vadd.f32 0.0, %v5635
        %v5637 = vpop.f32.mrf.mxu0
        %v5638 = vpop.f32.mrf.mxu0
        %v5639 = vadd.f32 0.0, %v5638
        %v5640 = vpop.f32.mrf.mxu0
        %5641 = vmatprep.mubr.bf16.mxu0 0
        %5642 = vmatmul.mubr.bf16.gmra.mxu0 %v5487
        %v5643 = vpop.f32.mrf.mxu0
        %v5644 = vadd.f32 0.0, %v5643
        %v5645 = vpop.f32.mrf.mxu0
        %v5646 = vpop.f32.mrf.mxu0
        %v5647 = vadd.f32 0.0, %v5646
        %v5648 = vpop.f32.mrf.mxu0
        %5649 = vmatprep.mubr.bf16.mxu0 0
        %5650 = vmatmul.mubr.bf16.gmra.mxu0 %v5488
        %v5651 = vpop.f32.mrf.mxu0
        %v5652 = vadd.f32 0.0, %v5651
        %v5653 = vpop.f32.mrf.mxu0
        %v5654 = vpop.f32.mrf.mxu0
        %v5655 = vadd.f32 0.0, %v5654
        %v5656 = vpop.f32.mrf.mxu0
        %5657 = vmatprep.mubr.bf16.mxu0 0
        %5658 = vmatmul.mubr.bf16.gmra.mxu0 %v5489
        %v5659 = vpop.f32.mrf.mxu0
        %v5660 = vadd.f32 0.0, %v5659
        %v5661 = vpop.f32.mrf.mxu0
        %v5662 = vpop.f32.mrf.mxu0
        %v5663 = vadd.f32 0.0, %v5662
        %v5664 = vpop.f32.mrf.mxu0
        %5665 = vmatprep.mubr.bf16.mxu0 0
        %5666 = vmatmul.mubr.bf16.gmra.mxu0 %v5490
        %v5667 = vpop.f32.mrf.mxu0
        %v5668 = vadd.f32 0.0, %v5667
        %v5669 = vpop.f32.mrf.mxu0
        %v5670 = vpop.f32.mrf.mxu0
        %v5671 = vadd.f32 0.0, %v5670
        %v5672 = vpop.f32.mrf.mxu0
        %5673 = vmatprep.mubr.bf16.mxu0 0
        %5674 = vmatmul.mubr.bf16.gmra.mxu0 %v5491
        %v5675 = vpop.f32.mrf.mxu0
        %v5676 = vadd.f32 0.0, %v5675
        %v5677 = vpop.f32.mrf.mxu0
        %v5678 = vpop.f32.mrf.mxu0
        %v5679 = vadd.f32 0.0, %v5678
        %v5680 = vpop.f32.mrf.mxu0
        %5681 = vmatprep.mubr.bf16.mxu0 0
        %5682 = vmatmul.mubr.bf16.gmra.mxu0 %v5492
        %v5683 = vpop.f32.mrf.mxu0
        %v5684 = vadd.f32 0.0, %v5683
        %v5685 = vpop.f32.mrf.mxu0
        %v5686 = vpop.f32.mrf.mxu0
        %v5687 = vadd.f32 0.0, %v5686
        %v5688 = vpop.f32.mrf.mxu0
        %5689 = vmatprep.mubr.bf16.mxu0 0
        %5690 = vmatmul.mubr.bf16.gmra.mxu0 %v5493
        %v5691 = vpop.f32.mrf.mxu0
        %v5692 = vadd.f32 0.0, %v5691
        %v5693 = vpop.f32.mrf.mxu0
        %v5694 = vpop.f32.mrf.mxu0
        %v5695 = vadd.f32 0.0, %v5694
        %v5696 = vpop.f32.mrf.mxu0
        %5697 = vmatprep.mubr.bf16.mxu0 0
        %5698 = vmatmul.mubr.bf16.gmra.mxu0 %v5494
        %v5699 = vpop.f32.mrf.mxu0
        %v5700 = vadd.f32 0.0, %v5699
        %v5701 = vpop.f32.mrf.mxu0
        %v5702 = vpop.f32.mrf.mxu0
        %v5703 = vadd.f32 0.0, %v5702
        %v5704 = vpop.f32.mrf.mxu0
        %5705 = vmatprep.mubr.bf16.mxu0 0
        %5706 = vmatmul.mubr.bf16.gmra.mxu0 %v5495
        %v5707 = vpop.f32.mrf.mxu0
        %v5708 = vadd.f32 0.0, %v5707
        %v5709 = vpop.f32.mrf.mxu0
        %v5710 = vpop.f32.mrf.mxu0
        %v5711 = vadd.f32 0.0, %v5710
        %v5712 = vpop.f32.mrf.mxu0
        %5713 = vmatprep.mubr.bf16.mxu0 0
        %5714 = vmatmul.mubr.bf16.gmra.mxu0 %v5496
        %v5715 = vpop.f32.mrf.mxu0
        %v5716 = vadd.f32 0.0, %v5715
        %v5717 = vpop.f32.mrf.mxu0
        %v5718 = vpop.f32.mrf.mxu0
        %v5719 = vadd.f32 0.0, %v5718
        %v5720 = vpop.f32.mrf.mxu0
        %5721 = vdwg.mxu0
        %v5722 = vadd.f32 %v5224, %v5596
        %v5723 = vadd.f32 %v5225, %v5599
        %v5724 = vadd.f32 %v5226, %v5604
        %v5725 = vadd.f32 %v5227, %v5607
        %v5726 = vadd.f32 %v5228, %v5612
        %v5727 = vadd.f32 %v5229, %v5615
        %v5728 = vadd.f32 %v5230, %v5620
        %v5729 = vadd.f32 %v5231, %v5623
        %v5730 = vadd.f32 %v5232, %v5628
        %v5731 = vadd.f32 %v5233, %v5631
        %v5732 = vadd.f32 %v5234, %v5636
        %v5733 = vadd.f32 %v5235, %v5639
        %v5734 = vadd.f32 %v5236, %v5644
        %v5735 = vadd.f32 %v5237, %v5647
        %v5736 = vadd.f32 %v5238, %v5652
        %v5737 = vadd.f32 %v5239, %v5655
        %v5738 = vadd.f32 %v5240, %v5660
        %v5739 = vadd.f32 %v5241, %v5663
        %v5740 = vadd.f32 %v5242, %v5668
        %v5741 = vadd.f32 %v5243, %v5671
        %v5742 = vadd.f32 %v5244, %v5676
        %v5743 = vadd.f32 %v5245, %v5679
        %v5744 = vadd.f32 %v5246, %v5684
        %v5745 = vadd.f32 %v5247, %v5687
        %v5746 = vadd.f32 %v5248, %v5692
        %v5747 = vadd.f32 %v5249, %v5695
        %v5748 = vadd.f32 %v5250, %v5700
        %v5749 = vadd.f32 %v5251, %v5703
        %v5750 = vadd.f32 %v5252, %v5708
        %v5751 = vadd.f32 %v5253, %v5711
        %v5752 = vadd.f32 %v5254, %v5716
        %v5753 = vadd.f32 %v5255, %v5719
        %v5754 = vld [vmem:[%s2] sm:$0x1]
        %v5756 = vlaneseq
        %v5757 = vshrl.u32 %v5756, 7
        %v5758 = vsub.s32 0, %v5757
        %v5759 = vrot.slane %v5754, %v5758
        %v5761 = vadd.f32 %v5722, %v5759
        %v5762 = vadd.f32 %v5723, %v5759
        %v5763 = vadd.f32 %v5724, %v5759
        %v5764 = vadd.f32 %v5725, %v5759
        %v5765 = vadd.f32 %v5726, %v5759
        %v5766 = vadd.f32 %v5727, %v5759
        %v5767 = vadd.f32 %v5728, %v5759
        %v5768 = vadd.f32 %v5729, %v5759
        %v5769 = vadd.f32 %v5730, %v5759
        %v5770 = vadd.f32 %v5731, %v5759
        %v5771 = vadd.f32 %v5732, %v5759
        %v5772 = vadd.f32 %v5733, %v5759
        %v5773 = vadd.f32 %v5734, %v5759
        %v5774 = vadd.f32 %v5735, %v5759
        %v5775 = vadd.f32 %v5736, %v5759
        %v5776 = vadd.f32 %v5737, %v5759
        %v5777 = vadd.f32 %v5738, %v5759
        %v5778 = vadd.f32 %v5739, %v5759
        %v5779 = vadd.f32 %v5740, %v5759
        %v5780 = vadd.f32 %v5741, %v5759
        %v5781 = vadd.f32 %v5742, %v5759
        %v5782 = vadd.f32 %v5743, %v5759
        %v5783 = vadd.f32 %v5744, %v5759
        %v5784 = vadd.f32 %v5745, %v5759
        %v5785 = vadd.f32 %v5746, %v5759
        %v5786 = vadd.f32 %v5747, %v5759
        %v5787 = vadd.f32 %v5748, %v5759
        %v5788 = vadd.f32 %v5749, %v5759
        %v5789 = vadd.f32 %v5750, %v5759
        %v5790 = vadd.f32 %v5751, %v5759
        %v5791 = vadd.f32 %v5752, %v5759
        %v5792 = vadd.f32 %v5753, %v5759
        %vm5793 = vcmp.ge.f32.partialorder %v5761, 0.0
        %vm5794 = vcmp.ge.f32.partialorder %v5762, 0.0
        %vm5795 = vcmp.ge.f32.partialorder %v5763, 0.0
        %vm5796 = vcmp.ge.f32.partialorder %v5764, 0.0
        %vm5797 = vcmp.ge.f32.partialorder %v5765, 0.0
        %vm5798 = vcmp.ge.f32.partialorder %v5766, 0.0
        %vm5799 = vcmp.ge.f32.partialorder %v5767, 0.0
        %vm5800 = vcmp.ge.f32.partialorder %v5768, 0.0
        %vm5801 = vcmp.ge.f32.partialorder %v5769, 0.0
        %vm5802 = vcmp.ge.f32.partialorder %v5770, 0.0
        %vm5803 = vcmp.ge.f32.partialorder %v5771, 0.0
        %vm5804 = vcmp.ge.f32.partialorder %v5772, 0.0
        %vm5805 = vcmp.ge.f32.partialorder %v5773, 0.0
        %vm5806 = vcmp.ge.f32.partialorder %v5774, 0.0
        %vm5807 = vcmp.ge.f32.partialorder %v5775, 0.0
        %vm5808 = vcmp.ge.f32.partialorder %v5776, 0.0
        %vm5809 = vcmp.ge.f32.partialorder %v5777, 0.0
        %vm5810 = vcmp.ge.f32.partialorder %v5778, 0.0
        %vm5811 = vcmp.ge.f32.partialorder %v5779, 0.0
        %vm5812 = vcmp.ge.f32.partialorder %v5780, 0.0
        %vm5813 = vcmp.ge.f32.partialorder %v5781, 0.0
        %vm5814 = vcmp.ge.f32.partialorder %v5782, 0.0
        %vm5815 = vcmp.ge.f32.partialorder %v5783, 0.0
        %vm5816 = vcmp.ge.f32.partialorder %v5784, 0.0
        %vm5817 = vcmp.ge.f32.partialorder %v5785, 0.0
        %vm5818 = vcmp.ge.f32.partialorder %v5786, 0.0
        %vm5819 = vcmp.ge.f32.partialorder %v5787, 0.0
        %vm5820 = vcmp.ge.f32.partialorder %v5788, 0.0
        %vm5821 = vcmp.ge.f32.partialorder %v5789, 0.0
        %vm5822 = vcmp.ge.f32.partialorder %v5790, 0.0
        %vm5823 = vcmp.ge.f32.partialorder %v5791, 0.0
        %vm5824 = vcmp.ge.f32.partialorder %v5792, 0.0
        %v5825 = vmul.f32 %v5761, 0.2
        %v5826 = vmul.f32 %v5762, 0.2
        %v5827 = vmul.f32 %v5763, 0.2
        %v5828 = vmul.f32 %v5764, 0.2
        %v5829 = vmul.f32 %v5765, 0.2
        %v5830 = vmul.f32 %v5766, 0.2
        %v5831 = vmul.f32 %v5767, 0.2
        %v5832 = vmul.f32 %v5768, 0.2
        %v5833 = vmul.f32 %v5769, 0.2
        %v5834 = vmul.f32 %v5770, 0.2
        %v5835 = vmul.f32 %v5771, 0.2
        %v5836 = vmul.f32 %v5772, 0.2
        %v5837 = vmul.f32 %v5773, 0.2
        %v5838 = vmul.f32 %v5774, 0.2
        %v5839 = vmul.f32 %v5775, 0.2
        %v5840 = vmul.f32 %v5776, 0.2
        %v5841 = vmul.f32 %v5777, 0.2
        %v5842 = vmul.f32 %v5778, 0.2
        %v5843 = vmul.f32 %v5779, 0.2
        %v5844 = vmul.f32 %v5780, 0.2
        %v5845 = vmul.f32 %v5781, 0.2
        %v5846 = vmul.f32 %v5782, 0.2
        %v5847 = vmul.f32 %v5783, 0.2
        %v5848 = vmul.f32 %v5784, 0.2
        %v5849 = vmul.f32 %v5785, 0.2
        %v5850 = vmul.f32 %v5786, 0.2
        %v5851 = vmul.f32 %v5787, 0.2
        %v5852 = vmul.f32 %v5788, 0.2
        %v5853 = vmul.f32 %v5789, 0.2
        %v5854 = vmul.f32 %v5790, 0.2
        %v5855 = vmul.f32 %v5791, 0.2
        %v5856 = vmul.f32 %v5792, 0.2
        %v5857 = vsel %vm5793, %v5761, %v5825
        %v5858 = vsel %vm5794, %v5762, %v5826
        %v5859 = vsel %vm5795, %v5763, %v5827
        %v5860 = vsel %vm5796, %v5764, %v5828
        %v5861 = vsel %vm5797, %v5765, %v5829
        %v5862 = vsel %vm5798, %v5766, %v5830
        %v5863 = vsel %vm5799, %v5767, %v5831
        %v5864 = vsel %vm5800, %v5768, %v5832
        %v5865 = vsel %vm5801, %v5769, %v5833
        %v5866 = vsel %vm5802, %v5770, %v5834
        %v5867 = vsel %vm5803, %v5771, %v5835
        %v5868 = vsel %vm5804, %v5772, %v5836
        %v5869 = vsel %vm5805, %v5773, %v5837
        %v5870 = vsel %vm5806, %v5774, %v5838
        %v5871 = vsel %vm5807, %v5775, %v5839
        %v5872 = vsel %vm5808, %v5776, %v5840
        %v5873 = vsel %vm5809, %v5777, %v5841
        %v5874 = vsel %vm5810, %v5778, %v5842
        %v5875 = vsel %vm5811, %v5779, %v5843
        %v5876 = vsel %vm5812, %v5780, %v5844
        %v5877 = vsel %vm5813, %v5781, %v5845
        %v5878 = vsel %vm5814, %v5782, %v5846
        %v5879 = vsel %vm5815, %v5783, %v5847
        %v5880 = vsel %vm5816, %v5784, %v5848
        %v5881 = vsel %vm5817, %v5785, %v5849
        %v5882 = vsel %vm5818, %v5786, %v5850
        %v5883 = vsel %vm5819, %v5787, %v5851
        %v5884 = vsel %vm5820, %v5788, %v5852
        %v5885 = vsel %vm5821, %v5789, %v5853
        %v5886 = vsel %vm5822, %v5790, %v5854
        %v5887 = vsel %vm5823, %v5791, %v5855
        %v5888 = vsel %vm5824, %v5792, %v5856
        %v5889 = vpack.c.bf16 %v5858, %v5857
        %v5890 = vpack.c.bf16 %v5860, %v5859
        %v5891 = vpack.c.bf16 %v5862, %v5861
        %v5892 = vpack.c.bf16 %v5864, %v5863
        %v5893 = vpack.c.bf16 %v5866, %v5865
        %v5894 = vpack.c.bf16 %v5868, %v5867
        %v5895 = vpack.c.bf16 %v5870, %v5869
        %v5896 = vpack.c.bf16 %v5872, %v5871
        %v5897 = vpack.c.bf16 %v5874, %v5873
        %v5898 = vpack.c.bf16 %v5876, %v5875
        %v5899 = vpack.c.bf16 %v5878, %v5877
        %v5900 = vpack.c.bf16 %v5880, %v5879
        %v5901 = vpack.c.bf16 %v5882, %v5881
        %v5902 = vpack.c.bf16 %v5884, %v5883
        %v5903 = vpack.c.bf16 %v5886, %v5885
        %v5904 = vpack.c.bf16 %v5888, %v5887
        %v5921 = vunpack.c.l.b16 %v5889
        %v5922 = vunpack.c.h.b16 %v5889
        %v5923 = vunpack.c.l.b16 %v5890
        %v5924 = vunpack.c.h.b16 %v5890
        %v5925 = vunpack.c.l.b16 %v5891
        %v5926 = vunpack.c.h.b16 %v5891
        %v5927 = vunpack.c.l.b16 %v5892
        %v5928 = vunpack.c.h.b16 %v5892
        %v5929 = vunpack.c.l.b16 %v5893
        %v5930 = vunpack.c.h.b16 %v5893
        %v5931 = vunpack.c.l.b16 %v5894
        %v5932 = vunpack.c.h.b16 %v5894
        %v5933 = vunpack.c.l.b16 %v5895
        %v5934 = vunpack.c.h.b16 %v5895
        %v5935 = vunpack.c.l.b16 %v5896
        %v5936 = vunpack.c.h.b16 %v5896
        %v5937 = vunpack.c.l.b16 %v5897
        %v5938 = vunpack.c.h.b16 %v5897
        %v5939 = vunpack.c.l.b16 %v5898
        %v5940 = vunpack.c.h.b16 %v5898
        %v5941 = vunpack.c.l.b16 %v5899
        %v5942 = vunpack.c.h.b16 %v5899
        %v5943 = vunpack.c.l.b16 %v5900
        %v5944 = vunpack.c.h.b16 %v5900
        %v5945 = vunpack.c.l.b16 %v5901
        %v5946 = vunpack.c.h.b16 %v5901
        %v5947 = vunpack.c.l.b16 %v5902
        %v5948 = vunpack.c.h.b16 %v5902
        %v5949 = vunpack.c.l.b16 %v5903
        %v5950 = vunpack.c.h.b16 %v5903
        %v5951 = vunpack.c.l.b16 %v5904
        %v5952 = vunpack.c.h.b16 %v5904
        %v5953 = vpack.c.b16 %v5921, %v5921
        %v5954 = vpack.c.b16 %v5922, %v5922
        %v5955 = vpack.c.b16 %v5923, %v5923
        %v5956 = vpack.c.b16 %v5924, %v5924
        %v5957 = vpack.c.b16 %v5925, %v5925
        %v5958 = vpack.c.b16 %v5926, %v5926
        %v5959 = vpack.c.b16 %v5927, %v5927
        %v5960 = vpack.c.b16 %v5928, %v5928
        %v5961 = vpack.c.b16 %v5929, %v5929
        %v5962 = vpack.c.b16 %v5930, %v5930
        %v5963 = vpack.c.b16 %v5931, %v5931
        %v5964 = vpack.c.b16 %v5932, %v5932
        %v5965 = vpack.c.b16 %v5933, %v5933
        %v5966 = vpack.c.b16 %v5934, %v5934
        %v5967 = vpack.c.b16 %v5935, %v5935
        %v5968 = vpack.c.b16 %v5936, %v5936
        %v5969 = vpack.c.b16 %v5937, %v5937
        %v5970 = vpack.c.b16 %v5938, %v5938
        %v5971 = vpack.c.b16 %v5939, %v5939
        %v5972 = vpack.c.b16 %v5940, %v5940
        %v5973 = vpack.c.b16 %v5941, %v5941
        %v5974 = vpack.c.b16 %v5942, %v5942
        %v5975 = vpack.c.b16 %v5943, %v5943
        %v5976 = vpack.c.b16 %v5944, %v5944
        %v5977 = vpack.c.b16 %v5945, %v5945
        %v5978 = vpack.c.b16 %v5946, %v5946
        %v5979 = vpack.c.b16 %v5947, %v5947
        %v5980 = vpack.c.b16 %v5948, %v5948
        %v5981 = vpack.c.b16 %v5949, %v5949
        %v5982 = vpack.c.b16 %v5950, %v5950
        %v5983 = vpack.c.b16 %v5951, %v5951
        %v5984 = vpack.c.b16 %v5952, %v5952
        %v5986 = vshrl.u32 %v5953, 16
        %v5988 = vrot.slane %v5986, 7
        %v5989 = vshll.u32 %v5953, 16
        %v5991 = vor.u32 %v5988, %v5989
        %v5992 = vrot.slane %v5988, 4
        %v5994 = vshrl.u32 %v5954, 16
        %v5996 = vrot.slane %v5994, 7
        %v5997 = vshll.u32 %v5954, 16
        %v5999 = vor.u32 %v5996, %v5997
        %v6000 = vsel %vm511, %v5992, %v5999
        %v6001 = vrot.slane %v5996, 4
        %v6003 = vshrl.u32 %v5955, 16
        %v6005 = vrot.slane %v6003, 7
        %v6006 = vshll.u32 %v5955, 16
        %v6008 = vor.u32 %v6005, %v6006
        %v6009 = vrot.slane %v6005, 4
        %v6011 = vshrl.u32 %v5956, 16
        %v6013 = vrot.slane %v6011, 7
        %v6014 = vshll.u32 %v5956, 16
        %v6016 = vor.u32 %v6013, %v6014
        %v6017 = vsel %vm511, %v6009, %v6016
        %v6018 = vrot.slane %v6013, 4
        %v6020 = vshrl.u32 %v5957, 16
        %v6022 = vrot.slane %v6020, 7
        %v6023 = vshll.u32 %v5957, 16
        %v6025 = vor.u32 %v6022, %v6023
        %v6026 = vrot.slane %v6022, 4
        %v6028 = vshrl.u32 %v5958, 16
        %v6030 = vrot.slane %v6028, 7
        %v6031 = vshll.u32 %v5958, 16
        %v6033 = vor.u32 %v6030, %v6031
        %v6034 = vsel %vm511, %v6026, %v6033
        %v6035 = vrot.slane %v6030, 4
        %v6037 = vshrl.u32 %v5959, 16
        %v6039 = vrot.slane %v6037, 7
        %v6040 = vshll.u32 %v5959, 16
        %v6042 = vor.u32 %v6039, %v6040
        %v6043 = vrot.slane %v6039, 4
        %v6045 = vshrl.u32 %v5960, 16
        %v6047 = vrot.slane %v6045, 7
        %v6048 = vshll.u32 %v5960, 16
        %v6050 = vor.u32 %v6047, %v6048
        %v6051 = vsel %vm511, %v6043, %v6050
        %v6052 = vrot.slane %v6047, 4
        %v6054 = vshrl.u32 %v5961, 16
        %v6056 = vrot.slane %v6054, 7
        %v6057 = vshll.u32 %v5961, 16
        %v6059 = vor.u32 %v6056, %v6057
        %v6060 = vrot.slane %v6056, 4
        %v6062 = vshrl.u32 %v5962, 16
        %v6064 = vrot.slane %v6062, 7
        %v6065 = vshll.u32 %v5962, 16
        %v6067 = vor.u32 %v6064, %v6065
        %v6068 = vsel %vm511, %v6060, %v6067
        %v6069 = vrot.slane %v6064, 4
        %v6071 = vshrl.u32 %v5963, 16
        %v6073 = vrot.slane %v6071, 7
        %v6074 = vshll.u32 %v5963, 16
        %v6076 = vor.u32 %v6073, %v6074
        %v6077 = vrot.slane %v6073, 4
        %v6079 = vshrl.u32 %v5964, 16
        %v6081 = vrot.slane %v6079, 7
        %v6082 = vshll.u32 %v5964, 16
        %v6084 = vor.u32 %v6081, %v6082
        %v6085 = vsel %vm511, %v6077, %v6084
        %v6086 = vrot.slane %v6081, 4
        %v6088 = vshrl.u32 %v5965, 16
        %v6090 = vrot.slane %v6088, 7
        %v6091 = vshll.u32 %v5965, 16
        %v6093 = vor.u32 %v6090, %v6091
        %v6094 = vrot.slane %v6090, 4
        %v6096 = vshrl.u32 %v5966, 16
        %v6098 = vrot.slane %v6096, 7
        %v6099 = vshll.u32 %v5966, 16
        %v6101 = vor.u32 %v6098, %v6099
        %v6102 = vsel %vm511, %v6094, %v6101
        %v6103 = vrot.slane %v6098, 4
        %v6105 = vshrl.u32 %v5967, 16
        %v6107 = vrot.slane %v6105, 7
        %v6108 = vshll.u32 %v5967, 16
        %v6110 = vor.u32 %v6107, %v6108
        %v6111 = vrot.slane %v6107, 4
        %v6113 = vshrl.u32 %v5968, 16
        %v6115 = vrot.slane %v6113, 7
        %v6116 = vshll.u32 %v5968, 16
        %v6118 = vor.u32 %v6115, %v6116
        %v6119 = vsel %vm511, %v6111, %v6118
        %v6120 = vrot.slane %v6115, 4
        %v6122 = vshrl.u32 %v5969, 16
        %v6124 = vrot.slane %v6122, 7
        %v6125 = vshll.u32 %v5969, 16
        %v6127 = vor.u32 %v6124, %v6125
        %v6128 = vrot.slane %v6124, 4
        %v6130 = vshrl.u32 %v5970, 16
        %v6132 = vrot.slane %v6130, 7
        %v6133 = vshll.u32 %v5970, 16
        %v6135 = vor.u32 %v6132, %v6133
        %v6136 = vsel %vm511, %v6128, %v6135
        %v6137 = vrot.slane %v6132, 4
        %v6139 = vshrl.u32 %v5971, 16
        %v6141 = vrot.slane %v6139, 7
        %v6142 = vshll.u32 %v5971, 16
        %v6144 = vor.u32 %v6141, %v6142
        %v6145 = vrot.slane %v6141, 4
        %v6147 = vshrl.u32 %v5972, 16
        %v6149 = vrot.slane %v6147, 7
        %v6150 = vshll.u32 %v5972, 16
        %v6152 = vor.u32 %v6149, %v6150
        %v6153 = vsel %vm511, %v6145, %v6152
        %v6154 = vrot.slane %v6149, 4
        %v6156 = vshrl.u32 %v5973, 16
        %v6158 = vrot.slane %v6156, 7
        %v6159 = vshll.u32 %v5973, 16
        %v6161 = vor.u32 %v6158, %v6159
        %v6162 = vrot.slane %v6158, 4
        %v6164 = vshrl.u32 %v5974, 16
        %v6166 = vrot.slane %v6164, 7
        %v6167 = vshll.u32 %v5974, 16
        %v6169 = vor.u32 %v6166, %v6167
        %v6170 = vsel %vm511, %v6162, %v6169
        %v6171 = vrot.slane %v6166, 4
        %v6173 = vshrl.u32 %v5975, 16
        %v6175 = vrot.slane %v6173, 7
        %v6176 = vshll.u32 %v5975, 16
        %v6178 = vor.u32 %v6175, %v6176
        %v6179 = vrot.slane %v6175, 4
        %v6181 = vshrl.u32 %v5976, 16
        %v6183 = vrot.slane %v6181, 7
        %v6184 = vshll.u32 %v5976, 16
        %v6186 = vor.u32 %v6183, %v6184
        %v6187 = vsel %vm511, %v6179, %v6186
        %v6188 = vrot.slane %v6183, 4
        %v6190 = vshrl.u32 %v5977, 16
        %v6192 = vrot.slane %v6190, 7
        %v6193 = vshll.u32 %v5977, 16
        %v6195 = vor.u32 %v6192, %v6193
        %v6196 = vrot.slane %v6192, 4
        %v6198 = vshrl.u32 %v5978, 16
        %v6200 = vrot.slane %v6198, 7
        %v6201 = vshll.u32 %v5978, 16
        %v6203 = vor.u32 %v6200, %v6201
        %v6204 = vsel %vm511, %v6196, %v6203
        %v6205 = vrot.slane %v6200, 4
        %v6207 = vshrl.u32 %v5979, 16
        %v6209 = vrot.slane %v6207, 7
        %v6210 = vshll.u32 %v5979, 16
        %v6212 = vor.u32 %v6209, %v6210
        %v6213 = vrot.slane %v6209, 4
        %v6215 = vshrl.u32 %v5980, 16
        %v6217 = vrot.slane %v6215, 7
        %v6218 = vshll.u32 %v5980, 16
        %v6220 = vor.u32 %v6217, %v6218
        %v6221 = vsel %vm511, %v6213, %v6220
        %v6222 = vrot.slane %v6217, 4
        %v6224 = vshrl.u32 %v5981, 16
        %v6226 = vrot.slane %v6224, 7
        %v6227 = vshll.u32 %v5981, 16
        %v6229 = vor.u32 %v6226, %v6227
        %v6230 = vrot.slane %v6226, 4
        %v6232 = vshrl.u32 %v5982, 16
        %v6234 = vrot.slane %v6232, 7
        %v6235 = vshll.u32 %v5982, 16
        %v6237 = vor.u32 %v6234, %v6235
        %v6238 = vsel %vm511, %v6230, %v6237
        %v6239 = vrot.slane %v6234, 4
        %v6241 = vshrl.u32 %v5983, 16
        %v6243 = vrot.slane %v6241, 7
        %v6244 = vshll.u32 %v5983, 16
        %v6246 = vor.u32 %v6243, %v6244
        %v6247 = vrot.slane %v6243, 4
        %v6249 = vshrl.u32 %v5984, 16
        %v6251 = vrot.slane %v6249, 7
        %v6252 = vshll.u32 %v5984, 16
        %v6254 = vor.u32 %v6251, %v6252
        %v6255 = vsel %vm511, %v6247, %v6254
        %v6256 = vrot.slane %v6251, 4
        %v6305 = vsel %vm833, %v5991, %v2863
        %6306 = vst [vmem:[%s280] sm:$0xf] %v6305
        %6307 = vst [vmem:[%s280 + $0x4] sm:$0xf] %v6000
        %v6308 = vld [vmem:[%s280 + $0x8] sm:$0x1]
        %v6309 = vsel %vm283, %v6001, %v6308
        %6310 = vst [vmem:[%s280 + $0x8] sm:$0x1] %v6309
        %v6311 = vld [vmem:[%s280 + $0xc] sm:$0xf]
        %v6312 = vsel %vm833, %v6008, %v6311
        %6313 = vst [vmem:[%s280 + $0xc] sm:$0xf] %v6312
        %6314 = vst [vmem:[%s280 + $0x10] sm:$0xf] %v6017
        %v6315 = vld [vmem:[%s280 + $0x14] sm:$0x1]
        %v6316 = vsel %vm283, %v6018, %v6315
        %6317 = vst [vmem:[%s280 + $0x14] sm:$0x1] %v6316
        %v6318 = vld [vmem:[%s280 + $0x18] sm:$0xf]
        %v6319 = vsel %vm833, %v6025, %v6318
        %6320 = vst [vmem:[%s280 + $0x18] sm:$0xf] %v6319
        %6321 = vst [vmem:[%s280 + $0x1c] sm:$0xf] %v6034
        %v6322 = vld [vmem:[%s280 + $0x20] sm:$0x1]
        %v6323 = vsel %vm283, %v6035, %v6322
        %6324 = vst [vmem:[%s280 + $0x20] sm:$0x1] %v6323
        %v6325 = vld [vmem:[%s280 + $0x24] sm:$0xf]
        %v6326 = vsel %vm833, %v6042, %v6325
        %6327 = vst [vmem:[%s280 + $0x24] sm:$0xf] %v6326
        %6328 = vst [vmem:[%s280 + $0x28] sm:$0xf] %v6051
        %v6329 = vld [vmem:[%s280 + $0x2c] sm:$0x1]
        %v6330 = vsel %vm283, %v6052, %v6329
        %6331 = vst [vmem:[%s280 + $0x2c] sm:$0x1] %v6330
        %v6332 = vld [vmem:[%s280 + $0x30] sm:$0xf]
        %v6333 = vsel %vm833, %v6059, %v6332
        %6334 = vst [vmem:[%s280 + $0x30] sm:$0xf] %v6333
        %6335 = vst [vmem:[%s280 + $0x34] sm:$0xf] %v6068
        %v6336 = vld [vmem:[%s280 + $0x38] sm:$0x1]
        %v6337 = vsel %vm283, %v6069, %v6336
        %6338 = vst [vmem:[%s280 + $0x38] sm:$0x1] %v6337
        %v6339 = vld [vmem:[%s280 + $0x3c] sm:$0xf]
        %v6340 = vsel %vm833, %v6076, %v6339
        %6341 = vst [vmem:[%s280 + $0x3c] sm:$0xf] %v6340
        %6342 = vst [vmem:[%s280 + $0x40] sm:$0xf] %v6085
        %v6343 = vld [vmem:[%s280 + $0x44] sm:$0x1]
        %v6344 = vsel %vm283, %v6086, %v6343
        %6345 = vst [vmem:[%s280 + $0x44] sm:$0x1] %v6344
        %v6346 = vld [vmem:[%s280 + $0x48] sm:$0xf]
        %v6347 = vsel %vm833, %v6093, %v6346
        %6348 = vst [vmem:[%s280 + $0x48] sm:$0xf] %v6347
        %6349 = vst [vmem:[%s280 + $0x4c] sm:$0xf] %v6102
        %v6350 = vld [vmem:[%s280 + $0x50] sm:$0x1]
        %v6351 = vsel %vm283, %v6103, %v6350
        %6352 = vst [vmem:[%s280 + $0x50] sm:$0x1] %v6351
        %v6353 = vld [vmem:[%s280 + $0x54] sm:$0xf]
        %v6354 = vsel %vm833, %v6110, %v6353
        %6355 = vst [vmem:[%s280 + $0x54] sm:$0xf] %v6354
        %6356 = vst [vmem:[%s280 + $0x58] sm:$0xf] %v6119
        %v6357 = vld [vmem:[%s280 + $0x5c] sm:$0x1]
        %v6358 = vsel %vm283, %v6120, %v6357
        %6359 = vst [vmem:[%s280 + $0x5c] sm:$0x1] %v6358
        %v6360 = vld [vmem:[%s280 + $0x60] sm:$0xf]
        %v6361 = vsel %vm833, %v6127, %v6360
        %6362 = vst [vmem:[%s280 + $0x60] sm:$0xf] %v6361
        %6363 = vst [vmem:[%s280 + $0x64] sm:$0xf] %v6136
        %v6364 = vld [vmem:[%s280 + $0x68] sm:$0x1]
        %v6365 = vsel %vm283, %v6137, %v6364
        %6366 = vst [vmem:[%s280 + $0x68] sm:$0x1] %v6365
        %v6367 = vld [vmem:[%s280 + $0x6c] sm:$0xf]
        %v6368 = vsel %vm833, %v6144, %v6367
        %6369 = vst [vmem:[%s280 + $0x6c] sm:$0xf] %v6368
        %6370 = vst [vmem:[%s280 + $0x70] sm:$0xf] %v6153
        %v6371 = vld [vmem:[%s280 + $0x74] sm:$0x1]
        %v6372 = vsel %vm283, %v6154, %v6371
        %6373 = vst [vmem:[%s280 + $0x74] sm:$0x1] %v6372
        %v6374 = vld [vmem:[%s280 + $0x78] sm:$0xf]
        %v6375 = vsel %vm833, %v6161, %v6374
        %6376 = vst [vmem:[%s280 + $0x78] sm:$0xf] %v6375
        %6377 = vst [vmem:[%s280 + $0x7c] sm:$0xf] %v6170
        %v6378 = vld [vmem:[%s280 + $0x80] sm:$0x1]
        %v6379 = vsel %vm283, %v6171, %v6378
        %6380 = vst [vmem:[%s280 + $0x80] sm:$0x1] %v6379
        %v6381 = vld [vmem:[%s280 + $0x84] sm:$0xf]
        %v6382 = vsel %vm833, %v6178, %v6381
        %6383 = vst [vmem:[%s280 + $0x84] sm:$0xf] %v6382
        %6384 = vst [vmem:[%s280 + $0x88] sm:$0xf] %v6187
        %v6385 = vld [vmem:[%s280 + $0x8c] sm:$0x1]
        %v6386 = vsel %vm283, %v6188, %v6385
        %6387 = vst [vmem:[%s280 + $0x8c] sm:$0x1] %v6386
        %v6388 = vld [vmem:[%s280 + $0x90] sm:$0xf]
        %v6389 = vsel %vm833, %v6195, %v6388
        %6390 = vst [vmem:[%s280 + $0x90] sm:$0xf] %v6389
        %6391 = vst [vmem:[%s280 + $0x94] sm:$0xf] %v6204
        %v6392 = vld [vmem:[%s280 + $0x98] sm:$0x1]
        %v6393 = vsel %vm283, %v6205, %v6392
        %6394 = vst [vmem:[%s280 + $0x98] sm:$0x1] %v6393
        %v6395 = vld [vmem:[%s280 + $0x9c] sm:$0xf]
        %v6396 = vsel %vm833, %v6212, %v6395
        %6397 = vst [vmem:[%s280 + $0x9c] sm:$0xf] %v6396
        %6398 = vst [vmem:[%s280 + $0xa0] sm:$0xf] %v6221
        %v6399 = vld [vmem:[%s280 + $0xa4] sm:$0x1]
        %v6400 = vsel %vm283, %v6222, %v6399
        %6401 = vst [vmem:[%s280 + $0xa4] sm:$0x1] %v6400
        %v6402 = vld [vmem:[%s280 + $0xa8] sm:$0xf]
        %v6403 = vsel %vm833, %v6229, %v6402
        %6404 = vst [vmem:[%s280 + $0xa8] sm:$0xf] %v6403
        %6405 = vst [vmem:[%s280 + $0xac] sm:$0xf] %v6238
        %v6406 = vld [vmem:[%s280 + $0xb0] sm:$0x1]
        %v6407 = vsel %vm283, %v6239, %v6406
        %6408 = vst [vmem:[%s280 + $0xb0] sm:$0x1] %v6407
        %v6409 = vld [vmem:[%s280 + $0xb4] sm:$0xf]
        %v6410 = vsel %vm833, %v6246, %v6409
        %6411 = vst [vmem:[%s280 + $0xb4] sm:$0xf] %v6410
        %6412 = vst [vmem:[%s280 + $0xb8] sm:$0xf] %v6255
        %v6413 = vld [vmem:[%s280 + $0xbc] sm:$0x1]
        %v6414 = vsel %vm283, %v6256, %v6413
        %6415 = vst [vmem:[%s280 + $0xbc] sm:$0x1] %v6414
        %v6416 = vld [vmem:[#allocation2] sm:$0xf]
        %v6417 = vld [vmem:[#allocation2 + $0x4] sm:$0xf]
        %v6418 = vld [vmem:[#allocation2 + $0xc] sm:$0xf]
        %v6419 = vld [vmem:[#allocation2 + $0x10] sm:$0xf]
        %v6420 = vld [vmem:[#allocation2 + $0x18] sm:$0xf]
        %v6421 = vld [vmem:[#allocation2 + $0x1c] sm:$0xf]
        %v6422 = vld [vmem:[#allocation2 + $0x24] sm:$0xf]
        %v6423 = vld [vmem:[#allocation2 + $0x28] sm:$0xf]
        %v6424 = vld [vmem:[#allocation2 + $0x30] sm:$0xf]
        %v6425 = vld [vmem:[#allocation2 + $0x34] sm:$0xf]
        %v6426 = vld [vmem:[#allocation2 + $0x3c] sm:$0xf]
        %v6427 = vld [vmem:[#allocation2 + $0x40] sm:$0xf]
        %v6428 = vld [vmem:[#allocation2 + $0x48] sm:$0xf]
        %v6429 = vld [vmem:[#allocation2 + $0x4c] sm:$0xf]
        %v6430 = vld [vmem:[#allocation2 + $0x54] sm:$0xf]
        %v6431 = vld [vmem:[#allocation2 + $0x58] sm:$0xf]
        %v6432 = vld [vmem:[#allocation2 + $0x60] sm:$0xf]
        %v6433 = vld [vmem:[#allocation2 + $0x64] sm:$0xf]
        %v6434 = vld [vmem:[#allocation2 + $0x6c] sm:$0xf]
        %v6435 = vld [vmem:[#allocation2 + $0x70] sm:$0xf]
        %v6436 = vld [vmem:[#allocation2 + $0x78] sm:$0xf]
        %v6437 = vld [vmem:[#allocation2 + $0x7c] sm:$0xf]
        %v6438 = vld [vmem:[#allocation2 + $0x84] sm:$0xf]
        %v6439 = vld [vmem:[#allocation2 + $0x88] sm:$0xf]
        %v6440 = vld [vmem:[#allocation2 + $0x90] sm:$0xf]
        %v6441 = vld [vmem:[#allocation2 + $0x94] sm:$0xf]
        %v6442 = vld [vmem:[#allocation2 + $0x9c] sm:$0xf]
        %v6443 = vld [vmem:[#allocation2 + $0xa0] sm:$0xf]
        %v6444 = vld [vmem:[#allocation2 + $0xa8] sm:$0xf]
        %v6445 = vld [vmem:[#allocation2 + $0xac] sm:$0xf]
        %v6446 = vld [vmem:[#allocation2 + $0xb4] sm:$0xf]
        %v6447 = vld [vmem:[#allocation2 + $0xb8] sm:$0xf]
        %v6448 = vld [vmem:[#allocation8] sm:$0xf]
        %v6449 = vld [vmem:[#allocation8 + $0x4] sm:$0xf]
        %v6450 = vld [vmem:[#allocation8 + $0x8] sm:$0xf]
        %v6451 = vld [vmem:[#allocation8 + $0xc] sm:$0xf]
        %v6452 = vld [vmem:[#allocation8 + $0x10] sm:$0xf]
        %v6453 = vld [vmem:[#allocation8 + $0x14] sm:$0xf]
        %v6454 = vld [vmem:[#allocation8 + $0x18] sm:$0xf]
        %v6455 = vld [vmem:[#allocation8 + $0x1c] sm:$0xf]
        %v6456 = vld [vmem:[#allocation8 + $0x20] sm:$0xf]
        %v6457 = vld [vmem:[#allocation8 + $0x24] sm:$0xf]
        %v6458 = vld [vmem:[#allocation8 + $0x28] sm:$0xf]
        %v6459 = vld [vmem:[#allocation8 + $0x2c] sm:$0xf]
        %v6460 = vld [vmem:[#allocation8 + $0x30] sm:$0xf]
        %v6461 = vld [vmem:[#allocation8 + $0x34] sm:$0xf]
        %v6462 = vld [vmem:[#allocation8 + $0x38] sm:$0xf]
        %v6463 = vld [vmem:[#allocation8 + $0x3c] sm:$0xf]
        %v6464 = vld [vmem:[#allocation2 + $0x8] sm:$0x1]
        %v6465 = vld [vmem:[#allocation2 + $0x14] sm:$0x1]
        %v6466 = vld [vmem:[#allocation2 + $0x20] sm:$0x1]
        %v6467 = vld [vmem:[#allocation2 + $0x2c] sm:$0x1]
        %v6468 = vld [vmem:[#allocation2 + $0x38] sm:$0x1]
        %v6469 = vld [vmem:[#allocation2 + $0x44] sm:$0x1]
        %v6470 = vld [vmem:[#allocation2 + $0x50] sm:$0x1]
        %v6471 = vld [vmem:[#allocation2 + $0x5c] sm:$0x1]
        %v6472 = vld [vmem:[#allocation2 + $0x68] sm:$0x1]
        %v6473 = vld [vmem:[#allocation2 + $0x74] sm:$0x1]
        %v6474 = vld [vmem:[#allocation2 + $0x80] sm:$0x1]
        %v6475 = vld [vmem:[#allocation2 + $0x8c] sm:$0x1]
        %v6476 = vld [vmem:[#allocation2 + $0x98] sm:$0x1]
        %v6477 = vld [vmem:[#allocation2 + $0xa4] sm:$0x1]
        %v6478 = vld [vmem:[#allocation2 + $0xb0] sm:$0x1]
        %v6479 = vld [vmem:[#allocation2 + $0xbc] sm:$0x1]
        %v6481 = vshrl.u32 %v6416, 16
        %v6483 = vrot.slane %v6481, 4
        %v6484 = vshll.u32 %v6416, 16
        %v6486 = vrot.slane %v6484, 5
        %v6487 = vor.u32 %v6483, %v6486
        %v6488 = vrot.slane %v6487, 4
        %v6490 = vshll.u32 %v6417, 16
        %v6492 = vrot.slane %v6490, 5
        %v6493 = vsel %vm1012, %v6488, %v6492
        %v6494 = vshrl.u32 %v6417, 16
        %v6496 = vrot.slane %v6494, 4
        %v6497 = vor.u32 %v6496, %v6492
        %v6498 = vrot.slane %v6497, 4
        %v6500 = vshll.u32 %v6464, 16
        %v6502 = vrot.slane %v6500, 5
        %v6503 = vsel %vm1012, %v6498, %v6502
        %v6505 = vshrl.u32 %v6418, 16
        %v6507 = vrot.slane %v6505, 4
        %v6508 = vshll.u32 %v6418, 16
        %v6510 = vrot.slane %v6508, 5
        %v6511 = vor.u32 %v6507, %v6510
        %v6512 = vrot.slane %v6511, 4
        %v6514 = vshll.u32 %v6419, 16
        %v6516 = vrot.slane %v6514, 5
        %v6517 = vsel %vm1012, %v6512, %v6516
        %v6518 = vshrl.u32 %v6419, 16
        %v6520 = vrot.slane %v6518, 4
        %v6521 = vor.u32 %v6520, %v6516
        %v6522 = vrot.slane %v6521, 4
        %v6524 = vshll.u32 %v6465, 16
        %v6526 = vrot.slane %v6524, 5
        %v6527 = vsel %vm1012, %v6522, %v6526
        %v6529 = vshrl.u32 %v6420, 16
        %v6531 = vrot.slane %v6529, 4
        %v6532 = vshll.u32 %v6420, 16
        %v6534 = vrot.slane %v6532, 5
        %v6535 = vor.u32 %v6531, %v6534
        %v6536 = vrot.slane %v6535, 4
        %v6538 = vshll.u32 %v6421, 16
        %v6540 = vrot.slane %v6538, 5
        %v6541 = vsel %vm1012, %v6536, %v6540
        %v6542 = vshrl.u32 %v6421, 16
        %v6544 = vrot.slane %v6542, 4
        %v6545 = vor.u32 %v6544, %v6540
        %v6546 = vrot.slane %v6545, 4
        %v6548 = vshll.u32 %v6466, 16
        %v6550 = vrot.slane %v6548, 5
        %v6551 = vsel %vm1012, %v6546, %v6550
        %v6553 = vshrl.u32 %v6422, 16
        %v6555 = vrot.slane %v6553, 4
        %v6556 = vshll.u32 %v6422, 16
        %v6558 = vrot.slane %v6556, 5
        %v6559 = vor.u32 %v6555, %v6558
        %v6560 = vrot.slane %v6559, 4
        %v6562 = vshll.u32 %v6423, 16
        %v6564 = vrot.slane %v6562, 5
        %v6565 = vsel %vm1012, %v6560, %v6564
        %v6566 = vshrl.u32 %v6423, 16
        %v6568 = vrot.slane %v6566, 4
        %v6569 = vor.u32 %v6568, %v6564
        %v6570 = vrot.slane %v6569, 4
        %v6572 = vshll.u32 %v6467, 16
        %v6574 = vrot.slane %v6572, 5
        %v6575 = vsel %vm1012, %v6570, %v6574
        %v6577 = vshrl.u32 %v6424, 16
        %v6579 = vrot.slane %v6577, 4
        %v6580 = vshll.u32 %v6424, 16
        %v6582 = vrot.slane %v6580, 5
        %v6583 = vor.u32 %v6579, %v6582
        %v6584 = vrot.slane %v6583, 4
        %v6586 = vshll.u32 %v6425, 16
        %v6588 = vrot.slane %v6586, 5
        %v6589 = vsel %vm1012, %v6584, %v6588
        %v6590 = vshrl.u32 %v6425, 16
        %v6592 = vrot.slane %v6590, 4
        %v6593 = vor.u32 %v6592, %v6588
        %v6594 = vrot.slane %v6593, 4
        %v6596 = vshll.u32 %v6468, 16
        %v6598 = vrot.slane %v6596, 5
        %v6599 = vsel %vm1012, %v6594, %v6598
        %v6601 = vshrl.u32 %v6426, 16
        %v6603 = vrot.slane %v6601, 4
        %v6604 = vshll.u32 %v6426, 16
        %v6606 = vrot.slane %v6604, 5
        %v6607 = vor.u32 %v6603, %v6606
        %v6608 = vrot.slane %v6607, 4
        %v6610 = vshll.u32 %v6427, 16
        %v6612 = vrot.slane %v6610, 5
        %v6613 = vsel %vm1012, %v6608, %v6612
        %v6614 = vshrl.u32 %v6427, 16
        %v6616 = vrot.slane %v6614, 4
        %v6617 = vor.u32 %v6616, %v6612
        %v6618 = vrot.slane %v6617, 4
        %v6620 = vshll.u32 %v6469, 16
        %v6622 = vrot.slane %v6620, 5
        %v6623 = vsel %vm1012, %v6618, %v6622
        %v6625 = vshrl.u32 %v6428, 16
        %v6627 = vrot.slane %v6625, 4
        %v6628 = vshll.u32 %v6428, 16
        %v6630 = vrot.slane %v6628, 5
        %v6631 = vor.u32 %v6627, %v6630
        %v6632 = vrot.slane %v6631, 4
        %v6634 = vshll.u32 %v6429, 16
        %v6636 = vrot.slane %v6634, 5
        %v6637 = vsel %vm1012, %v6632, %v6636
        %v6638 = vshrl.u32 %v6429, 16
        %v6640 = vrot.slane %v6638, 4
        %v6641 = vor.u32 %v6640, %v6636
        %v6642 = vrot.slane %v6641, 4
        %v6644 = vshll.u32 %v6470, 16
        %v6646 = vrot.slane %v6644, 5
        %v6647 = vsel %vm1012, %v6642, %v6646
        %v6649 = vshrl.u32 %v6430, 16
        %v6651 = vrot.slane %v6649, 4
        %v6652 = vshll.u32 %v6430, 16
        %v6654 = vrot.slane %v6652, 5
        %v6655 = vor.u32 %v6651, %v6654
        %v6656 = vrot.slane %v6655, 4
        %v6658 = vshll.u32 %v6431, 16
        %v6660 = vrot.slane %v6658, 5
        %v6661 = vsel %vm1012, %v6656, %v6660
        %v6662 = vshrl.u32 %v6431, 16
        %v6664 = vrot.slane %v6662, 4
        %v6665 = vor.u32 %v6664, %v6660
        %v6666 = vrot.slane %v6665, 4
        %v6668 = vshll.u32 %v6471, 16
        %v6670 = vrot.slane %v6668, 5
        %v6671 = vsel %vm1012, %v6666, %v6670
        %v6673 = vshrl.u32 %v6432, 16
        %v6675 = vrot.slane %v6673, 4
        %v6676 = vshll.u32 %v6432, 16
        %v6678 = vrot.slane %v6676, 5
        %v6679 = vor.u32 %v6675, %v6678
        %v6680 = vrot.slane %v6679, 4
        %v6682 = vshll.u32 %v6433, 16
        %v6684 = vrot.slane %v6682, 5
        %v6685 = vsel %vm1012, %v6680, %v6684
        %v6686 = vshrl.u32 %v6433, 16
        %v6688 = vrot.slane %v6686, 4
        %v6689 = vor.u32 %v6688, %v6684
        %v6690 = vrot.slane %v6689, 4
        %v6692 = vshll.u32 %v6472, 16
        %v6694 = vrot.slane %v6692, 5
        %v6695 = vsel %vm1012, %v6690, %v6694
        %v6697 = vshrl.u32 %v6434, 16
        %v6699 = vrot.slane %v6697, 4
        %v6700 = vshll.u32 %v6434, 16
        %v6702 = vrot.slane %v6700, 5
        %v6703 = vor.u32 %v6699, %v6702
        %v6704 = vrot.slane %v6703, 4
        %v6706 = vshll.u32 %v6435, 16
        %v6708 = vrot.slane %v6706, 5
        %v6709 = vsel %vm1012, %v6704, %v6708
        %v6710 = vshrl.u32 %v6435, 16
        %v6712 = vrot.slane %v6710, 4
        %v6713 = vor.u32 %v6712, %v6708
        %v6714 = vrot.slane %v6713, 4
        %v6716 = vshll.u32 %v6473, 16
        %v6718 = vrot.slane %v6716, 5
        %v6719 = vsel %vm1012, %v6714, %v6718
        %v6721 = vshrl.u32 %v6436, 16
        %v6723 = vrot.slane %v6721, 4
        %v6724 = vshll.u32 %v6436, 16
        %v6726 = vrot.slane %v6724, 5
        %v6727 = vor.u32 %v6723, %v6726
        %v6728 = vrot.slane %v6727, 4
        %v6730 = vshll.u32 %v6437, 16
        %v6732 = vrot.slane %v6730, 5
        %v6733 = vsel %vm1012, %v6728, %v6732
        %v6734 = vshrl.u32 %v6437, 16
        %v6736 = vrot.slane %v6734, 4
        %v6737 = vor.u32 %v6736, %v6732
        %v6738 = vrot.slane %v6737, 4
        %v6740 = vshll.u32 %v6474, 16
        %v6742 = vrot.slane %v6740, 5
        %v6743 = vsel %vm1012, %v6738, %v6742
        %v6745 = vshrl.u32 %v6438, 16
        %v6747 = vrot.slane %v6745, 4
        %v6748 = vshll.u32 %v6438, 16
        %v6750 = vrot.slane %v6748, 5
        %v6751 = vor.u32 %v6747, %v6750
        %v6752 = vrot.slane %v6751, 4
        %v6754 = vshll.u32 %v6439, 16
        %v6756 = vrot.slane %v6754, 5
        %v6757 = vsel %vm1012, %v6752, %v6756
        %v6758 = vshrl.u32 %v6439, 16
        %v6760 = vrot.slane %v6758, 4
        %v6761 = vor.u32 %v6760, %v6756
        %v6762 = vrot.slane %v6761, 4
        %v6764 = vshll.u32 %v6475, 16
        %v6766 = vrot.slane %v6764, 5
        %v6767 = vsel %vm1012, %v6762, %v6766
        %v6769 = vshrl.u32 %v6440, 16
        %v6771 = vrot.slane %v6769, 4
        %v6772 = vshll.u32 %v6440, 16
        %v6774 = vrot.slane %v6772, 5
        %v6775 = vor.u32 %v6771, %v6774
        %v6776 = vrot.slane %v6775, 4
        %v6778 = vshll.u32 %v6441, 16
        %v6780 = vrot.slane %v6778, 5
        %v6781 = vsel %vm1012, %v6776, %v6780
        %v6782 = vshrl.u32 %v6441, 16
        %v6784 = vrot.slane %v6782, 4
        %v6785 = vor.u32 %v6784, %v6780
        %v6786 = vrot.slane %v6785, 4
        %v6788 = vshll.u32 %v6476, 16
        %v6790 = vrot.slane %v6788, 5
        %v6791 = vsel %vm1012, %v6786, %v6790
        %v6793 = vshrl.u32 %v6442, 16
        %v6795 = vrot.slane %v6793, 4
        %v6796 = vshll.u32 %v6442, 16
        %v6798 = vrot.slane %v6796, 5
        %v6799 = vor.u32 %v6795, %v6798
        %v6800 = vrot.slane %v6799, 4
        %v6802 = vshll.u32 %v6443, 16
        %v6804 = vrot.slane %v6802, 5
        %v6805 = vsel %vm1012, %v6800, %v6804
        %v6806 = vshrl.u32 %v6443, 16
        %v6808 = vrot.slane %v6806, 4
        %v6809 = vor.u32 %v6808, %v6804
        %v6810 = vrot.slane %v6809, 4
        %v6812 = vshll.u32 %v6477, 16
        %v6814 = vrot.slane %v6812, 5
        %v6815 = vsel %vm1012, %v6810, %v6814
        %v6817 = vshrl.u32 %v6444, 16
        %v6819 = vrot.slane %v6817, 4
        %v6820 = vshll.u32 %v6444, 16
        %v6822 = vrot.slane %v6820, 5
        %v6823 = vor.u32 %v6819, %v6822
        %v6824 = vrot.slane %v6823, 4
        %v6826 = vshll.u32 %v6445, 16
        %v6828 = vrot.slane %v6826, 5
        %v6829 = vsel %vm1012, %v6824, %v6828
        %v6830 = vshrl.u32 %v6445, 16
        %v6832 = vrot.slane %v6830, 4
        %v6833 = vor.u32 %v6832, %v6828
        %v6834 = vrot.slane %v6833, 4
        %v6836 = vshll.u32 %v6478, 16
        %v6838 = vrot.slane %v6836, 5
        %v6839 = vsel %vm1012, %v6834, %v6838
        %v6841 = vshrl.u32 %v6446, 16
        %v6843 = vrot.slane %v6841, 4
        %v6844 = vshll.u32 %v6446, 16
        %v6846 = vrot.slane %v6844, 5
        %v6847 = vor.u32 %v6843, %v6846
        %v6848 = vrot.slane %v6847, 4
        %v6850 = vshll.u32 %v6447, 16
        %v6852 = vrot.slane %v6850, 5
        %v6853 = vsel %vm1012, %v6848, %v6852
        %v6854 = vshrl.u32 %v6447, 16
        %v6856 = vrot.slane %v6854, 4
        %v6857 = vor.u32 %v6856, %v6852
        %v6858 = vrot.slane %v6857, 4
        %v6860 = vshll.u32 %v6479, 16
        %v6862 = vrot.slane %v6860, 5
        %v6863 = vsel %vm1012, %v6858, %v6862
        %s6864 = scalar_lea.vmem [#allocation8], 64
        %v6865 = vld [vmem:[%s6864] sm:$0xf]
        %v6866 = vld [vmem:[%s6864 + $0x4] sm:$0xf]
        %v6867 = vld [vmem:[%s6864 + $0x8] sm:$0xf]
        %v6868 = vld [vmem:[%s6864 + $0xc] sm:$0xf]
        %v6869 = vld [vmem:[%s6864 + $0x10] sm:$0xf]
        %v6870 = vld [vmem:[%s6864 + $0x14] sm:$0xf]
        %v6871 = vld [vmem:[%s6864 + $0x18] sm:$0xf]
        %v6872 = vld [vmem:[%s6864 + $0x1c] sm:$0xf]
        %v6873 = vld [vmem:[%s6864 + $0x20] sm:$0xf]
        %v6874 = vld [vmem:[%s6864 + $0x24] sm:$0xf]
        %v6875 = vld [vmem:[%s6864 + $0x28] sm:$0xf]
        %v6876 = vld [vmem:[%s6864 + $0x2c] sm:$0xf]
        %v6877 = vld [vmem:[%s6864 + $0x30] sm:$0xf]
        %v6878 = vld [vmem:[%s6864 + $0x34] sm:$0xf]
        %v6879 = vld [vmem:[%s6864 + $0x38] sm:$0xf]
        %v6880 = vld [vmem:[%s6864 + $0x3c] sm:$0xf]
        %v6881 = vunpack.c.l.b16 %v6493
        %v6882 = vunpack.c.l.b16 %v6503
        %v6883 = vunpack.c.l.b16 %v6517
        %v6884 = vunpack.c.l.b16 %v6527
        %v6885 = vunpack.c.l.b16 %v6541
        %v6886 = vunpack.c.l.b16 %v6551
        %v6887 = vunpack.c.l.b16 %v6565
        %v6888 = vunpack.c.l.b16 %v6575
        %v6889 = vunpack.c.l.b16 %v6589
        %v6890 = vunpack.c.l.b16 %v6599
        %v6891 = vunpack.c.l.b16 %v6613
        %v6892 = vunpack.c.l.b16 %v6623
        %v6893 = vunpack.c.l.b16 %v6637
        %v6894 = vunpack.c.l.b16 %v6647
        %v6895 = vunpack.c.l.b16 %v6661
        %v6896 = vunpack.c.l.b16 %v6671
        %v6897 = vunpack.c.l.b16 %v6685
        %v6898 = vunpack.c.l.b16 %v6695
        %v6899 = vunpack.c.l.b16 %v6709
        %v6900 = vunpack.c.l.b16 %v6719
        %v6901 = vunpack.c.l.b16 %v6733
        %v6902 = vunpack.c.l.b16 %v6743
        %v6903 = vunpack.c.l.b16 %v6757
        %v6904 = vunpack.c.l.b16 %v6767
        %v6905 = vunpack.c.l.b16 %v6781
        %v6906 = vunpack.c.l.b16 %v6791
        %v6907 = vunpack.c.l.b16 %v6805
        %v6908 = vunpack.c.l.b16 %v6815
        %v6909 = vunpack.c.l.b16 %v6829
        %v6910 = vunpack.c.l.b16 %v6839
        %v6911 = vunpack.c.l.b16 %v6853
        %v6912 = vunpack.c.l.b16 %v6863
        %v6913 = vpack.c.b16 %v6882, %v6881
        %v6914 = vpack.c.b16 %v6884, %v6883
        %v6915 = vpack.c.b16 %v6886, %v6885
        %v6916 = vpack.c.b16 %v6888, %v6887
        %v6917 = vpack.c.b16 %v6890, %v6889
        %v6918 = vpack.c.b16 %v6892, %v6891
        %v6919 = vpack.c.b16 %v6894, %v6893
        %v6920 = vpack.c.b16 %v6896, %v6895
        %v6921 = vpack.c.b16 %v6898, %v6897
        %v6922 = vpack.c.b16 %v6900, %v6899
        %v6923 = vpack.c.b16 %v6902, %v6901
        %v6924 = vpack.c.b16 %v6904, %v6903
        %v6925 = vpack.c.b16 %v6906, %v6905
        %v6926 = vpack.c.b16 %v6908, %v6907
        %v6927 = vpack.c.b16 %v6910, %v6909
        %v6928 = vpack.c.b16 %v6912, %v6911
        %v6961 = vunpack.c.l.b16 %v6865
        %v6962 = vunpack.c.l.b16 %v6866
        %v6963 = vunpack.c.l.b16 %v6867
        %v6964 = vunpack.c.l.b16 %v6868
        %v6965 = vunpack.c.l.b16 %v6869
        %v6966 = vunpack.c.l.b16 %v6870
        %v6967 = vunpack.c.l.b16 %v6871
        %v6968 = vunpack.c.l.b16 %v6872
        %v6969 = vunpack.c.l.b16 %v6873
        %v6970 = vunpack.c.l.b16 %v6874
        %v6971 = vunpack.c.l.b16 %v6875
        %v6972 = vunpack.c.l.b16 %v6876
        %v6973 = vunpack.c.l.b16 %v6877
        %v6974 = vunpack.c.l.b16 %v6878
        %v6975 = vunpack.c.l.b16 %v6879
        %v6976 = vunpack.c.l.b16 %v6880
        %v6977 = vpack.c.b16 %v6962, %v6961
        %v6978 = vpack.c.b16 %v6964, %v6963
        %v6979 = vpack.c.b16 %v6966, %v6965
        %v6980 = vpack.c.b16 %v6968, %v6967
        %v6981 = vpack.c.b16 %v6970, %v6969
        %v6982 = vpack.c.b16 %v6972, %v6971
        %v6983 = vpack.c.b16 %v6974, %v6973
        %v6984 = vpack.c.b16 %v6976, %v6975
        %6993 = vmatprep.subr.bf16.mxu0 0
        %6994 = vmatpush1.bf16.msra.mxu0 %v6984
        %6995 = vmatprep.subr.bf16.mxu0 0
        %6996 = vmatpush1.bf16.msra.mxu0 %v6983
        %6997 = vmatprep.subr.bf16.mxu0 0
        %6998 = vmatpush1.bf16.msra.mxu0 %v6982
        %6999 = vmatprep.subr.bf16.mxu0 0
        %7000 = vmatpush1.bf16.msra.mxu0 %v6981
        %7001 = vmatprep.subr.bf16.mxu0 0
        %7002 = vmatpush1.bf16.msra.mxu0 %v6980
        %7003 = vmatprep.subr.bf16.mxu0 0
        %7004 = vmatpush1.bf16.msra.mxu0 %v6979
        %7005 = vmatprep.subr.bf16.mxu0 0
        %7006 = vmatpush1.bf16.msra.mxu0 %v6978
        %7007 = vmatprep.subr.bf16.mxu0 0
        %7008 = vmatpush1.bf16.msra.mxu0 %v6977
        %7009 = vmatprep.subr.bf16.mxu0 0
        %7010 = vmatpush2.bf16.msra.mxu0 0
        %7011 = vmatprep.subr.bf16.mxu0 0
        %7012 = vmatpush2.bf16.msra.mxu0 0
        %7013 = vmatprep.subr.bf16.mxu0 0
        %7014 = vmatpush2.bf16.msra.mxu0 0
        %7015 = vmatprep.subr.bf16.mxu0 0
        %7016 = vmatpush2.bf16.msra.mxu0 0
        %7017 = vmatprep.subr.bf16.mxu0 0
        %7018 = vmatpush2.bf16.msra.mxu0 0
        %7019 = vmatprep.subr.bf16.mxu0 0
        %7020 = vmatpush2.bf16.msra.mxu0 0
        %7021 = vmatprep.subr.bf16.mxu0 0
        %7022 = vmatpush2.bf16.msra.mxu0 0
        %7023 = vmatprep.subr.bf16.mxu0 0
        %7024 = vmatpush2.bf16.msra.mxu0 0
        %7025 = vmatprep.mubr.bf16.mxu0 0
        %7026 = vmatmul.mubr.bf16.gmra.mxu0 %v6913
        %v7027 = vpop.f32.mrf.mxu0
        %v7028 = vadd.f32 0.0, %v7027
        %v7029 = vpop.f32.mrf.mxu0
        %v7030 = vpop.f32.mrf.mxu0
        %v7031 = vadd.f32 0.0, %v7030
        %v7032 = vpop.f32.mrf.mxu0
        %7033 = vmatprep.mubr.bf16.mxu0 0
        %7034 = vmatmul.mubr.bf16.gmra.mxu0 %v6914
        %v7035 = vpop.f32.mrf.mxu0
        %v7036 = vadd.f32 0.0, %v7035
        %v7037 = vpop.f32.mrf.mxu0
        %v7038 = vpop.f32.mrf.mxu0
        %v7039 = vadd.f32 0.0, %v7038
        %v7040 = vpop.f32.mrf.mxu0
        %7041 = vmatprep.mubr.bf16.mxu0 0
        %7042 = vmatmul.mubr.bf16.gmra.mxu0 %v6915
        %v7043 = vpop.f32.mrf.mxu0
        %v7044 = vadd.f32 0.0, %v7043
        %v7045 = vpop.f32.mrf.mxu0
        %v7046 = vpop.f32.mrf.mxu0
        %v7047 = vadd.f32 0.0, %v7046
        %v7048 = vpop.f32.mrf.mxu0
        %7049 = vmatprep.mubr.bf16.mxu0 0
        %7050 = vmatmul.mubr.bf16.gmra.mxu0 %v6916
        %v7051 = vpop.f32.mrf.mxu0
        %v7052 = vadd.f32 0.0, %v7051
        %v7053 = vpop.f32.mrf.mxu0
        %v7054 = vpop.f32.mrf.mxu0
        %v7055 = vadd.f32 0.0, %v7054
        %v7056 = vpop.f32.mrf.mxu0
        %7057 = vmatprep.mubr.bf16.mxu0 0
        %7058 = vmatmul.mubr.bf16.gmra.mxu0 %v6917
        %v7059 = vpop.f32.mrf.mxu0
        %v7060 = vadd.f32 0.0, %v7059
        %v7061 = vpop.f32.mrf.mxu0
        %v7062 = vpop.f32.mrf.mxu0
        %v7063 = vadd.f32 0.0, %v7062
        %v7064 = vpop.f32.mrf.mxu0
        %7065 = vmatprep.mubr.bf16.mxu0 0
        %7066 = vmatmul.mubr.bf16.gmra.mxu0 %v6918
        %v7067 = vpop.f32.mrf.mxu0
        %v7068 = vadd.f32 0.0, %v7067
        %v7069 = vpop.f32.mrf.mxu0
        %v7070 = vpop.f32.mrf.mxu0
        %v7071 = vadd.f32 0.0, %v7070
        %v7072 = vpop.f32.mrf.mxu0
        %7073 = vmatprep.mubr.bf16.mxu0 0
        %7074 = vmatmul.mubr.bf16.gmra.mxu0 %v6919
        %v7075 = vpop.f32.mrf.mxu0
        %v7076 = vadd.f32 0.0, %v7075
        %v7077 = vpop.f32.mrf.mxu0
        %v7078 = vpop.f32.mrf.mxu0
        %v7079 = vadd.f32 0.0, %v7078
        %v7080 = vpop.f32.mrf.mxu0
        %7081 = vmatprep.mubr.bf16.mxu0 0
        %7082 = vmatmul.mubr.bf16.gmra.mxu0 %v6920
        %v7083 = vpop.f32.mrf.mxu0
        %v7084 = vadd.f32 0.0, %v7083
        %v7085 = vpop.f32.mrf.mxu0
        %v7086 = vpop.f32.mrf.mxu0
        %v7087 = vadd.f32 0.0, %v7086
        %v7088 = vpop.f32.mrf.mxu0
        %7089 = vmatprep.mubr.bf16.mxu0 0
        %7090 = vmatmul.mubr.bf16.gmra.mxu0 %v6921
        %v7091 = vpop.f32.mrf.mxu0
        %v7092 = vadd.f32 0.0, %v7091
        %v7093 = vpop.f32.mrf.mxu0
        %v7094 = vpop.f32.mrf.mxu0
        %v7095 = vadd.f32 0.0, %v7094
        %v7096 = vpop.f32.mrf.mxu0
        %7097 = vmatprep.mubr.bf16.mxu0 0
        %7098 = vmatmul.mubr.bf16.gmra.mxu0 %v6922
        %v7099 = vpop.f32.mrf.mxu0
        %v7100 = vadd.f32 0.0, %v7099
        %v7101 = vpop.f32.mrf.mxu0
        %v7102 = vpop.f32.mrf.mxu0
        %v7103 = vadd.f32 0.0, %v7102
        %v7104 = vpop.f32.mrf.mxu0
        %7105 = vmatprep.mubr.bf16.mxu0 0
        %7106 = vmatmul.mubr.bf16.gmra.mxu0 %v6923
        %v7107 = vpop.f32.mrf.mxu0
        %v7108 = vadd.f32 0.0, %v7107
        %v7109 = vpop.f32.mrf.mxu0
        %v7110 = vpop.f32.mrf.mxu0
        %v7111 = vadd.f32 0.0, %v7110
        %v7112 = vpop.f32.mrf.mxu0
        %7113 = vmatprep.mubr.bf16.mxu0 0
        %7114 = vmatmul.mubr.bf16.gmra.mxu0 %v6924
        %v7115 = vpop.f32.mrf.mxu0
        %v7116 = vadd.f32 0.0, %v7115
        %v7117 = vpop.f32.mrf.mxu0
        %v7118 = vpop.f32.mrf.mxu0
        %v7119 = vadd.f32 0.0, %v7118
        %v7120 = vpop.f32.mrf.mxu0
        %7121 = vmatprep.mubr.bf16.mxu0 0
        %7122 = vmatmul.mubr.bf16.gmra.mxu0 %v6925
        %v7123 = vpop.f32.mrf.mxu0
        %v7124 = vadd.f32 0.0, %v7123
        %v7125 = vpop.f32.mrf.mxu0
        %v7126 = vpop.f32.mrf.mxu0
        %v7127 = vadd.f32 0.0, %v7126
        %v7128 = vpop.f32.mrf.mxu0
        %7129 = vmatprep.mubr.bf16.mxu0 0
        %7130 = vmatmul.mubr.bf16.gmra.mxu0 %v6926
        %v7131 = vpop.f32.mrf.mxu0
        %v7132 = vadd.f32 0.0, %v7131
        %v7133 = vpop.f32.mrf.mxu0
        %v7134 = vpop.f32.mrf.mxu0
        %v7135 = vadd.f32 0.0, %v7134
        %v7136 = vpop.f32.mrf.mxu0
        %7137 = vmatprep.mubr.bf16.mxu0 0
        %7138 = vmatmul.mubr.bf16.gmra.mxu0 %v6927
        %v7139 = vpop.f32.mrf.mxu0
        %v7140 = vadd.f32 0.0, %v7139
        %v7141 = vpop.f32.mrf.mxu0
        %v7142 = vpop.f32.mrf.mxu0
        %v7143 = vadd.f32 0.0, %v7142
        %v7144 = vpop.f32.mrf.mxu0
        %7145 = vmatprep.mubr.bf16.mxu0 0
        %7146 = vmatmul.mubr.bf16.gmra.mxu0 %v6928
        %v7147 = vpop.f32.mrf.mxu0
        %v7148 = vadd.f32 0.0, %v7147
        %v7149 = vpop.f32.mrf.mxu0
        %v7150 = vpop.f32.mrf.mxu0
        %v7151 = vadd.f32 0.0, %v7150
        %v7152 = vpop.f32.mrf.mxu0
        %7153 = vdwg.mxu0
        %v7186 = vunpack.c.l.b16 %v6416
        %v7187 = vunpack.c.l.b16 %v6417
        %v7188 = vunpack.c.l.b16 %v6418
        %v7189 = vunpack.c.l.b16 %v6419
        %v7190 = vunpack.c.l.b16 %v6420
        %v7191 = vunpack.c.l.b16 %v6421
        %v7192 = vunpack.c.l.b16 %v6422
        %v7193 = vunpack.c.l.b16 %v6423
        %v7194 = vunpack.c.l.b16 %v6424
        %v7195 = vunpack.c.l.b16 %v6425
        %v7196 = vunpack.c.l.b16 %v6426
        %v7197 = vunpack.c.l.b16 %v6427
        %v7198 = vunpack.c.l.b16 %v6428
        %v7199 = vunpack.c.l.b16 %v6429
        %v7200 = vunpack.c.l.b16 %v6430
        %v7201 = vunpack.c.l.b16 %v6431
        %v7202 = vunpack.c.l.b16 %v6432
        %v7203 = vunpack.c.l.b16 %v6433
        %v7204 = vunpack.c.l.b16 %v6434
        %v7205 = vunpack.c.l.b16 %v6435
        %v7206 = vunpack.c.l.b16 %v6436
        %v7207 = vunpack.c.l.b16 %v6437
        %v7208 = vunpack.c.l.b16 %v6438
        %v7209 = vunpack.c.l.b16 %v6439
        %v7210 = vunpack.c.l.b16 %v6440
        %v7211 = vunpack.c.l.b16 %v6441
        %v7212 = vunpack.c.l.b16 %v6442
        %v7213 = vunpack.c.l.b16 %v6443
        %v7214 = vunpack.c.l.b16 %v6444
        %v7215 = vunpack.c.l.b16 %v6445
        %v7216 = vunpack.c.l.b16 %v6446
        %v7217 = vunpack.c.l.b16 %v6447
        %v7218 = vpack.c.b16 %v7187, %v7186
        %v7219 = vpack.c.b16 %v7189, %v7188
        %v7220 = vpack.c.b16 %v7191, %v7190
        %v7221 = vpack.c.b16 %v7193, %v7192
        %v7222 = vpack.c.b16 %v7195, %v7194
        %v7223 = vpack.c.b16 %v7197, %v7196
        %v7224 = vpack.c.b16 %v7199, %v7198
        %v7225 = vpack.c.b16 %v7201, %v7200
        %v7226 = vpack.c.b16 %v7203, %v7202
        %v7227 = vpack.c.b16 %v7205, %v7204
        %v7228 = vpack.c.b16 %v7207, %v7206
        %v7229 = vpack.c.b16 %v7209, %v7208
        %v7230 = vpack.c.b16 %v7211, %v7210
        %v7231 = vpack.c.b16 %v7213, %v7212
        %v7232 = vpack.c.b16 %v7215, %v7214
        %v7233 = vpack.c.b16 %v7217, %v7216
        %v7266 = vunpack.c.l.b16 %v6448
        %v7267 = vunpack.c.l.b16 %v6449
        %v7268 = vunpack.c.l.b16 %v6450
        %v7269 = vunpack.c.l.b16 %v6451
        %v7270 = vunpack.c.l.b16 %v6452
        %v7271 = vunpack.c.l.b16 %v6453
        %v7272 = vunpack.c.l.b16 %v6454
        %v7273 = vunpack.c.l.b16 %v6455
        %v7274 = vunpack.c.l.b16 %v6456
        %v7275 = vunpack.c.l.b16 %v6457
        %v7276 = vunpack.c.l.b16 %v6458
        %v7277 = vunpack.c.l.b16 %v6459
        %v7278 = vunpack.c.l.b16 %v6460
        %v7279 = vunpack.c.l.b16 %v6461
        %v7280 = vunpack.c.l.b16 %v6462
        %v7281 = vunpack.c.l.b16 %v6463
        %v7282 = vpack.c.b16 %v7267, %v7266
        %v7283 = vpack.c.b16 %v7269, %v7268
        %v7284 = vpack.c.b16 %v7271, %v7270
        %v7285 = vpack.c.b16 %v7273, %v7272
        %v7286 = vpack.c.b16 %v7275, %v7274
        %v7287 = vpack.c.b16 %v7277, %v7276
        %v7288 = vpack.c.b16 %v7279, %v7278
        %v7289 = vpack.c.b16 %v7281, %v7280
        %7298 = vmatprep.subr.bf16.mxu0 0
        %7299 = vmatpush1.bf16.msra.mxu0 %v7289
        %7300 = vmatprep.subr.bf16.mxu0 0
        %7301 = vmatpush1.bf16.msra.mxu0 %v7288
        %7302 = vmatprep.subr.bf16.mxu0 0
        %7303 = vmatpush1.bf16.msra.mxu0 %v7287
        %7304 = vmatprep.subr.bf16.mxu0 0
        %7305 = vmatpush1.bf16.msra.mxu0 %v7286
        %7306 = vmatprep.subr.bf16.mxu0 0
        %7307 = vmatpush1.bf16.msra.mxu0 %v7285
        %7308 = vmatprep.subr.bf16.mxu0 0
        %7309 = vmatpush1.bf16.msra.mxu0 %v7284
        %7310 = vmatprep.subr.bf16.mxu0 0
        %7311 = vmatpush1.bf16.msra.mxu0 %v7283
        %7312 = vmatprep.subr.bf16.mxu0 0
        %7313 = vmatpush1.bf16.msra.mxu0 %v7282
        %7314 = vmatprep.subr.bf16.mxu0 0
        %7315 = vmatpush2.bf16.msra.mxu0 0
        %7316 = vmatprep.subr.bf16.mxu0 0
        %7317 = vmatpush2.bf16.msra.mxu0 0
        %7318 = vmatprep.subr.bf16.mxu0 0
        %7319 = vmatpush2.bf16.msra.mxu0 0
        %7320 = vmatprep.subr.bf16.mxu0 0
        %7321 = vmatpush2.bf16.msra.mxu0 0
        %7322 = vmatprep.subr.bf16.mxu0 0
        %7323 = vmatpush2.bf16.msra.mxu0 0
        %7324 = vmatprep.subr.bf16.mxu0 0
        %7325 = vmatpush2.bf16.msra.mxu0 0
        %7326 = vmatprep.subr.bf16.mxu0 0
        %7327 = vmatpush2.bf16.msra.mxu0 0
        %7328 = vmatprep.subr.bf16.mxu0 0
        %7329 = vmatpush2.bf16.msra.mxu0 0
        %7330 = vmatprep.mubr.bf16.mxu0 0
        %7331 = vmatmul.mubr.bf16.gmra.mxu0 %v7218
        %v7332 = vpop.f32.mrf.mxu0
        %v7333 = vadd.f32 %v7028, %v7332
        %v7334 = vpop.f32.mrf.mxu0
        %v7335 = vpop.f32.mrf.mxu0
        %v7336 = vadd.f32 %v7031, %v7335
        %v7337 = vpop.f32.mrf.mxu0
        %7338 = vmatprep.mubr.bf16.mxu0 0
        %7339 = vmatmul.mubr.bf16.gmra.mxu0 %v7219
        %v7340 = vpop.f32.mrf.mxu0
        %v7341 = vadd.f32 %v7036, %v7340
        %v7342 = vpop.f32.mrf.mxu0
        %v7343 = vpop.f32.mrf.mxu0
        %v7344 = vadd.f32 %v7039, %v7343
        %v7345 = vpop.f32.mrf.mxu0
        %7346 = vmatprep.mubr.bf16.mxu0 0
        %7347 = vmatmul.mubr.bf16.gmra.mxu0 %v7220
        %v7348 = vpop.f32.mrf.mxu0
        %v7349 = vadd.f32 %v7044, %v7348
        %v7350 = vpop.f32.mrf.mxu0
        %v7351 = vpop.f32.mrf.mxu0
        %v7352 = vadd.f32 %v7047, %v7351
        %v7353 = vpop.f32.mrf.mxu0
        %7354 = vmatprep.mubr.bf16.mxu0 0
        %7355 = vmatmul.mubr.bf16.gmra.mxu0 %v7221
        %v7356 = vpop.f32.mrf.mxu0
        %v7357 = vadd.f32 %v7052, %v7356
        %v7358 = vpop.f32.mrf.mxu0
        %v7359 = vpop.f32.mrf.mxu0
        %v7360 = vadd.f32 %v7055, %v7359
        %v7361 = vpop.f32.mrf.mxu0
        %7362 = vmatprep.mubr.bf16.mxu0 0
        %7363 = vmatmul.mubr.bf16.gmra.mxu0 %v7222
        %v7364 = vpop.f32.mrf.mxu0
        %v7365 = vadd.f32 %v7060, %v7364
        %v7366 = vpop.f32.mrf.mxu0
        %v7367 = vpop.f32.mrf.mxu0
        %v7368 = vadd.f32 %v7063, %v7367
        %v7369 = vpop.f32.mrf.mxu0
        %7370 = vmatprep.mubr.bf16.mxu0 0
        %7371 = vmatmul.mubr.bf16.gmra.mxu0 %v7223
        %v7372 = vpop.f32.mrf.mxu0
        %v7373 = vadd.f32 %v7068, %v7372
        %v7374 = vpop.f32.mrf.mxu0
        %v7375 = vpop.f32.mrf.mxu0
        %v7376 = vadd.f32 %v7071, %v7375
        %v7377 = vpop.f32.mrf.mxu0
        %7378 = vmatprep.mubr.bf16.mxu0 0
        %7379 = vmatmul.mubr.bf16.gmra.mxu0 %v7224
        %v7380 = vpop.f32.mrf.mxu0
        %v7381 = vadd.f32 %v7076, %v7380
        %v7382 = vpop.f32.mrf.mxu0
        %v7383 = vpop.f32.mrf.mxu0
        %v7384 = vadd.f32 %v7079, %v7383
        %v7385 = vpop.f32.mrf.mxu0
        %7386 = vmatprep.mubr.bf16.mxu0 0
        %7387 = vmatmul.mubr.bf16.gmra.mxu0 %v7225
        %v7388 = vpop.f32.mrf.mxu0
        %v7389 = vadd.f32 %v7084, %v7388
        %v7390 = vpop.f32.mrf.mxu0
        %v7391 = vpop.f32.mrf.mxu0
        %v7392 = vadd.f32 %v7087, %v7391
        %v7393 = vpop.f32.mrf.mxu0
        %7394 = vmatprep.mubr.bf16.mxu0 0
        %7395 = vmatmul.mubr.bf16.gmra.mxu0 %v7226
        %v7396 = vpop.f32.mrf.mxu0
        %v7397 = vadd.f32 %v7092, %v7396
        %v7398 = vpop.f32.mrf.mxu0
        %v7399 = vpop.f32.mrf.mxu0
        %v7400 = vadd.f32 %v7095, %v7399
        %v7401 = vpop.f32.mrf.mxu0
        %7402 = vmatprep.mubr.bf16.mxu0 0
        %7403 = vmatmul.mubr.bf16.gmra.mxu0 %v7227
        %v7404 = vpop.f32.mrf.mxu0
        %v7405 = vadd.f32 %v7100, %v7404
        %v7406 = vpop.f32.mrf.mxu0
        %v7407 = vpop.f32.mrf.mxu0
        %v7408 = vadd.f32 %v7103, %v7407
        %v7409 = vpop.f32.mrf.mxu0
        %7410 = vmatprep.mubr.bf16.mxu0 0
        %7411 = vmatmul.mubr.bf16.gmra.mxu0 %v7228
        %v7412 = vpop.f32.mrf.mxu0
        %v7413 = vadd.f32 %v7108, %v7412
        %v7414 = vpop.f32.mrf.mxu0
        %v7415 = vpop.f32.mrf.mxu0
        %v7416 = vadd.f32 %v7111, %v7415
        %v7417 = vpop.f32.mrf.mxu0
        %7418 = vmatprep.mubr.bf16.mxu0 0
        %7419 = vmatmul.mubr.bf16.gmra.mxu0 %v7229
        %v7420 = vpop.f32.mrf.mxu0
        %v7421 = vadd.f32 %v7116, %v7420
        %v7422 = vpop.f32.mrf.mxu0
        %v7423 = vpop.f32.mrf.mxu0
        %v7424 = vadd.f32 %v7119, %v7423
        %v7425 = vpop.f32.mrf.mxu0
        %7426 = vmatprep.mubr.bf16.mxu0 0
        %7427 = vmatmul.mubr.bf16.gmra.mxu0 %v7230
        %v7428 = vpop.f32.mrf.mxu0
        %v7429 = vadd.f32 %v7124, %v7428
        %v7430 = vpop.f32.mrf.mxu0
        %v7431 = vpop.f32.mrf.mxu0
        %v7432 = vadd.f32 %v7127, %v7431
        %v7433 = vpop.f32.mrf.mxu0
        %7434 = vmatprep.mubr.bf16.mxu0 0
        %7435 = vmatmul.mubr.bf16.gmra.mxu0 %v7231
        %v7436 = vpop.f32.mrf.mxu0
        %v7437 = vadd.f32 %v7132, %v7436
        %v7438 = vpop.f32.mrf.mxu0
        %v7439 = vpop.f32.mrf.mxu0
        %v7440 = vadd.f32 %v7135, %v7439
        %v7441 = vpop.f32.mrf.mxu0
        %7442 = vmatprep.mubr.bf16.mxu0 0
        %7443 = vmatmul.mubr.bf16.gmra.mxu0 %v7232
        %v7444 = vpop.f32.mrf.mxu0
        %v7445 = vadd.f32 %v7140, %v7444
        %v7446 = vpop.f32.mrf.mxu0
        %v7447 = vpop.f32.mrf.mxu0
        %v7448 = vadd.f32 %v7143, %v7447
        %v7449 = vpop.f32.mrf.mxu0
        %7450 = vmatprep.mubr.bf16.mxu0 0
        %7451 = vmatmul.mubr.bf16.gmra.mxu0 %v7233
        %v7452 = vpop.f32.mrf.mxu0
        %v7453 = vadd.f32 %v7148, %v7452
        %v7454 = vpop.f32.mrf.mxu0
        %v7455 = vpop.f32.mrf.mxu0
        %v7456 = vadd.f32 %v7151, %v7455
        %v7457 = vpop.f32.mrf.mxu0
        %7458 = vdwg.mxu0
        %v7459 = vld [vmem:[#allocation2] sm:$0xe]
        %v7460 = vld [vmem:[#allocation2 + $0xc] sm:$0xe]
        %v7461 = vld [vmem:[#allocation2 + $0x18] sm:$0xe]
        %v7462 = vld [vmem:[#allocation2 + $0x24] sm:$0xe]
        %v7463 = vld [vmem:[#allocation2 + $0x30] sm:$0xe]
        %v7464 = vld [vmem:[#allocation2 + $0x3c] sm:$0xe]
        %v7465 = vld [vmem:[#allocation2 + $0x48] sm:$0xe]
        %v7466 = vld [vmem:[#allocation2 + $0x54] sm:$0xe]
        %v7467 = vld [vmem:[#allocation2 + $0x60] sm:$0xe]
        %v7468 = vld [vmem:[#allocation2 + $0x6c] sm:$0xe]
        %v7469 = vld [vmem:[#allocation2 + $0x78] sm:$0xe]
        %v7470 = vld [vmem:[#allocation2 + $0x84] sm:$0xe]
        %v7471 = vld [vmem:[#allocation2 + $0x90] sm:$0xe]
        %v7472 = vld [vmem:[#allocation2 + $0x9c] sm:$0xe]
        %v7473 = vld [vmem:[#allocation2 + $0xa8] sm:$0xe]
        %v7474 = vld [vmem:[#allocation2 + $0xb4] sm:$0xe]
        %v7507 = vrot.slane %v7459, 5
        %v7508 = vrot.slane %v7507, 4
        %v7509 = vrot.slane %v6417, 5
        %v7510 = vsel %vm2042, %v7508, %v7509
        %v7511 = vrot.slane %v7509, 4
        %v7512 = vrot.slane %v6464, 5
        %v7513 = vsel %vm2042, %v7511, %v7512
        %v7514 = vrot.slane %v7460, 5
        %v7515 = vrot.slane %v7514, 4
        %v7516 = vrot.slane %v6419, 5
        %v7517 = vsel %vm2042, %v7515, %v7516
        %v7518 = vrot.slane %v7516, 4
        %v7519 = vrot.slane %v6465, 5
        %v7520 = vsel %vm2042, %v7518, %v7519
        %v7521 = vrot.slane %v7461, 5
        %v7522 = vrot.slane %v7521, 4
        %v7523 = vrot.slane %v6421, 5
        %v7524 = vsel %vm2042, %v7522, %v7523
        %v7525 = vrot.slane %v7523, 4
        %v7526 = vrot.slane %v6466, 5
        %v7527 = vsel %vm2042, %v7525, %v7526
        %v7528 = vrot.slane %v7462, 5
        %v7529 = vrot.slane %v7528, 4
        %v7530 = vrot.slane %v6423, 5
        %v7531 = vsel %vm2042, %v7529, %v7530
        %v7532 = vrot.slane %v7530, 4
        %v7533 = vrot.slane %v6467, 5
        %v7534 = vsel %vm2042, %v7532, %v7533
        %v7535 = vrot.slane %v7463, 5
        %v7536 = vrot.slane %v7535, 4
        %v7537 = vrot.slane %v6425, 5
        %v7538 = vsel %vm2042, %v7536, %v7537
        %v7539 = vrot.slane %v7537, 4
        %v7540 = vrot.slane %v6468, 5
        %v7541 = vsel %vm2042, %v7539, %v7540
        %v7542 = vrot.slane %v7464, 5
        %v7543 = vrot.slane %v7542, 4
        %v7544 = vrot.slane %v6427, 5
        %v7545 = vsel %vm2042, %v7543, %v7544
        %v7546 = vrot.slane %v7544, 4
        %v7547 = vrot.slane %v6469, 5
        %v7548 = vsel %vm2042, %v7546, %v7547
        %v7549 = vrot.slane %v7465, 5
        %v7550 = vrot.slane %v7549, 4
        %v7551 = vrot.slane %v6429, 5
        %v7552 = vsel %vm2042, %v7550, %v7551
        %v7553 = vrot.slane %v7551, 4
        %v7554 = vrot.slane %v6470, 5
        %v7555 = vsel %vm2042, %v7553, %v7554
        %v7556 = vrot.slane %v7466, 5
        %v7557 = vrot.slane %v7556, 4
        %v7558 = vrot.slane %v6431, 5
        %v7559 = vsel %vm2042, %v7557, %v7558
        %v7560 = vrot.slane %v7558, 4
        %v7561 = vrot.slane %v6471, 5
        %v7562 = vsel %vm2042, %v7560, %v7561
        %v7563 = vrot.slane %v7467, 5
        %v7564 = vrot.slane %v7563, 4
        %v7565 = vrot.slane %v6433, 5
        %v7566 = vsel %vm2042, %v7564, %v7565
        %v7567 = vrot.slane %v7565, 4
        %v7568 = vrot.slane %v6472, 5
        %v7569 = vsel %vm2042, %v7567, %v7568
        %v7570 = vrot.slane %v7468, 5
        %v7571 = vrot.slane %v7570, 4
        %v7572 = vrot.slane %v6435, 5
        %v7573 = vsel %vm2042, %v7571, %v7572
        %v7574 = vrot.slane %v7572, 4
        %v7575 = vrot.slane %v6473, 5
        %v7576 = vsel %vm2042, %v7574, %v7575
        %v7577 = vrot.slane %v7469, 5
        %v7578 = vrot.slane %v7577, 4
        %v7579 = vrot.slane %v6437, 5
        %v7580 = vsel %vm2042, %v7578, %v7579
        %v7581 = vrot.slane %v7579, 4
        %v7582 = vrot.slane %v6474, 5
        %v7583 = vsel %vm2042, %v7581, %v7582
        %v7584 = vrot.slane %v7470, 5
        %v7585 = vrot.slane %v7584, 4
        %v7586 = vrot.slane %v6439, 5
        %v7587 = vsel %vm2042, %v7585, %v7586
        %v7588 = vrot.slane %v7586, 4
        %v7589 = vrot.slane %v6475, 5
        %v7590 = vsel %vm2042, %v7588, %v7589
        %v7591 = vrot.slane %v7471, 5
        %v7592 = vrot.slane %v7591, 4
        %v7593 = vrot.slane %v6441, 5
        %v7594 = vsel %vm2042, %v7592, %v7593
        %v7595 = vrot.slane %v7593, 4
        %v7596 = vrot.slane %v6476, 5
        %v7597 = vsel %vm2042, %v7595, %v7596
        %v7598 = vrot.slane %v7472, 5
        %v7599 = vrot.slane %v7598, 4
        %v7600 = vrot.slane %v6443, 5
        %v7601 = vsel %vm2042, %v7599, %v7600
        %v7602 = vrot.slane %v7600, 4
        %v7603 = vrot.slane %v6477, 5
        %v7604 = vsel %vm2042, %v7602, %v7603
        %v7605 = vrot.slane %v7473, 5
        %v7606 = vrot.slane %v7605, 4
        %v7607 = vrot.slane %v6445, 5
        %v7608 = vsel %vm2042, %v7606, %v7607
        %v7609 = vrot.slane %v7607, 4
        %v7610 = vrot.slane %v6478, 5
        %v7611 = vsel %vm2042, %v7609, %v7610
        %v7612 = vrot.slane %v7474, 5
        %v7613 = vrot.slane %v7612, 4
        %v7614 = vrot.slane %v6447, 5
        %v7615 = vsel %vm2042, %v7613, %v7614
        %v7616 = vrot.slane %v7614, 4
        %v7617 = vrot.slane %v6479, 5
        %v7618 = vsel %vm2042, %v7616, %v7617
        %s7619 = scalar_lea.vmem [#allocation8], 128
        %v7620 = vld [vmem:[%s7619] sm:$0xf]
        %v7621 = vld [vmem:[%s7619 + $0x4] sm:$0xf]
        %v7622 = vld [vmem:[%s7619 + $0x8] sm:$0xf]
        %v7623 = vld [vmem:[%s7619 + $0xc] sm:$0xf]
        %v7624 = vld [vmem:[%s7619 + $0x10] sm:$0xf]
        %v7625 = vld [vmem:[%s7619 + $0x14] sm:$0xf]
        %v7626 = vld [vmem:[%s7619 + $0x18] sm:$0xf]
        %v7627 = vld [vmem:[%s7619 + $0x1c] sm:$0xf]
        %v7628 = vld [vmem:[%s7619 + $0x20] sm:$0xf]
        %v7629 = vld [vmem:[%s7619 + $0x24] sm:$0xf]
        %v7630 = vld [vmem:[%s7619 + $0x28] sm:$0xf]
        %v7631 = vld [vmem:[%s7619 + $0x2c] sm:$0xf]
        %v7632 = vld [vmem:[%s7619 + $0x30] sm:$0xf]
        %v7633 = vld [vmem:[%s7619 + $0x34] sm:$0xf]
        %v7634 = vld [vmem:[%s7619 + $0x38] sm:$0xf]
        %v7635 = vld [vmem:[%s7619 + $0x3c] sm:$0xf]
        %v7636 = vunpack.c.l.b16 %v7510
        %v7637 = vunpack.c.l.b16 %v7513
        %v7638 = vunpack.c.l.b16 %v7517
        %v7639 = vunpack.c.l.b16 %v7520
        %v7640 = vunpack.c.l.b16 %v7524
        %v7641 = vunpack.c.l.b16 %v7527
        %v7642 = vunpack.c.l.b16 %v7531
        %v7643 = vunpack.c.l.b16 %v7534
        %v7644 = vunpack.c.l.b16 %v7538
        %v7645 = vunpack.c.l.b16 %v7541
        %v7646 = vunpack.c.l.b16 %v7545
        %v7647 = vunpack.c.l.b16 %v7548
        %v7648 = vunpack.c.l.b16 %v7552
        %v7649 = vunpack.c.l.b16 %v7555
        %v7650 = vunpack.c.l.b16 %v7559
        %v7651 = vunpack.c.l.b16 %v7562
        %v7652 = vunpack.c.l.b16 %v7566
        %v7653 = vunpack.c.l.b16 %v7569
        %v7654 = vunpack.c.l.b16 %v7573
        %v7655 = vunpack.c.l.b16 %v7576
        %v7656 = vunpack.c.l.b16 %v7580
        %v7657 = vunpack.c.l.b16 %v7583
        %v7658 = vunpack.c.l.b16 %v7587
        %v7659 = vunpack.c.l.b16 %v7590
        %v7660 = vunpack.c.l.b16 %v7594
        %v7661 = vunpack.c.l.b16 %v7597
        %v7662 = vunpack.c.l.b16 %v7601
        %v7663 = vunpack.c.l.b16 %v7604
        %v7664 = vunpack.c.l.b16 %v7608
        %v7665 = vunpack.c.l.b16 %v7611
        %v7666 = vunpack.c.l.b16 %v7615
        %v7667 = vunpack.c.l.b16 %v7618
        %v7668 = vpack.c.b16 %v7637, %v7636
        %v7669 = vpack.c.b16 %v7639, %v7638
        %v7670 = vpack.c.b16 %v7641, %v7640
        %v7671 = vpack.c.b16 %v7643, %v7642
        %v7672 = vpack.c.b16 %v7645, %v7644
        %v7673 = vpack.c.b16 %v7647, %v7646
        %v7674 = vpack.c.b16 %v7649, %v7648
        %v7675 = vpack.c.b16 %v7651, %v7650
        %v7676 = vpack.c.b16 %v7653, %v7652
        %v7677 = vpack.c.b16 %v7655, %v7654
        %v7678 = vpack.c.b16 %v7657, %v7656
        %v7679 = vpack.c.b16 %v7659, %v7658
        %v7680 = vpack.c.b16 %v7661, %v7660
        %v7681 = vpack.c.b16 %v7663, %v7662
        %v7682 = vpack.c.b16 %v7665, %v7664
        %v7683 = vpack.c.b16 %v7667, %v7666
        %v7716 = vunpack.c.l.b16 %v7620
        %v7717 = vunpack.c.l.b16 %v7621
        %v7718 = vunpack.c.l.b16 %v7622
        %v7719 = vunpack.c.l.b16 %v7623
        %v7720 = vunpack.c.l.b16 %v7624
        %v7721 = vunpack.c.l.b16 %v7625
        %v7722 = vunpack.c.l.b16 %v7626
        %v7723 = vunpack.c.l.b16 %v7627
        %v7724 = vunpack.c.l.b16 %v7628
        %v7725 = vunpack.c.l.b16 %v7629
        %v7726 = vunpack.c.l.b16 %v7630
        %v7727 = vunpack.c.l.b16 %v7631
        %v7728 = vunpack.c.l.b16 %v7632
        %v7729 = vunpack.c.l.b16 %v7633
        %v7730 = vunpack.c.l.b16 %v7634
        %v7731 = vunpack.c.l.b16 %v7635
        %v7732 = vpack.c.b16 %v7717, %v7716
        %v7733 = vpack.c.b16 %v7719, %v7718
        %v7734 = vpack.c.b16 %v7721, %v7720
        %v7735 = vpack.c.b16 %v7723, %v7722
        %v7736 = vpack.c.b16 %v7725, %v7724
        %v7737 = vpack.c.b16 %v7727, %v7726
        %v7738 = vpack.c.b16 %v7729, %v7728
        %v7739 = vpack.c.b16 %v7731, %v7730
        %7748 = vmatprep.subr.bf16.mxu0 0
        %7749 = vmatpush1.bf16.msra.mxu0 %v7739
        %7750 = vmatprep.subr.bf16.mxu0 0
        %7751 = vmatpush1.bf16.msra.mxu0 %v7738
        %7752 = vmatprep.subr.bf16.mxu0 0
        %7753 = vmatpush1.bf16.msra.mxu0 %v7737
        %7754 = vmatprep.subr.bf16.mxu0 0
        %7755 = vmatpush1.bf16.msra.mxu0 %v7736
        %7756 = vmatprep.subr.bf16.mxu0 0
        %7757 = vmatpush1.bf16.msra.mxu0 %v7735
        %7758 = vmatprep.subr.bf16.mxu0 0
        %7759 = vmatpush1.bf16.msra.mxu0 %v7734
        %7760 = vmatprep.subr.bf16.mxu0 0
        %7761 = vmatpush1.bf16.msra.mxu0 %v7733
        %7762 = vmatprep.subr.bf16.mxu0 0
        %7763 = vmatpush1.bf16.msra.mxu0 %v7732
        %7764 = vmatprep.subr.bf16.mxu0 0
        %7765 = vmatpush2.bf16.msra.mxu0 0
        %7766 = vmatprep.subr.bf16.mxu0 0
        %7767 = vmatpush2.bf16.msra.mxu0 0
        %7768 = vmatprep.subr.bf16.mxu0 0
        %7769 = vmatpush2.bf16.msra.mxu0 0
        %7770 = vmatprep.subr.bf16.mxu0 0
        %7771 = vmatpush2.bf16.msra.mxu0 0
        %7772 = vmatprep.subr.bf16.mxu0 0
        %7773 = vmatpush2.bf16.msra.mxu0 0
        %7774 = vmatprep.subr.bf16.mxu0 0
        %7775 = vmatpush2.bf16.msra.mxu0 0
        %7776 = vmatprep.subr.bf16.mxu0 0
        %7777 = vmatpush2.bf16.msra.mxu0 0
        %7778 = vmatprep.subr.bf16.mxu0 0
        %7779 = vmatpush2.bf16.msra.mxu0 0
        %7780 = vmatprep.mubr.bf16.mxu0 0
        %7781 = vmatmul.mubr.bf16.gmra.mxu0 %v7668
        %v7782 = vpop.f32.mrf.mxu0
        %v7783 = vadd.f32 0.0, %v7782
        %v7784 = vpop.f32.mrf.mxu0
        %v7785 = vpop.f32.mrf.mxu0
        %v7786 = vadd.f32 0.0, %v7785
        %v7787 = vpop.f32.mrf.mxu0
        %7788 = vmatprep.mubr.bf16.mxu0 0
        %7789 = vmatmul.mubr.bf16.gmra.mxu0 %v7669
        %v7790 = vpop.f32.mrf.mxu0
        %v7791 = vadd.f32 0.0, %v7790
        %v7792 = vpop.f32.mrf.mxu0
        %v7793 = vpop.f32.mrf.mxu0
        %v7794 = vadd.f32 0.0, %v7793
        %v7795 = vpop.f32.mrf.mxu0
        %7796 = vmatprep.mubr.bf16.mxu0 0
        %7797 = vmatmul.mubr.bf16.gmra.mxu0 %v7670
        %v7798 = vpop.f32.mrf.mxu0
        %v7799 = vadd.f32 0.0, %v7798
        %v7800 = vpop.f32.mrf.mxu0
        %v7801 = vpop.f32.mrf.mxu0
        %v7802 = vadd.f32 0.0, %v7801
        %v7803 = vpop.f32.mrf.mxu0
        %7804 = vmatprep.mubr.bf16.mxu0 0
        %7805 = vmatmul.mubr.bf16.gmra.mxu0 %v7671
        %v7806 = vpop.f32.mrf.mxu0
        %v7807 = vadd.f32 0.0, %v7806
        %v7808 = vpop.f32.mrf.mxu0
        %v7809 = vpop.f32.mrf.mxu0
        %v7810 = vadd.f32 0.0, %v7809
        %v7811 = vpop.f32.mrf.mxu0
        %7812 = vmatprep.mubr.bf16.mxu0 0
        %7813 = vmatmul.mubr.bf16.gmra.mxu0 %v7672
        %v7814 = vpop.f32.mrf.mxu0
        %v7815 = vadd.f32 0.0, %v7814
        %v7816 = vpop.f32.mrf.mxu0
        %v7817 = vpop.f32.mrf.mxu0
        %v7818 = vadd.f32 0.0, %v7817
        %v7819 = vpop.f32.mrf.mxu0
        %7820 = vmatprep.mubr.bf16.mxu0 0
        %7821 = vmatmul.mubr.bf16.gmra.mxu0 %v7673
        %v7822 = vpop.f32.mrf.mxu0
        %v7823 = vadd.f32 0.0, %v7822
        %v7824 = vpop.f32.mrf.mxu0
        %v7825 = vpop.f32.mrf.mxu0
        %v7826 = vadd.f32 0.0, %v7825
        %v7827 = vpop.f32.mrf.mxu0
        %7828 = vmatprep.mubr.bf16.mxu0 0
        %7829 = vmatmul.mubr.bf16.gmra.mxu0 %v7674
        %v7830 = vpop.f32.mrf.mxu0
        %v7831 = vadd.f32 0.0, %v7830
        %v7832 = vpop.f32.mrf.mxu0
        %v7833 = vpop.f32.mrf.mxu0
        %v7834 = vadd.f32 0.0, %v7833
        %v7835 = vpop.f32.mrf.mxu0
        %7836 = vmatprep.mubr.bf16.mxu0 0
        %7837 = vmatmul.mubr.bf16.gmra.mxu0 %v7675
        %v7838 = vpop.f32.mrf.mxu0
        %v7839 = vadd.f32 0.0, %v7838
        %v7840 = vpop.f32.mrf.mxu0
        %v7841 = vpop.f32.mrf.mxu0
        %v7842 = vadd.f32 0.0, %v7841
        %v7843 = vpop.f32.mrf.mxu0
        %7844 = vmatprep.mubr.bf16.mxu0 0
        %7845 = vmatmul.mubr.bf16.gmra.mxu0 %v7676
        %v7846 = vpop.f32.mrf.mxu0
        %v7847 = vadd.f32 0.0, %v7846
        %v7848 = vpop.f32.mrf.mxu0
        %v7849 = vpop.f32.mrf.mxu0
        %v7850 = vadd.f32 0.0, %v7849
        %v7851 = vpop.f32.mrf.mxu0
        %7852 = vmatprep.mubr.bf16.mxu0 0
        %7853 = vmatmul.mubr.bf16.gmra.mxu0 %v7677
        %v7854 = vpop.f32.mrf.mxu0
        %v7855 = vadd.f32 0.0, %v7854
        %v7856 = vpop.f32.mrf.mxu0
        %v7857 = vpop.f32.mrf.mxu0
        %v7858 = vadd.f32 0.0, %v7857
        %v7859 = vpop.f32.mrf.mxu0
        %7860 = vmatprep.mubr.bf16.mxu0 0
        %7861 = vmatmul.mubr.bf16.gmra.mxu0 %v7678
        %v7862 = vpop.f32.mrf.mxu0
        %v7863 = vadd.f32 0.0, %v7862
        %v7864 = vpop.f32.mrf.mxu0
        %v7865 = vpop.f32.mrf.mxu0
        %v7866 = vadd.f32 0.0, %v7865
        %v7867 = vpop.f32.mrf.mxu0
        %7868 = vmatprep.mubr.bf16.mxu0 0
        %7869 = vmatmul.mubr.bf16.gmra.mxu0 %v7679
        %v7870 = vpop.f32.mrf.mxu0
        %v7871 = vadd.f32 0.0, %v7870
        %v7872 = vpop.f32.mrf.mxu0
        %v7873 = vpop.f32.mrf.mxu0
        %v7874 = vadd.f32 0.0, %v7873
        %v7875 = vpop.f32.mrf.mxu0
        %7876 = vmatprep.mubr.bf16.mxu0 0
        %7877 = vmatmul.mubr.bf16.gmra.mxu0 %v7680
        %v7878 = vpop.f32.mrf.mxu0
        %v7879 = vadd.f32 0.0, %v7878
        %v7880 = vpop.f32.mrf.mxu0
        %v7881 = vpop.f32.mrf.mxu0
        %v7882 = vadd.f32 0.0, %v7881
        %v7883 = vpop.f32.mrf.mxu0
        %7884 = vmatprep.mubr.bf16.mxu0 0
        %7885 = vmatmul.mubr.bf16.gmra.mxu0 %v7681
        %v7886 = vpop.f32.mrf.mxu0
        %v7887 = vadd.f32 0.0, %v7886
        %v7888 = vpop.f32.mrf.mxu0
        %v7889 = vpop.f32.mrf.mxu0
        %v7890 = vadd.f32 0.0, %v7889
        %v7891 = vpop.f32.mrf.mxu0
        %7892 = vmatprep.mubr.bf16.mxu0 0
        %7893 = vmatmul.mubr.bf16.gmra.mxu0 %v7682
        %v7894 = vpop.f32.mrf.mxu0
        %v7895 = vadd.f32 0.0, %v7894
        %v7896 = vpop.f32.mrf.mxu0
        %v7897 = vpop.f32.mrf.mxu0
        %v7898 = vadd.f32 0.0, %v7897
        %v7899 = vpop.f32.mrf.mxu0
        %7900 = vmatprep.mubr.bf16.mxu0 0
        %7901 = vmatmul.mubr.bf16.gmra.mxu0 %v7683
        %v7902 = vpop.f32.mrf.mxu0
        %v7903 = vadd.f32 0.0, %v7902
        %v7904 = vpop.f32.mrf.mxu0
        %v7905 = vpop.f32.mrf.mxu0
        %v7906 = vadd.f32 0.0, %v7905
        %v7907 = vpop.f32.mrf.mxu0
        %7908 = vdwg.mxu0
        %v7909 = vadd.f32 %v7333, %v7783
        %v7910 = vadd.f32 %v7336, %v7786
        %v7911 = vadd.f32 %v7341, %v7791
        %v7912 = vadd.f32 %v7344, %v7794
        %v7913 = vadd.f32 %v7349, %v7799
        %v7914 = vadd.f32 %v7352, %v7802
        %v7915 = vadd.f32 %v7357, %v7807
        %v7916 = vadd.f32 %v7360, %v7810
        %v7917 = vadd.f32 %v7365, %v7815
        %v7918 = vadd.f32 %v7368, %v7818
        %v7919 = vadd.f32 %v7373, %v7823
        %v7920 = vadd.f32 %v7376, %v7826
        %v7921 = vadd.f32 %v7381, %v7831
        %v7922 = vadd.f32 %v7384, %v7834
        %v7923 = vadd.f32 %v7389, %v7839
        %v7924 = vadd.f32 %v7392, %v7842
        %v7925 = vadd.f32 %v7397, %v7847
        %v7926 = vadd.f32 %v7400, %v7850
        %v7927 = vadd.f32 %v7405, %v7855
        %v7928 = vadd.f32 %v7408, %v7858
        %v7929 = vadd.f32 %v7413, %v7863
        %v7930 = vadd.f32 %v7416, %v7866
        %v7931 = vadd.f32 %v7421, %v7871
        %v7932 = vadd.f32 %v7424, %v7874
        %v7933 = vadd.f32 %v7429, %v7879
        %v7934 = vadd.f32 %v7432, %v7882
        %v7935 = vadd.f32 %v7437, %v7887
        %v7936 = vadd.f32 %v7440, %v7890
        %v7937 = vadd.f32 %v7445, %v7895
        %v7938 = vadd.f32 %v7448, %v7898
        %v7939 = vadd.f32 %v7453, %v7903
        %v7940 = vadd.f32 %v7456, %v7906
        %v7941 = vld [vmem:[%s280] sm:$0xf]
        %v7942 = vld [vmem:[%s280 + $0x4] sm:$0xf]
        %v7943 = vld [vmem:[%s280 + $0xc] sm:$0xf]
        %v7944 = vld [vmem:[%s280 + $0x10] sm:$0xf]
        %v7945 = vld [vmem:[%s280 + $0x18] sm:$0xf]
        %v7946 = vld [vmem:[%s280 + $0x1c] sm:$0xf]
        %v7947 = vld [vmem:[%s280 + $0x24] sm:$0xf]
        %v7948 = vld [vmem:[%s280 + $0x28] sm:$0xf]
        %v7949 = vld [vmem:[%s280 + $0x30] sm:$0xf]
        %v7950 = vld [vmem:[%s280 + $0x34] sm:$0xf]
        %v7951 = vld [vmem:[%s280 + $0x3c] sm:$0xf]
        %v7952 = vld [vmem:[%s280 + $0x40] sm:$0xf]
        %v7953 = vld [vmem:[%s280 + $0x48] sm:$0xf]
        %v7954 = vld [vmem:[%s280 + $0x4c] sm:$0xf]
        %v7955 = vld [vmem:[%s280 + $0x54] sm:$0xf]
        %v7956 = vld [vmem:[%s280 + $0x58] sm:$0xf]
        %v7957 = vld [vmem:[%s280 + $0x60] sm:$0xf]
        %v7958 = vld [vmem:[%s280 + $0x64] sm:$0xf]
        %v7959 = vld [vmem:[%s280 + $0x6c] sm:$0xf]
        %v7960 = vld [vmem:[%s280 + $0x70] sm:$0xf]
        %v7961 = vld [vmem:[%s280 + $0x78] sm:$0xf]
        %v7962 = vld [vmem:[%s280 + $0x7c] sm:$0xf]
        %v7963 = vld [vmem:[%s280 + $0x84] sm:$0xf]
        %v7964 = vld [vmem:[%s280 + $0x88] sm:$0xf]
        %v7965 = vld [vmem:[%s280 + $0x90] sm:$0xf]
        %v7966 = vld [vmem:[%s280 + $0x94] sm:$0xf]
        %v7967 = vld [vmem:[%s280 + $0x9c] sm:$0xf]
        %v7968 = vld [vmem:[%s280 + $0xa0] sm:$0xf]
        %v7969 = vld [vmem:[%s280 + $0xa8] sm:$0xf]
        %v7970 = vld [vmem:[%s280 + $0xac] sm:$0xf]
        %v7971 = vld [vmem:[%s280 + $0xb4] sm:$0xf]
        %v7972 = vld [vmem:[%s280 + $0xb8] sm:$0xf]
        %s7973 = scalar_lea.vmem [#allocation8], 192
        %v7974 = vld [vmem:[%s7973] sm:$0xf]
        %v7975 = vld [vmem:[%s7973 + $0x4] sm:$0xf]
        %v7976 = vld [vmem:[%s7973 + $0x8] sm:$0xf]
        %v7977 = vld [vmem:[%s7973 + $0xc] sm:$0xf]
        %v7978 = vld [vmem:[%s7973 + $0x10] sm:$0xf]
        %v7979 = vld [vmem:[%s7973 + $0x14] sm:$0xf]
        %v7980 = vld [vmem:[%s7973 + $0x18] sm:$0xf]
        %v7981 = vld [vmem:[%s7973 + $0x1c] sm:$0xf]
        %v7982 = vld [vmem:[%s7973 + $0x20] sm:$0xf]
        %v7983 = vld [vmem:[%s7973 + $0x24] sm:$0xf]
        %v7984 = vld [vmem:[%s7973 + $0x28] sm:$0xf]
        %v7985 = vld [vmem:[%s7973 + $0x2c] sm:$0xf]
        %v7986 = vld [vmem:[%s7973 + $0x30] sm:$0xf]
        %v7987 = vld [vmem:[%s7973 + $0x34] sm:$0xf]
        %v7988 = vld [vmem:[%s7973 + $0x38] sm:$0xf]
        %v7989 = vld [vmem:[%s7973 + $0x3c] sm:$0xf]
        %v8022 = vunpack.c.l.b16 %v7941
        %v8023 = vunpack.c.l.b16 %v7942
        %v8024 = vunpack.c.l.b16 %v7943
        %v8025 = vunpack.c.l.b16 %v7944
        %v8026 = vunpack.c.l.b16 %v7945
        %v8027 = vunpack.c.l.b16 %v7946
        %v8028 = vunpack.c.l.b16 %v7947
        %v8029 = vunpack.c.l.b16 %v7948
        %v8030 = vunpack.c.l.b16 %v7949
        %v8031 = vunpack.c.l.b16 %v7950
        %v8032 = vunpack.c.l.b16 %v7951
        %v8033 = vunpack.c.l.b16 %v7952
        %v8034 = vunpack.c.l.b16 %v7953
        %v8035 = vunpack.c.l.b16 %v7954
        %v8036 = vunpack.c.l.b16 %v7955
        %v8037 = vunpack.c.l.b16 %v7956
        %v8038 = vunpack.c.l.b16 %v7957
        %v8039 = vunpack.c.l.b16 %v7958
        %v8040 = vunpack.c.l.b16 %v7959
        %v8041 = vunpack.c.l.b16 %v7960
        %v8042 = vunpack.c.l.b16 %v7961
        %v8043 = vunpack.c.l.b16 %v7962
        %v8044 = vunpack.c.l.b16 %v7963
        %v8045 = vunpack.c.l.b16 %v7964
        %v8046 = vunpack.c.l.b16 %v7965
        %v8047 = vunpack.c.l.b16 %v7966
        %v8048 = vunpack.c.l.b16 %v7967
        %v8049 = vunpack.c.l.b16 %v7968
        %v8050 = vunpack.c.l.b16 %v7969
        %v8051 = vunpack.c.l.b16 %v7970
        %v8052 = vunpack.c.l.b16 %v7971
        %v8053 = vunpack.c.l.b16 %v7972
        %v8054 = vpack.c.b16 %v8023, %v8022
        %v8055 = vpack.c.b16 %v8025, %v8024
        %v8056 = vpack.c.b16 %v8027, %v8026
        %v8057 = vpack.c.b16 %v8029, %v8028
        %v8058 = vpack.c.b16 %v8031, %v8030
        %v8059 = vpack.c.b16 %v8033, %v8032
        %v8060 = vpack.c.b16 %v8035, %v8034
        %v8061 = vpack.c.b16 %v8037, %v8036
        %v8062 = vpack.c.b16 %v8039, %v8038
        %v8063 = vpack.c.b16 %v8041, %v8040
        %v8064 = vpack.c.b16 %v8043, %v8042
        %v8065 = vpack.c.b16 %v8045, %v8044
        %v8066 = vpack.c.b16 %v8047, %v8046
        %v8067 = vpack.c.b16 %v8049, %v8048
        %v8068 = vpack.c.b16 %v8051, %v8050
        %v8069 = vpack.c.b16 %v8053, %v8052
        %v8102 = vunpack.c.l.b16 %v7974
        %v8103 = vunpack.c.l.b16 %v7975
        %v8104 = vunpack.c.l.b16 %v7976
        %v8105 = vunpack.c.l.b16 %v7977
        %v8106 = vunpack.c.l.b16 %v7978
        %v8107 = vunpack.c.l.b16 %v7979
        %v8108 = vunpack.c.l.b16 %v7980
        %v8109 = vunpack.c.l.b16 %v7981
        %v8110 = vunpack.c.l.b16 %v7982
        %v8111 = vunpack.c.l.b16 %v7983
        %v8112 = vunpack.c.l.b16 %v7984
        %v8113 = vunpack.c.l.b16 %v7985
        %v8114 = vunpack.c.l.b16 %v7986
        %v8115 = vunpack.c.l.b16 %v7987
        %v8116 = vunpack.c.l.b16 %v7988
        %v8117 = vunpack.c.l.b16 %v7989
        %v8118 = vpack.c.b16 %v8103, %v8102
        %v8119 = vpack.c.b16 %v8105, %v8104
        %v8120 = vpack.c.b16 %v8107, %v8106
        %v8121 = vpack.c.b16 %v8109, %v8108
        %v8122 = vpack.c.b16 %v8111, %v8110
        %v8123 = vpack.c.b16 %v8113, %v8112
        %v8124 = vpack.c.b16 %v8115, %v8114
        %v8125 = vpack.c.b16 %v8117, %v8116
        %8134 = vmatprep.subr.bf16.mxu0 0
        %8135 = vmatpush1.bf16.msra.mxu0 %v8125
        %8136 = vmatprep.subr.bf16.mxu0 0
        %8137 = vmatpush1.bf16.msra.mxu0 %v8124
        %8138 = vmatprep.subr.bf16.mxu0 0
        %8139 = vmatpush1.bf16.msra.mxu0 %v8123
        %8140 = vmatprep.subr.bf16.mxu0 0
        %8141 = vmatpush1.bf16.msra.mxu0 %v8122
        %8142 = vmatprep.subr.bf16.mxu0 0
        %8143 = vmatpush1.bf16.msra.mxu0 %v8121
        %8144 = vmatprep.subr.bf16.mxu0 0
        %8145 = vmatpush1.bf16.msra.mxu0 %v8120
        %8146 = vmatprep.subr.bf16.mxu0 0
        %8147 = vmatpush1.bf16.msra.mxu0 %v8119
        %8148 = vmatprep.subr.bf16.mxu0 0
        %8149 = vmatpush1.bf16.msra.mxu0 %v8118
        %8150 = vmatprep.subr.bf16.mxu0 0
        %8151 = vmatpush2.bf16.msra.mxu0 0
        %8152 = vmatprep.subr.bf16.mxu0 0
        %8153 = vmatpush2.bf16.msra.mxu0 0
        %8154 = vmatprep.subr.bf16.mxu0 0
        %8155 = vmatpush2.bf16.msra.mxu0 0
        %8156 = vmatprep.subr.bf16.mxu0 0
        %8157 = vmatpush2.bf16.msra.mxu0 0
        %8158 = vmatprep.subr.bf16.mxu0 0
        %8159 = vmatpush2.bf16.msra.mxu0 0
        %8160 = vmatprep.subr.bf16.mxu0 0
        %8161 = vmatpush2.bf16.msra.mxu0 0
        %8162 = vmatprep.subr.bf16.mxu0 0
        %8163 = vmatpush2.bf16.msra.mxu0 0
        %8164 = vmatprep.subr.bf16.mxu0 0
        %8165 = vmatpush2.bf16.msra.mxu0 0
        %8166 = vmatprep.mubr.bf16.mxu0 0
        %8167 = vmatmul.mubr.bf16.gmra.mxu0 %v8054
        %v8168 = vpop.f32.mrf.mxu0
        %v8169 = vadd.f32 0.0, %v8168
        %v8170 = vpop.f32.mrf.mxu0
        %v8171 = vpop.f32.mrf.mxu0
        %v8172 = vadd.f32 0.0, %v8171
        %v8173 = vpop.f32.mrf.mxu0
        %8174 = vmatprep.mubr.bf16.mxu0 0
        %8175 = vmatmul.mubr.bf16.gmra.mxu0 %v8055
        %v8176 = vpop.f32.mrf.mxu0
        %v8177 = vadd.f32 0.0, %v8176
        %v8178 = vpop.f32.mrf.mxu0
        %v8179 = vpop.f32.mrf.mxu0
        %v8180 = vadd.f32 0.0, %v8179
        %v8181 = vpop.f32.mrf.mxu0
        %8182 = vmatprep.mubr.bf16.mxu0 0
        %8183 = vmatmul.mubr.bf16.gmra.mxu0 %v8056
        %v8184 = vpop.f32.mrf.mxu0
        %v8185 = vadd.f32 0.0, %v8184
        %v8186 = vpop.f32.mrf.mxu0
        %v8187 = vpop.f32.mrf.mxu0
        %v8188 = vadd.f32 0.0, %v8187
        %v8189 = vpop.f32.mrf.mxu0
        %8190 = vmatprep.mubr.bf16.mxu0 0
        %8191 = vmatmul.mubr.bf16.gmra.mxu0 %v8057
        %v8192 = vpop.f32.mrf.mxu0
        %v8193 = vadd.f32 0.0, %v8192
        %v8194 = vpop.f32.mrf.mxu0
        %v8195 = vpop.f32.mrf.mxu0
        %v8196 = vadd.f32 0.0, %v8195
        %v8197 = vpop.f32.mrf.mxu0
        %8198 = vmatprep.mubr.bf16.mxu0 0
        %8199 = vmatmul.mubr.bf16.gmra.mxu0 %v8058
        %v8200 = vpop.f32.mrf.mxu0
        %v8201 = vadd.f32 0.0, %v8200
        %v8202 = vpop.f32.mrf.mxu0
        %v8203 = vpop.f32.mrf.mxu0
        %v8204 = vadd.f32 0.0, %v8203
        %v8205 = vpop.f32.mrf.mxu0
        %8206 = vmatprep.mubr.bf16.mxu0 0
        %8207 = vmatmul.mubr.bf16.gmra.mxu0 %v8059
        %v8208 = vpop.f32.mrf.mxu0
        %v8209 = vadd.f32 0.0, %v8208
        %v8210 = vpop.f32.mrf.mxu0
        %v8211 = vpop.f32.mrf.mxu0
        %v8212 = vadd.f32 0.0, %v8211
        %v8213 = vpop.f32.mrf.mxu0
        %8214 = vmatprep.mubr.bf16.mxu0 0
        %8215 = vmatmul.mubr.bf16.gmra.mxu0 %v8060
        %v8216 = vpop.f32.mrf.mxu0
        %v8217 = vadd.f32 0.0, %v8216
        %v8218 = vpop.f32.mrf.mxu0
        %v8219 = vpop.f32.mrf.mxu0
        %v8220 = vadd.f32 0.0, %v8219
        %v8221 = vpop.f32.mrf.mxu0
        %8222 = vmatprep.mubr.bf16.mxu0 0
        %8223 = vmatmul.mubr.bf16.gmra.mxu0 %v8061
        %v8224 = vpop.f32.mrf.mxu0
        %v8225 = vadd.f32 0.0, %v8224
        %v8226 = vpop.f32.mrf.mxu0
        %v8227 = vpop.f32.mrf.mxu0
        %v8228 = vadd.f32 0.0, %v8227
        %v8229 = vpop.f32.mrf.mxu0
        %8230 = vmatprep.mubr.bf16.mxu0 0
        %8231 = vmatmul.mubr.bf16.gmra.mxu0 %v8062
        %v8232 = vpop.f32.mrf.mxu0
        %v8233 = vadd.f32 0.0, %v8232
        %v8234 = vpop.f32.mrf.mxu0
        %v8235 = vpop.f32.mrf.mxu0
        %v8236 = vadd.f32 0.0, %v8235
        %v8237 = vpop.f32.mrf.mxu0
        %8238 = vmatprep.mubr.bf16.mxu0 0
        %8239 = vmatmul.mubr.bf16.gmra.mxu0 %v8063
        %v8240 = vpop.f32.mrf.mxu0
        %v8241 = vadd.f32 0.0, %v8240
        %v8242 = vpop.f32.mrf.mxu0
        %v8243 = vpop.f32.mrf.mxu0
        %v8244 = vadd.f32 0.0, %v8243
        %v8245 = vpop.f32.mrf.mxu0
        %8246 = vmatprep.mubr.bf16.mxu0 0
        %8247 = vmatmul.mubr.bf16.gmra.mxu0 %v8064
        %v8248 = vpop.f32.mrf.mxu0
        %v8249 = vadd.f32 0.0, %v8248
        %v8250 = vpop.f32.mrf.mxu0
        %v8251 = vpop.f32.mrf.mxu0
        %v8252 = vadd.f32 0.0, %v8251
        %v8253 = vpop.f32.mrf.mxu0
        %8254 = vmatprep.mubr.bf16.mxu0 0
        %8255 = vmatmul.mubr.bf16.gmra.mxu0 %v8065
        %v8256 = vpop.f32.mrf.mxu0
        %v8257 = vadd.f32 0.0, %v8256
        %v8258 = vpop.f32.mrf.mxu0
        %v8259 = vpop.f32.mrf.mxu0
        %v8260 = vadd.f32 0.0, %v8259
        %v8261 = vpop.f32.mrf.mxu0
        %8262 = vmatprep.mubr.bf16.mxu0 0
        %8263 = vmatmul.mubr.bf16.gmra.mxu0 %v8066
        %v8264 = vpop.f32.mrf.mxu0
        %v8265 = vadd.f32 0.0, %v8264
        %v8266 = vpop.f32.mrf.mxu0
        %v8267 = vpop.f32.mrf.mxu0
        %v8268 = vadd.f32 0.0, %v8267
        %v8269 = vpop.f32.mrf.mxu0
        %8270 = vmatprep.mubr.bf16.mxu0 0
        %8271 = vmatmul.mubr.bf16.gmra.mxu0 %v8067
        %v8272 = vpop.f32.mrf.mxu0
        %v8273 = vadd.f32 0.0, %v8272
        %v8274 = vpop.f32.mrf.mxu0
        %v8275 = vpop.f32.mrf.mxu0
        %v8276 = vadd.f32 0.0, %v8275
        %v8277 = vpop.f32.mrf.mxu0
        %8278 = vmatprep.mubr.bf16.mxu0 0
        %8279 = vmatmul.mubr.bf16.gmra.mxu0 %v8068
        %v8280 = vpop.f32.mrf.mxu0
        %v8281 = vadd.f32 0.0, %v8280
        %v8282 = vpop.f32.mrf.mxu0
        %v8283 = vpop.f32.mrf.mxu0
        %v8284 = vadd.f32 0.0, %v8283
        %v8285 = vpop.f32.mrf.mxu0
        %8286 = vmatprep.mubr.bf16.mxu0 0
        %8287 = vmatmul.mubr.bf16.gmra.mxu0 %v8069
        %v8288 = vpop.f32.mrf.mxu0
        %v8289 = vadd.f32 0.0, %v8288
        %v8290 = vpop.f32.mrf.mxu0
        %v8291 = vpop.f32.mrf.mxu0
        %v8292 = vadd.f32 0.0, %v8291
        %v8293 = vpop.f32.mrf.mxu0
        %8294 = vdwg.mxu0
        %v8295 = vadd.f32 %v7909, %v8169
        %v8296 = vadd.f32 %v7910, %v8172
        %v8297 = vadd.f32 %v7911, %v8177
        %v8298 = vadd.f32 %v7912, %v8180
        %v8299 = vadd.f32 %v7913, %v8185
        %v8300 = vadd.f32 %v7914, %v8188
        %v8301 = vadd.f32 %v7915, %v8193
        %v8302 = vadd.f32 %v7916, %v8196
        %v8303 = vadd.f32 %v7917, %v8201
        %v8304 = vadd.f32 %v7918, %v8204
        %v8305 = vadd.f32 %v7919, %v8209
        %v8306 = vadd.f32 %v7920, %v8212
        %v8307 = vadd.f32 %v7921, %v8217
        %v8308 = vadd.f32 %v7922, %v8220
        %v8309 = vadd.f32 %v7923, %v8225
        %v8310 = vadd.f32 %v7924, %v8228
        %v8311 = vadd.f32 %v7925, %v8233
        %v8312 = vadd.f32 %v7926, %v8236
        %v8313 = vadd.f32 %v7927, %v8241
        %v8314 = vadd.f32 %v7928, %v8244
        %v8315 = vadd.f32 %v7929, %v8249
        %v8316 = vadd.f32 %v7930, %v8252
        %v8317 = vadd.f32 %v7931, %v8257
        %v8318 = vadd.f32 %v7932, %v8260
        %v8319 = vadd.f32 %v7933, %v8265
        %v8320 = vadd.f32 %v7934, %v8268
        %v8321 = vadd.f32 %v7935, %v8273
        %v8322 = vadd.f32 %v7936, %v8276
        %v8323 = vadd.f32 %v7937, %v8281
        %v8324 = vadd.f32 %v7938, %v8284
        %v8325 = vadd.f32 %v7939, %v8289
        %v8326 = vadd.f32 %v7940, %v8292
        %v8327 = vld [vmem:[%s280] sm:$0xf]
        %v8328 = vld [vmem:[%s280 + $0x4] sm:$0xf]
        %v8329 = vld [vmem:[%s280 + $0x8] sm:$0x1]
        %v8330 = vld [vmem:[%s280 + $0xc] sm:$0xf]
        %v8331 = vld [vmem:[%s280 + $0x10] sm:$0xf]
        %v8332 = vld [vmem:[%s280 + $0x14] sm:$0x1]
        %v8333 = vld [vmem:[%s280 + $0x18] sm:$0xf]
        %v8334 = vld [vmem:[%s280 + $0x1c] sm:$0xf]
        %v8335 = vld [vmem:[%s280 + $0x20] sm:$0x1]
        %v8336 = vld [vmem:[%s280 + $0x24] sm:$0xf]
        %v8337 = vld [vmem:[%s280 + $0x28] sm:$0xf]
        %v8338 = vld [vmem:[%s280 + $0x2c] sm:$0x1]
        %v8339 = vld [vmem:[%s280 + $0x30] sm:$0xf]
        %v8340 = vld [vmem:[%s280 + $0x34] sm:$0xf]
        %v8341 = vld [vmem:[%s280 + $0x38] sm:$0x1]
        %v8342 = vld [vmem:[%s280 + $0x3c] sm:$0xf]
        %v8343 = vld [vmem:[%s280 + $0x40] sm:$0xf]
        %v8344 = vld [vmem:[%s280 + $0x44] sm:$0x1]
        %v8345 = vld [vmem:[%s280 + $0x48] sm:$0xf]
        %v8346 = vld [vmem:[%s280 + $0x4c] sm:$0xf]
        %v8347 = vld [vmem:[%s280 + $0x50] sm:$0x1]
        %v8348 = vld [vmem:[%s280 + $0x54] sm:$0xf]
        %v8349 = vld [vmem:[%s280 + $0x58] sm:$0xf]
        %v8350 = vld [vmem:[%s280 + $0x5c] sm:$0x1]
        %v8351 = vld [vmem:[%s280 + $0x60] sm:$0xf]
        %v8352 = vld [vmem:[%s280 + $0x64] sm:$0xf]
        %v8353 = vld [vmem:[%s280 + $0x68] sm:$0x1]
        %v8354 = vld [vmem:[%s280 + $0x6c] sm:$0xf]
        %v8355 = vld [vmem:[%s280 + $0x70] sm:$0xf]
        %v8356 = vld [vmem:[%s280 + $0x74] sm:$0x1]
        %v8357 = vld [vmem:[%s280 + $0x78] sm:$0xf]
        %v8358 = vld [vmem:[%s280 + $0x7c] sm:$0xf]
        %v8359 = vld [vmem:[%s280 + $0x80] sm:$0x1]
        %v8360 = vld [vmem:[%s280 + $0x84] sm:$0xf]
        %v8361 = vld [vmem:[%s280 + $0x88] sm:$0xf]
        %v8362 = vld [vmem:[%s280 + $0x8c] sm:$0x1]
        %v8363 = vld [vmem:[%s280 + $0x90] sm:$0xf]
        %v8364 = vld [vmem:[%s280 + $0x94] sm:$0xf]
        %v8365 = vld [vmem:[%s280 + $0x98] sm:$0x1]
        %v8366 = vld [vmem:[%s280 + $0x9c] sm:$0xf]
        %v8367 = vld [vmem:[%s280 + $0xa0] sm:$0xf]
        %v8368 = vld [vmem:[%s280 + $0xa4] sm:$0x1]
        %v8369 = vld [vmem:[%s280 + $0xa8] sm:$0xf]
        %v8370 = vld [vmem:[%s280 + $0xac] sm:$0xf]
        %v8371 = vld [vmem:[%s280 + $0xb0] sm:$0x1]
        %v8372 = vld [vmem:[%s280 + $0xb4] sm:$0xf]
        %v8373 = vld [vmem:[%s280 + $0xb8] sm:$0xf]
        %v8374 = vld [vmem:[%s280 + $0xbc] sm:$0x1]
        %v8376 = vshrl.u32 %v8327, 16
        %v8378 = vrot.slane %v8376, 4
        %v8379 = vshll.u32 %v8327, 16
        %v8381 = vrot.slane %v8379, 5
        %v8382 = vor.u32 %v8378, %v8381
        %v8383 = vrot.slane %v8382, 4
        %v8385 = vshll.u32 %v8328, 16
        %v8387 = vrot.slane %v8385, 5
        %v8388 = vsel %vm1012, %v8383, %v8387
        %v8389 = vshrl.u32 %v8328, 16
        %v8391 = vrot.slane %v8389, 4
        %v8392 = vor.u32 %v8391, %v8387
        %v8393 = vrot.slane %v8392, 4
        %v8395 = vshll.u32 %v8329, 16
        %v8397 = vrot.slane %v8395, 5
        %v8398 = vsel %vm1012, %v8393, %v8397
        %v8400 = vshrl.u32 %v8330, 16
        %v8402 = vrot.slane %v8400, 4
        %v8403 = vshll.u32 %v8330, 16
        %v8405 = vrot.slane %v8403, 5
        %v8406 = vor.u32 %v8402, %v8405
        %v8407 = vrot.slane %v8406, 4
        %v8409 = vshll.u32 %v8331, 16
        %v8411 = vrot.slane %v8409, 5
        %v8412 = vsel %vm1012, %v8407, %v8411
        %v8413 = vshrl.u32 %v8331, 16
        %v8415 = vrot.slane %v8413, 4
        %v8416 = vor.u32 %v8415, %v8411
        %v8417 = vrot.slane %v8416, 4
        %v8419 = vshll.u32 %v8332, 16
        %v8421 = vrot.slane %v8419, 5
        %v8422 = vsel %vm1012, %v8417, %v8421
        %v8424 = vshrl.u32 %v8333, 16
        %v8426 = vrot.slane %v8424, 4
        %v8427 = vshll.u32 %v8333, 16
        %v8429 = vrot.slane %v8427, 5
        %v8430 = vor.u32 %v8426, %v8429
        %v8431 = vrot.slane %v8430, 4
        %v8433 = vshll.u32 %v8334, 16
        %v8435 = vrot.slane %v8433, 5
        %v8436 = vsel %vm1012, %v8431, %v8435
        %v8437 = vshrl.u32 %v8334, 16
        %v8439 = vrot.slane %v8437, 4
        %v8440 = vor.u32 %v8439, %v8435
        %v8441 = vrot.slane %v8440, 4
        %v8443 = vshll.u32 %v8335, 16
        %v8445 = vrot.slane %v8443, 5
        %v8446 = vsel %vm1012, %v8441, %v8445
        %v8448 = vshrl.u32 %v8336, 16
        %v8450 = vrot.slane %v8448, 4
        %v8451 = vshll.u32 %v8336, 16
        %v8453 = vrot.slane %v8451, 5
        %v8454 = vor.u32 %v8450, %v8453
        %v8455 = vrot.slane %v8454, 4
        %v8457 = vshll.u32 %v8337, 16
        %v8459 = vrot.slane %v8457, 5
        %v8460 = vsel %vm1012, %v8455, %v8459
        %v8461 = vshrl.u32 %v8337, 16
        %v8463 = vrot.slane %v8461, 4
        %v8464 = vor.u32 %v8463, %v8459
        %v8465 = vrot.slane %v8464, 4
        %v8467 = vshll.u32 %v8338, 16
        %v8469 = vrot.slane %v8467, 5
        %v8470 = vsel %vm1012, %v8465, %v8469
        %v8472 = vshrl.u32 %v8339, 16
        %v8474 = vrot.slane %v8472, 4
        %v8475 = vshll.u32 %v8339, 16
        %v8477 = vrot.slane %v8475, 5
        %v8478 = vor.u32 %v8474, %v8477
        %v8479 = vrot.slane %v8478, 4
        %v8481 = vshll.u32 %v8340, 16
        %v8483 = vrot.slane %v8481, 5
        %v8484 = vsel %vm1012, %v8479, %v8483
        %v8485 = vshrl.u32 %v8340, 16
        %v8487 = vrot.slane %v8485, 4
        %v8488 = vor.u32 %v8487, %v8483
        %v8489 = vrot.slane %v8488, 4
        %v8491 = vshll.u32 %v8341, 16
        %v8493 = vrot.slane %v8491, 5
        %v8494 = vsel %vm1012, %v8489, %v8493
        %v8496 = vshrl.u32 %v8342, 16
        %v8498 = vrot.slane %v8496, 4
        %v8499 = vshll.u32 %v8342, 16
        %v8501 = vrot.slane %v8499, 5
        %v8502 = vor.u32 %v8498, %v8501
        %v8503 = vrot.slane %v8502, 4
        %v8505 = vshll.u32 %v8343, 16
        %v8507 = vrot.slane %v8505, 5
        %v8508 = vsel %vm1012, %v8503, %v8507
        %v8509 = vshrl.u32 %v8343, 16
        %v8511 = vrot.slane %v8509, 4
        %v8512 = vor.u32 %v8511, %v8507
        %v8513 = vrot.slane %v8512, 4
        %v8515 = vshll.u32 %v8344, 16
        %v8517 = vrot.slane %v8515, 5
        %v8518 = vsel %vm1012, %v8513, %v8517
        %v8520 = vshrl.u32 %v8345, 16
        %v8522 = vrot.slane %v8520, 4
        %v8523 = vshll.u32 %v8345, 16
        %v8525 = vrot.slane %v8523, 5
        %v8526 = vor.u32 %v8522, %v8525
        %v8527 = vrot.slane %v8526, 4
        %v8529 = vshll.u32 %v8346, 16
        %v8531 = vrot.slane %v8529, 5
        %v8532 = vsel %vm1012, %v8527, %v8531
        %v8533 = vshrl.u32 %v8346, 16
        %v8535 = vrot.slane %v8533, 4
        %v8536 = vor.u32 %v8535, %v8531
        %v8537 = vrot.slane %v8536, 4
        %v8539 = vshll.u32 %v8347, 16
        %v8541 = vrot.slane %v8539, 5
        %v8542 = vsel %vm1012, %v8537, %v8541
        %v8544 = vshrl.u32 %v8348, 16
        %v8546 = vrot.slane %v8544, 4
        %v8547 = vshll.u32 %v8348, 16
        %v8549 = vrot.slane %v8547, 5
        %v8550 = vor.u32 %v8546, %v8549
        %v8551 = vrot.slane %v8550, 4
        %v8553 = vshll.u32 %v8349, 16
        %v8555 = vrot.slane %v8553, 5
        %v8556 = vsel %vm1012, %v8551, %v8555
        %v8557 = vshrl.u32 %v8349, 16
        %v8559 = vrot.slane %v8557, 4
        %v8560 = vor.u32 %v8559, %v8555
        %v8561 = vrot.slane %v8560, 4
        %v8563 = vshll.u32 %v8350, 16
        %v8565 = vrot.slane %v8563, 5
        %v8566 = vsel %vm1012, %v8561, %v8565
        %v8568 = vshrl.u32 %v8351, 16
        %v8570 = vrot.slane %v8568, 4
        %v8571 = vshll.u32 %v8351, 16
        %v8573 = vrot.slane %v8571, 5
        %v8574 = vor.u32 %v8570, %v8573
        %v8575 = vrot.slane %v8574, 4
        %v8577 = vshll.u32 %v8352, 16
        %v8579 = vrot.slane %v8577, 5
        %v8580 = vsel %vm1012, %v8575, %v8579
        %v8581 = vshrl.u32 %v8352, 16
        %v8583 = vrot.slane %v8581, 4
        %v8584 = vor.u32 %v8583, %v8579
        %v8585 = vrot.slane %v8584, 4
        %v8587 = vshll.u32 %v8353, 16
        %v8589 = vrot.slane %v8587, 5
        %v8590 = vsel %vm1012, %v8585, %v8589
        %v8592 = vshrl.u32 %v8354, 16
        %v8594 = vrot.slane %v8592, 4
        %v8595 = vshll.u32 %v8354, 16
        %v8597 = vrot.slane %v8595, 5
        %v8598 = vor.u32 %v8594, %v8597
        %v8599 = vrot.slane %v8598, 4
        %v8601 = vshll.u32 %v8355, 16
        %v8603 = vrot.slane %v8601, 5
        %v8604 = vsel %vm1012, %v8599, %v8603
        %v8605 = vshrl.u32 %v8355, 16
        %v8607 = vrot.slane %v8605, 4
        %v8608 = vor.u32 %v8607, %v8603
        %v8609 = vrot.slane %v8608, 4
        %v8611 = vshll.u32 %v8356, 16
        %v8613 = vrot.slane %v8611, 5
        %v8614 = vsel %vm1012, %v8609, %v8613
        %v8616 = vshrl.u32 %v8357, 16
        %v8618 = vrot.slane %v8616, 4
        %v8619 = vshll.u32 %v8357, 16
        %v8621 = vrot.slane %v8619, 5
        %v8622 = vor.u32 %v8618, %v8621
        %v8623 = vrot.slane %v8622, 4
        %v8625 = vshll.u32 %v8358, 16
        %v8627 = vrot.slane %v8625, 5
        %v8628 = vsel %vm1012, %v8623, %v8627
        %v8629 = vshrl.u32 %v8358, 16
        %v8631 = vrot.slane %v8629, 4
        %v8632 = vor.u32 %v8631, %v8627
        %v8633 = vrot.slane %v8632, 4
        %v8635 = vshll.u32 %v8359, 16
        %v8637 = vrot.slane %v8635, 5
        %v8638 = vsel %vm1012, %v8633, %v8637
        %v8640 = vshrl.u32 %v8360, 16
        %v8642 = vrot.slane %v8640, 4
        %v8643 = vshll.u32 %v8360, 16
        %v8645 = vrot.slane %v8643, 5
        %v8646 = vor.u32 %v8642, %v8645
        %v8647 = vrot.slane %v8646, 4
        %v8649 = vshll.u32 %v8361, 16
        %v8651 = vrot.slane %v8649, 5
        %v8652 = vsel %vm1012, %v8647, %v8651
        %v8653 = vshrl.u32 %v8361, 16
        %v8655 = vrot.slane %v8653, 4
        %v8656 = vor.u32 %v8655, %v8651
        %v8657 = vrot.slane %v8656, 4
        %v8659 = vshll.u32 %v8362, 16
        %v8661 = vrot.slane %v8659, 5
        %v8662 = vsel %vm1012, %v8657, %v8661
        %v8664 = vshrl.u32 %v8363, 16
        %v8666 = vrot.slane %v8664, 4
        %v8667 = vshll.u32 %v8363, 16
        %v8669 = vrot.slane %v8667, 5
        %v8670 = vor.u32 %v8666, %v8669
        %v8671 = vrot.slane %v8670, 4
        %v8673 = vshll.u32 %v8364, 16
        %v8675 = vrot.slane %v8673, 5
        %v8676 = vsel %vm1012, %v8671, %v8675
        %v8677 = vshrl.u32 %v8364, 16
        %v8679 = vrot.slane %v8677, 4
        %v8680 = vor.u32 %v8679, %v8675
        %v8681 = vrot.slane %v8680, 4
        %v8683 = vshll.u32 %v8365, 16
        %v8685 = vrot.slane %v8683, 5
        %v8686 = vsel %vm1012, %v8681, %v8685
        %v8688 = vshrl.u32 %v8366, 16
        %v8690 = vrot.slane %v8688, 4
        %v8691 = vshll.u32 %v8366, 16
        %v8693 = vrot.slane %v8691, 5
        %v8694 = vor.u32 %v8690, %v8693
        %v8695 = vrot.slane %v8694, 4
        %v8697 = vshll.u32 %v8367, 16
        %v8699 = vrot.slane %v8697, 5
        %v8700 = vsel %vm1012, %v8695, %v8699
        %v8701 = vshrl.u32 %v8367, 16
        %v8703 = vrot.slane %v8701, 4
        %v8704 = vor.u32 %v8703, %v8699
        %v8705 = vrot.slane %v8704, 4
        %v8707 = vshll.u32 %v8368, 16
        %v8709 = vrot.slane %v8707, 5
        %v8710 = vsel %vm1012, %v8705, %v8709
        %v8712 = vshrl.u32 %v8369, 16
        %v8714 = vrot.slane %v8712, 4
        %v8715 = vshll.u32 %v8369, 16
        %v8717 = vrot.slane %v8715, 5
        %v8718 = vor.u32 %v8714, %v8717
        %v8719 = vrot.slane %v8718, 4
        %v8721 = vshll.u32 %v8370, 16
        %v8723 = vrot.slane %v8721, 5
        %v8724 = vsel %vm1012, %v8719, %v8723
        %v8725 = vshrl.u32 %v8370, 16
        %v8727 = vrot.slane %v8725, 4
        %v8728 = vor.u32 %v8727, %v8723
        %v8729 = vrot.slane %v8728, 4
        %v8731 = vshll.u32 %v8371, 16
        %v8733 = vrot.slane %v8731, 5
        %v8734 = vsel %vm1012, %v8729, %v8733
        %v8736 = vshrl.u32 %v8372, 16
        %v8738 = vrot.slane %v8736, 4
        %v8739 = vshll.u32 %v8372, 16
        %v8741 = vrot.slane %v8739, 5
        %v8742 = vor.u32 %v8738, %v8741
        %v8743 = vrot.slane %v8742, 4
        %v8745 = vshll.u32 %v8373, 16
        %v8747 = vrot.slane %v8745, 5
        %v8748 = vsel %vm1012, %v8743, %v8747
        %v8749 = vshrl.u32 %v8373, 16
        %v8751 = vrot.slane %v8749, 4
        %v8752 = vor.u32 %v8751, %v8747
        %v8753 = vrot.slane %v8752, 4
        %v8755 = vshll.u32 %v8374, 16
        %v8757 = vrot.slane %v8755, 5
        %v8758 = vsel %vm1012, %v8753, %v8757
        %s8759 = scalar_lea.vmem [#allocation8], 256
        %v8760 = vld [vmem:[%s8759] sm:$0xf]
        %v8761 = vld [vmem:[%s8759 + $0x4] sm:$0xf]
        %v8762 = vld [vmem:[%s8759 + $0x8] sm:$0xf]
        %v8763 = vld [vmem:[%s8759 + $0xc] sm:$0xf]
        %v8764 = vld [vmem:[%s8759 + $0x10] sm:$0xf]
        %v8765 = vld [vmem:[%s8759 + $0x14] sm:$0xf]
        %v8766 = vld [vmem:[%s8759 + $0x18] sm:$0xf]
        %v8767 = vld [vmem:[%s8759 + $0x1c] sm:$0xf]
        %v8768 = vld [vmem:[%s8759 + $0x20] sm:$0xf]
        %v8769 = vld [vmem:[%s8759 + $0x24] sm:$0xf]
        %v8770 = vld [vmem:[%s8759 + $0x28] sm:$0xf]
        %v8771 = vld [vmem:[%s8759 + $0x2c] sm:$0xf]
        %v8772 = vld [vmem:[%s8759 + $0x30] sm:$0xf]
        %v8773 = vld [vmem:[%s8759 + $0x34] sm:$0xf]
        %v8774 = vld [vmem:[%s8759 + $0x38] sm:$0xf]
        %v8775 = vld [vmem:[%s8759 + $0x3c] sm:$0xf]
        %v8776 = vunpack.c.l.b16 %v8388
        %v8777 = vunpack.c.l.b16 %v8398
        %v8778 = vunpack.c.l.b16 %v8412
        %v8779 = vunpack.c.l.b16 %v8422
        %v8780 = vunpack.c.l.b16 %v8436
        %v8781 = vunpack.c.l.b16 %v8446
        %v8782 = vunpack.c.l.b16 %v8460
        %v8783 = vunpack.c.l.b16 %v8470
        %v8784 = vunpack.c.l.b16 %v8484
        %v8785 = vunpack.c.l.b16 %v8494
        %v8786 = vunpack.c.l.b16 %v8508
        %v8787 = vunpack.c.l.b16 %v8518
        %v8788 = vunpack.c.l.b16 %v8532
        %v8789 = vunpack.c.l.b16 %v8542
        %v8790 = vunpack.c.l.b16 %v8556
        %v8791 = vunpack.c.l.b16 %v8566
        %v8792 = vunpack.c.l.b16 %v8580
        %v8793 = vunpack.c.l.b16 %v8590
        %v8794 = vunpack.c.l.b16 %v8604
        %v8795 = vunpack.c.l.b16 %v8614
        %v8796 = vunpack.c.l.b16 %v8628
        %v8797 = vunpack.c.l.b16 %v8638
        %v8798 = vunpack.c.l.b16 %v8652
        %v8799 = vunpack.c.l.b16 %v8662
        %v8800 = vunpack.c.l.b16 %v8676
        %v8801 = vunpack.c.l.b16 %v8686
        %v8802 = vunpack.c.l.b16 %v8700
        %v8803 = vunpack.c.l.b16 %v8710
        %v8804 = vunpack.c.l.b16 %v8724
        %v8805 = vunpack.c.l.b16 %v8734
        %v8806 = vunpack.c.l.b16 %v8748
        %v8807 = vunpack.c.l.b16 %v8758
        %v8808 = vpack.c.b16 %v8777, %v8776
        %v8809 = vpack.c.b16 %v8779, %v8778
        %v8810 = vpack.c.b16 %v8781, %v8780
        %v8811 = vpack.c.b16 %v8783, %v8782
        %v8812 = vpack.c.b16 %v8785, %v8784
        %v8813 = vpack.c.b16 %v8787, %v8786
        %v8814 = vpack.c.b16 %v8789, %v8788
        %v8815 = vpack.c.b16 %v8791, %v8790
        %v8816 = vpack.c.b16 %v8793, %v8792
        %v8817 = vpack.c.b16 %v8795, %v8794
        %v8818 = vpack.c.b16 %v8797, %v8796
        %v8819 = vpack.c.b16 %v8799, %v8798
        %v8820 = vpack.c.b16 %v8801, %v8800
        %v8821 = vpack.c.b16 %v8803, %v8802
        %v8822 = vpack.c.b16 %v8805, %v8804
        %v8823 = vpack.c.b16 %v8807, %v8806
        %v8856 = vunpack.c.l.b16 %v8760
        %v8857 = vunpack.c.l.b16 %v8761
        %v8858 = vunpack.c.l.b16 %v8762
        %v8859 = vunpack.c.l.b16 %v8763
        %v8860 = vunpack.c.l.b16 %v8764
        %v8861 = vunpack.c.l.b16 %v8765
        %v8862 = vunpack.c.l.b16 %v8766
        %v8863 = vunpack.c.l.b16 %v8767
        %v8864 = vunpack.c.l.b16 %v8768
        %v8865 = vunpack.c.l.b16 %v8769
        %v8866 = vunpack.c.l.b16 %v8770
        %v8867 = vunpack.c.l.b16 %v8771
        %v8868 = vunpack.c.l.b16 %v8772
        %v8869 = vunpack.c.l.b16 %v8773
        %v8870 = vunpack.c.l.b16 %v8774
        %v8871 = vunpack.c.l.b16 %v8775
        %v8872 = vpack.c.b16 %v8857, %v8856
        %v8873 = vpack.c.b16 %v8859, %v8858
        %v8874 = vpack.c.b16 %v8861, %v8860
        %v8875 = vpack.c.b16 %v8863, %v8862
        %v8876 = vpack.c.b16 %v8865, %v8864
        %v8877 = vpack.c.b16 %v8867, %v8866
        %v8878 = vpack.c.b16 %v8869, %v8868
        %v8879 = vpack.c.b16 %v8871, %v8870
        %8888 = vmatprep.subr.bf16.mxu0 0
        %8889 = vmatpush1.bf16.msra.mxu0 %v8879
        %8890 = vmatprep.subr.bf16.mxu0 0
        %8891 = vmatpush1.bf16.msra.mxu0 %v8878
        %8892 = vmatprep.subr.bf16.mxu0 0
        %8893 = vmatpush1.bf16.msra.mxu0 %v8877
        %8894 = vmatprep.subr.bf16.mxu0 0
        %8895 = vmatpush1.bf16.msra.mxu0 %v8876
        %8896 = vmatprep.subr.bf16.mxu0 0
        %8897 = vmatpush1.bf16.msra.mxu0 %v8875
        %8898 = vmatprep.subr.bf16.mxu0 0
        %8899 = vmatpush1.bf16.msra.mxu0 %v8874
        %8900 = vmatprep.subr.bf16.mxu0 0
        %8901 = vmatpush1.bf16.msra.mxu0 %v8873
        %8902 = vmatprep.subr.bf16.mxu0 0
        %8903 = vmatpush1.bf16.msra.mxu0 %v8872
        %8904 = vmatprep.subr.bf16.mxu0 0
        %8905 = vmatpush2.bf16.msra.mxu0 0
        %8906 = vmatprep.subr.bf16.mxu0 0
        %8907 = vmatpush2.bf16.msra.mxu0 0
        %8908 = vmatprep.subr.bf16.mxu0 0
        %8909 = vmatpush2.bf16.msra.mxu0 0
        %8910 = vmatprep.subr.bf16.mxu0 0
        %8911 = vmatpush2.bf16.msra.mxu0 0
        %8912 = vmatprep.subr.bf16.mxu0 0
        %8913 = vmatpush2.bf16.msra.mxu0 0
        %8914 = vmatprep.subr.bf16.mxu0 0
        %8915 = vmatpush2.bf16.msra.mxu0 0
        %8916 = vmatprep.subr.bf16.mxu0 0
        %8917 = vmatpush2.bf16.msra.mxu0 0
        %8918 = vmatprep.subr.bf16.mxu0 0
        %8919 = vmatpush2.bf16.msra.mxu0 0
        %8920 = vmatprep.mubr.bf16.mxu0 0
        %8921 = vmatmul.mubr.bf16.gmra.mxu0 %v8808
        %v8922 = vpop.f32.mrf.mxu0
        %v8923 = vadd.f32 0.0, %v8922
        %v8924 = vpop.f32.mrf.mxu0
        %v8925 = vpop.f32.mrf.mxu0
        %v8926 = vadd.f32 0.0, %v8925
        %v8927 = vpop.f32.mrf.mxu0
        %8928 = vmatprep.mubr.bf16.mxu0 0
        %8929 = vmatmul.mubr.bf16.gmra.mxu0 %v8809
        %v8930 = vpop.f32.mrf.mxu0
        %v8931 = vadd.f32 0.0, %v8930
        %v8932 = vpop.f32.mrf.mxu0
        %v8933 = vpop.f32.mrf.mxu0
        %v8934 = vadd.f32 0.0, %v8933
        %v8935 = vpop.f32.mrf.mxu0
        %8936 = vmatprep.mubr.bf16.mxu0 0
        %8937 = vmatmul.mubr.bf16.gmra.mxu0 %v8810
        %v8938 = vpop.f32.mrf.mxu0
        %v8939 = vadd.f32 0.0, %v8938
        %v8940 = vpop.f32.mrf.mxu0
        %v8941 = vpop.f32.mrf.mxu0
        %v8942 = vadd.f32 0.0, %v8941
        %v8943 = vpop.f32.mrf.mxu0
        %8944 = vmatprep.mubr.bf16.mxu0 0
        %8945 = vmatmul.mubr.bf16.gmra.mxu0 %v8811
        %v8946 = vpop.f32.mrf.mxu0
        %v8947 = vadd.f32 0.0, %v8946
        %v8948 = vpop.f32.mrf.mxu0
        %v8949 = vpop.f32.mrf.mxu0
        %v8950 = vadd.f32 0.0, %v8949
        %v8951 = vpop.f32.mrf.mxu0
        %8952 = vmatprep.mubr.bf16.mxu0 0
        %8953 = vmatmul.mubr.bf16.gmra.mxu0 %v8812
        %v8954 = vpop.f32.mrf.mxu0
        %v8955 = vadd.f32 0.0, %v8954
        %v8956 = vpop.f32.mrf.mxu0
        %v8957 = vpop.f32.mrf.mxu0
        %v8958 = vadd.f32 0.0, %v8957
        %v8959 = vpop.f32.mrf.mxu0
        %8960 = vmatprep.mubr.bf16.mxu0 0
        %8961 = vmatmul.mubr.bf16.gmra.mxu0 %v8813
        %v8962 = vpop.f32.mrf.mxu0
        %v8963 = vadd.f32 0.0, %v8962
        %v8964 = vpop.f32.mrf.mxu0
        %v8965 = vpop.f32.mrf.mxu0
        %v8966 = vadd.f32 0.0, %v8965
        %v8967 = vpop.f32.mrf.mxu0
        %8968 = vmatprep.mubr.bf16.mxu0 0
        %8969 = vmatmul.mubr.bf16.gmra.mxu0 %v8814
        %v8970 = vpop.f32.mrf.mxu0
        %v8971 = vadd.f32 0.0, %v8970
        %v8972 = vpop.f32.mrf.mxu0
        %v8973 = vpop.f32.mrf.mxu0
        %v8974 = vadd.f32 0.0, %v8973
        %v8975 = vpop.f32.mrf.mxu0
        %8976 = vmatprep.mubr.bf16.mxu0 0
        %8977 = vmatmul.mubr.bf16.gmra.mxu0 %v8815
        %v8978 = vpop.f32.mrf.mxu0
        %v8979 = vadd.f32 0.0, %v8978
        %v8980 = vpop.f32.mrf.mxu0
        %v8981 = vpop.f32.mrf.mxu0
        %v8982 = vadd.f32 0.0, %v8981
        %v8983 = vpop.f32.mrf.mxu0
        %8984 = vmatprep.mubr.bf16.mxu0 0
        %8985 = vmatmul.mubr.bf16.gmra.mxu0 %v8816
        %v8986 = vpop.f32.mrf.mxu0
        %v8987 = vadd.f32 0.0, %v8986
        %v8988 = vpop.f32.mrf.mxu0
        %v8989 = vpop.f32.mrf.mxu0
        %v8990 = vadd.f32 0.0, %v8989
        %v8991 = vpop.f32.mrf.mxu0
        %8992 = vmatprep.mubr.bf16.mxu0 0
        %8993 = vmatmul.mubr.bf16.gmra.mxu0 %v8817
        %v8994 = vpop.f32.mrf.mxu0
        %v8995 = vadd.f32 0.0, %v8994
        %v8996 = vpop.f32.mrf.mxu0
        %v8997 = vpop.f32.mrf.mxu0
        %v8998 = vadd.f32 0.0, %v8997
        %v8999 = vpop.f32.mrf.mxu0
        %9000 = vmatprep.mubr.bf16.mxu0 0
        %9001 = vmatmul.mubr.bf16.gmra.mxu0 %v8818
        %v9002 = vpop.f32.mrf.mxu0
        %v9003 = vadd.f32 0.0, %v9002
        %v9004 = vpop.f32.mrf.mxu0
        %v9005 = vpop.f32.mrf.mxu0
        %v9006 = vadd.f32 0.0, %v9005
        %v9007 = vpop.f32.mrf.mxu0
        %9008 = vmatprep.mubr.bf16.mxu0 0
        %9009 = vmatmul.mubr.bf16.gmra.mxu0 %v8819
        %v9010 = vpop.f32.mrf.mxu0
        %v9011 = vadd.f32 0.0, %v9010
        %v9012 = vpop.f32.mrf.mxu0
        %v9013 = vpop.f32.mrf.mxu0
        %v9014 = vadd.f32 0.0, %v9013
        %v9015 = vpop.f32.mrf.mxu0
        %9016 = vmatprep.mubr.bf16.mxu0 0
        %9017 = vmatmul.mubr.bf16.gmra.mxu0 %v8820
        %v9018 = vpop.f32.mrf.mxu0
        %v9019 = vadd.f32 0.0, %v9018
        %v9020 = vpop.f32.mrf.mxu0
        %v9021 = vpop.f32.mrf.mxu0
        %v9022 = vadd.f32 0.0, %v9021
        %v9023 = vpop.f32.mrf.mxu0
        %9024 = vmatprep.mubr.bf16.mxu0 0
        %9025 = vmatmul.mubr.bf16.gmra.mxu0 %v8821
        %v9026 = vpop.f32.mrf.mxu0
        %v9027 = vadd.f32 0.0, %v9026
        %v9028 = vpop.f32.mrf.mxu0
        %v9029 = vpop.f32.mrf.mxu0
        %v9030 = vadd.f32 0.0, %v9029
        %v9031 = vpop.f32.mrf.mxu0
        %9032 = vmatprep.mubr.bf16.mxu0 0
        %9033 = vmatmul.mubr.bf16.gmra.mxu0 %v8822
        %v9034 = vpop.f32.mrf.mxu0
        %v9035 = vadd.f32 0.0, %v9034
        %v9036 = vpop.f32.mrf.mxu0
        %v9037 = vpop.f32.mrf.mxu0
        %v9038 = vadd.f32 0.0, %v9037
        %v9039 = vpop.f32.mrf.mxu0
        %9040 = vmatprep.mubr.bf16.mxu0 0
        %9041 = vmatmul.mubr.bf16.gmra.mxu0 %v8823
        %v9042 = vpop.f32.mrf.mxu0
        %v9043 = vadd.f32 0.0, %v9042
        %v9044 = vpop.f32.mrf.mxu0
        %v9045 = vpop.f32.mrf.mxu0
        %v9046 = vadd.f32 0.0, %v9045
        %v9047 = vpop.f32.mrf.mxu0
        %9048 = vdwg.mxu0
        %v9049 = vadd.f32 %v8295, %v8923
        %v9050 = vadd.f32 %v8296, %v8926
        %v9051 = vadd.f32 %v8297, %v8931
        %v9052 = vadd.f32 %v8298, %v8934
        %v9053 = vadd.f32 %v8299, %v8939
        %v9054 = vadd.f32 %v8300, %v8942
        %v9055 = vadd.f32 %v8301, %v8947
        %v9056 = vadd.f32 %v8302, %v8950
        %v9057 = vadd.f32 %v8303, %v8955
        %v9058 = vadd.f32 %v8304, %v8958
        %v9059 = vadd.f32 %v8305, %v8963
        %v9060 = vadd.f32 %v8306, %v8966
        %v9061 = vadd.f32 %v8307, %v8971
        %v9062 = vadd.f32 %v8308, %v8974
        %v9063 = vadd.f32 %v8309, %v8979
        %v9064 = vadd.f32 %v8310, %v8982
        %v9065 = vadd.f32 %v8311, %v8987
        %v9066 = vadd.f32 %v8312, %v8990
        %v9067 = vadd.f32 %v8313, %v8995
        %v9068 = vadd.f32 %v8314, %v8998
        %v9069 = vadd.f32 %v8315, %v9003
        %v9070 = vadd.f32 %v8316, %v9006
        %v9071 = vadd.f32 %v8317, %v9011
        %v9072 = vadd.f32 %v8318, %v9014
        %v9073 = vadd.f32 %v8319, %v9019
        %v9074 = vadd.f32 %v8320, %v9022
        %v9075 = vadd.f32 %v8321, %v9027
        %v9076 = vadd.f32 %v8322, %v9030
        %v9077 = vadd.f32 %v8323, %v9035
        %v9078 = vadd.f32 %v8324, %v9038
        %v9079 = vadd.f32 %v8325, %v9043
        %v9080 = vadd.f32 %v8326, %v9046
        %v9081 = vld [vmem:[%s280] sm:$0xe]
        %v9082 = vld [vmem:[%s280 + $0xc] sm:$0xe]
        %v9083 = vld [vmem:[%s280 + $0x18] sm:$0xe]
        %v9084 = vld [vmem:[%s280 + $0x24] sm:$0xe]
        %v9085 = vld [vmem:[%s280 + $0x30] sm:$0xe]
        %v9086 = vld [vmem:[%s280 + $0x3c] sm:$0xe]
        %v9087 = vld [vmem:[%s280 + $0x48] sm:$0xe]
        %v9088 = vld [vmem:[%s280 + $0x54] sm:$0xe]
        %v9089 = vld [vmem:[%s280 + $0x60] sm:$0xe]
        %v9090 = vld [vmem:[%s280 + $0x6c] sm:$0xe]
        %v9091 = vld [vmem:[%s280 + $0x78] sm:$0xe]
        %v9092 = vld [vmem:[%s280 + $0x84] sm:$0xe]
        %v9093 = vld [vmem:[%s280 + $0x90] sm:$0xe]
        %v9094 = vld [vmem:[%s280 + $0x9c] sm:$0xe]
        %v9095 = vld [vmem:[%s280 + $0xa8] sm:$0xe]
        %v9096 = vld [vmem:[%s280 + $0xb4] sm:$0xe]
        %v9145 = vrot.slane %v9081, 5
        %v9146 = vrot.slane %v9145, 4
        %v9147 = vrot.slane %v8328, 5
        %v9148 = vsel %vm2042, %v9146, %v9147
        %v9149 = vrot.slane %v9147, 4
        %v9150 = vrot.slane %v8329, 5
        %v9151 = vsel %vm2042, %v9149, %v9150
        %v9152 = vrot.slane %v9082, 5
        %v9153 = vrot.slane %v9152, 4
        %v9154 = vrot.slane %v8331, 5
        %v9155 = vsel %vm2042, %v9153, %v9154
        %v9156 = vrot.slane %v9154, 4
        %v9157 = vrot.slane %v8332, 5
        %v9158 = vsel %vm2042, %v9156, %v9157
        %v9159 = vrot.slane %v9083, 5
        %v9160 = vrot.slane %v9159, 4
        %v9161 = vrot.slane %v8334, 5
        %v9162 = vsel %vm2042, %v9160, %v9161
        %v9163 = vrot.slane %v9161, 4
        %v9164 = vrot.slane %v8335, 5
        %v9165 = vsel %vm2042, %v9163, %v9164
        %v9166 = vrot.slane %v9084, 5
        %v9167 = vrot.slane %v9166, 4
        %v9168 = vrot.slane %v8337, 5
        %v9169 = vsel %vm2042, %v9167, %v9168
        %v9170 = vrot.slane %v9168, 4
        %v9171 = vrot.slane %v8338, 5
        %v9172 = vsel %vm2042, %v9170, %v9171
        %v9173 = vrot.slane %v9085, 5
        %v9174 = vrot.slane %v9173, 4
        %v9175 = vrot.slane %v8340, 5
        %v9176 = vsel %vm2042, %v9174, %v9175
        %v9177 = vrot.slane %v9175, 4
        %v9178 = vrot.slane %v8341, 5
        %v9179 = vsel %vm2042, %v9177, %v9178
        %v9180 = vrot.slane %v9086, 5
        %v9181 = vrot.slane %v9180, 4
        %v9182 = vrot.slane %v8343, 5
        %v9183 = vsel %vm2042, %v9181, %v9182
        %v9184 = vrot.slane %v9182, 4
        %v9185 = vrot.slane %v8344, 5
        %v9186 = vsel %vm2042, %v9184, %v9185
        %v9187 = vrot.slane %v9087, 5
        %v9188 = vrot.slane %v9187, 4
        %v9189 = vrot.slane %v8346, 5
        %v9190 = vsel %vm2042, %v9188, %v9189
        %v9191 = vrot.slane %v9189, 4
        %v9192 = vrot.slane %v8347, 5
        %v9193 = vsel %vm2042, %v9191, %v9192
        %v9194 = vrot.slane %v9088, 5
        %v9195 = vrot.slane %v9194, 4
        %v9196 = vrot.slane %v8349, 5
        %v9197 = vsel %vm2042, %v9195, %v9196
        %v9198 = vrot.slane %v9196, 4
        %v9199 = vrot.slane %v8350, 5
        %v9200 = vsel %vm2042, %v9198, %v9199
        %v9201 = vrot.slane %v9089, 5
        %v9202 = vrot.slane %v9201, 4
        %v9203 = vrot.slane %v8352, 5
        %v9204 = vsel %vm2042, %v9202, %v9203
        %v9205 = vrot.slane %v9203, 4
        %v9206 = vrot.slane %v8353, 5
        %v9207 = vsel %vm2042, %v9205, %v9206
        %v9208 = vrot.slane %v9090, 5
        %v9209 = vrot.slane %v9208, 4
        %v9210 = vrot.slane %v8355, 5
        %v9211 = vsel %vm2042, %v9209, %v9210
        %v9212 = vrot.slane %v9210, 4
        %v9213 = vrot.slane %v8356, 5
        %v9214 = vsel %vm2042, %v9212, %v9213
        %v9215 = vrot.slane %v9091, 5
        %v9216 = vrot.slane %v9215, 4
        %v9217 = vrot.slane %v8358, 5
        %v9218 = vsel %vm2042, %v9216, %v9217
        %v9219 = vrot.slane %v9217, 4
        %v9220 = vrot.slane %v8359, 5
        %v9221 = vsel %vm2042, %v9219, %v9220
        %v9222 = vrot.slane %v9092, 5
        %v9223 = vrot.slane %v9222, 4
        %v9224 = vrot.slane %v8361, 5
        %v9225 = vsel %vm2042, %v9223, %v9224
        %v9226 = vrot.slane %v9224, 4
        %v9227 = vrot.slane %v8362, 5
        %v9228 = vsel %vm2042, %v9226, %v9227
        %v9229 = vrot.slane %v9093, 5
        %v9230 = vrot.slane %v9229, 4
        %v9231 = vrot.slane %v8364, 5
        %v9232 = vsel %vm2042, %v9230, %v9231
        %v9233 = vrot.slane %v9231, 4
        %v9234 = vrot.slane %v8365, 5
        %v9235 = vsel %vm2042, %v9233, %v9234
        %v9236 = vrot.slane %v9094, 5
        %v9237 = vrot.slane %v9236, 4
        %v9238 = vrot.slane %v8367, 5
        %v9239 = vsel %vm2042, %v9237, %v9238
        %v9240 = vrot.slane %v9238, 4
        %v9241 = vrot.slane %v8368, 5
        %v9242 = vsel %vm2042, %v9240, %v9241
        %v9243 = vrot.slane %v9095, 5
        %v9244 = vrot.slane %v9243, 4
        %v9245 = vrot.slane %v8370, 5
        %v9246 = vsel %vm2042, %v9244, %v9245
        %v9247 = vrot.slane %v9245, 4
        %v9248 = vrot.slane %v8371, 5
        %v9249 = vsel %vm2042, %v9247, %v9248
        %v9250 = vrot.slane %v9096, 5
        %v9251 = vrot.slane %v9250, 4
        %v9252 = vrot.slane %v8373, 5
        %v9253 = vsel %vm2042, %v9251, %v9252
        %v9254 = vrot.slane %v9252, 4
        %v9255 = vrot.slane %v8374, 5
        %v9256 = vsel %vm2042, %v9254, %v9255
        %s9257 = scalar_lea.vmem [#allocation8], 320
        %v9258 = vld [vmem:[%s9257] sm:$0xf]
        %v9259 = vld [vmem:[%s9257 + $0x4] sm:$0xf]
        %v9260 = vld [vmem:[%s9257 + $0x8] sm:$0xf]
        %v9261 = vld [vmem:[%s9257 + $0xc] sm:$0xf]
        %v9262 = vld [vmem:[%s9257 + $0x10] sm:$0xf]
        %v9263 = vld [vmem:[%s9257 + $0x14] sm:$0xf]
        %v9264 = vld [vmem:[%s9257 + $0x18] sm:$0xf]
        %v9265 = vld [vmem:[%s9257 + $0x1c] sm:$0xf]
        %v9266 = vld [vmem:[%s9257 + $0x20] sm:$0xf]
        %v9267 = vld [vmem:[%s9257 + $0x24] sm:$0xf]
        %v9268 = vld [vmem:[%s9257 + $0x28] sm:$0xf]
        %v9269 = vld [vmem:[%s9257 + $0x2c] sm:$0xf]
        %v9270 = vld [vmem:[%s9257 + $0x30] sm:$0xf]
        %v9271 = vld [vmem:[%s9257 + $0x34] sm:$0xf]
        %v9272 = vld [vmem:[%s9257 + $0x38] sm:$0xf]
        %v9273 = vld [vmem:[%s9257 + $0x3c] sm:$0xf]
        %v9274 = vunpack.c.l.b16 %v9148
        %v9275 = vunpack.c.l.b16 %v9151
        %v9276 = vunpack.c.l.b16 %v9155
        %v9277 = vunpack.c.l.b16 %v9158
        %v9278 = vunpack.c.l.b16 %v9162
        %v9279 = vunpack.c.l.b16 %v9165
        %v9280 = vunpack.c.l.b16 %v9169
        %v9281 = vunpack.c.l.b16 %v9172
        %v9282 = vunpack.c.l.b16 %v9176
        %v9283 = vunpack.c.l.b16 %v9179
        %v9284 = vunpack.c.l.b16 %v9183
        %v9285 = vunpack.c.l.b16 %v9186
        %v9286 = vunpack.c.l.b16 %v9190
        %v9287 = vunpack.c.l.b16 %v9193
        %v9288 = vunpack.c.l.b16 %v9197
        %v9289 = vunpack.c.l.b16 %v9200
        %v9290 = vunpack.c.l.b16 %v9204
        %v9291 = vunpack.c.l.b16 %v9207
        %v9292 = vunpack.c.l.b16 %v9211
        %v9293 = vunpack.c.l.b16 %v9214
        %v9294 = vunpack.c.l.b16 %v9218
        %v9295 = vunpack.c.l.b16 %v9221
        %v9296 = vunpack.c.l.b16 %v9225
        %v9297 = vunpack.c.l.b16 %v9228
        %v9298 = vunpack.c.l.b16 %v9232
        %v9299 = vunpack.c.l.b16 %v9235
        %v9300 = vunpack.c.l.b16 %v9239
        %v9301 = vunpack.c.l.b16 %v9242
        %v9302 = vunpack.c.l.b16 %v9246
        %v9303 = vunpack.c.l.b16 %v9249
        %v9304 = vunpack.c.l.b16 %v9253
        %v9305 = vunpack.c.l.b16 %v9256
        %v9306 = vpack.c.b16 %v9275, %v9274
        %v9307 = vpack.c.b16 %v9277, %v9276
        %v9308 = vpack.c.b16 %v9279, %v9278
        %v9309 = vpack.c.b16 %v9281, %v9280
        %v9310 = vpack.c.b16 %v9283, %v9282
        %v9311 = vpack.c.b16 %v9285, %v9284
        %v9312 = vpack.c.b16 %v9287, %v9286
        %v9313 = vpack.c.b16 %v9289, %v9288
        %v9314 = vpack.c.b16 %v9291, %v9290
        %v9315 = vpack.c.b16 %v9293, %v9292
        %v9316 = vpack.c.b16 %v9295, %v9294
        %v9317 = vpack.c.b16 %v9297, %v9296
        %v9318 = vpack.c.b16 %v9299, %v9298
        %v9319 = vpack.c.b16 %v9301, %v9300
        %v9320 = vpack.c.b16 %v9303, %v9302
        %v9321 = vpack.c.b16 %v9305, %v9304
        %v9354 = vunpack.c.l.b16 %v9258
        %v9355 = vunpack.c.l.b16 %v9259
        %v9356 = vunpack.c.l.b16 %v9260
        %v9357 = vunpack.c.l.b16 %v9261
        %v9358 = vunpack.c.l.b16 %v9262
        %v9359 = vunpack.c.l.b16 %v9263
        %v9360 = vunpack.c.l.b16 %v9264
        %v9361 = vunpack.c.l.b16 %v9265
        %v9362 = vunpack.c.l.b16 %v9266
        %v9363 = vunpack.c.l.b16 %v9267
        %v9364 = vunpack.c.l.b16 %v9268
        %v9365 = vunpack.c.l.b16 %v9269
        %v9366 = vunpack.c.l.b16 %v9270
        %v9367 = vunpack.c.l.b16 %v9271
        %v9368 = vunpack.c.l.b16 %v9272
        %v9369 = vunpack.c.l.b16 %v9273
        %v9370 = vpack.c.b16 %v9355, %v9354
        %v9371 = vpack.c.b16 %v9357, %v9356
        %v9372 = vpack.c.b16 %v9359, %v9358
        %v9373 = vpack.c.b16 %v9361, %v9360
        %v9374 = vpack.c.b16 %v9363, %v9362
        %v9375 = vpack.c.b16 %v9365, %v9364
        %v9376 = vpack.c.b16 %v9367, %v9366
        %v9377 = vpack.c.b16 %v9369, %v9368
        %9386 = vmatprep.subr.bf16.mxu0 0
        %9387 = vmatpush1.bf16.msra.mxu0 %v9377
        %9388 = vmatprep.subr.bf16.mxu0 0
        %9389 = vmatpush1.bf16.msra.mxu0 %v9376
        %9390 = vmatprep.subr.bf16.mxu0 0
        %9391 = vmatpush1.bf16.msra.mxu0 %v9375
        %9392 = vmatprep.subr.bf16.mxu0 0
        %9393 = vmatpush1.bf16.msra.mxu0 %v9374
        %9394 = vmatprep.subr.bf16.mxu0 0
        %9395 = vmatpush1.bf16.msra.mxu0 %v9373
        %9396 = vmatprep.subr.bf16.mxu0 0
        %9397 = vmatpush1.bf16.msra.mxu0 %v9372
        %9398 = vmatprep.subr.bf16.mxu0 0
        %9399 = vmatpush1.bf16.msra.mxu0 %v9371
        %9400 = vmatprep.subr.bf16.mxu0 0
        %9401 = vmatpush1.bf16.msra.mxu0 %v9370
        %9402 = vmatprep.subr.bf16.mxu0 0
        %9403 = vmatpush2.bf16.msra.mxu0 0
        %9404 = vmatprep.subr.bf16.mxu0 0
        %9405 = vmatpush2.bf16.msra.mxu0 0
        %9406 = vmatprep.subr.bf16.mxu0 0
        %9407 = vmatpush2.bf16.msra.mxu0 0
        %9408 = vmatprep.subr.bf16.mxu0 0
        %9409 = vmatpush2.bf16.msra.mxu0 0
        %9410 = vmatprep.subr.bf16.mxu0 0
        %9411 = vmatpush2.bf16.msra.mxu0 0
        %9412 = vmatprep.subr.bf16.mxu0 0
        %9413 = vmatpush2.bf16.msra.mxu0 0
        %9414 = vmatprep.subr.bf16.mxu0 0
        %9415 = vmatpush2.bf16.msra.mxu0 0
        %9416 = vmatprep.subr.bf16.mxu0 0
        %9417 = vmatpush2.bf16.msra.mxu0 0
        %9418 = vmatprep.mubr.bf16.mxu0 0
        %9419 = vmatmul.mubr.bf16.gmra.mxu0 %v9306
        %v9420 = vpop.f32.mrf.mxu0
        %v9421 = vadd.f32 0.0, %v9420
        %v9422 = vpop.f32.mrf.mxu0
        %v9423 = vpop.f32.mrf.mxu0
        %v9424 = vadd.f32 0.0, %v9423
        %v9425 = vpop.f32.mrf.mxu0
        %9426 = vmatprep.mubr.bf16.mxu0 0
        %9427 = vmatmul.mubr.bf16.gmra.mxu0 %v9307
        %v9428 = vpop.f32.mrf.mxu0
        %v9429 = vadd.f32 0.0, %v9428
        %v9430 = vpop.f32.mrf.mxu0
        %v9431 = vpop.f32.mrf.mxu0
        %v9432 = vadd.f32 0.0, %v9431
        %v9433 = vpop.f32.mrf.mxu0
        %9434 = vmatprep.mubr.bf16.mxu0 0
        %9435 = vmatmul.mubr.bf16.gmra.mxu0 %v9308
        %v9436 = vpop.f32.mrf.mxu0
        %v9437 = vadd.f32 0.0, %v9436
        %v9438 = vpop.f32.mrf.mxu0
        %v9439 = vpop.f32.mrf.mxu0
        %v9440 = vadd.f32 0.0, %v9439
        %v9441 = vpop.f32.mrf.mxu0
        %9442 = vmatprep.mubr.bf16.mxu0 0
        %9443 = vmatmul.mubr.bf16.gmra.mxu0 %v9309
        %v9444 = vpop.f32.mrf.mxu0
        %v9445 = vadd.f32 0.0, %v9444
        %v9446 = vpop.f32.mrf.mxu0
        %v9447 = vpop.f32.mrf.mxu0
        %v9448 = vadd.f32 0.0, %v9447
        %v9449 = vpop.f32.mrf.mxu0
        %9450 = vmatprep.mubr.bf16.mxu0 0
        %9451 = vmatmul.mubr.bf16.gmra.mxu0 %v9310
        %v9452 = vpop.f32.mrf.mxu0
        %v9453 = vadd.f32 0.0, %v9452
        %v9454 = vpop.f32.mrf.mxu0
        %v9455 = vpop.f32.mrf.mxu0
        %v9456 = vadd.f32 0.0, %v9455
        %v9457 = vpop.f32.mrf.mxu0
        %9458 = vmatprep.mubr.bf16.mxu0 0
        %9459 = vmatmul.mubr.bf16.gmra.mxu0 %v9311
        %v9460 = vpop.f32.mrf.mxu0
        %v9461 = vadd.f32 0.0, %v9460
        %v9462 = vpop.f32.mrf.mxu0
        %v9463 = vpop.f32.mrf.mxu0
        %v9464 = vadd.f32 0.0, %v9463
        %v9465 = vpop.f32.mrf.mxu0
        %9466 = vmatprep.mubr.bf16.mxu0 0
        %9467 = vmatmul.mubr.bf16.gmra.mxu0 %v9312
        %v9468 = vpop.f32.mrf.mxu0
        %v9469 = vadd.f32 0.0, %v9468
        %v9470 = vpop.f32.mrf.mxu0
        %v9471 = vpop.f32.mrf.mxu0
        %v9472 = vadd.f32 0.0, %v9471
        %v9473 = vpop.f32.mrf.mxu0
        %9474 = vmatprep.mubr.bf16.mxu0 0
        %9475 = vmatmul.mubr.bf16.gmra.mxu0 %v9313
        %v9476 = vpop.f32.mrf.mxu0
        %v9477 = vadd.f32 0.0, %v9476
        %v9478 = vpop.f32.mrf.mxu0
        %v9479 = vpop.f32.mrf.mxu0
        %v9480 = vadd.f32 0.0, %v9479
        %v9481 = vpop.f32.mrf.mxu0
        %9482 = vmatprep.mubr.bf16.mxu0 0
        %9483 = vmatmul.mubr.bf16.gmra.mxu0 %v9314
        %v9484 = vpop.f32.mrf.mxu0
        %v9485 = vadd.f32 0.0, %v9484
        %v9486 = vpop.f32.mrf.mxu0
        %v9487 = vpop.f32.mrf.mxu0
        %v9488 = vadd.f32 0.0, %v9487
        %v9489 = vpop.f32.mrf.mxu0
        %9490 = vmatprep.mubr.bf16.mxu0 0
        %9491 = vmatmul.mubr.bf16.gmra.mxu0 %v9315
        %v9492 = vpop.f32.mrf.mxu0
        %v9493 = vadd.f32 0.0, %v9492
        %v9494 = vpop.f32.mrf.mxu0
        %v9495 = vpop.f32.mrf.mxu0
        %v9496 = vadd.f32 0.0, %v9495
        %v9497 = vpop.f32.mrf.mxu0
        %9498 = vmatprep.mubr.bf16.mxu0 0
        %9499 = vmatmul.mubr.bf16.gmra.mxu0 %v9316
        %v9500 = vpop.f32.mrf.mxu0
        %v9501 = vadd.f32 0.0, %v9500
        %v9502 = vpop.f32.mrf.mxu0
        %v9503 = vpop.f32.mrf.mxu0
        %v9504 = vadd.f32 0.0, %v9503
        %v9505 = vpop.f32.mrf.mxu0
        %9506 = vmatprep.mubr.bf16.mxu0 0
        %9507 = vmatmul.mubr.bf16.gmra.mxu0 %v9317
        %v9508 = vpop.f32.mrf.mxu0
        %v9509 = vadd.f32 0.0, %v9508
        %v9510 = vpop.f32.mrf.mxu0
        %v9511 = vpop.f32.mrf.mxu0
        %v9512 = vadd.f32 0.0, %v9511
        %v9513 = vpop.f32.mrf.mxu0
        %9514 = vmatprep.mubr.bf16.mxu0 0
        %9515 = vmatmul.mubr.bf16.gmra.mxu0 %v9318
        %v9516 = vpop.f32.mrf.mxu0
        %v9517 = vadd.f32 0.0, %v9516
        %v9518 = vpop.f32.mrf.mxu0
        %v9519 = vpop.f32.mrf.mxu0
        %v9520 = vadd.f32 0.0, %v9519
        %v9521 = vpop.f32.mrf.mxu0
        %9522 = vmatprep.mubr.bf16.mxu0 0
        %9523 = vmatmul.mubr.bf16.gmra.mxu0 %v9319
        %v9524 = vpop.f32.mrf.mxu0
        %v9525 = vadd.f32 0.0, %v9524
        %v9526 = vpop.f32.mrf.mxu0
        %v9527 = vpop.f32.mrf.mxu0
        %v9528 = vadd.f32 0.0, %v9527
        %v9529 = vpop.f32.mrf.mxu0
        %9530 = vmatprep.mubr.bf16.mxu0 0
        %9531 = vmatmul.mubr.bf16.gmra.mxu0 %v9320
        %v9532 = vpop.f32.mrf.mxu0
        %v9533 = vadd.f32 0.0, %v9532
        %v9534 = vpop.f32.mrf.mxu0
        %v9535 = vpop.f32.mrf.mxu0
        %v9536 = vadd.f32 0.0, %v9535
        %v9537 = vpop.f32.mrf.mxu0
        %9538 = vmatprep.mubr.bf16.mxu0 0
        %9539 = vmatmul.mubr.bf16.gmra.mxu0 %v9321
        %v9540 = vpop.f32.mrf.mxu0
        %v9541 = vadd.f32 0.0, %v9540
        %v9542 = vpop.f32.mrf.mxu0
        %v9543 = vpop.f32.mrf.mxu0
        %v9544 = vadd.f32 0.0, %v9543
        %v9545 = vpop.f32.mrf.mxu0
        %9546 = vdwg.mxu0
        %v9547 = vadd.f32 %v9049, %v9421
        %v9548 = vadd.f32 %v9050, %v9424
        %v9549 = vadd.f32 %v9051, %v9429
        %v9550 = vadd.f32 %v9052, %v9432
        %v9551 = vadd.f32 %v9053, %v9437
        %v9552 = vadd.f32 %v9054, %v9440
        %v9553 = vadd.f32 %v9055, %v9445
        %v9554 = vadd.f32 %v9056, %v9448
        %v9555 = vadd.f32 %v9057, %v9453
        %v9556 = vadd.f32 %v9058, %v9456
        %v9557 = vadd.f32 %v9059, %v9461
        %v9558 = vadd.f32 %v9060, %v9464
        %v9559 = vadd.f32 %v9061, %v9469
        %v9560 = vadd.f32 %v9062, %v9472
        %v9561 = vadd.f32 %v9063, %v9477
        %v9562 = vadd.f32 %v9064, %v9480
        %v9563 = vadd.f32 %v9065, %v9485
        %v9564 = vadd.f32 %v9066, %v9488
        %v9565 = vadd.f32 %v9067, %v9493
        %v9566 = vadd.f32 %v9068, %v9496
        %v9567 = vadd.f32 %v9069, %v9501
        %v9568 = vadd.f32 %v9070, %v9504
        %v9569 = vadd.f32 %v9071, %v9509
        %v9570 = vadd.f32 %v9072, %v9512
        %v9571 = vadd.f32 %v9073, %v9517
        %v9572 = vadd.f32 %v9074, %v9520
        %v9573 = vadd.f32 %v9075, %v9525
        %v9574 = vadd.f32 %v9076, %v9528
        %v9575 = vadd.f32 %v9077, %v9533
        %v9576 = vadd.f32 %v9078, %v9536
        %v9577 = vadd.f32 %v9079, %v9541
        %v9578 = vadd.f32 %v9080, %v9544
        %v9579 = vld [vmem:[%s4115] sm:$0xf]
        %v9580 = vld [vmem:[%s4115 + $0x4] sm:$0xf]
        %v9581 = vld [vmem:[%s4115 + $0xc] sm:$0xf]
        %v9582 = vld [vmem:[%s4115 + $0x10] sm:$0xf]
        %v9583 = vld [vmem:[%s4115 + $0x18] sm:$0xf]
        %v9584 = vld [vmem:[%s4115 + $0x1c] sm:$0xf]
        %v9585 = vld [vmem:[%s4115 + $0x24] sm:$0xf]
        %v9586 = vld [vmem:[%s4115 + $0x28] sm:$0xf]
        %v9587 = vld [vmem:[%s4115 + $0x30] sm:$0xf]
        %v9588 = vld [vmem:[%s4115 + $0x34] sm:$0xf]
        %v9589 = vld [vmem:[%s4115 + $0x3c] sm:$0xf]
        %v9590 = vld [vmem:[%s4115 + $0x40] sm:$0xf]
        %v9591 = vld [vmem:[%s4115 + $0x48] sm:$0xf]
        %v9592 = vld [vmem:[%s4115 + $0x4c] sm:$0xf]
        %v9593 = vld [vmem:[%s4115 + $0x54] sm:$0xf]
        %v9594 = vld [vmem:[%s4115 + $0x58] sm:$0xf]
        %v9595 = vld [vmem:[%s4115 + $0x60] sm:$0xf]
        %v9596 = vld [vmem:[%s4115 + $0x64] sm:$0xf]
        %v9597 = vld [vmem:[%s4115 + $0x6c] sm:$0xf]
        %v9598 = vld [vmem:[%s4115 + $0x70] sm:$0xf]
        %v9599 = vld [vmem:[%s4115 + $0x78] sm:$0xf]
        %v9600 = vld [vmem:[%s4115 + $0x7c] sm:$0xf]
        %v9601 = vld [vmem:[%s4115 + $0x84] sm:$0xf]
        %v9602 = vld [vmem:[%s4115 + $0x88] sm:$0xf]
        %v9603 = vld [vmem:[%s4115 + $0x90] sm:$0xf]
        %v9604 = vld [vmem:[%s4115 + $0x94] sm:$0xf]
        %v9605 = vld [vmem:[%s4115 + $0x9c] sm:$0xf]
        %v9606 = vld [vmem:[%s4115 + $0xa0] sm:$0xf]
        %v9607 = vld [vmem:[%s4115 + $0xa8] sm:$0xf]
        %v9608 = vld [vmem:[%s4115 + $0xac] sm:$0xf]
        %v9609 = vld [vmem:[%s4115 + $0xb4] sm:$0xf]
        %v9610 = vld [vmem:[%s4115 + $0xb8] sm:$0xf]
        %s9611 = scalar_lea.vmem [#allocation8], 384
        %v9612 = vld [vmem:[%s9611] sm:$0xf]
        %v9613 = vld [vmem:[%s9611 + $0x4] sm:$0xf]
        %v9614 = vld [vmem:[%s9611 + $0x8] sm:$0xf]
        %v9615 = vld [vmem:[%s9611 + $0xc] sm:$0xf]
        %v9616 = vld [vmem:[%s9611 + $0x10] sm:$0xf]
        %v9617 = vld [vmem:[%s9611 + $0x14] sm:$0xf]
        %v9618 = vld [vmem:[%s9611 + $0x18] sm:$0xf]
        %v9619 = vld [vmem:[%s9611 + $0x1c] sm:$0xf]
        %v9620 = vld [vmem:[%s9611 + $0x20] sm:$0xf]
        %v9621 = vld [vmem:[%s9611 + $0x24] sm:$0xf]
        %v9622 = vld [vmem:[%s9611 + $0x28] sm:$0xf]
        %v9623 = vld [vmem:[%s9611 + $0x2c] sm:$0xf]
        %v9624 = vld [vmem:[%s9611 + $0x30] sm:$0xf]
        %v9625 = vld [vmem:[%s9611 + $0x34] sm:$0xf]
        %v9626 = vld [vmem:[%s9611 + $0x38] sm:$0xf]
        %v9627 = vld [vmem:[%s9611 + $0x3c] sm:$0xf]
        %v9660 = vunpack.c.l.b16 %v9579
        %v9661 = vunpack.c.l.b16 %v9580
        %v9662 = vunpack.c.l.b16 %v9581
        %v9663 = vunpack.c.l.b16 %v9582
        %v9664 = vunpack.c.l.b16 %v9583
        %v9665 = vunpack.c.l.b16 %v9584
        %v9666 = vunpack.c.l.b16 %v9585
        %v9667 = vunpack.c.l.b16 %v9586
        %v9668 = vunpack.c.l.b16 %v9587
        %v9669 = vunpack.c.l.b16 %v9588
        %v9670 = vunpack.c.l.b16 %v9589
        %v9671 = vunpack.c.l.b16 %v9590
        %v9672 = vunpack.c.l.b16 %v9591
        %v9673 = vunpack.c.l.b16 %v9592
        %v9674 = vunpack.c.l.b16 %v9593
        %v9675 = vunpack.c.l.b16 %v9594
        %v9676 = vunpack.c.l.b16 %v9595
        %v9677 = vunpack.c.l.b16 %v9596
        %v9678 = vunpack.c.l.b16 %v9597
        %v9679 = vunpack.c.l.b16 %v9598
        %v9680 = vunpack.c.l.b16 %v9599
        %v9681 = vunpack.c.l.b16 %v9600
        %v9682 = vunpack.c.l.b16 %v9601
        %v9683 = vunpack.c.l.b16 %v9602
        %v9684 = vunpack.c.l.b16 %v9603
        %v9685 = vunpack.c.l.b16 %v9604
        %v9686 = vunpack.c.l.b16 %v9605
        %v9687 = vunpack.c.l.b16 %v9606
        %v9688 = vunpack.c.l.b16 %v9607
        %v9689 = vunpack.c.l.b16 %v9608
        %v9690 = vunpack.c.l.b16 %v9609
        %v9691 = vunpack.c.l.b16 %v9610
        %v9692 = vpack.c.b16 %v9661, %v9660
        %v9693 = vpack.c.b16 %v9663, %v9662
        %v9694 = vpack.c.b16 %v9665, %v9664
        %v9695 = vpack.c.b16 %v9667, %v9666
        %v9696 = vpack.c.b16 %v9669, %v9668
        %v9697 = vpack.c.b16 %v9671, %v9670
        %v9698 = vpack.c.b16 %v9673, %v9672
        %v9699 = vpack.c.b16 %v9675, %v9674
        %v9700 = vpack.c.b16 %v9677, %v9676
        %v9701 = vpack.c.b16 %v9679, %v9678
        %v9702 = vpack.c.b16 %v9681, %v9680
        %v9703 = vpack.c.b16 %v9683, %v9682
        %v9704 = vpack.c.b16 %v9685, %v9684
        %v9705 = vpack.c.b16 %v9687, %v9686
        %v9706 = vpack.c.b16 %v9689, %v9688
        %v9707 = vpack.c.b16 %v9691, %v9690
        %v9740 = vunpack.c.l.b16 %v9612
        %v9741 = vunpack.c.l.b16 %v9613
        %v9742 = vunpack.c.l.b16 %v9614
        %v9743 = vunpack.c.l.b16 %v9615
        %v9744 = vunpack.c.l.b16 %v9616
        %v9745 = vunpack.c.l.b16 %v9617
        %v9746 = vunpack.c.l.b16 %v9618
        %v9747 = vunpack.c.l.b16 %v9619
        %v9748 = vunpack.c.l.b16 %v9620
        %v9749 = vunpack.c.l.b16 %v9621
        %v9750 = vunpack.c.l.b16 %v9622
        %v9751 = vunpack.c.l.b16 %v9623
        %v9752 = vunpack.c.l.b16 %v9624
        %v9753 = vunpack.c.l.b16 %v9625
        %v9754 = vunpack.c.l.b16 %v9626
        %v9755 = vunpack.c.l.b16 %v9627
        %v9756 = vpack.c.b16 %v9741, %v9740
        %v9757 = vpack.c.b16 %v9743, %v9742
        %v9758 = vpack.c.b16 %v9745, %v9744
        %v9759 = vpack.c.b16 %v9747, %v9746
        %v9760 = vpack.c.b16 %v9749, %v9748
        %v9761 = vpack.c.b16 %v9751, %v9750
        %v9762 = vpack.c.b16 %v9753, %v9752
        %v9763 = vpack.c.b16 %v9755, %v9754
        %9772 = vmatprep.subr.bf16.mxu0 0
        %9773 = vmatpush1.bf16.msra.mxu0 %v9763
        %9774 = vmatprep.subr.bf16.mxu0 0
        %9775 = vmatpush1.bf16.msra.mxu0 %v9762
        %9776 = vmatprep.subr.bf16.mxu0 0
        %9777 = vmatpush1.bf16.msra.mxu0 %v9761
        %9778 = vmatprep.subr.bf16.mxu0 0
        %9779 = vmatpush1.bf16.msra.mxu0 %v9760
        %9780 = vmatprep.subr.bf16.mxu0 0
        %9781 = vmatpush1.bf16.msra.mxu0 %v9759
        %9782 = vmatprep.subr.bf16.mxu0 0
        %9783 = vmatpush1.bf16.msra.mxu0 %v9758
        %9784 = vmatprep.subr.bf16.mxu0 0
        %9785 = vmatpush1.bf16.msra.mxu0 %v9757
        %9786 = vmatprep.subr.bf16.mxu0 0
        %9787 = vmatpush1.bf16.msra.mxu0 %v9756
        %9788 = vmatprep.subr.bf16.mxu0 0
        %9789 = vmatpush2.bf16.msra.mxu0 0
        %9790 = vmatprep.subr.bf16.mxu0 0
        %9791 = vmatpush2.bf16.msra.mxu0 0
        %9792 = vmatprep.subr.bf16.mxu0 0
        %9793 = vmatpush2.bf16.msra.mxu0 0
        %9794 = vmatprep.subr.bf16.mxu0 0
        %9795 = vmatpush2.bf16.msra.mxu0 0
        %9796 = vmatprep.subr.bf16.mxu0 0
        %9797 = vmatpush2.bf16.msra.mxu0 0
        %9798 = vmatprep.subr.bf16.mxu0 0
        %9799 = vmatpush2.bf16.msra.mxu0 0
        %9800 = vmatprep.subr.bf16.mxu0 0
        %9801 = vmatpush2.bf16.msra.mxu0 0
        %9802 = vmatprep.subr.bf16.mxu0 0
        %9803 = vmatpush2.bf16.msra.mxu0 0
        %9804 = vmatprep.mubr.bf16.mxu0 0
        %9805 = vmatmul.mubr.bf16.gmra.mxu0 %v9692
        %v9806 = vpop.f32.mrf.mxu0
        %v9807 = vadd.f32 0.0, %v9806
        %v9808 = vpop.f32.mrf.mxu0
        %v9809 = vpop.f32.mrf.mxu0
        %v9810 = vadd.f32 0.0, %v9809
        %v9811 = vpop.f32.mrf.mxu0
        %9812 = vmatprep.mubr.bf16.mxu0 0
        %9813 = vmatmul.mubr.bf16.gmra.mxu0 %v9693
        %v9814 = vpop.f32.mrf.mxu0
        %v9815 = vadd.f32 0.0, %v9814
        %v9816 = vpop.f32.mrf.mxu0
        %v9817 = vpop.f32.mrf.mxu0
        %v9818 = vadd.f32 0.0, %v9817
        %v9819 = vpop.f32.mrf.mxu0
        %9820 = vmatprep.mubr.bf16.mxu0 0
        %9821 = vmatmul.mubr.bf16.gmra.mxu0 %v9694
        %v9822 = vpop.f32.mrf.mxu0
        %v9823 = vadd.f32 0.0, %v9822
        %v9824 = vpop.f32.mrf.mxu0
        %v9825 = vpop.f32.mrf.mxu0
        %v9826 = vadd.f32 0.0, %v9825
        %v9827 = vpop.f32.mrf.mxu0
        %9828 = vmatprep.mubr.bf16.mxu0 0
        %9829 = vmatmul.mubr.bf16.gmra.mxu0 %v9695
        %v9830 = vpop.f32.mrf.mxu0
        %v9831 = vadd.f32 0.0, %v9830
        %v9832 = vpop.f32.mrf.mxu0
        %v9833 = vpop.f32.mrf.mxu0
        %v9834 = vadd.f32 0.0, %v9833
        %v9835 = vpop.f32.mrf.mxu0
        %9836 = vmatprep.mubr.bf16.mxu0 0
        %9837 = vmatmul.mubr.bf16.gmra.mxu0 %v9696
        %v9838 = vpop.f32.mrf.mxu0
        %v9839 = vadd.f32 0.0, %v9838
        %v9840 = vpop.f32.mrf.mxu0
        %v9841 = vpop.f32.mrf.mxu0
        %v9842 = vadd.f32 0.0, %v9841
        %v9843 = vpop.f32.mrf.mxu0
        %9844 = vmatprep.mubr.bf16.mxu0 0
        %9845 = vmatmul.mubr.bf16.gmra.mxu0 %v9697
        %v9846 = vpop.f32.mrf.mxu0
        %v9847 = vadd.f32 0.0, %v9846
        %v9848 = vpop.f32.mrf.mxu0
        %v9849 = vpop.f32.mrf.mxu0
        %v9850 = vadd.f32 0.0, %v9849
        %v9851 = vpop.f32.mrf.mxu0
        %9852 = vmatprep.mubr.bf16.mxu0 0
        %9853 = vmatmul.mubr.bf16.gmra.mxu0 %v9698
        %v9854 = vpop.f32.mrf.mxu0
        %v9855 = vadd.f32 0.0, %v9854
        %v9856 = vpop.f32.mrf.mxu0
        %v9857 = vpop.f32.mrf.mxu0
        %v9858 = vadd.f32 0.0, %v9857
        %v9859 = vpop.f32.mrf.mxu0
        %9860 = vmatprep.mubr.bf16.mxu0 0
        %9861 = vmatmul.mubr.bf16.gmra.mxu0 %v9699
        %v9862 = vpop.f32.mrf.mxu0
        %v9863 = vadd.f32 0.0, %v9862
        %v9864 = vpop.f32.mrf.mxu0
        %v9865 = vpop.f32.mrf.mxu0
        %v9866 = vadd.f32 0.0, %v9865
        %v9867 = vpop.f32.mrf.mxu0
        %9868 = vmatprep.mubr.bf16.mxu0 0
        %9869 = vmatmul.mubr.bf16.gmra.mxu0 %v9700
        %v9870 = vpop.f32.mrf.mxu0
        %v9871 = vadd.f32 0.0, %v9870
        %v9872 = vpop.f32.mrf.mxu0
        %v9873 = vpop.f32.mrf.mxu0
        %v9874 = vadd.f32 0.0, %v9873
        %v9875 = vpop.f32.mrf.mxu0
        %9876 = vmatprep.mubr.bf16.mxu0 0
        %9877 = vmatmul.mubr.bf16.gmra.mxu0 %v9701
        %v9878 = vpop.f32.mrf.mxu0
        %v9879 = vadd.f32 0.0, %v9878
        %v9880 = vpop.f32.mrf.mxu0
        %v9881 = vpop.f32.mrf.mxu0
        %v9882 = vadd.f32 0.0, %v9881
        %v9883 = vpop.f32.mrf.mxu0
        %9884 = vmatprep.mubr.bf16.mxu0 0
        %9885 = vmatmul.mubr.bf16.gmra.mxu0 %v9702
        %v9886 = vpop.f32.mrf.mxu0
        %v9887 = vadd.f32 0.0, %v9886
        %v9888 = vpop.f32.mrf.mxu0
        %v9889 = vpop.f32.mrf.mxu0
        %v9890 = vadd.f32 0.0, %v9889
        %v9891 = vpop.f32.mrf.mxu0
        %9892 = vmatprep.mubr.bf16.mxu0 0
        %9893 = vmatmul.mubr.bf16.gmra.mxu0 %v9703
        %v9894 = vpop.f32.mrf.mxu0
        %v9895 = vadd.f32 0.0, %v9894
        %v9896 = vpop.f32.mrf.mxu0
        %v9897 = vpop.f32.mrf.mxu0
        %v9898 = vadd.f32 0.0, %v9897
        %v9899 = vpop.f32.mrf.mxu0
        %9900 = vmatprep.mubr.bf16.mxu0 0
        %9901 = vmatmul.mubr.bf16.gmra.mxu0 %v9704
        %v9902 = vpop.f32.mrf.mxu0
        %v9903 = vadd.f32 0.0, %v9902
        %v9904 = vpop.f32.mrf.mxu0
        %v9905 = vpop.f32.mrf.mxu0
        %v9906 = vadd.f32 0.0, %v9905
        %v9907 = vpop.f32.mrf.mxu0
        %9908 = vmatprep.mubr.bf16.mxu0 0
        %9909 = vmatmul.mubr.bf16.gmra.mxu0 %v9705
        %v9910 = vpop.f32.mrf.mxu0
        %v9911 = vadd.f32 0.0, %v9910
        %v9912 = vpop.f32.mrf.mxu0
        %v9913 = vpop.f32.mrf.mxu0
        %v9914 = vadd.f32 0.0, %v9913
        %v9915 = vpop.f32.mrf.mxu0
        %9916 = vmatprep.mubr.bf16.mxu0 0
        %9917 = vmatmul.mubr.bf16.gmra.mxu0 %v9706
        %v9918 = vpop.f32.mrf.mxu0
        %v9919 = vadd.f32 0.0, %v9918
        %v9920 = vpop.f32.mrf.mxu0
        %v9921 = vpop.f32.mrf.mxu0
        %v9922 = vadd.f32 0.0, %v9921
        %v9923 = vpop.f32.mrf.mxu0
        %9924 = vmatprep.mubr.bf16.mxu0 0
        %9925 = vmatmul.mubr.bf16.gmra.mxu0 %v9707
        %v9926 = vpop.f32.mrf.mxu0
        %v9927 = vadd.f32 0.0, %v9926
        %v9928 = vpop.f32.mrf.mxu0
        %v9929 = vpop.f32.mrf.mxu0
        %v9930 = vadd.f32 0.0, %v9929
        %v9931 = vpop.f32.mrf.mxu0
        %9932 = vdwg.mxu0
        %v9933 = vadd.f32 %v9547, %v9807
        %v9934 = vadd.f32 %v9548, %v9810
        %v9935 = vadd.f32 %v9549, %v9815
        %v9936 = vadd.f32 %v9550, %v9818
        %v9937 = vadd.f32 %v9551, %v9823
        %v9938 = vadd.f32 %v9552, %v9826
        %v9939 = vadd.f32 %v9553, %v9831
        %v9940 = vadd.f32 %v9554, %v9834
        %v9941 = vadd.f32 %v9555, %v9839
        %v9942 = vadd.f32 %v9556, %v9842
        %v9943 = vadd.f32 %v9557, %v9847
        %v9944 = vadd.f32 %v9558, %v9850
        %v9945 = vadd.f32 %v9559, %v9855
        %v9946 = vadd.f32 %v9560, %v9858
        %v9947 = vadd.f32 %v9561, %v9863
        %v9948 = vadd.f32 %v9562, %v9866
        %v9949 = vadd.f32 %v9563, %v9871
        %v9950 = vadd.f32 %v9564, %v9874
        %v9951 = vadd.f32 %v9565, %v9879
        %v9952 = vadd.f32 %v9566, %v9882
        %v9953 = vadd.f32 %v9567, %v9887
        %v9954 = vadd.f32 %v9568, %v9890
        %v9955 = vadd.f32 %v9569, %v9895
        %v9956 = vadd.f32 %v9570, %v9898
        %v9957 = vadd.f32 %v9571, %v9903
        %v9958 = vadd.f32 %v9572, %v9906
        %v9959 = vadd.f32 %v9573, %v9911
        %v9960 = vadd.f32 %v9574, %v9914
        %v9961 = vadd.f32 %v9575, %v9919
        %v9962 = vadd.f32 %v9576, %v9922
        %v9963 = vadd.f32 %v9577, %v9927
        %v9964 = vadd.f32 %v9578, %v9930
        %v9965 = vld [vmem:[%s4115] sm:$0xf]
        %v9966 = vld [vmem:[%s4115 + $0x4] sm:$0xf]
        %v9967 = vld [vmem:[%s4115 + $0x8] sm:$0x1]
        %v9968 = vld [vmem:[%s4115 + $0xc] sm:$0xf]
        %v9969 = vld [vmem:[%s4115 + $0x10] sm:$0xf]
        %v9970 = vld [vmem:[%s4115 + $0x14] sm:$0x1]
        %v9971 = vld [vmem:[%s4115 + $0x18] sm:$0xf]
        %v9972 = vld [vmem:[%s4115 + $0x1c] sm:$0xf]
        %v9973 = vld [vmem:[%s4115 + $0x20] sm:$0x1]
        %v9974 = vld [vmem:[%s4115 + $0x24] sm:$0xf]
        %v9975 = vld [vmem:[%s4115 + $0x28] sm:$0xf]
        %v9976 = vld [vmem:[%s4115 + $0x2c] sm:$0x1]
        %v9977 = vld [vmem:[%s4115 + $0x30] sm:$0xf]
        %v9978 = vld [vmem:[%s4115 + $0x34] sm:$0xf]
        %v9979 = vld [vmem:[%s4115 + $0x38] sm:$0x1]
        %v9980 = vld [vmem:[%s4115 + $0x3c] sm:$0xf]
        %v9981 = vld [vmem:[%s4115 + $0x40] sm:$0xf]
        %v9982 = vld [vmem:[%s4115 + $0x44] sm:$0x1]
        %v9983 = vld [vmem:[%s4115 + $0x48] sm:$0xf]
        %v9984 = vld [vmem:[%s4115 + $0x4c] sm:$0xf]
        %v9985 = vld [vmem:[%s4115 + $0x50] sm:$0x1]
        %v9986 = vld [vmem:[%s4115 + $0x54] sm:$0xf]
        %v9987 = vld [vmem:[%s4115 + $0x58] sm:$0xf]
        %v9988 = vld [vmem:[%s4115 + $0x5c] sm:$0x1]
        %v9989 = vld [vmem:[%s4115 + $0x60] sm:$0xf]
        %v9990 = vld [vmem:[%s4115 + $0x64] sm:$0xf]
        %v9991 = vld [vmem:[%s4115 + $0x68] sm:$0x1]
        %v9992 = vld [vmem:[%s4115 + $0x6c] sm:$0xf]
        %v9993 = vld [vmem:[%s4115 + $0x70] sm:$0xf]
        %v9994 = vld [vmem:[%s4115 + $0x74] sm:$0x1]
        %v9995 = vld [vmem:[%s4115 + $0x78] sm:$0xf]
        %v9996 = vld [vmem:[%s4115 + $0x7c] sm:$0xf]
        %v9997 = vld [vmem:[%s4115 + $0x80] sm:$0x1]
        %v9998 = vld [vmem:[%s4115 + $0x84] sm:$0xf]
        %v9999 = vld [vmem:[%s4115 + $0x88] sm:$0xf]
        %v10000 = vld [vmem:[%s4115 + $0x8c] sm:$0x1]
        %v10001 = vld [vmem:[%s4115 + $0x90] sm:$0xf]
        %v10002 = vld [vmem:[%s4115 + $0x94] sm:$0xf]
        %v10003 = vld [vmem:[%s4115 + $0x98] sm:$0x1]
        %v10004 = vld [vmem:[%s4115 + $0x9c] sm:$0xf]
        %v10005 = vld [vmem:[%s4115 + $0xa0] sm:$0xf]
        %v10006 = vld [vmem:[%s4115 + $0xa4] sm:$0x1]
        %v10007 = vld [vmem:[%s4115 + $0xa8] sm:$0xf]
        %v10008 = vld [vmem:[%s4115 + $0xac] sm:$0xf]
        %v10009 = vld [vmem:[%s4115 + $0xb0] sm:$0x1]
        %v10010 = vld [vmem:[%s4115 + $0xb4] sm:$0xf]
        %v10011 = vld [vmem:[%s4115 + $0xb8] sm:$0xf]
        %v10012 = vld [vmem:[%s4115 + $0xbc] sm:$0x1]
        %v10014 = vshrl.u32 %v9965, 16
        %v10016 = vrot.slane %v10014, 4
        %v10017 = vshll.u32 %v9965, 16
        %v10019 = vrot.slane %v10017, 5
        %v10020 = vor.u32 %v10016, %v10019
        %v10021 = vrot.slane %v10020, 4
        %v10023 = vshll.u32 %v9966, 16
        %v10025 = vrot.slane %v10023, 5
        %v10026 = vsel %vm1012, %v10021, %v10025
        %v10027 = vshrl.u32 %v9966, 16
        %v10029 = vrot.slane %v10027, 4
        %v10030 = vor.u32 %v10029, %v10025
        %v10031 = vrot.slane %v10030, 4
        %v10033 = vshll.u32 %v9967, 16
        %v10035 = vrot.slane %v10033, 5
        %v10036 = vsel %vm1012, %v10031, %v10035
        %v10038 = vshrl.u32 %v9968, 16
        %v10040 = vrot.slane %v10038, 4
        %v10041 = vshll.u32 %v9968, 16
        %v10043 = vrot.slane %v10041, 5
        %v10044 = vor.u32 %v10040, %v10043
        %v10045 = vrot.slane %v10044, 4
        %v10047 = vshll.u32 %v9969, 16
        %v10049 = vrot.slane %v10047, 5
        %v10050 = vsel %vm1012, %v10045, %v10049
        %v10051 = vshrl.u32 %v9969, 16
        %v10053 = vrot.slane %v10051, 4
        %v10054 = vor.u32 %v10053, %v10049
        %v10055 = vrot.slane %v10054, 4
        %v10057 = vshll.u32 %v9970, 16
        %v10059 = vrot.slane %v10057, 5
        %v10060 = vsel %vm1012, %v10055, %v10059
        %v10062 = vshrl.u32 %v9971, 16
        %v10064 = vrot.slane %v10062, 4
        %v10065 = vshll.u32 %v9971, 16
        %v10067 = vrot.slane %v10065, 5
        %v10068 = vor.u32 %v10064, %v10067
        %v10069 = vrot.slane %v10068, 4
        %v10071 = vshll.u32 %v9972, 16
        %v10073 = vrot.slane %v10071, 5
        %v10074 = vsel %vm1012, %v10069, %v10073
        %v10075 = vshrl.u32 %v9972, 16
        %v10077 = vrot.slane %v10075, 4
        %v10078 = vor.u32 %v10077, %v10073
        %v10079 = vrot.slane %v10078, 4
        %v10081 = vshll.u32 %v9973, 16
        %v10083 = vrot.slane %v10081, 5
        %v10084 = vsel %vm1012, %v10079, %v10083
        %v10086 = vshrl.u32 %v9974, 16
        %v10088 = vrot.slane %v10086, 4
        %v10089 = vshll.u32 %v9974, 16
        %v10091 = vrot.slane %v10089, 5
        %v10092 = vor.u32 %v10088, %v10091
        %v10093 = vrot.slane %v10092, 4
        %v10095 = vshll.u32 %v9975, 16
        %v10097 = vrot.slane %v10095, 5
        %v10098 = vsel %vm1012, %v10093, %v10097
        %v10099 = vshrl.u32 %v9975, 16
        %v10101 = vrot.slane %v10099, 4
        %v10102 = vor.u32 %v10101, %v10097
        %v10103 = vrot.slane %v10102, 4
        %v10105 = vshll.u32 %v9976, 16
        %v10107 = vrot.slane %v10105, 5
        %v10108 = vsel %vm1012, %v10103, %v10107
        %v10110 = vshrl.u32 %v9977, 16
        %v10112 = vrot.slane %v10110, 4
        %v10113 = vshll.u32 %v9977, 16
        %v10115 = vrot.slane %v10113, 5
        %v10116 = vor.u32 %v10112, %v10115
        %v10117 = vrot.slane %v10116, 4
        %v10119 = vshll.u32 %v9978, 16
        %v10121 = vrot.slane %v10119, 5
        %v10122 = vsel %vm1012, %v10117, %v10121
        %v10123 = vshrl.u32 %v9978, 16
        %v10125 = vrot.slane %v10123, 4
        %v10126 = vor.u32 %v10125, %v10121
        %v10127 = vrot.slane %v10126, 4
        %v10129 = vshll.u32 %v9979, 16
        %v10131 = vrot.slane %v10129, 5
        %v10132 = vsel %vm1012, %v10127, %v10131
        %v10134 = vshrl.u32 %v9980, 16
        %v10136 = vrot.slane %v10134, 4
        %v10137 = vshll.u32 %v9980, 16
        %v10139 = vrot.slane %v10137, 5
        %v10140 = vor.u32 %v10136, %v10139
        %v10141 = vrot.slane %v10140, 4
        %v10143 = vshll.u32 %v9981, 16
        %v10145 = vrot.slane %v10143, 5
        %v10146 = vsel %vm1012, %v10141, %v10145
        %v10147 = vshrl.u32 %v9981, 16
        %v10149 = vrot.slane %v10147, 4
        %v10150 = vor.u32 %v10149, %v10145
        %v10151 = vrot.slane %v10150, 4
        %v10153 = vshll.u32 %v9982, 16
        %v10155 = vrot.slane %v10153, 5
        %v10156 = vsel %vm1012, %v10151, %v10155
        %v10158 = vshrl.u32 %v9983, 16
        %v10160 = vrot.slane %v10158, 4
        %v10161 = vshll.u32 %v9983, 16
        %v10163 = vrot.slane %v10161, 5
        %v10164 = vor.u32 %v10160, %v10163
        %v10165 = vrot.slane %v10164, 4
        %v10167 = vshll.u32 %v9984, 16
        %v10169 = vrot.slane %v10167, 5
        %v10170 = vsel %vm1012, %v10165, %v10169
        %v10171 = vshrl.u32 %v9984, 16
        %v10173 = vrot.slane %v10171, 4
        %v10174 = vor.u32 %v10173, %v10169
        %v10175 = vrot.slane %v10174, 4
        %v10177 = vshll.u32 %v9985, 16
        %v10179 = vrot.slane %v10177, 5
        %v10180 = vsel %vm1012, %v10175, %v10179
        %v10182 = vshrl.u32 %v9986, 16
        %v10184 = vrot.slane %v10182, 4
        %v10185 = vshll.u32 %v9986, 16
        %v10187 = vrot.slane %v10185, 5
        %v10188 = vor.u32 %v10184, %v10187
        %v10189 = vrot.slane %v10188, 4
        %v10191 = vshll.u32 %v9987, 16
        %v10193 = vrot.slane %v10191, 5
        %v10194 = vsel %vm1012, %v10189, %v10193
        %v10195 = vshrl.u32 %v9987, 16
        %v10197 = vrot.slane %v10195, 4
        %v10198 = vor.u32 %v10197, %v10193
        %v10199 = vrot.slane %v10198, 4
        %v10201 = vshll.u32 %v9988, 16
        %v10203 = vrot.slane %v10201, 5
        %v10204 = vsel %vm1012, %v10199, %v10203
        %v10206 = vshrl.u32 %v9989, 16
        %v10208 = vrot.slane %v10206, 4
        %v10209 = vshll.u32 %v9989, 16
        %v10211 = vrot.slane %v10209, 5
        %v10212 = vor.u32 %v10208, %v10211
        %v10213 = vrot.slane %v10212, 4
        %v10215 = vshll.u32 %v9990, 16
        %v10217 = vrot.slane %v10215, 5
        %v10218 = vsel %vm1012, %v10213, %v10217
        %v10219 = vshrl.u32 %v9990, 16
        %v10221 = vrot.slane %v10219, 4
        %v10222 = vor.u32 %v10221, %v10217
        %v10223 = vrot.slane %v10222, 4
        %v10225 = vshll.u32 %v9991, 16
        %v10227 = vrot.slane %v10225, 5
        %v10228 = vsel %vm1012, %v10223, %v10227
        %v10230 = vshrl.u32 %v9992, 16
        %v10232 = vrot.slane %v10230, 4
        %v10233 = vshll.u32 %v9992, 16
        %v10235 = vrot.slane %v10233, 5
        %v10236 = vor.u32 %v10232, %v10235
        %v10237 = vrot.slane %v10236, 4
        %v10239 = vshll.u32 %v9993, 16
        %v10241 = vrot.slane %v10239, 5
        %v10242 = vsel %vm1012, %v10237, %v10241
        %v10243 = vshrl.u32 %v9993, 16
        %v10245 = vrot.slane %v10243, 4
        %v10246 = vor.u32 %v10245, %v10241
        %v10247 = vrot.slane %v10246, 4
        %v10249 = vshll.u32 %v9994, 16
        %v10251 = vrot.slane %v10249, 5
        %v10252 = vsel %vm1012, %v10247, %v10251
        %v10254 = vshrl.u32 %v9995, 16
        %v10256 = vrot.slane %v10254, 4
        %v10257 = vshll.u32 %v9995, 16
        %v10259 = vrot.slane %v10257, 5
        %v10260 = vor.u32 %v10256, %v10259
        %v10261 = vrot.slane %v10260, 4
        %v10263 = vshll.u32 %v9996, 16
        %v10265 = vrot.slane %v10263, 5
        %v10266 = vsel %vm1012, %v10261, %v10265
        %v10267 = vshrl.u32 %v9996, 16
        %v10269 = vrot.slane %v10267, 4
        %v10270 = vor.u32 %v10269, %v10265
        %v10271 = vrot.slane %v10270, 4
        %v10273 = vshll.u32 %v9997, 16
        %v10275 = vrot.slane %v10273, 5
        %v10276 = vsel %vm1012, %v10271, %v10275
        %v10278 = vshrl.u32 %v9998, 16
        %v10280 = vrot.slane %v10278, 4
        %v10281 = vshll.u32 %v9998, 16
        %v10283 = vrot.slane %v10281, 5
        %v10284 = vor.u32 %v10280, %v10283
        %v10285 = vrot.slane %v10284, 4
        %v10287 = vshll.u32 %v9999, 16
        %v10289 = vrot.slane %v10287, 5
        %v10290 = vsel %vm1012, %v10285, %v10289
        %v10291 = vshrl.u32 %v9999, 16
        %v10293 = vrot.slane %v10291, 4
        %v10294 = vor.u32 %v10293, %v10289
        %v10295 = vrot.slane %v10294, 4
        %v10297 = vshll.u32 %v10000, 16
        %v10299 = vrot.slane %v10297, 5
        %v10300 = vsel %vm1012, %v10295, %v10299
        %v10302 = vshrl.u32 %v10001, 16
        %v10304 = vrot.slane %v10302, 4
        %v10305 = vshll.u32 %v10001, 16
        %v10307 = vrot.slane %v10305, 5
        %v10308 = vor.u32 %v10304, %v10307
        %v10309 = vrot.slane %v10308, 4
        %v10311 = vshll.u32 %v10002, 16
        %v10313 = vrot.slane %v10311, 5
        %v10314 = vsel %vm1012, %v10309, %v10313
        %v10315 = vshrl.u32 %v10002, 16
        %v10317 = vrot.slane %v10315, 4
        %v10318 = vor.u32 %v10317, %v10313
        %v10319 = vrot.slane %v10318, 4
        %v10321 = vshll.u32 %v10003, 16
        %v10323 = vrot.slane %v10321, 5
        %v10324 = vsel %vm1012, %v10319, %v10323
        %v10326 = vshrl.u32 %v10004, 16
        %v10328 = vrot.slane %v10326, 4
        %v10329 = vshll.u32 %v10004, 16
        %v10331 = vrot.slane %v10329, 5
        %v10332 = vor.u32 %v10328, %v10331
        %v10333 = vrot.slane %v10332, 4
        %v10335 = vshll.u32 %v10005, 16
        %v10337 = vrot.slane %v10335, 5
        %v10338 = vsel %vm1012, %v10333, %v10337
        %v10339 = vshrl.u32 %v10005, 16
        %v10341 = vrot.slane %v10339, 4
        %v10342 = vor.u32 %v10341, %v10337
        %v10343 = vrot.slane %v10342, 4
        %v10345 = vshll.u32 %v10006, 16
        %v10347 = vrot.slane %v10345, 5
        %v10348 = vsel %vm1012, %v10343, %v10347
        %v10350 = vshrl.u32 %v10007, 16
        %v10352 = vrot.slane %v10350, 4
        %v10353 = vshll.u32 %v10007, 16
        %v10355 = vrot.slane %v10353, 5
        %v10356 = vor.u32 %v10352, %v10355
        %v10357 = vrot.slane %v10356, 4
        %v10359 = vshll.u32 %v10008, 16
        %v10361 = vrot.slane %v10359, 5
        %v10362 = vsel %vm1012, %v10357, %v10361
        %v10363 = vshrl.u32 %v10008, 16
        %v10365 = vrot.slane %v10363, 4
        %v10366 = vor.u32 %v10365, %v10361
        %v10367 = vrot.slane %v10366, 4
        %v10369 = vshll.u32 %v10009, 16
        %v10371 = vrot.slane %v10369, 5
        %v10372 = vsel %vm1012, %v10367, %v10371
        %v10374 = vshrl.u32 %v10010, 16
        %v10376 = vrot.slane %v10374, 4
        %v10377 = vshll.u32 %v10010, 16
        %v10379 = vrot.slane %v10377, 5
        %v10380 = vor.u32 %v10376, %v10379
        %v10381 = vrot.slane %v10380, 4
        %v10383 = vshll.u32 %v10011, 16
        %v10385 = vrot.slane %v10383, 5
        %v10386 = vsel %vm1012, %v10381, %v10385
        %v10387 = vshrl.u32 %v10011, 16
        %v10389 = vrot.slane %v10387, 4
        %v10390 = vor.u32 %v10389, %v10385
        %v10391 = vrot.slane %v10390, 4
        %v10393 = vshll.u32 %v10012, 16
        %v10395 = vrot.slane %v10393, 5
        %v10396 = vsel %vm1012, %v10391, %v10395
        %s10397 = scalar_lea.vmem [#allocation8], 448
        %v10398 = vld [vmem:[%s10397] sm:$0xf]
        %v10399 = vld [vmem:[%s10397 + $0x4] sm:$0xf]
        %v10400 = vld [vmem:[%s10397 + $0x8] sm:$0xf]
        %v10401 = vld [vmem:[%s10397 + $0xc] sm:$0xf]
        %v10402 = vld [vmem:[%s10397 + $0x10] sm:$0xf]
        %v10403 = vld [vmem:[%s10397 + $0x14] sm:$0xf]
        %v10404 = vld [vmem:[%s10397 + $0x18] sm:$0xf]
        %v10405 = vld [vmem:[%s10397 + $0x1c] sm:$0xf]
        %v10406 = vld [vmem:[%s10397 + $0x20] sm:$0xf]
        %v10407 = vld [vmem:[%s10397 + $0x24] sm:$0xf]
        %v10408 = vld [vmem:[%s10397 + $0x28] sm:$0xf]
        %v10409 = vld [vmem:[%s10397 + $0x2c] sm:$0xf]
        %v10410 = vld [vmem:[%s10397 + $0x30] sm:$0xf]
        %v10411 = vld [vmem:[%s10397 + $0x34] sm:$0xf]
        %v10412 = vld [vmem:[%s10397 + $0x38] sm:$0xf]
        %v10413 = vld [vmem:[%s10397 + $0x3c] sm:$0xf]
        %v10414 = vunpack.c.l.b16 %v10026
        %v10415 = vunpack.c.l.b16 %v10036
        %v10416 = vunpack.c.l.b16 %v10050
        %v10417 = vunpack.c.l.b16 %v10060
        %v10418 = vunpack.c.l.b16 %v10074
        %v10419 = vunpack.c.l.b16 %v10084
        %v10420 = vunpack.c.l.b16 %v10098
        %v10421 = vunpack.c.l.b16 %v10108
        %v10422 = vunpack.c.l.b16 %v10122
        %v10423 = vunpack.c.l.b16 %v10132
        %v10424 = vunpack.c.l.b16 %v10146
        %v10425 = vunpack.c.l.b16 %v10156
        %v10426 = vunpack.c.l.b16 %v10170
        %v10427 = vunpack.c.l.b16 %v10180
        %v10428 = vunpack.c.l.b16 %v10194
        %v10429 = vunpack.c.l.b16 %v10204
        %v10430 = vunpack.c.l.b16 %v10218
        %v10431 = vunpack.c.l.b16 %v10228
        %v10432 = vunpack.c.l.b16 %v10242
        %v10433 = vunpack.c.l.b16 %v10252
        %v10434 = vunpack.c.l.b16 %v10266
        %v10435 = vunpack.c.l.b16 %v10276
        %v10436 = vunpack.c.l.b16 %v10290
        %v10437 = vunpack.c.l.b16 %v10300
        %v10438 = vunpack.c.l.b16 %v10314
        %v10439 = vunpack.c.l.b16 %v10324
        %v10440 = vunpack.c.l.b16 %v10338
        %v10441 = vunpack.c.l.b16 %v10348
        %v10442 = vunpack.c.l.b16 %v10362
        %v10443 = vunpack.c.l.b16 %v10372
        %v10444 = vunpack.c.l.b16 %v10386
        %v10445 = vunpack.c.l.b16 %v10396
        %v10446 = vpack.c.b16 %v10415, %v10414
        %v10447 = vpack.c.b16 %v10417, %v10416
        %v10448 = vpack.c.b16 %v10419, %v10418
        %v10449 = vpack.c.b16 %v10421, %v10420
        %v10450 = vpack.c.b16 %v10423, %v10422
        %v10451 = vpack.c.b16 %v10425, %v10424
        %v10452 = vpack.c.b16 %v10427, %v10426
        %v10453 = vpack.c.b16 %v10429, %v10428
        %v10454 = vpack.c.b16 %v10431, %v10430
        %v10455 = vpack.c.b16 %v10433, %v10432
        %v10456 = vpack.c.b16 %v10435, %v10434
        %v10457 = vpack.c.b16 %v10437, %v10436
        %v10458 = vpack.c.b16 %v10439, %v10438
        %v10459 = vpack.c.b16 %v10441, %v10440
        %v10460 = vpack.c.b16 %v10443, %v10442
        %v10461 = vpack.c.b16 %v10445, %v10444
        %v10494 = vunpack.c.l.b16 %v10398
        %v10495 = vunpack.c.l.b16 %v10399
        %v10496 = vunpack.c.l.b16 %v10400
        %v10497 = vunpack.c.l.b16 %v10401
        %v10498 = vunpack.c.l.b16 %v10402
        %v10499 = vunpack.c.l.b16 %v10403
        %v10500 = vunpack.c.l.b16 %v10404
        %v10501 = vunpack.c.l.b16 %v10405
        %v10502 = vunpack.c.l.b16 %v10406
        %v10503 = vunpack.c.l.b16 %v10407
        %v10504 = vunpack.c.l.b16 %v10408
        %v10505 = vunpack.c.l.b16 %v10409
        %v10506 = vunpack.c.l.b16 %v10410
        %v10507 = vunpack.c.l.b16 %v10411
        %v10508 = vunpack.c.l.b16 %v10412
        %v10509 = vunpack.c.l.b16 %v10413
        %v10510 = vpack.c.b16 %v10495, %v10494
        %v10511 = vpack.c.b16 %v10497, %v10496
        %v10512 = vpack.c.b16 %v10499, %v10498
        %v10513 = vpack.c.b16 %v10501, %v10500
        %v10514 = vpack.c.b16 %v10503, %v10502
        %v10515 = vpack.c.b16 %v10505, %v10504
        %v10516 = vpack.c.b16 %v10507, %v10506
        %v10517 = vpack.c.b16 %v10509, %v10508
        %10526 = vmatprep.subr.bf16.mxu0 0
        %10527 = vmatpush1.bf16.msra.mxu0 %v10517
        %10528 = vmatprep.subr.bf16.mxu0 0
        %10529 = vmatpush1.bf16.msra.mxu0 %v10516
        %10530 = vmatprep.subr.bf16.mxu0 0
        %10531 = vmatpush1.bf16.msra.mxu0 %v10515
        %10532 = vmatprep.subr.bf16.mxu0 0
        %10533 = vmatpush1.bf16.msra.mxu0 %v10514
        %10534 = vmatprep.subr.bf16.mxu0 0
        %10535 = vmatpush1.bf16.msra.mxu0 %v10513
        %10536 = vmatprep.subr.bf16.mxu0 0
        %10537 = vmatpush1.bf16.msra.mxu0 %v10512
        %10538 = vmatprep.subr.bf16.mxu0 0
        %10539 = vmatpush1.bf16.msra.mxu0 %v10511
        %10540 = vmatprep.subr.bf16.mxu0 0
        %10541 = vmatpush1.bf16.msra.mxu0 %v10510
        %10542 = vmatprep.subr.bf16.mxu0 0
        %10543 = vmatpush2.bf16.msra.mxu0 0
        %10544 = vmatprep.subr.bf16.mxu0 0
        %10545 = vmatpush2.bf16.msra.mxu0 0
        %10546 = vmatprep.subr.bf16.mxu0 0
        %10547 = vmatpush2.bf16.msra.mxu0 0
        %10548 = vmatprep.subr.bf16.mxu0 0
        %10549 = vmatpush2.bf16.msra.mxu0 0
        %10550 = vmatprep.subr.bf16.mxu0 0
        %10551 = vmatpush2.bf16.msra.mxu0 0
        %10552 = vmatprep.subr.bf16.mxu0 0
        %10553 = vmatpush2.bf16.msra.mxu0 0
        %10554 = vmatprep.subr.bf16.mxu0 0
        %10555 = vmatpush2.bf16.msra.mxu0 0
        %10556 = vmatprep.subr.bf16.mxu0 0
        %10557 = vmatpush2.bf16.msra.mxu0 0
        %10558 = vmatprep.mubr.bf16.mxu0 0
        %10559 = vmatmul.mubr.bf16.gmra.mxu0 %v10446
        %v10560 = vpop.f32.mrf.mxu0
        %v10561 = vadd.f32 0.0, %v10560
        %v10562 = vpop.f32.mrf.mxu0
        %v10563 = vpop.f32.mrf.mxu0
        %v10564 = vadd.f32 0.0, %v10563
        %v10565 = vpop.f32.mrf.mxu0
        %10566 = vmatprep.mubr.bf16.mxu0 0
        %10567 = vmatmul.mubr.bf16.gmra.mxu0 %v10447
        %v10568 = vpop.f32.mrf.mxu0
        %v10569 = vadd.f32 0.0, %v10568
        %v10570 = vpop.f32.mrf.mxu0
        %v10571 = vpop.f32.mrf.mxu0
        %v10572 = vadd.f32 0.0, %v10571
        %v10573 = vpop.f32.mrf.mxu0
        %10574 = vmatprep.mubr.bf16.mxu0 0
        %10575 = vmatmul.mubr.bf16.gmra.mxu0 %v10448
        %v10576 = vpop.f32.mrf.mxu0
        %v10577 = vadd.f32 0.0, %v10576
        %v10578 = vpop.f32.mrf.mxu0
        %v10579 = vpop.f32.mrf.mxu0
        %v10580 = vadd.f32 0.0, %v10579
        %v10581 = vpop.f32.mrf.mxu0
        %10582 = vmatprep.mubr.bf16.mxu0 0
        %10583 = vmatmul.mubr.bf16.gmra.mxu0 %v10449
        %v10584 = vpop.f32.mrf.mxu0
        %v10585 = vadd.f32 0.0, %v10584
        %v10586 = vpop.f32.mrf.mxu0
        %v10587 = vpop.f32.mrf.mxu0
        %v10588 = vadd.f32 0.0, %v10587
        %v10589 = vpop.f32.mrf.mxu0
        %10590 = vmatprep.mubr.bf16.mxu0 0
        %10591 = vmatmul.mubr.bf16.gmra.mxu0 %v10450
        %v10592 = vpop.f32.mrf.mxu0
        %v10593 = vadd.f32 0.0, %v10592
        %v10594 = vpop.f32.mrf.mxu0
        %v10595 = vpop.f32.mrf.mxu0
        %v10596 = vadd.f32 0.0, %v10595
        %v10597 = vpop.f32.mrf.mxu0
        %10598 = vmatprep.mubr.bf16.mxu0 0
        %10599 = vmatmul.mubr.bf16.gmra.mxu0 %v10451
        %v10600 = vpop.f32.mrf.mxu0
        %v10601 = vadd.f32 0.0, %v10600
        %v10602 = vpop.f32.mrf.mxu0
        %v10603 = vpop.f32.mrf.mxu0
        %v10604 = vadd.f32 0.0, %v10603
        %v10605 = vpop.f32.mrf.mxu0
        %10606 = vmatprep.mubr.bf16.mxu0 0
        %10607 = vmatmul.mubr.bf16.gmra.mxu0 %v10452
        %v10608 = vpop.f32.mrf.mxu0
        %v10609 = vadd.f32 0.0, %v10608
        %v10610 = vpop.f32.mrf.mxu0
        %v10611 = vpop.f32.mrf.mxu0
        %v10612 = vadd.f32 0.0, %v10611
        %v10613 = vpop.f32.mrf.mxu0
        %10614 = vmatprep.mubr.bf16.mxu0 0
        %10615 = vmatmul.mubr.bf16.gmra.mxu0 %v10453
        %v10616 = vpop.f32.mrf.mxu0
        %v10617 = vadd.f32 0.0, %v10616
        %v10618 = vpop.f32.mrf.mxu0
        %v10619 = vpop.f32.mrf.mxu0
        %v10620 = vadd.f32 0.0, %v10619
        %v10621 = vpop.f32.mrf.mxu0
        %10622 = vmatprep.mubr.bf16.mxu0 0
        %10623 = vmatmul.mubr.bf16.gmra.mxu0 %v10454
        %v10624 = vpop.f32.mrf.mxu0
        %v10625 = vadd.f32 0.0, %v10624
        %v10626 = vpop.f32.mrf.mxu0
        %v10627 = vpop.f32.mrf.mxu0
        %v10628 = vadd.f32 0.0, %v10627
        %v10629 = vpop.f32.mrf.mxu0
        %10630 = vmatprep.mubr.bf16.mxu0 0
        %10631 = vmatmul.mubr.bf16.gmra.mxu0 %v10455
        %v10632 = vpop.f32.mrf.mxu0
        %v10633 = vadd.f32 0.0, %v10632
        %v10634 = vpop.f32.mrf.mxu0
        %v10635 = vpop.f32.mrf.mxu0
        %v10636 = vadd.f32 0.0, %v10635
        %v10637 = vpop.f32.mrf.mxu0
        %10638 = vmatprep.mubr.bf16.mxu0 0
        %10639 = vmatmul.mubr.bf16.gmra.mxu0 %v10456
        %v10640 = vpop.f32.mrf.mxu0
        %v10641 = vadd.f32 0.0, %v10640
        %v10642 = vpop.f32.mrf.mxu0
        %v10643 = vpop.f32.mrf.mxu0
        %v10644 = vadd.f32 0.0, %v10643
        %v10645 = vpop.f32.mrf.mxu0
        %10646 = vmatprep.mubr.bf16.mxu0 0
        %10647 = vmatmul.mubr.bf16.gmra.mxu0 %v10457
        %v10648 = vpop.f32.mrf.mxu0
        %v10649 = vadd.f32 0.0, %v10648
        %v10650 = vpop.f32.mrf.mxu0
        %v10651 = vpop.f32.mrf.mxu0
        %v10652 = vadd.f32 0.0, %v10651
        %v10653 = vpop.f32.mrf.mxu0
        %10654 = vmatprep.mubr.bf16.mxu0 0
        %10655 = vmatmul.mubr.bf16.gmra.mxu0 %v10458
        %v10656 = vpop.f32.mrf.mxu0
        %v10657 = vadd.f32 0.0, %v10656
        %v10658 = vpop.f32.mrf.mxu0
        %v10659 = vpop.f32.mrf.mxu0
        %v10660 = vadd.f32 0.0, %v10659
        %v10661 = vpop.f32.mrf.mxu0
        %10662 = vmatprep.mubr.bf16.mxu0 0
        %10663 = vmatmul.mubr.bf16.gmra.mxu0 %v10459
        %v10664 = vpop.f32.mrf.mxu0
        %v10665 = vadd.f32 0.0, %v10664
        %v10666 = vpop.f32.mrf.mxu0
        %v10667 = vpop.f32.mrf.mxu0
        %v10668 = vadd.f32 0.0, %v10667
        %v10669 = vpop.f32.mrf.mxu0
        %10670 = vmatprep.mubr.bf16.mxu0 0
        %10671 = vmatmul.mubr.bf16.gmra.mxu0 %v10460
        %v10672 = vpop.f32.mrf.mxu0
        %v10673 = vadd.f32 0.0, %v10672
        %v10674 = vpop.f32.mrf.mxu0
        %v10675 = vpop.f32.mrf.mxu0
        %v10676 = vadd.f32 0.0, %v10675
        %v10677 = vpop.f32.mrf.mxu0
        %10678 = vmatprep.mubr.bf16.mxu0 0
        %10679 = vmatmul.mubr.bf16.gmra.mxu0 %v10461
        %v10680 = vpop.f32.mrf.mxu0
        %v10681 = vadd.f32 0.0, %v10680
        %v10682 = vpop.f32.mrf.mxu0
        %v10683 = vpop.f32.mrf.mxu0
        %v10684 = vadd.f32 0.0, %v10683
        %v10685 = vpop.f32.mrf.mxu0
        %10686 = vdwg.mxu0
        %v10687 = vadd.f32 %v9933, %v10561
        %v10688 = vadd.f32 %v9934, %v10564
        %v10689 = vadd.f32 %v9935, %v10569
        %v10690 = vadd.f32 %v9936, %v10572
        %v10691 = vadd.f32 %v9937, %v10577
        %v10692 = vadd.f32 %v9938, %v10580
        %v10693 = vadd.f32 %v9939, %v10585
        %v10694 = vadd.f32 %v9940, %v10588
        %v10695 = vadd.f32 %v9941, %v10593
        %v10696 = vadd.f32 %v9942, %v10596
        %v10697 = vadd.f32 %v9943, %v10601
        %v10698 = vadd.f32 %v9944, %v10604
        %v10699 = vadd.f32 %v9945, %v10609
        %v10700 = vadd.f32 %v9946, %v10612
        %v10701 = vadd.f32 %v9947, %v10617
        %v10702 = vadd.f32 %v9948, %v10620
        %v10703 = vadd.f32 %v9949, %v10625
        %v10704 = vadd.f32 %v9950, %v10628
        %v10705 = vadd.f32 %v9951, %v10633
        %v10706 = vadd.f32 %v9952, %v10636
        %v10707 = vadd.f32 %v9953, %v10641
        %v10708 = vadd.f32 %v9954, %v10644
        %v10709 = vadd.f32 %v9955, %v10649
        %v10710 = vadd.f32 %v9956, %v10652
        %v10711 = vadd.f32 %v9957, %v10657
        %v10712 = vadd.f32 %v9958, %v10660
        %v10713 = vadd.f32 %v9959, %v10665
        %v10714 = vadd.f32 %v9960, %v10668
        %v10715 = vadd.f32 %v9961, %v10673
        %v10716 = vadd.f32 %v9962, %v10676
        %v10717 = vadd.f32 %v9963, %v10681
        %v10718 = vadd.f32 %v9964, %v10684
        %v10719 = vld [vmem:[%s4115] sm:$0xe]
        %v10720 = vld [vmem:[%s4115 + $0xc] sm:$0xe]
        %v10721 = vld [vmem:[%s4115 + $0x18] sm:$0xe]
        %v10722 = vld [vmem:[%s4115 + $0x24] sm:$0xe]
        %v10723 = vld [vmem:[%s4115 + $0x30] sm:$0xe]
        %v10724 = vld [vmem:[%s4115 + $0x3c] sm:$0xe]
        %v10725 = vld [vmem:[%s4115 + $0x48] sm:$0xe]
        %v10726 = vld [vmem:[%s4115 + $0x54] sm:$0xe]
        %v10727 = vld [vmem:[%s4115 + $0x60] sm:$0xe]
        %v10728 = vld [vmem:[%s4115 + $0x6c] sm:$0xe]
        %v10729 = vld [vmem:[%s4115 + $0x78] sm:$0xe]
        %v10730 = vld [vmem:[%s4115 + $0x84] sm:$0xe]
        %v10731 = vld [vmem:[%s4115 + $0x90] sm:$0xe]
        %v10732 = vld [vmem:[%s4115 + $0x9c] sm:$0xe]
        %v10733 = vld [vmem:[%s4115 + $0xa8] sm:$0xe]
        %v10734 = vld [vmem:[%s4115 + $0xb4] sm:$0xe]
        %v10783 = vrot.slane %v10719, 5
        %v10784 = vrot.slane %v10783, 4
        %v10785 = vrot.slane %v9966, 5
        %v10786 = vsel %vm2042, %v10784, %v10785
        %v10787 = vrot.slane %v10785, 4
        %v10788 = vrot.slane %v9967, 5
        %v10789 = vsel %vm2042, %v10787, %v10788
        %v10790 = vrot.slane %v10720, 5
        %v10791 = vrot.slane %v10790, 4
        %v10792 = vrot.slane %v9969, 5
        %v10793 = vsel %vm2042, %v10791, %v10792
        %v10794 = vrot.slane %v10792, 4
        %v10795 = vrot.slane %v9970, 5
        %v10796 = vsel %vm2042, %v10794, %v10795
        %v10797 = vrot.slane %v10721, 5
        %v10798 = vrot.slane %v10797, 4
        %v10799 = vrot.slane %v9972, 5
        %v10800 = vsel %vm2042, %v10798, %v10799
        %v10801 = vrot.slane %v10799, 4
        %v10802 = vrot.slane %v9973, 5
        %v10803 = vsel %vm2042, %v10801, %v10802
        %v10804 = vrot.slane %v10722, 5
        %v10805 = vrot.slane %v10804, 4
        %v10806 = vrot.slane %v9975, 5
        %v10807 = vsel %vm2042, %v10805, %v10806
        %v10808 = vrot.slane %v10806, 4
        %v10809 = vrot.slane %v9976, 5
        %v10810 = vsel %vm2042, %v10808, %v10809
        %v10811 = vrot.slane %v10723, 5
        %v10812 = vrot.slane %v10811, 4
        %v10813 = vrot.slane %v9978, 5
        %v10814 = vsel %vm2042, %v10812, %v10813
        %v10815 = vrot.slane %v10813, 4
        %v10816 = vrot.slane %v9979, 5
        %v10817 = vsel %vm2042, %v10815, %v10816
        %v10818 = vrot.slane %v10724, 5
        %v10819 = vrot.slane %v10818, 4
        %v10820 = vrot.slane %v9981, 5
        %v10821 = vsel %vm2042, %v10819, %v10820
        %v10822 = vrot.slane %v10820, 4
        %v10823 = vrot.slane %v9982, 5
        %v10824 = vsel %vm2042, %v10822, %v10823
        %v10825 = vrot.slane %v10725, 5
        %v10826 = vrot.slane %v10825, 4
        %v10827 = vrot.slane %v9984, 5
        %v10828 = vsel %vm2042, %v10826, %v10827
        %v10829 = vrot.slane %v10827, 4
        %v10830 = vrot.slane %v9985, 5
        %v10831 = vsel %vm2042, %v10829, %v10830
        %v10832 = vrot.slane %v10726, 5
        %v10833 = vrot.slane %v10832, 4
        %v10834 = vrot.slane %v9987, 5
        %v10835 = vsel %vm2042, %v10833, %v10834
        %v10836 = vrot.slane %v10834, 4
        %v10837 = vrot.slane %v9988, 5
        %v10838 = vsel %vm2042, %v10836, %v10837
        %v10839 = vrot.slane %v10727, 5
        %v10840 = vrot.slane %v10839, 4
        %v10841 = vrot.slane %v9990, 5
        %v10842 = vsel %vm2042, %v10840, %v10841
        %v10843 = vrot.slane %v10841, 4
        %v10844 = vrot.slane %v9991, 5
        %v10845 = vsel %vm2042, %v10843, %v10844
        %v10846 = vrot.slane %v10728, 5
        %v10847 = vrot.slane %v10846, 4
        %v10848 = vrot.slane %v9993, 5
        %v10849 = vsel %vm2042, %v10847, %v10848
        %v10850 = vrot.slane %v10848, 4
        %v10851 = vrot.slane %v9994, 5
        %v10852 = vsel %vm2042, %v10850, %v10851
        %v10853 = vrot.slane %v10729, 5
        %v10854 = vrot.slane %v10853, 4
        %v10855 = vrot.slane %v9996, 5
        %v10856 = vsel %vm2042, %v10854, %v10855
        %v10857 = vrot.slane %v10855, 4
        %v10858 = vrot.slane %v9997, 5
        %v10859 = vsel %vm2042, %v10857, %v10858
        %v10860 = vrot.slane %v10730, 5
        %v10861 = vrot.slane %v10860, 4
        %v10862 = vrot.slane %v9999, 5
        %v10863 = vsel %vm2042, %v10861, %v10862
        %v10864 = vrot.slane %v10862, 4
        %v10865 = vrot.slane %v10000, 5
        %v10866 = vsel %vm2042, %v10864, %v10865
        %v10867 = vrot.slane %v10731, 5
        %v10868 = vrot.slane %v10867, 4
        %v10869 = vrot.slane %v10002, 5
        %v10870 = vsel %vm2042, %v10868, %v10869
        %v10871 = vrot.slane %v10869, 4
        %v10872 = vrot.slane %v10003, 5
        %v10873 = vsel %vm2042, %v10871, %v10872
        %v10874 = vrot.slane %v10732, 5
        %v10875 = vrot.slane %v10874, 4
        %v10876 = vrot.slane %v10005, 5
        %v10877 = vsel %vm2042, %v10875, %v10876
        %v10878 = vrot.slane %v10876, 4
        %v10879 = vrot.slane %v10006, 5
        %v10880 = vsel %vm2042, %v10878, %v10879
        %v10881 = vrot.slane %v10733, 5
        %v10882 = vrot.slane %v10881, 4
        %v10883 = vrot.slane %v10008, 5
        %v10884 = vsel %vm2042, %v10882, %v10883
        %v10885 = vrot.slane %v10883, 4
        %v10886 = vrot.slane %v10009, 5
        %v10887 = vsel %vm2042, %v10885, %v10886
        %v10888 = vrot.slane %v10734, 5
        %v10889 = vrot.slane %v10888, 4
        %v10890 = vrot.slane %v10011, 5
        %v10891 = vsel %vm2042, %v10889, %v10890
        %v10892 = vrot.slane %v10890, 4
        %v10893 = vrot.slane %v10012, 5
        %v10894 = vsel %vm2042, %v10892, %v10893
        %s10895 = scalar_lea.vmem [#allocation8], 512
        %v10896 = vld [vmem:[%s10895] sm:$0xf]
        %v10897 = vld [vmem:[%s10895 + $0x4] sm:$0xf]
        %v10898 = vld [vmem:[%s10895 + $0x8] sm:$0xf]
        %v10899 = vld [vmem:[%s10895 + $0xc] sm:$0xf]
        %v10900 = vld [vmem:[%s10895 + $0x10] sm:$0xf]
        %v10901 = vld [vmem:[%s10895 + $0x14] sm:$0xf]
        %v10902 = vld [vmem:[%s10895 + $0x18] sm:$0xf]
        %v10903 = vld [vmem:[%s10895 + $0x1c] sm:$0xf]
        %v10904 = vld [vmem:[%s10895 + $0x20] sm:$0xf]
        %v10905 = vld [vmem:[%s10895 + $0x24] sm:$0xf]
        %v10906 = vld [vmem:[%s10895 + $0x28] sm:$0xf]
        %v10907 = vld [vmem:[%s10895 + $0x2c] sm:$0xf]
        %v10908 = vld [vmem:[%s10895 + $0x30] sm:$0xf]
        %v10909 = vld [vmem:[%s10895 + $0x34] sm:$0xf]
        %v10910 = vld [vmem:[%s10895 + $0x38] sm:$0xf]
        %v10911 = vld [vmem:[%s10895 + $0x3c] sm:$0xf]
        %v10912 = vunpack.c.l.b16 %v10786
        %v10913 = vunpack.c.l.b16 %v10789
        %v10914 = vunpack.c.l.b16 %v10793
        %v10915 = vunpack.c.l.b16 %v10796
        %v10916 = vunpack.c.l.b16 %v10800
        %v10917 = vunpack.c.l.b16 %v10803
        %v10918 = vunpack.c.l.b16 %v10807
        %v10919 = vunpack.c.l.b16 %v10810
        %v10920 = vunpack.c.l.b16 %v10814
        %v10921 = vunpack.c.l.b16 %v10817
        %v10922 = vunpack.c.l.b16 %v10821
        %v10923 = vunpack.c.l.b16 %v10824
        %v10924 = vunpack.c.l.b16 %v10828
        %v10925 = vunpack.c.l.b16 %v10831
        %v10926 = vunpack.c.l.b16 %v10835
        %v10927 = vunpack.c.l.b16 %v10838
        %v10928 = vunpack.c.l.b16 %v10842
        %v10929 = vunpack.c.l.b16 %v10845
        %v10930 = vunpack.c.l.b16 %v10849
        %v10931 = vunpack.c.l.b16 %v10852
        %v10932 = vunpack.c.l.b16 %v10856
        %v10933 = vunpack.c.l.b16 %v10859
        %v10934 = vunpack.c.l.b16 %v10863
        %v10935 = vunpack.c.l.b16 %v10866
        %v10936 = vunpack.c.l.b16 %v10870
        %v10937 = vunpack.c.l.b16 %v10873
        %v10938 = vunpack.c.l.b16 %v10877
        %v10939 = vunpack.c.l.b16 %v10880
        %v10940 = vunpack.c.l.b16 %v10884
        %v10941 = vunpack.c.l.b16 %v10887
        %v10942 = vunpack.c.l.b16 %v10891
        %v10943 = vunpack.c.l.b16 %v10894
        %v10944 = vpack.c.b16 %v10913, %v10912
        %v10945 = vpack.c.b16 %v10915, %v10914
        %v10946 = vpack.c.b16 %v10917, %v10916
        %v10947 = vpack.c.b16 %v10919, %v10918
        %v10948 = vpack.c.b16 %v10921, %v10920
        %v10949 = vpack.c.b16 %v10923, %v10922
        %v10950 = vpack.c.b16 %v10925, %v10924
        %v10951 = vpack.c.b16 %v10927, %v10926
        %v10952 = vpack.c.b16 %v10929, %v10928
        %v10953 = vpack.c.b16 %v10931, %v10930
        %v10954 = vpack.c.b16 %v10933, %v10932
        %v10955 = vpack.c.b16 %v10935, %v10934
        %v10956 = vpack.c.b16 %v10937, %v10936
        %v10957 = vpack.c.b16 %v10939, %v10938
        %v10958 = vpack.c.b16 %v10941, %v10940
        %v10959 = vpack.c.b16 %v10943, %v10942
        %v10992 = vunpack.c.l.b16 %v10896
        %v10993 = vunpack.c.l.b16 %v10897
        %v10994 = vunpack.c.l.b16 %v10898
        %v10995 = vunpack.c.l.b16 %v10899
        %v10996 = vunpack.c.l.b16 %v10900
        %v10997 = vunpack.c.l.b16 %v10901
        %v10998 = vunpack.c.l.b16 %v10902
        %v10999 = vunpack.c.l.b16 %v10903
        %v11000 = vunpack.c.l.b16 %v10904
        %v11001 = vunpack.c.l.b16 %v10905
        %v11002 = vunpack.c.l.b16 %v10906
        %v11003 = vunpack.c.l.b16 %v10907
        %v11004 = vunpack.c.l.b16 %v10908
        %v11005 = vunpack.c.l.b16 %v10909
        %v11006 = vunpack.c.l.b16 %v10910
        %v11007 = vunpack.c.l.b16 %v10911
        %v11008 = vpack.c.b16 %v10993, %v10992
        %v11009 = vpack.c.b16 %v10995, %v10994
        %v11010 = vpack.c.b16 %v10997, %v10996
        %v11011 = vpack.c.b16 %v10999, %v10998
        %v11012 = vpack.c.b16 %v11001, %v11000
        %v11013 = vpack.c.b16 %v11003, %v11002
        %v11014 = vpack.c.b16 %v11005, %v11004
        %v11015 = vpack.c.b16 %v11007, %v11006
        %11024 = vmatprep.subr.bf16.mxu0 0
        %11025 = vmatpush1.bf16.msra.mxu0 %v11015
        %11026 = vmatprep.subr.bf16.mxu0 0
        %11027 = vmatpush1.bf16.msra.mxu0 %v11014
        %11028 = vmatprep.subr.bf16.mxu0 0
        %11029 = vmatpush1.bf16.msra.mxu0 %v11013
        %11030 = vmatprep.subr.bf16.mxu0 0
        %11031 = vmatpush1.bf16.msra.mxu0 %v11012
        %11032 = vmatprep.subr.bf16.mxu0 0
        %11033 = vmatpush1.bf16.msra.mxu0 %v11011
        %11034 = vmatprep.subr.bf16.mxu0 0
        %11035 = vmatpush1.bf16.msra.mxu0 %v11010
        %11036 = vmatprep.subr.bf16.mxu0 0
        %11037 = vmatpush1.bf16.msra.mxu0 %v11009
        %11038 = vmatprep.subr.bf16.mxu0 0
        %11039 = vmatpush1.bf16.msra.mxu0 %v11008
        %11040 = vmatprep.subr.bf16.mxu0 0
        %11041 = vmatpush2.bf16.msra.mxu0 0
        %11042 = vmatprep.subr.bf16.mxu0 0
        %11043 = vmatpush2.bf16.msra.mxu0 0
        %11044 = vmatprep.subr.bf16.mxu0 0
        %11045 = vmatpush2.bf16.msra.mxu0 0
        %11046 = vmatprep.subr.bf16.mxu0 0
        %11047 = vmatpush2.bf16.msra.mxu0 0
        %11048 = vmatprep.subr.bf16.mxu0 0
        %11049 = vmatpush2.bf16.msra.mxu0 0
        %11050 = vmatprep.subr.bf16.mxu0 0
        %11051 = vmatpush2.bf16.msra.mxu0 0
        %11052 = vmatprep.subr.bf16.mxu0 0
        %11053 = vmatpush2.bf16.msra.mxu0 0
        %11054 = vmatprep.subr.bf16.mxu0 0
        %11055 = vmatpush2.bf16.msra.mxu0 0
        %11056 = vmatprep.mubr.bf16.mxu0 0
        %11057 = vmatmul.mubr.bf16.gmra.mxu0 %v10944
        %v11058 = vpop.f32.mrf.mxu0
        %v11059 = vadd.f32 0.0, %v11058
        %v11060 = vpop.f32.mrf.mxu0
        %v11061 = vpop.f32.mrf.mxu0
        %v11062 = vadd.f32 0.0, %v11061
        %v11063 = vpop.f32.mrf.mxu0
        %11064 = vmatprep.mubr.bf16.mxu0 0
        %11065 = vmatmul.mubr.bf16.gmra.mxu0 %v10945
        %v11066 = vpop.f32.mrf.mxu0
        %v11067 = vadd.f32 0.0, %v11066
        %v11068 = vpop.f32.mrf.mxu0
        %v11069 = vpop.f32.mrf.mxu0
        %v11070 = vadd.f32 0.0, %v11069
        %v11071 = vpop.f32.mrf.mxu0
        %11072 = vmatprep.mubr.bf16.mxu0 0
        %11073 = vmatmul.mubr.bf16.gmra.mxu0 %v10946
        %v11074 = vpop.f32.mrf.mxu0
        %v11075 = vadd.f32 0.0, %v11074
        %v11076 = vpop.f32.mrf.mxu0
        %v11077 = vpop.f32.mrf.mxu0
        %v11078 = vadd.f32 0.0, %v11077
        %v11079 = vpop.f32.mrf.mxu0
        %11080 = vmatprep.mubr.bf16.mxu0 0
        %11081 = vmatmul.mubr.bf16.gmra.mxu0 %v10947
        %v11082 = vpop.f32.mrf.mxu0
        %v11083 = vadd.f32 0.0, %v11082
        %v11084 = vpop.f32.mrf.mxu0
        %v11085 = vpop.f32.mrf.mxu0
        %v11086 = vadd.f32 0.0, %v11085
        %v11087 = vpop.f32.mrf.mxu0
        %11088 = vmatprep.mubr.bf16.mxu0 0
        %11089 = vmatmul.mubr.bf16.gmra.mxu0 %v10948
        %v11090 = vpop.f32.mrf.mxu0
        %v11091 = vadd.f32 0.0, %v11090
        %v11092 = vpop.f32.mrf.mxu0
        %v11093 = vpop.f32.mrf.mxu0
        %v11094 = vadd.f32 0.0, %v11093
        %v11095 = vpop.f32.mrf.mxu0
        %11096 = vmatprep.mubr.bf16.mxu0 0
        %11097 = vmatmul.mubr.bf16.gmra.mxu0 %v10949
        %v11098 = vpop.f32.mrf.mxu0
        %v11099 = vadd.f32 0.0, %v11098
        %v11100 = vpop.f32.mrf.mxu0
        %v11101 = vpop.f32.mrf.mxu0
        %v11102 = vadd.f32 0.0, %v11101
        %v11103 = vpop.f32.mrf.mxu0
        %11104 = vmatprep.mubr.bf16.mxu0 0
        %11105 = vmatmul.mubr.bf16.gmra.mxu0 %v10950
        %v11106 = vpop.f32.mrf.mxu0
        %v11107 = vadd.f32 0.0, %v11106
        %v11108 = vpop.f32.mrf.mxu0
        %v11109 = vpop.f32.mrf.mxu0
        %v11110 = vadd.f32 0.0, %v11109
        %v11111 = vpop.f32.mrf.mxu0
        %11112 = vmatprep.mubr.bf16.mxu0 0
        %11113 = vmatmul.mubr.bf16.gmra.mxu0 %v10951
        %v11114 = vpop.f32.mrf.mxu0
        %v11115 = vadd.f32 0.0, %v11114
        %v11116 = vpop.f32.mrf.mxu0
        %v11117 = vpop.f32.mrf.mxu0
        %v11118 = vadd.f32 0.0, %v11117
        %v11119 = vpop.f32.mrf.mxu0
        %11120 = vmatprep.mubr.bf16.mxu0 0
        %11121 = vmatmul.mubr.bf16.gmra.mxu0 %v10952
        %v11122 = vpop.f32.mrf.mxu0
        %v11123 = vadd.f32 0.0, %v11122
        %v11124 = vpop.f32.mrf.mxu0
        %v11125 = vpop.f32.mrf.mxu0
        %v11126 = vadd.f32 0.0, %v11125
        %v11127 = vpop.f32.mrf.mxu0
        %11128 = vmatprep.mubr.bf16.mxu0 0
        %11129 = vmatmul.mubr.bf16.gmra.mxu0 %v10953
        %v11130 = vpop.f32.mrf.mxu0
        %v11131 = vadd.f32 0.0, %v11130
        %v11132 = vpop.f32.mrf.mxu0
        %v11133 = vpop.f32.mrf.mxu0
        %v11134 = vadd.f32 0.0, %v11133
        %v11135 = vpop.f32.mrf.mxu0
        %11136 = vmatprep.mubr.bf16.mxu0 0
        %11137 = vmatmul.mubr.bf16.gmra.mxu0 %v10954
        %v11138 = vpop.f32.mrf.mxu0
        %v11139 = vadd.f32 0.0, %v11138
        %v11140 = vpop.f32.mrf.mxu0
        %v11141 = vpop.f32.mrf.mxu0
        %v11142 = vadd.f32 0.0, %v11141
        %v11143 = vpop.f32.mrf.mxu0
        %11144 = vmatprep.mubr.bf16.mxu0 0
        %11145 = vmatmul.mubr.bf16.gmra.mxu0 %v10955
        %v11146 = vpop.f32.mrf.mxu0
        %v11147 = vadd.f32 0.0, %v11146
        %v11148 = vpop.f32.mrf.mxu0
        %v11149 = vpop.f32.mrf.mxu0
        %v11150 = vadd.f32 0.0, %v11149
        %v11151 = vpop.f32.mrf.mxu0
        %11152 = vmatprep.mubr.bf16.mxu0 0
        %11153 = vmatmul.mubr.bf16.gmra.mxu0 %v10956
        %v11154 = vpop.f32.mrf.mxu0
        %v11155 = vadd.f32 0.0, %v11154
        %v11156 = vpop.f32.mrf.mxu0
        %v11157 = vpop.f32.mrf.mxu0
        %v11158 = vadd.f32 0.0, %v11157
        %v11159 = vpop.f32.mrf.mxu0
        %11160 = vmatprep.mubr.bf16.mxu0 0
        %11161 = vmatmul.mubr.bf16.gmra.mxu0 %v10957
        %v11162 = vpop.f32.mrf.mxu0
        %v11163 = vadd.f32 0.0, %v11162
        %v11164 = vpop.f32.mrf.mxu0
        %v11165 = vpop.f32.mrf.mxu0
        %v11166 = vadd.f32 0.0, %v11165
        %v11167 = vpop.f32.mrf.mxu0
        %11168 = vmatprep.mubr.bf16.mxu0 0
        %11169 = vmatmul.mubr.bf16.gmra.mxu0 %v10958
        %v11170 = vpop.f32.mrf.mxu0
        %v11171 = vadd.f32 0.0, %v11170
        %v11172 = vpop.f32.mrf.mxu0
        %v11173 = vpop.f32.mrf.mxu0
        %v11174 = vadd.f32 0.0, %v11173
        %v11175 = vpop.f32.mrf.mxu0
        %11176 = vmatprep.mubr.bf16.mxu0 0
        %11177 = vmatmul.mubr.bf16.gmra.mxu0 %v10959
        %v11178 = vpop.f32.mrf.mxu0
        %v11179 = vadd.f32 0.0, %v11178
        %v11180 = vpop.f32.mrf.mxu0
        %v11181 = vpop.f32.mrf.mxu0
        %v11182 = vadd.f32 0.0, %v11181
        %v11183 = vpop.f32.mrf.mxu0
        %11184 = vdwg.mxu0
        %v11185 = vadd.f32 %v10687, %v11059
        %v11186 = vadd.f32 %v10688, %v11062
        %v11187 = vadd.f32 %v10689, %v11067
        %v11188 = vadd.f32 %v10690, %v11070
        %v11189 = vadd.f32 %v10691, %v11075
        %v11190 = vadd.f32 %v10692, %v11078
        %v11191 = vadd.f32 %v10693, %v11083
        %v11192 = vadd.f32 %v10694, %v11086
        %v11193 = vadd.f32 %v10695, %v11091
        %v11194 = vadd.f32 %v10696, %v11094
        %v11195 = vadd.f32 %v10697, %v11099
        %v11196 = vadd.f32 %v10698, %v11102
        %v11197 = vadd.f32 %v10699, %v11107
        %v11198 = vadd.f32 %v10700, %v11110
        %v11199 = vadd.f32 %v10701, %v11115
        %v11200 = vadd.f32 %v10702, %v11118
        %v11201 = vadd.f32 %v10703, %v11123
        %v11202 = vadd.f32 %v10704, %v11126
        %v11203 = vadd.f32 %v10705, %v11131
        %v11204 = vadd.f32 %v10706, %v11134
        %v11205 = vadd.f32 %v10707, %v11139
        %v11206 = vadd.f32 %v10708, %v11142
        %v11207 = vadd.f32 %v10709, %v11147
        %v11208 = vadd.f32 %v10710, %v11150
        %v11209 = vadd.f32 %v10711, %v11155
        %v11210 = vadd.f32 %v10712, %v11158
        %v11211 = vadd.f32 %v10713, %v11163
        %v11212 = vadd.f32 %v10714, %v11166
        %v11213 = vadd.f32 %v10715, %v11171
        %v11214 = vadd.f32 %v10716, %v11174
        %v11215 = vadd.f32 %v10717, %v11179
        %v11216 = vadd.f32 %v10718, %v11182
        %v11217 = vld [vmem:[%s4] sm:$0x1]
        %v11219 = vlaneseq
        %v11220 = vshrl.u32 %v11219, 7
        %v11221 = vsub.s32 0, %v11220
        %v11222 = vrot.slane %v11217, %v11221
        %v11224 = vadd.f32 %v11185, %v11222
        %v11225 = vadd.f32 %v11186, %v11222
        %v11226 = vadd.f32 %v11187, %v11222
        %v11227 = vadd.f32 %v11188, %v11222
        %v11228 = vadd.f32 %v11189, %v11222
        %v11229 = vadd.f32 %v11190, %v11222
        %v11230 = vadd.f32 %v11191, %v11222
        %v11231 = vadd.f32 %v11192, %v11222
        %v11232 = vadd.f32 %v11193, %v11222
        %v11233 = vadd.f32 %v11194, %v11222
        %v11234 = vadd.f32 %v11195, %v11222
        %v11235 = vadd.f32 %v11196, %v11222
        %v11236 = vadd.f32 %v11197, %v11222
        %v11237 = vadd.f32 %v11198, %v11222
        %v11238 = vadd.f32 %v11199, %v11222
        %v11239 = vadd.f32 %v11200, %v11222
        %v11240 = vadd.f32 %v11201, %v11222
        %v11241 = vadd.f32 %v11202, %v11222
        %v11242 = vadd.f32 %v11203, %v11222
        %v11243 = vadd.f32 %v11204, %v11222
        %v11244 = vadd.f32 %v11205, %v11222
        %v11245 = vadd.f32 %v11206, %v11222
        %v11246 = vadd.f32 %v11207, %v11222
        %v11247 = vadd.f32 %v11208, %v11222
        %v11248 = vadd.f32 %v11209, %v11222
        %v11249 = vadd.f32 %v11210, %v11222
        %v11250 = vadd.f32 %v11211, %v11222
        %v11251 = vadd.f32 %v11212, %v11222
        %v11252 = vadd.f32 %v11213, %v11222
        %v11253 = vadd.f32 %v11214, %v11222
        %v11254 = vadd.f32 %v11215, %v11222
        %v11255 = vadd.f32 %v11216, %v11222
        %v11256 = vld [vmem:[%s237] sm:$0xff]
        %v11257 = vld [vmem:[%s237 + $0x8] sm:$0xff]
        %v11258 = vld [vmem:[%s237 + $0x10] sm:$0xff]
        %v11259 = vld [vmem:[%s237 + $0x18] sm:$0xff]
        %v11260 = vld [vmem:[%s237 + $0x20] sm:$0xff]
        %v11261 = vld [vmem:[%s237 + $0x28] sm:$0xff]
        %v11262 = vld [vmem:[%s237 + $0x30] sm:$0xff]
        %v11263 = vld [vmem:[%s237 + $0x38] sm:$0xff]
        %v11264 = vld [vmem:[%s237 + $0x40] sm:$0xff]
        %v11265 = vld [vmem:[%s237 + $0x48] sm:$0xff]
        %v11266 = vld [vmem:[%s237 + $0x50] sm:$0xff]
        %v11267 = vld [vmem:[%s237 + $0x58] sm:$0xff]
        %v11268 = vld [vmem:[%s237 + $0x60] sm:$0xff]
        %v11269 = vld [vmem:[%s237 + $0x68] sm:$0xff]
        %v11270 = vld [vmem:[%s237 + $0x70] sm:$0xff]
        %v11271 = vld [vmem:[%s237 + $0x78] sm:$0xff]
        %v11272 = vld [vmem:[%s237 + $0x80] sm:$0xff]
        %v11273 = vld [vmem:[%s237 + $0x88] sm:$0xff]
        %v11274 = vld [vmem:[%s237 + $0x90] sm:$0xff]
        %v11275 = vld [vmem:[%s237 + $0x98] sm:$0xff]
        %v11276 = vld [vmem:[%s237 + $0xa0] sm:$0xff]
        %v11277 = vld [vmem:[%s237 + $0xa8] sm:$0xff]
        %v11278 = vld [vmem:[%s237 + $0xb0] sm:$0xff]
        %v11279 = vld [vmem:[%s237 + $0xb8] sm:$0xff]
        %v11280 = vld [vmem:[%s237 + $0xc0] sm:$0xff]
        %v11281 = vld [vmem:[%s237 + $0xc8] sm:$0xff]
        %v11282 = vld [vmem:[%s237 + $0xd0] sm:$0xff]
        %v11283 = vld [vmem:[%s237 + $0xd8] sm:$0xff]
        %v11284 = vld [vmem:[%s237 + $0xe0] sm:$0xff]
        %v11285 = vld [vmem:[%s237 + $0xe8] sm:$0xff]
        %v11286 = vld [vmem:[%s237 + $0xf0] sm:$0xff]
        %v11287 = vld [vmem:[%s237 + $0xf8] sm:$0xff]
        %v11288 = vadd.f32 %v11224, %v11256
        %v11289 = vadd.f32 %v11225, %v11257
        %v11290 = vadd.f32 %v11226, %v11258
        %v11291 = vadd.f32 %v11227, %v11259
        %v11292 = vadd.f32 %v11228, %v11260
        %v11293 = vadd.f32 %v11229, %v11261
        %v11294 = vadd.f32 %v11230, %v11262
        %v11295 = vadd.f32 %v11231, %v11263
        %v11296 = vadd.f32 %v11232, %v11264
        %v11297 = vadd.f32 %v11233, %v11265
        %v11298 = vadd.f32 %v11234, %v11266
        %v11299 = vadd.f32 %v11235, %v11267
        %v11300 = vadd.f32 %v11236, %v11268
        %v11301 = vadd.f32 %v11237, %v11269
        %v11302 = vadd.f32 %v11238, %v11270
        %v11303 = vadd.f32 %v11239, %v11271
        %v11304 = vadd.f32 %v11240, %v11272
        %v11305 = vadd.f32 %v11241, %v11273
        %v11306 = vadd.f32 %v11242, %v11274
        %v11307 = vadd.f32 %v11243, %v11275
        %v11308 = vadd.f32 %v11244, %v11276
        %v11309 = vadd.f32 %v11245, %v11277
        %v11310 = vadd.f32 %v11246, %v11278
        %v11311 = vadd.f32 %v11247, %v11279
        %v11312 = vadd.f32 %v11248, %v11280
        %v11313 = vadd.f32 %v11249, %v11281
        %v11314 = vadd.f32 %v11250, %v11282
        %v11315 = vadd.f32 %v11251, %v11283
        %v11316 = vadd.f32 %v11252, %v11284
        %v11317 = vadd.f32 %v11253, %v11285
        %v11318 = vadd.f32 %v11254, %v11286
        %v11319 = vadd.f32 %v11255, %v11287
        %11320 = vst [vmem:[%s271] sm:$0xff] %v11288
        %11321 = vst [vmem:[%s271 + $0x8] sm:$0xff] %v11289
        %11322 = vst [vmem:[%s271 + $0x10] sm:$0xff] %v11290
        %11323 = vst [vmem:[%s271 + $0x18] sm:$0xff] %v11291
        %11324 = vst [vmem:[%s271 + $0x20] sm:$0xff] %v11292
        %11325 = vst [vmem:[%s271 + $0x28] sm:$0xff] %v11293
        %11326 = vst [vmem:[%s271 + $0x30] sm:$0xff] %v11294
        %11327 = vst [vmem:[%s271 + $0x38] sm:$0xff] %v11295
        %11328 = vst [vmem:[%s271 + $0x40] sm:$0xff] %v11296
        %11329 = vst [vmem:[%s271 + $0x48] sm:$0xff] %v11297
        %11330 = vst [vmem:[%s271 + $0x50] sm:$0xff] %v11298
        %11331 = vst [vmem:[%s271 + $0x58] sm:$0xff] %v11299
        %11332 = vst [vmem:[%s271 + $0x60] sm:$0xff] %v11300
        %11333 = vst [vmem:[%s271 + $0x68] sm:$0xff] %v11301
        %11334 = vst [vmem:[%s271 + $0x70] sm:$0xff] %v11302
        %11335 = vst [vmem:[%s271 + $0x78] sm:$0xff] %v11303
        %11336 = vst [vmem:[%s271 + $0x80] sm:$0xff] %v11304
        %11337 = vst [vmem:[%s271 + $0x88] sm:$0xff] %v11305
        %11338 = vst [vmem:[%s271 + $0x90] sm:$0xff] %v11306
        %11339 = vst [vmem:[%s271 + $0x98] sm:$0xff] %v11307
        %11340 = vst [vmem:[%s271 + $0xa0] sm:$0xff] %v11308
        %11341 = vst [vmem:[%s271 + $0xa8] sm:$0xff] %v11309
        %11342 = vst [vmem:[%s271 + $0xb0] sm:$0xff] %v11310
        %11343 = vst [vmem:[%s271 + $0xb8] sm:$0xff] %v11311
        %11344 = vst [vmem:[%s271 + $0xc0] sm:$0xff] %v11312
        %11345 = vst [vmem:[%s271 + $0xc8] sm:$0xff] %v11313
        %11346 = vst [vmem:[%s271 + $0xd0] sm:$0xff] %v11314
        %11347 = vst [vmem:[%s271 + $0xd8] sm:$0xff] %v11315
        %11348 = vst [vmem:[%s271 + $0xe0] sm:$0xff] %v11316
        %11349 = vst [vmem:[%s271 + $0xe8] sm:$0xff] %v11317
        %11350 = vst [vmem:[%s271 + $0xf0] sm:$0xff] %v11318
        %11351 = vst [vmem:[%s271 + $0xf8] sm:$0xff] %v11319
        %s11352 = sand.u32 %s141, 1
        %s11353 = scalar_lea.sflag [#allocation5], %s11352
        %s11354 = sand.u32 %s141, 1
        %s11355 = smul.addr %s11354, 256
        %s11356 = scalar_lea.vmem [#allocation9], %s11355
        // Predicated region
        $region53: #{tpu_custom_call.1} parent=39 // pred_check
          %p11357 = pneg %p151
        $region54: #{tpu_custom_call.1} parent=39 // pred_check_branch
          %11359 = sbr.rel (%p11357) target = $region56
        $region55: #{tpu_custom_call.1} parent=39 // pred_region
          %s11361 = ssub.s32 4096, 4096
          %11362 = vsyncadd %s11353, %s11361
          %s11363 = smul.addr %s23, 32
          %s11364 = smul.addr %s11363, 128
          %s11365 = scalar_lea.hbm %s5, %s11364
          %s11366 = sshll.u32 %s11356, 4
          %s11367 = int_to_ptr.vmem [resolvable:$true] %s11366
          %11372 = dma.vmem_to_hbm [thread:$0]  %s11367, 4096, %s11365, %s11353, 128, 128, 8
        $region56: #{tpu_custom_call.1} parent=39 // pred_fallthru
          _
      $region40: #{tpu_custom_call.1} parent=5 // pred_fallthru
        _
      %p11373 = scmp.le.s32.totalorder 2, %s18
      // Predicated region
      $region57: #{tpu_custom_call.1} parent=5 // pred_check
        %p11374 = pneg %p11373
      $region58: #{tpu_custom_call.1} parent=5 // pred_check_branch
        %11376 = sbr.rel (%p11374) target = $region60
      $region59: #{tpu_custom_call.1} parent=5 // pred_region
        %s11377 = ssub.s32 %s18, 2
        // Predicated region
        $region61: #{tpu_custom_call.1} parent=59 // pred_check
          %p11378 = pneg %p157
        $region62: #{tpu_custom_call.1} parent=59 // pred_check_branch
          %11380 = sbr.rel (%p11378) target = $region64
        $region63: #{tpu_custom_call.1} parent=59 // pred_region
          %s11381 = sand.u32 %s142, 1
          %s11382 = scalar_lea.sflag [#allocation5], %s11381
          %s11383 = sand.u32 %s142, 1
          %s11384 = smul.addr %s11383, 256
          %s11385 = scalar_lea.vmem [#allocation9], %s11384
          %11386 = dma.done %s11382, 4096
        $region64: #{tpu_custom_call.1} parent=59 // pred_fallthru
          _
      $region60: #{tpu_custom_call.1} parent=5 // pred_fallthru
        _
    $region6: #{tpu_custom_call.1} parent=1 // loop_footer
      %s22 = sadd.s32 1, %s18
    $region7: #{tpu_custom_call.1} parent=1 // loop_footer_branch
      %17 = sbr.rel target = $region3
    $region8: #{tpu_custom_call.1} parent=1 // loop_exit
      _
    %11387 = vsyncpa [#allocation4], 1
    %s11388 = scalar_lea.sflag [#allocation4], 1
    %11389 = vsyncpa %s11388, 1
    %11390 = vsyncpa [#allocation7], 1
    %11391 = vsyncpa [#allocation5], 1
    %s11392 = scalar_lea.sflag [#allocation5], 1
    %11393 = vsyncpa %s11392, 1

</llo_original>
